<compile_context>
chip_gen: v7x
topology: tpu7x:2x2x1
jax: 0.10.0
libtpu: 0.0.40
codegen_flags: <defaults>
</compile_context>

<pallas_src>
import functools

import jax
import jax.numpy as jnp
from jax.experimental import pallas as pl
from jax.experimental.pallas import tpu as pltpu

LANE = 128                       # channel dims padded to lane width -> dense ld/st
BN_EPS = 1e-5
VMEM_LIMIT = 48 * 1024 * 1024    # scoped VMEM limit per call (fits v7x's 64 MiB)
TILE_BUDGET = 10 * 1024 * 1024   # rough per-grid-step working-set budget


def _round_up(x, m):
    return ((x + m - 1) // m) * m


def _row_tile(h, w, chans, target_m=1024, budget=TILE_BUDGET):
    """Rows per grid step: largest divisor of h with TH*W ~ target_m while the
    double-buffered bf16 tiles + f32 working copies stay under `budget`."""
    per_row = max(1, w * chans * 12)              # ~2B x 2buf in/out + ~4B working
    cap = max(1, min(h, budget // per_row))
    want = min(cap, max(1, -(-target_m // w)))    # ceil(target_m / w), capped
    t = max(1, min(h, want))
    while h % t:                                  # prime H degrades gracefully
        t -= 1
    return t


# ----------------------------- kernels ------------------------------------ #
def _deconv2x2_kernel(x_ref, w_ref, b_ref, o_ref):
    # x: (1, TH, W, Cin_p) bf16   w: (Cin_p, 4*Cout_p) bf16   b: (1, 4*Cout_p) f32
    # o: (1, TH, W, 4*Cout_p) bf16 -- packed (dy, dx, cout) sub-pixel channels.
    th, w_, cin = x_ref.shape[1], x_ref.shape[2], x_ref.shape[3]
    x2d = x_ref[0].reshape(th * w_, cin)
    y = jnp.dot(x2d, w_ref[...], preferred_element_type=jnp.float32) + b_ref[...]
    o_ref[0, :, :, :] = y.reshape(th, w_, y.shape[-1]).astype(o_ref.dtype)


def _conv3x3_kernel(pre_act, body_ref, top_ref, bot_ref, w_ref, a_ref, b_ref,
                    o_ref, st_ref):
    """3x3 conv (padding=1, no bias) over one (TH, W) row-tile of one image.

    * 9 per-tap bf16 MXU matmuls accumulated into one f32 accumulator
      (no 9x-materialized im2col buffer); W-axis shifts built once per kx.
    * If `pre_act`, relu(x*a + b) (previous BatchNorm+ReLU) is applied to the
      loaded rows BEFORE the spatial zero padding.
    * Emits per-tile channel (sum, sumsq) so the training-mode BatchNorm stats
      of this conv's output can be finished outside (two-pass BN).
    """
    i = pl.program_id(1)
    last = pl.num_programs(1) - 1
    th, w_, cp = body_ref.shape[1], body_ref.shape[2], body_ref.shape[3]
    co_p = o_ref.shape[3]
    mm_dtype = w_ref.dtype

    body = body_ref[0].astype(jnp.float32)      # (TH, W, Cp)
    top = top_ref[0, 0].astype(jnp.float32)     # (W, Cp)  row above the tile
    bot = bot_ref[0, 0].astype(jnp.float32)     # (W, Cp)  row below the tile
    if pre_act:
        a2 = a_ref[...].astype(jnp.float32)     # (1, Cp)
        b2 = b_ref[...].astype(jnp.float32)
        body = jnp.maximum(body * a2.reshape(1, 1, cp) + b2.reshape(1, 1, cp), 0.0)
        top = jnp.maximum(top * a2 + b2, 0.0)
        bot = jnp.maximum(bot * a2 + b2, 0.0)
    # zero out-of-image halo rows (zero padding is applied AFTER the activation)
    top = top * jnp.where(i == 0, 0.0, 1.0)
    bot = bot * jnp.where(i == last, 0.0, 1.0)

    col = jnp.concatenate(
        [top.reshape(1, w_, cp), body, bot.reshape(1, w_, cp)], axis=0)  # (TH+2, W, Cp)
    # one W-axis shift per kx, reused across the 3 ky row-slices (edge = zero pad)
    zc = jnp.zeros((th + 2, 1, cp), jnp.float32)
    cols = (jnp.concatenate([zc, col[:, :w_ - 1, :]], axis=1),   # kx=0 -> x[.., c-1]
            col,                                                  # kx=1 -> x[.., c  ]
            jnp.concatenate([col[:, 1:, :], zc], axis=1))         # kx=2 -> x[.., c+1]

    acc = jnp.zeros((th * w_, co_p), jnp.float32)
    for ky in range(3):
        for kx in range(3):
            tap = cols[kx][ky:ky + th].reshape(th * w_, cp).astype(mm_dtype)
            acc += jnp.dot(tap, w_ref[ky * 3 + kx],
                           preferred_element_type=jnp.float32)

    o_ref[0, :, :, :] = acc.reshape(th, w_, co_p).astype(o_ref.dtype)
    s1 = jnp.sum(acc, axis=0, keepdims=True)
    s2 = jnp.sum(acc * acc, axis=0, keepdims=True)
    st_ref[0, 0, :, :] = jnp.concatenate([s1, s2], axis=0)


# ----------------------------- wrappers ------------------------------------ #
def conv_transpose2x2(x_nhwc, w_pt, bias, matmul_dtype=jnp.bfloat16):
    """ConvTranspose2d(kernel=2, stride=2) with bias.  w_pt: (Cin, Cout, 2, 2)."""
    n, h, w, cin = x_nhwc.shape
    cout = w_pt.shape[1]
    cin_p = _round_up(cin, LANE)
    cout_p = _round_up(cout, LANE // 4)      # 4*cout_p is a multiple of 128 -> dense stores
    x_p = jnp.pad(x_nhwc, ((0, 0), (0, 0), (0, 0), (0, cin_p - cin))).astype(matmul_dtype)
    w_m = jnp.transpose(w_pt, (0, 2, 3, 1))                               # (Cin, 2, 2, Cout)
    w_m = jnp.pad(w_m, ((0, cin_p - cin), (0, 0), (0, 0), (0, cout_p - cout)))
    w_m = w_m.reshape(cin_p, 4 * cout_p).astype(matmul_dtype)
    b_m = jnp.tile(jnp.pad(bias, (0, cout_p - cout)).reshape(1, 1, cout_p),
                   (1, 4, 1)).reshape(1, 4 * cout_p).astype(jnp.float32)

    th = _row_tile(h, w, cin_p + 4 * cout_p)
    y = pl.pallas_call(
        _deconv2x2_kernel,
        out_shape=jax.ShapeDtypeStruct((n, h, w, 4 * cout_p), jnp.bfloat16),
        grid=(n, h // th),
        in_specs=[
            pl.BlockSpec((1, th, w, cin_p), lambda b, i: (b, i, 0, 0)),
            pl.BlockSpec((cin_p, 4 * cout_p), lambda b, i: (0, 0)),
            pl.BlockSpec((1, 4 * cout_p), lambda b, i: (0, 0)),
        ],
        out_specs=pl.BlockSpec((1, th, w, 4 * cout_p), lambda b, i: (b, i, 0, 0)),
        compiler_params=pltpu.CompilerParams(
            dimension_semantics=("parallel", "parallel"),
            vmem_limit_bytes=VMEM_LIMIT),
    )(x_p, w_m, b_m)
    # 2x2 sub-pixel scatter: thin bf16 layout glue in XLA.
    # TODO(synk): write the interleaved (N,2H,2W,Cp) layout directly from the kernel
    # (strided sublane stores) to drop this HBM round trip of the upsampled feature.
    y = y.reshape(n, h, w, 2, 2, cout_p)
    y = jnp.transpose(y, (0, 1, 3, 2, 4, 5)).reshape(n, 2 * h, 2 * w, cout_p)
    return y[..., :cout]


def conv3x3_bn_stats(x_padc, w_hwio, pre_ab=None, matmul_dtype=jnp.bfloat16):
    """Conv2d(3x3, pad=1, bias=False) on a channels-last, lane-padded input.

    Optionally fuses relu(x*a + b) (previous layer's BatchNorm+ReLU) onto the input.
    Returns (conv output bf16 (N,H,W,Co_p), per-tile f32 stats (N, nH, 2, Co_p)).
    """
    n, h, w, cp = x_padc.shape
    cin, cout = w_hwio.shape[2], w_hwio.shape[3]
    co_p = _round_up(cout, LANE)
    # TODO(synk): when 9*cin <= 128, pack the real channels of the 9 taps into a
    # single 128-lane K instead of 9 lane-padded matmuls (saves ~9x MXU work).
    w_m = jnp.pad(w_hwio, ((0, 0), (0, 0), (0, cp - cin), (0, co_p - cout)))
    w_m = w_m.reshape(9, cp, co_p).astype(matmul_dtype)
    if pre_ab is None:
        a_m = jnp.ones((1, cp), jnp.float32)
        b_m = jnp.zeros((1, cp), jnp.float32)
        pre = False
    else:
        a_m, b_m = pre_ab
        pre = True

    th = _row_tile(h, w, cp + co_p)
    nh = h // th
    kernel = functools.partial(_conv3x3_kernel, pre)
    raw, stats = pl.pallas_call(
        kernel,
        out_shape=(jax.ShapeDtypeStruct((n, h, w, co_p), jnp.bfloat16),
                   jax.ShapeDtypeStruct((n, nh, 2, co_p), jnp.float32)),
        grid=(n, nh),
        in_specs=[
            # row tile + 1-row halos (same array passed three times, clamped at edges)
            pl.BlockSpec((1, th, w, cp), lambda b, i: (b, i, 0, 0)),
            pl.BlockSpec((1, 1, w, cp),
                         lambda b, i: (b, jnp.maximum(i * th - 1, 0), 0, 0)),
            pl.BlockSpec((1, 1, w, cp),
                         lambda b, i: (b, jnp.minimum(i * th + th, h - 1), 0, 0)),
            pl.BlockSpec((9, cp, co_p), lambda b, i: (0, 0, 0)),  # weights resident
            pl.BlockSpec((1, cp), lambda b, i: (0, 0)),           # pre-act scale
            pl.BlockSpec((1, cp), lambda b, i: (0, 0)),           # pre-act shift
        ],
        out_specs=[
            pl.BlockSpec((1, th, w, co_p), lambda b, i: (b, i, 0, 0)),
            pl.BlockSpec((1, 1, 2, co_p), lambda b, i: (b, i, 0, 0)),
        ],
        compiler_params=pltpu.CompilerParams(
            dimension_semantics=("parallel", "parallel"),
            vmem_limit_bytes=VMEM_LIMIT),
    )(x_padc, x_padc, x_padc, w_m, a_m, b_m)
    return raw, stats


def _bn_affine(stats, tile_elems, gamma, beta, co_p, eps=BN_EPS):
    """Finish training-mode BatchNorm from per-tile (sum, sumsq) with Chan's
    parallel merge (per-tile centered SS, then merged) -> y = x*a + b."""
    s = stats.reshape(-1, 2, stats.shape[-1]).astype(jnp.float32)
    sum_t, sq_t = s[:, 0, :], s[:, 1, :]
    n_t = jnp.float32(tile_elems)
    total = n_t * s.shape[0]
    mean_t = sum_t / n_t
    m2_t = jnp.maximum(sq_t - sum_t * mean_t, 0.0)        # per-tile centered SS
    mean = jnp.sum(sum_t, axis=0) / total
    m2 = jnp.sum(m2_t, axis=0) + n_t * jnp.sum((mean_t - mean) ** 2, axis=0)
    var = m2 / total                                      # biased variance
    g = jnp.pad(gamma, (0, co_p - gamma.shape[0]))
    bt = jnp.pad(beta, (0, co_p - beta.shape[0]))
    a = g * jax.lax.rsqrt(var + eps)
    b = bt - mean * a
    return a.reshape(1, co_p).astype(jnp.float32), b.reshape(1, co_p).astype(jnp.float32)


def up_forward(to_up_nchw, xs_nchw, params, *, matmul_dtype=jnp.bfloat16):
    """Equivalent of Up.forward(to_up, xs).  NCHW in / NCHW out (PyTorch convention)."""
    cout = params["up_w"].shape[1]
    # 1) ConvTranspose2d(k=2, s=2): tiled bf16 MXU matmul kernel.
    up = conv_transpose2x2(jnp.transpose(to_up_nchw, (0, 2, 3, 1)),
                           params["up_w"], params["up_b"], matmul_dtype)
    # 2) torch.cat(xs + [up], dim=channel); lane-padded, bf16.
    # TODO(synk): feed the skips and `up` as separate in_specs of conv1 and
    # accumulate per-source matmuls to remove this concat/pad HBM round trip.
    feats = [jnp.transpose(t, (0, 2, 3, 1)).astype(jnp.bfloat16) for t in xs_nchw] + [up]
    cat = jnp.concatenate(feats, axis=-1)
    cp = _round_up(cat.shape[-1], LANE)
    cat = jnp.pad(cat, ((0, 0), (0, 0), (0, 0), (0, cp - cat.shape[-1])))
    n, ho, wo, _ = cat.shape
    # 3) conv1 (9 per-tap matmuls / tile) + per-tile stats for training-mode BN1.
    h1, st1 = conv3x3_bn_stats(cat, params["conv1_w"], None, matmul_dtype)
    a1, b1 = _bn_affine(st1, ho * wo // st1.shape[1],
                        params["bn1_g"], params["bn1_b"], h1.shape[-1])
    # 4) conv2 with BN1+ReLU fused in as a per-channel pre-activation (+ BN2 stats).
    h2, st2 = conv3x3_bn_stats(h1, params["conv2_w"], (a1, b1), matmul_dtype)
    a2, b2 = _bn_affine(st2, ho * wo // st2.shape[1],
                        params["bn2_g"], params["bn2_b"], h2.shape[-1])
    # 5) final BN2 + ReLU + channel slice + NCHW transpose: plain XLA (fused
    #    elementwise), no extra pallas_call / HBM round trip.
    y = jnp.maximum(h2.astype(jnp.float32) * a2.reshape(1, 1, 1, -1)
                    + b2.reshape(1, 1, 1, -1), 0.0)[..., :cout]
    return jnp.transpose(y, (0, 3, 1, 2))


# ----------------------------- main ---------------------------------------- #
if __name__ == "__main__":
    key = jax.random.PRNGKey(0)
    ks = jax.random.split(key, 10)

    N = 2
    in_channels, out_channels, n_feats = 8, 4, 3    # Up(in=8, out=4, n=3, L=2)
    H = W = 8                                       # to_up spatial; upsampled to 16x16

    to_up = jax.random.normal(ks[0], (N, in_channels, H, W), jnp.float32)
    xs = [jax.random.normal(ks[1], (N, out_channels, 2 * H, 2 * W), jnp.float32),
          jax.random.normal(ks[2], (N, out_channels, 2 * H, 2 * W), jnp.float32)]

    cat_c = n_feats * out_channels                  # DoubleConv in_channels = n * out_channels
    params = {
        # ConvTranspose2d(in_channels, out_channels, 2, 2): weight (Cin, Cout, 2, 2) + bias
        "up_w": 0.1 * jax.random.normal(ks[3], (in_channels, out_channels, 2, 2), jnp.float32),
        "up_b": 0.1 * jax.random.normal(ks[4], (out_channels,), jnp.float32),
        # DoubleConv block 1: Conv2d(cat_c -> out_channels, 3x3, no bias), BN affine
        "conv1_w": 0.1 * jax.random.normal(ks[5], (3, 3, cat_c, out_channels), jnp.float32),
        "bn1_g": jnp.ones((out_channels,), jnp.float32),
        "bn1_b": jnp.zeros((out_channels,), jnp.float32),
        # DoubleConv block 2: Conv2d(out_channels -> out_channels, 3x3, no bias), BN affine
        "conv2_w": 0.1 * jax.random.normal(ks[6], (3, 3, out_channels, out_channels), jnp.float32),
        "bn2_g": jnp.ones((out_channels,), jnp.float32),
        "bn2_b": jnp.zeros((out_channels,), jnp.float32),
    }

    out = jax.jit(up_forward)(to_up, xs, params)
    out = jax.block_until_ready(out)
    assert out.shape == (N, out_channels, 2 * H, 2 * W), out.shape
    assert bool(jnp.all(jnp.isfinite(out)))
    print("KERNEL_OK")
</pallas_src>

<mosaic_0001>
module attributes {stable_mosaic.version = 11 : i64} {
  func.func @_deconv2x2_kernel(%arg0: i32, %arg1: i32, %arg2: memref<1x8x8x128xbf16, #tpu.memory_space<vmem>>, %arg3: memref<128x128xbf16, #tpu.memory_space<vmem>>, %arg4: memref<1x128xf32, #tpu.memory_space<vmem>>, %arg5: memref<1x8x8x128xbf16, #tpu.memory_space<vmem>>) attributes {dimension_semantics = [#tpu.dimension_semantics<parallel>, #tpu.dimension_semantics<parallel>], iteration_bounds = array<i64: 2, 1>, scalar_prefetch = 0 : i64, scratch_operands = 0 : i64, tpu.core_type = #tpu.core_type<tc>, window_params = [{transform_indices = @transform_0, window_bounds = array<i64: 1, 8, 8, 128>}, {pipeline_mode = #tpu.pipeline_mode<synchronous>, transform_indices = @transform_1, window_bounds = array<i64: 128, 128>}, {pipeline_mode = #tpu.pipeline_mode<synchronous>, transform_indices = @transform_2, window_bounds = array<i64: 1, 128>}, {transform_indices = @transform_3, window_bounds = array<i64: 1, 8, 8, 128>}]} {
    %c0 = arith.constant 0 : index
    %c0_0 = arith.constant 0 : index
    %c0_1 = arith.constant 0 : index
    %c0_2 = arith.constant 0 : index
    %0 = vector.load %arg2[%c0, %c0_0, %c0_1, %c0_2] : memref<1x8x8x128xbf16, #tpu.memory_space<vmem>>, vector<1x8x8x128xbf16>
    %1 = vector.shape_cast %0 : vector<1x8x8x128xbf16> to vector<8x8x128xbf16>
    %2 = vector.shape_cast %1 : vector<8x8x128xbf16> to vector<64x128xbf16>
    %c0_3 = arith.constant 0 : index
    %c0_4 = arith.constant 0 : index
    %3 = vector.load %arg3[%c0_3, %c0_4] : memref<128x128xbf16, #tpu.memory_space<vmem>>, vector<128x128xbf16>
    %cst = arith.constant dense<0.000000e+00> : vector<64x128xf32>
    %4 = tpu.matmul %2, %3, %cst {dimension_numbers = #tpu.dot_dimension_numbers<[1], [0], [0], [1], [0, 0, 1, 1], [], []>} : vector<64x128xbf16>, vector<128x128xbf16>, vector<64x128xf32> -> vector<64x128xf32>
    %c0_5 = arith.constant 0 : index
    %c0_6 = arith.constant 0 : index
    %5 = vector.load %arg4[%c0_5, %c0_6] : memref<1x128xf32, #tpu.memory_space<vmem>>, vector<1x128xf32>
    %6 = vector.broadcast %5 : vector<1x128xf32> to vector<64x128xf32>
    %7 = arith.addf %4, %6 : vector<64x128xf32>
    %8 = vector.shape_cast %7 : vector<64x128xf32> to vector<8x8x128xf32>
    %9 = arith.truncf %8 : vector<8x8x128xf32> to vector<8x8x128xbf16>
    %c0_7 = arith.constant 0 : index
    %c0_8 = arith.constant 0 : index
    %c0_9 = arith.constant 0 : index
    %c0_10 = arith.constant 0 : index
    %10 = vector.load %arg5[%c0_7, %c0_8, %c0_9, %c0_10] : memref<1x8x8x128xbf16, #tpu.memory_space<vmem>>, vector<1x8x8x128xbf16>
    %11 = vector.shape_cast %10 : vector<1x8x8x128xbf16> to vector<8x8x128xbf16>
    %12 = vector.shape_cast %9 : vector<8x8x128xbf16> to vector<1x8x8x128xbf16>
    tpu.vector_store %arg5[%c0_7, %c0_8, %c0_9, %c0_10], %12 {strides = array<i32>} : memref<1x8x8x128xbf16, #tpu.memory_space<vmem>>, vector<1x8x8x128xbf16>,
    return
  }
  func.func @transform_0(%arg0: i32, %arg1: i32) -> (i32, i32, i32, i32) {
    %c0_i32 = arith.constant 0 : i32
    %c0_i32_0 = arith.constant 0 : i32
    %c0_i32_1 = arith.constant 0 : i32
    return %arg0, %arg1, %c0_i32, %c0_i32_0 : i32, i32, i32, i32
  }
  func.func @transform_1(%arg0: i32, %arg1: i32) -> (i32, i32) {
    %c0_i32 = arith.constant 0 : i32
    %c0_i32_0 = arith.constant 0 : i32
    %c0_i32_1 = arith.constant 0 : i32
    return %c0_i32, %c0_i32_0 : i32, i32
  }
  func.func @transform_2(%arg0: i32, %arg1: i32) -> (i32, i32) {
    %c0_i32 = arith.constant 0 : i32
    %c0_i32_0 = arith.constant 0 : i32
    %c0_i32_1 = arith.constant 0 : i32
    return %c0_i32, %c0_i32_0 : i32, i32
  }
  func.func @transform_3(%arg0: i32, %arg1: i32) -> (i32, i32, i32, i32) {
    %c0_i32 = arith.constant 0 : i32
    %c0_i32_0 = arith.constant 0 : i32
    %c0_i32_1 = arith.constant 0 : i32
    return %arg0, %arg1, %c0_i32, %c0_i32_0 : i32, i32, i32, i32
  }
}

module attributes {stable_mosaic.version = 11 : i64} {
  func.func @_conv3x3_kernel(%arg0: i32, %arg1: i32, %arg2: memref<1x16x16x128xbf16, #tpu.memory_space<vmem>>, %arg3: memref<1x1x16x128xbf16, #tpu.memory_space<vmem>>, %arg4: memref<1x1x16x128xbf16, #tpu.memory_space<vmem>>, %arg5: memref<9x128x128xbf16, #tpu.memory_space<vmem>>, %arg6: memref<1x128xf32, #tpu.memory_space<vmem>>, %arg7: memref<1x128xf32, #tpu.memory_space<vmem>>, %arg8: memref<1x16x16x128xbf16, #tpu.memory_space<vmem>>, %arg9: memref<1x1x2x128xf32, #tpu.memory_space<vmem>>) attributes {dimension_semantics = [#tpu.dimension_semantics<parallel>, #tpu.dimension_semantics<parallel>], iteration_bounds = array<i64: 2, 1>, scalar_prefetch = 0 : i64, scratch_operands = 0 : i64, tpu.core_type = #tpu.core_type<tc>, window_params = [{transform_indices = @transform_0, window_bounds = array<i64: 1, 16, 16, 128>}, {transform_indices = @transform_1, window_bounds = array<i64: 1, 1, 16, 128>}, {transform_indices = @transform_2, window_bounds = array<i64: 1, 1, 16, 128>}, {pipeline_mode = #tpu.pipeline_mode<synchronous>, transform_indices = @transform_3, window_bounds = array<i64: 9, 128, 128>}, {pipeline_mode = #tpu.pipeline_mode<synchronous>, transform_indices = @transform_4, window_bounds = array<i64: 1, 128>}, {pipeline_mode = #tpu.pipeline_mode<synchronous>, transform_indices = @transform_5, window_bounds = array<i64: 1, 128>}, {transform_indices = @transform_6, window_bounds = array<i64: 1, 16, 16, 128>}, {transform_indices = @transform_7, window_bounds = array<i64: 1, 1, 2, 128>}]} {
    %c0 = arith.constant 0 : index
    %c0_0 = arith.constant 0 : index
    %c0_1 = arith.constant 0 : index
    %c0_2 = arith.constant 0 : index
    %0 = vector.load %arg2[%c0, %c0_0, %c0_1, %c0_2] : memref<1x16x16x128xbf16, #tpu.memory_space<vmem>>, vector<1x16x16x128xbf16>
    %1 = vector.shape_cast %0 : vector<1x16x16x128xbf16> to vector<16x16x128xbf16>
    %2 = arith.extf %1 : vector<16x16x128xbf16> to vector<16x16x128xf32>
    %c0_3 = arith.constant 0 : index
    %c0_4 = arith.constant 0 : index
    %c0_5 = arith.constant 0 : index
    %c0_6 = arith.constant 0 : index
    %3 = vector.load %arg3[%c0_3, %c0_4, %c0_5, %c0_6] : memref<1x1x16x128xbf16, #tpu.memory_space<vmem>>, vector<1x1x16x128xbf16>
    %4 = vector.shape_cast %3 : vector<1x1x16x128xbf16> to vector<16x128xbf16>
    %5 = arith.extf %4 : vector<16x128xbf16> to vector<16x128xf32>
    %c0_7 = arith.constant 0 : index
    %c0_8 = arith.constant 0 : index
    %c0_9 = arith.constant 0 : index
    %c0_10 = arith.constant 0 : index
    %6 = vector.load %arg4[%c0_7, %c0_8, %c0_9, %c0_10] : memref<1x1x16x128xbf16, #tpu.memory_space<vmem>>, vector<1x1x16x128xbf16>
    %7 = vector.shape_cast %6 : vector<1x1x16x128xbf16> to vector<16x128xbf16>
    %8 = arith.extf %7 : vector<16x128xbf16> to vector<16x128xf32>
    %c0_i32 = arith.constant 0 : i32
    %9 = arith.cmpi eq, %arg1, %c0_i32 : i32
    %cst = arith.constant 0.000000e+00 : f32
    %cst_11 = arith.constant 1.000000e+00 : f32
    %10 = arith.select %9, %cst, %cst_11 : f32
    %11 = vector.broadcast %10 : f32 to vector<16x128xf32>
    %12 = arith.mulf %5, %11 : vector<16x128xf32>
    %c0_i32_12 = arith.constant 0 : i32
    %13 = arith.cmpi eq, %arg1, %c0_i32_12 : i32
    %cst_13 = arith.constant 0.000000e+00 : f32
    %cst_14 = arith.constant 1.000000e+00 : f32
    %14 = arith.select %13, %cst_13, %cst_14 : f32
    %15 = vector.broadcast %14 : f32 to vector<16x128xf32>
    %16 = arith.mulf %8, %15 : vector<16x128xf32>
    %17 = vector.shape_cast %12 : vector<16x128xf32> to vector<1x16x128xf32>
    %18 = vector.shape_cast %16 : vector<16x128xf32> to vector<1x16x128xf32>
    %19 = tpu.concatenate %17, %2, %18 in 0 : vector<1x16x128xf32>, vector<16x16x128xf32>, vector<1x16x128xf32> -> vector<18x16x128xf32>
    %cst_15 = arith.constant 0.000000e+00 : f32
    %20 = vector.broadcast %cst_15 : f32 to vector<18x1x128xf32>
    %21 = vector.extract_strided_slice %19 {offsets = [0, 0, 0], sizes = [18, 15, 128], strides = [1, 1, 1]} : vector<18x16x128xf32> to vector<18x15x128xf32>
    %22 = tpu.concatenate %20, %21 in 1 : vector<18x1x128xf32>, vector<18x15x128xf32> -> vector<18x16x128xf32>
    %23 = vector.extract_strided_slice %19 {offsets = [0, 1, 0], sizes = [18, 15, 128], strides = [1, 1, 1]} : vector<18x16x128xf32> to vector<18x15x128xf32>
    %24 = tpu.concatenate %23, %20 in 1 : vector<18x15x128xf32>, vector<18x1x128xf32> -> vector<18x16x128xf32>
    %cst_16 = arith.constant 0.000000e+00 : f32
    %25 = vector.broadcast %cst_16 : f32 to vector<256x128xf32>
    %26 = vector.extract_strided_slice %22 {offsets = [0, 0, 0], sizes = [16, 16, 128], strides = [1, 1, 1]} : vector<18x16x128xf32> to vector<16x16x128xf32>
    %27 = vector.shape_cast %26 : vector<16x16x128xf32> to vector<256x128xf32>
    %28 = arith.truncf %27 : vector<256x128xf32> to vector<256x128xbf16>
    %c0_17 = arith.constant 0 : index
    %c0_18 = arith.constant 0 : index
    %c0_19 = arith.constant 0 : index
    %29 = vector.load %arg5[%c0_17, %c0_18, %c0_19] : memref<9x128x128xbf16, #tpu.memory_space<vmem>>, vector<1x128x128xbf16>
    %30 = vector.shape_cast %29 : vector<1x128x128xbf16> to vector<128x128xbf16>
    %cst_20 = arith.constant dense<0.000000e+00> : vector<256x128xf32>
    %31 = tpu.matmul %28, %30, %cst_20 {dimension_numbers = #tpu.dot_dimension_numbers<[1], [0], [0], [1], [0, 0, 1, 1], [], []>} : vector<256x128xbf16>, vector<128x128xbf16>, vector<256x128xf32> -> vector<256x128xf32>
    %32 = arith.addf %25, %31 : vector<256x128xf32>
    %33 = vector.extract_strided_slice %19 {offsets = [0, 0, 0], sizes = [16, 16, 128], strides = [1, 1, 1]} : vector<18x16x128xf32> to vector<16x16x128xf32>
    %34 = vector.shape_cast %33 : vector<16x16x128xf32> to vector<256x128xf32>
    %35 = arith.truncf %34 : vector<256x128xf32> to vector<256x128xbf16>
    %c1 = arith.constant 1 : index
    %c0_21 = arith.constant 0 : index
    %c0_22 = arith.constant 0 : index
    %36 = vector.load %arg5[%c1, %c0_21, %c0_22] : memref<9x128x128xbf16, #tpu.memory_space<vmem>>, vector<1x128x128xbf16>
    %37 = vector.shape_cast %36 : vector<1x128x128xbf16> to vector<128x128xbf16>
    %cst_23 = arith.constant dense<0.000000e+00> : vector<256x128xf32>
    %38 = tpu.matmul %35, %37, %cst_23 {dimension_numbers = #tpu.dot_dimension_numbers<[1], [0], [0], [1], [0, 0, 1, 1], [], []>} : vector<256x128xbf16>, vector<128x128xbf16>, vector<256x128xf32> -> vector<256x128xf32>
    %39 = arith.addf %32, %38 : vector<256x128xf32>
    %40 = vector.extract_strided_slice %24 {offsets = [0, 0, 0], sizes = [16, 16, 128], strides = [1, 1, 1]} : vector<18x16x128xf32> to vector<16x16x128xf32>
    %41 = vector.shape_cast %40 : vector<16x16x128xf32> to vector<256x128xf32>
    %42 = arith.truncf %41 : vector<256x128xf32> to vector<256x128xbf16>
    %c2 = arith.constant 2 : index
    %c0_24 = arith.constant 0 : index
    %c0_25 = arith.constant 0 : index
    %43 = vector.load %arg5[%c2, %c0_24, %c0_25] : memref<9x128x128xbf16, #tpu.memory_space<vmem>>, vector<1x128x128xbf16>
    %44 = vector.shape_cast %43 : vector<1x128x128xbf16> to vector<128x128xbf16>
    %cst_26 = arith.constant dense<0.000000e+00> : vector<256x128xf32>
    %45 = tpu.matmul %42, %44, %cst_26 {dimension_numbers = #tpu.dot_dimension_numbers<[1], [0], [0], [1], [0, 0, 1, 1], [], []>} : vector<256x128xbf16>, vector<128x128xbf16>, vector<256x128xf32> -> vector<256x128xf32>
    %46 = arith.addf %39, %45 : vector<256x128xf32>
    %47 = vector.extract_strided_slice %22 {offsets = [1, 0, 0], sizes = [16, 16, 128], strides = [1, 1, 1]} : vector<18x16x128xf32> to vector<16x16x128xf32>
    %48 = vector.shape_cast %47 : vector<16x16x128xf32> to vector<256x128xf32>
    %49 = arith.truncf %48 : vector<256x128xf32> to vector<256x128xbf16>
    %c3 = arith.constant 3 : index
    %c0_27 = arith.constant 0 : index
    %c0_28 = arith.constant 0 : index
    %50 = vector.load %arg5[%c3, %c0_27, %c0_28] : memref<9x128x128xbf16, #tpu.memory_space<vmem>>, vector<1x128x128xbf16>
    %51 = vector.shape_cast %50 : vector<1x128x128xbf16> to vector<128x128xbf16>
    %cst_29 = arith.constant dense<0.000000e+00> : vector<256x128xf32>
    %52 = tpu.matmul %49, %51, %cst_29 {dimension_numbers = #tpu.dot_dimension_numbers<[1], [0], [0], [1], [0, 0, 1, 1], [], []>} : vector<256x128xbf16>, vector<128x128xbf16>, vector<256x128xf32> -> vector<256x128xf32>
    %53 = arith.addf %46, %52 : vector<256x128xf32>
    %54 = vector.extract_strided_slice %19 {offsets = [1, 0, 0], sizes = [16, 16, 128], strides = [1, 1, 1]} : vector<18x16x128xf32> to vector<16x16x128xf32>
    %55 = vector.shape_cast %54 : vector<16x16x128xf32> to vector<256x128xf32>
    %56 = arith.truncf %55 : vector<256x128xf32> to vector<256x128xbf16>
    %c4 = arith.constant 4 : index
    %c0_30 = arith.constant 0 : index
    %c0_31 = arith.constant 0 : index
    %57 = vector.load %arg5[%c4, %c0_30, %c0_31] : memref<9x128x128xbf16, #tpu.memory_space<vmem>>, vector<1x128x128xbf16>
    %58 = vector.shape_cast %57 : vector<1x128x128xbf16> to vector<128x128xbf16>
    %cst_32 = arith.constant dense<0.000000e+00> : vector<256x128xf32>
    %59 = tpu.matmul %56, %58, %cst_32 {dimension_numbers = #tpu.dot_dimension_numbers<[1], [0], [0], [1], [0, 0, 1, 1], [], []>} : vector<256x128xbf16>, vector<128x128xbf16>, vector<256x128xf32> -> vector<256x128xf32>
    %60 = arith.addf %53, %59 : vector<256x128xf32>
    %61 = vector.extract_strided_slice %24 {offsets = [1, 0, 0], sizes = [16, 16, 128], strides = [1, 1, 1]} : vector<18x16x128xf32> to vector<16x16x128xf32>
    %62 = vector.shape_cast %61 : vector<16x16x128xf32> to vector<256x128xf32>
    %63 = arith.truncf %62 : vector<256x128xf32> to vector<256x128xbf16>
    %c5 = arith.constant 5 : index
    %c0_33 = arith.constant 0 : index
    %c0_34 = arith.constant 0 : index
    %64 = vector.load %arg5[%c5, %c0_33, %c0_34] : memref<9x128x128xbf16, #tpu.memory_space<vmem>>, vector<1x128x128xbf16>
    %65 = vector.shape_cast %64 : vector<1x128x128xbf16> to vector<128x128xbf16>
    %cst_35 = arith.constant dense<0.000000e+00> : vector<256x128xf32>
    %66 = tpu.matmul %63, %65, %cst_35 {dimension_numbers = #tpu.dot_dimension_numbers<[1], [0], [0], [1], [0, 0, 1, 1], [], []>} : vector<256x128xbf16>, vector<128x128xbf16>, vector<256x128xf32> -> vector<256x128xf32>
    %67 = arith.addf %60, %66 : vector<256x128xf32>
    %68 = vector.extract_strided_slice %22 {offsets = [2, 0, 0], sizes = [16, 16, 128], strides = [1, 1, 1]} : vector<18x16x128xf32> to vector<16x16x128xf32>
    %69 = vector.shape_cast %68 : vector<16x16x128xf32> to vector<256x128xf32>
    %70 = arith.truncf %69 : vector<256x128xf32> to vector<256x128xbf16>
    %c6 = arith.constant 6 : index
    %c0_36 = arith.constant 0 : index
    %c0_37 = arith.constant 0 : index
    %71 = vector.load %arg5[%c6, %c0_36, %c0_37] : memref<9x128x128xbf16, #tpu.memory_space<vmem>>, vector<1x128x128xbf16>
    %72 = vector.shape_cast %71 : vector<1x128x128xbf16> to vector<128x128xbf16>
    %cst_38 = arith.constant dense<0.000000e+00> : vector<256x128xf32>
    %73 = tpu.matmul %70, %72, %cst_38 {dimension_numbers = #tpu.dot_dimension_numbers<[1], [0], [0], [1], [0, 0, 1, 1], [], []>} : vector<256x128xbf16>, vector<128x128xbf16>, vector<256x128xf32> -> vector<256x128xf32>
    %74 = arith.addf %67, %73 : vector<256x128xf32>
    %75 = vector.extract_strided_slice %19 {offsets = [2, 0, 0], sizes = [16, 16, 128], strides = [1, 1, 1]} : vector<18x16x128xf32> to vector<16x16x128xf32>
    %76 = vector.shape_cast %75 : vector<16x16x128xf32> to vector<256x128xf32>
    %77 = arith.truncf %76 : vector<256x128xf32> to vector<256x128xbf16>
    %c7 = arith.constant 7 : index
    %c0_39 = arith.constant 0 : index
    %c0_40 = arith.constant 0 : index
    %78 = vector.load %arg5[%c7, %c0_39, %c0_40] : memref<9x128x128xbf16, #tpu.memory_space<vmem>>, vector<1x128x128xbf16>
    %79 = vector.shape_cast %78 : vector<1x128x128xbf16> to vector<128x128xbf16>
    %cst_41 = arith.constant dense<0.000000e+00> : vector<256x128xf32>
    %80 = tpu.matmul %77, %79, %cst_41 {dimension_numbers = #tpu.dot_dimension_numbers<[1], [0], [0], [1], [0, 0, 1, 1], [], []>} : vector<256x128xbf16>, vector<128x128xbf16>, vector<256x128xf32> -> vector<256x128xf32>
    %81 = arith.addf %74, %80 : vector<256x128xf32>
    %82 = vector.extract_strided_slice %24 {offsets = [2, 0, 0], sizes = [16, 16, 128], strides = [1, 1, 1]} : vector<18x16x128xf32> to vector<16x16x128xf32>
    %83 = vector.shape_cast %82 : vector<16x16x128xf32> to vector<256x128xf32>
    %84 = arith.truncf %83 : vector<256x128xf32> to vector<256x128xbf16>
    %c8 = arith.constant 8 : index
    %c0_42 = arith.constant 0 : index
    %c0_43 = arith.constant 0 : index
    %85 = vector.load %arg5[%c8, %c0_42, %c0_43] : memref<9x128x128xbf16, #tpu.memory_space<vmem>>, vector<1x128x128xbf16>
    %86 = vector.shape_cast %85 : vector<1x128x128xbf16> to vector<128x128xbf16>
    %cst_44 = arith.constant dense<0.000000e+00> : vector<256x128xf32>
    %87 = tpu.matmul %84, %86, %cst_44 {dimension_numbers = #tpu.dot_dimension_numbers<[1], [0], [0], [1], [0, 0, 1, 1], [], []>} : vector<256x128xbf16>, vector<128x128xbf16>, vector<256x128xf32> -> vector<256x128xf32>
    %88 = arith.addf %81, %87 : vector<256x128xf32>
    %89 = vector.shape_cast %88 : vector<256x128xf32> to vector<16x16x128xf32>
    %90 = arith.truncf %89 : vector<16x16x128xf32> to vector<16x16x128xbf16>
    %c0_45 = arith.constant 0 : index
    %c0_46 = arith.constant 0 : index
    %c0_47 = arith.constant 0 : index
    %c0_48 = arith.constant 0 : index
    %91 = vector.load %arg8[%c0_45, %c0_46, %c0_47, %c0_48] : memref<1x16x16x128xbf16, #tpu.memory_space<vmem>>, vector<1x16x16x128xbf16>
    %92 = vector.shape_cast %91 : vector<1x16x16x128xbf16> to vector<16x16x128xbf16>
    %93 = vector.shape_cast %90 : vector<16x16x128xbf16> to vector<1x16x16x128xbf16>
    tpu.vector_store %arg8[%c0_45, %c0_46, %c0_47, %c0_48], %93 {strides = array<i32>} : memref<1x16x16x128xbf16, #tpu.memory_space<vmem>>, vector<1x16x16x128xbf16>,
    %cst_49 = arith.constant dense<0.000000e+00> : vector<128xf32>
    %94 = vector.multi_reduction <add>, %88, %cst_49 [0] : vector<256x128xf32> to vector<128xf32>
    %95 = vector.shape_cast %94 : vector<128xf32> to vector<1x128xf32>
    %96 = arith.mulf %88, %88 : vector<256x128xf32>
    %cst_50 = arith.constant dense<0.000000e+00> : vector<128xf32>
    %97 = vector.multi_reduction <add>, %96, %cst_50 [0] : vector<256x128xf32> to vector<128xf32>
    %98 = vector.shape_cast %97 : vector<128xf32> to vector<1x128xf32>
    %99 = tpu.concatenate %95, %98 in 0 : vector<1x128xf32>, vector<1x128xf32> -> vector<2x128xf32>
    %c0_51 = arith.constant 0 : index
    %c0_52 = arith.constant 0 : index
    %c0_53 = arith.constant 0 : index
    %c0_54 = arith.constant 0 : index
    %100 = vector.load %arg9[%c0_51, %c0_52, %c0_53, %c0_54] : memref<1x1x2x128xf32, #tpu.memory_space<vmem>>, vector<1x1x2x128xf32>
    %101 = vector.shape_cast %100 : vector<1x1x2x128xf32> to vector<2x128xf32>
    %102 = vector.shape_cast %99 : vector<2x128xf32> to vector<1x1x2x128xf32>
    tpu.vector_store %arg9[%c0_51, %c0_52, %c0_53, %c0_54], %102 {strides = array<i32>} : memref<1x1x2x128xf32, #tpu.memory_space<vmem>>, vector<1x1x2x128xf32>,
    return
  }
  func.func @transform_0(%arg0: i32, %arg1: i32) -> (i32, i32, i32, i32) {
    %c0_i32 = arith.constant 0 : i32
    %c0_i32_0 = arith.constant 0 : i32
    %c0_i32_1 = arith.constant 0 : i32
    return %arg0, %arg1, %c0_i32, %c0_i32_0 : i32, i32, i32, i32
  }
  func.func @transform_1(%arg0: i32, %arg1: i32) -> (i32, i32, i32, i32) {
    %c16_i32 = arith.constant 16 : i32
    %0 = arith.muli %arg1, %c16_i32 : i32
    %c1_i32 = arith.constant 1 : i32
    %1 = arith.subi %0, %c1_i32 : i32
    %c0_i32 = arith.constant 0 : i32
    %2 = arith.maxsi %1, %c0_i32 : i32
    %c0_i32_0 = arith.constant 0 : i32
    %c0_i32_1 = arith.constant 0 : i32
    %c0_i32_2 = arith.constant 0 : i32
    return %arg0, %2, %c0_i32_0, %c0_i32_1 : i32, i32, i32, i32
  }
  func.func @transform_2(%arg0: i32, %arg1: i32) -> (i32, i32, i32, i32) {
    %c16_i32 = arith.constant 16 : i32
    %0 = arith.muli %arg1, %c16_i32 : i32
    %c16_i32_0 = arith.constant 16 : i32
    %1 = arith.addi %0, %c16_i32_0 : i32
    %c15_i32 = arith.constant 15 : i32
    %2 = arith.minsi %1, %c15_i32 : i32
    %c0_i32 = arith.constant 0 : i32
    %c0_i32_1 = arith.constant 0 : i32
    %c0_i32_2 = arith.constant 0 : i32
    return %arg0, %2, %c0_i32, %c0_i32_1 : i32, i32, i32, i32
  }
  func.func @transform_3(%arg0: i32, %arg1: i32) -> (i32, i32, i32) {
    %c0_i32 = arith.constant 0 : i32
    %c0_i32_0 = arith.constant 0 : i32
    %c0_i32_1 = arith.constant 0 : i32
    %c0_i32_2 = arith.constant 0 : i32
    return %c0_i32, %c0_i32_0, %c0_i32_1 : i32, i32, i32
  }
  func.func @transform_4(%arg0: i32, %arg1: i32) -> (i32, i32) {
    %c0_i32 = arith.constant 0 : i32
    %c0_i32_0 = arith.constant 0 : i32
    %c0_i32_1 = arith.constant 0 : i32
    return %c0_i32, %c0_i32_0 : i32, i32
  }
  func.func @transform_5(%arg0: i32, %arg1: i32) -> (i32, i32) {
    %c0_i32 = arith.constant 0 : i32
    %c0_i32_0 = arith.constant 0 : i32
    %c0_i32_1 = arith.constant 0 : i32
    return %c0_i32, %c0_i32_0 : i32, i32
  }
  func.func @transform_6(%arg0: i32, %arg1: i32) -> (i32, i32, i32, i32) {
    %c0_i32 = arith.constant 0 : i32
    %c0_i32_0 = arith.constant 0 : i32
    %c0_i32_1 = arith.constant 0 : i32
    return %arg0, %arg1, %c0_i32, %c0_i32_0 : i32, i32, i32, i32
  }
  func.func @transform_7(%arg0: i32, %arg1: i32) -> (i32, i32, i32, i32) {
    %c0_i32 = arith.constant 0 : i32
    %c0_i32_0 = arith.constant 0 : i32
    %c0_i32_1 = arith.constant 0 : i32
    return %arg0, %arg1, %c0_i32, %c0_i32_0 : i32, i32, i32, i32
  }
}

module attributes {stable_mosaic.version = 11 : i64} {
  func.func @_conv3x3_kernel(%arg0: i32, %arg1: i32, %arg2: memref<1x16x16x128xbf16, #tpu.memory_space<vmem>>, %arg3: memref<1x1x16x128xbf16, #tpu.memory_space<vmem>>, %arg4: memref<1x1x16x128xbf16, #tpu.memory_space<vmem>>, %arg5: memref<9x128x128xbf16, #tpu.memory_space<vmem>>, %arg6: memref<1x128xf32, #tpu.memory_space<vmem>>, %arg7: memref<1x128xf32, #tpu.memory_space<vmem>>, %arg8: memref<1x16x16x128xbf16, #tpu.memory_space<vmem>>, %arg9: memref<1x1x2x128xf32, #tpu.memory_space<vmem>>) attributes {dimension_semantics = [#tpu.dimension_semantics<parallel>, #tpu.dimension_semantics<parallel>], iteration_bounds = array<i64: 2, 1>, scalar_prefetch = 0 : i64, scratch_operands = 0 : i64, tpu.core_type = #tpu.core_type<tc>, window_params = [{transform_indices = @transform_0, window_bounds = array<i64: 1, 16, 16, 128>}, {transform_indices = @transform_1, window_bounds = array<i64: 1, 1, 16, 128>}, {transform_indices = @transform_2, window_bounds = array<i64: 1, 1, 16, 128>}, {pipeline_mode = #tpu.pipeline_mode<synchronous>, transform_indices = @transform_3, window_bounds = array<i64: 9, 128, 128>}, {pipeline_mode = #tpu.pipeline_mode<synchronous>, transform_indices = @transform_4, window_bounds = array<i64: 1, 128>}, {pipeline_mode = #tpu.pipeline_mode<synchronous>, transform_indices = @transform_5, window_bounds = array<i64: 1, 128>}, {transform_indices = @transform_6, window_bounds = array<i64: 1, 16, 16, 128>}, {transform_indices = @transform_7, window_bounds = array<i64: 1, 1, 2, 128>}]} {
    %c0 = arith.constant 0 : index
    %c0_0 = arith.constant 0 : index
    %c0_1 = arith.constant 0 : index
    %c0_2 = arith.constant 0 : index
    %0 = vector.load %arg2[%c0, %c0_0, %c0_1, %c0_2] : memref<1x16x16x128xbf16, #tpu.memory_space<vmem>>, vector<1x16x16x128xbf16>
    %1 = vector.shape_cast %0 : vector<1x16x16x128xbf16> to vector<16x16x128xbf16>
    %2 = arith.extf %1 : vector<16x16x128xbf16> to vector<16x16x128xf32>
    %c0_3 = arith.constant 0 : index
    %c0_4 = arith.constant 0 : index
    %c0_5 = arith.constant 0 : index
    %c0_6 = arith.constant 0 : index
    %3 = vector.load %arg3[%c0_3, %c0_4, %c0_5, %c0_6] : memref<1x1x16x128xbf16, #tpu.memory_space<vmem>>, vector<1x1x16x128xbf16>
    %4 = vector.shape_cast %3 : vector<1x1x16x128xbf16> to vector<16x128xbf16>
    %5 = arith.extf %4 : vector<16x128xbf16> to vector<16x128xf32>
    %c0_7 = arith.constant 0 : index
    %c0_8 = arith.constant 0 : index
    %c0_9 = arith.constant 0 : index
    %c0_10 = arith.constant 0 : index
    %6 = vector.load %arg4[%c0_7, %c0_8, %c0_9, %c0_10] : memref<1x1x16x128xbf16, #tpu.memory_space<vmem>>, vector<1x1x16x128xbf16>
    %7 = vector.shape_cast %6 : vector<1x1x16x128xbf16> to vector<16x128xbf16>
    %8 = arith.extf %7 : vector<16x128xbf16> to vector<16x128xf32>
    %c0_11 = arith.constant 0 : index
    %c0_12 = arith.constant 0 : index
    %9 = vector.load %arg6[%c0_11, %c0_12] : memref<1x128xf32, #tpu.memory_space<vmem>>, vector<1x128xf32>
    %c0_13 = arith.constant 0 : index
    %c0_14 = arith.constant 0 : index
    %10 = vector.load %arg7[%c0_13, %c0_14] : memref<1x128xf32, #tpu.memory_space<vmem>>, vector<1x128xf32>
    %11 = vector.shape_cast %9 : vector<1x128xf32> to vector<1x1x128xf32>
    %12 = vector.broadcast %11 : vector<1x1x128xf32> to vector<16x16x128xf32>
    %13 = arith.mulf %2, %12 : vector<16x16x128xf32>
    %14 = vector.shape_cast %10 : vector<1x128xf32> to vector<1x1x128xf32>
    %15 = vector.broadcast %14 : vector<1x1x128xf32> to vector<16x16x128xf32>
    %16 = arith.addf %13, %15 : vector<16x16x128xf32>
    %cst = arith.constant 0.000000e+00 : f32
    %17 = vector.broadcast %cst : f32 to vector<16x16x128xf32>
    %18 = arith.maximumf %16, %17 : vector<16x16x128xf32>
    %19 = vector.broadcast %9 : vector<1x128xf32> to vector<16x128xf32>
    %20 = arith.mulf %5, %19 : vector<16x128xf32>
    %21 = vector.broadcast %10 : vector<1x128xf32> to vector<16x128xf32>
    %22 = arith.addf %20, %21 : vector<16x128xf32>
    %cst_15 = arith.constant 0.000000e+00 : f32
    %23 = vector.broadcast %cst_15 : f32 to vector<16x128xf32>
    %24 = arith.maximumf %22, %23 : vector<16x128xf32>
    %25 = vector.broadcast %9 : vector<1x128xf32> to vector<16x128xf32>
    %26 = arith.mulf %8, %25 : vector<16x128xf32>
    %27 = vector.broadcast %10 : vector<1x128xf32> to vector<16x128xf32>
    %28 = arith.addf %26, %27 : vector<16x128xf32>
    %cst_16 = arith.constant 0.000000e+00 : f32
    %29 = vector.broadcast %cst_16 : f32 to vector<16x128xf32>
    %30 = arith.maximumf %28, %29 : vector<16x128xf32>
    %c0_i32 = arith.constant 0 : i32
    %31 = arith.cmpi eq, %arg1, %c0_i32 : i32
    %cst_17 = arith.constant 0.000000e+00 : f32
    %cst_18 = arith.constant 1.000000e+00 : f32
    %32 = arith.select %31, %cst_17, %cst_18 : f32
    %33 = vector.broadcast %32 : f32 to vector<16x128xf32>
    %34 = arith.mulf %24, %33 : vector<16x128xf32>
    %c0_i32_19 = arith.constant 0 : i32
    %35 = arith.cmpi eq, %arg1, %c0_i32_19 : i32
    %cst_20 = arith.constant 0.000000e+00 : f32
    %cst_21 = arith.constant 1.000000e+00 : f32
    %36 = arith.select %35, %cst_20, %cst_21 : f32
    %37 = vector.broadcast %36 : f32 to vector<16x128xf32>
    %38 = arith.mulf %30, %37 : vector<16x128xf32>
    %39 = vector.shape_cast %34 : vector<16x128xf32> to vector<1x16x128xf32>
    %40 = vector.shape_cast %38 : vector<16x128xf32> to vector<1x16x128xf32>
    %41 = tpu.concatenate %39, %18, %40 in 0 : vector<1x16x128xf32>, vector<16x16x128xf32>, vector<1x16x128xf32> -> vector<18x16x128xf32>
    %cst_22 = arith.constant 0.000000e+00 : f32
    %42 = vector.broadcast %cst_22 : f32 to vector<18x1x128xf32>
    %43 = vector.extract_strided_slice %41 {offsets = [0, 0, 0], sizes = [18, 15, 128], strides = [1, 1, 1]} : vector<18x16x128xf32> to vector<18x15x128xf32>
    %44 = tpu.concatenate %42, %43 in 1 : vector<18x1x128xf32>, vector<18x15x128xf32> -> vector<18x16x128xf32>
    %45 = vector.extract_strided_slice %41 {offsets = [0, 1, 0], sizes = [18, 15, 128], strides = [1, 1, 1]} : vector<18x16x128xf32> to vector<18x15x128xf32>
    %46 = tpu.concatenate %45, %42 in 1 : vector<18x15x128xf32>, vector<18x1x128xf32> -> vector<18x16x128xf32>
    %cst_23 = arith.constant 0.000000e+00 : f32
    %47 = vector.broadcast %cst_23 : f32 to vector<256x128xf32>
    %48 = vector.extract_strided_slice %44 {offsets = [0, 0, 0], sizes = [16, 16, 128], strides = [1, 1, 1]} : vector<18x16x128xf32> to vector<16x16x128xf32>
    %49 = vector.shape_cast %48 : vector<16x16x128xf32> to vector<256x128xf32>
    %50 = arith.truncf %49 : vector<256x128xf32> to vector<256x128xbf16>
    %c0_24 = arith.constant 0 : index
    %c0_25 = arith.constant 0 : index
    %c0_26 = arith.constant 0 : index
    %51 = vector.load %arg5[%c0_24, %c0_25, %c0_26] : memref<9x128x128xbf16, #tpu.memory_space<vmem>>, vector<1x128x128xbf16>
    %52 = vector.shape_cast %51 : vector<1x128x128xbf16> to vector<128x128xbf16>
    %cst_27 = arith.constant dense<0.000000e+00> : vector<256x128xf32>
    %53 = tpu.matmul %50, %52, %cst_27 {dimension_numbers = #tpu.dot_dimension_numbers<[1], [0], [0], [1], [0, 0, 1, 1], [], []>} : vector<256x128xbf16>, vector<128x128xbf16>, vector<256x128xf32> -> vector<256x128xf32>
    %54 = arith.addf %47, %53 : vector<256x128xf32>
    %55 = vector.extract_strided_slice %41 {offsets = [0, 0, 0], sizes = [16, 16, 128], strides = [1, 1, 1]} : vector<18x16x128xf32> to vector<16x16x128xf32>
    %56 = vector.shape_cast %55 : vector<16x16x128xf32> to vector<256x128xf32>
    %57 = arith.truncf %56 : vector<256x128xf32> to vector<256x128xbf16>
    %c1 = arith.constant 1 : index
    %c0_28 = arith.constant 0 : index
    %c0_29 = arith.constant 0 : index
    %58 = vector.load %arg5[%c1, %c0_28, %c0_29] : memref<9x128x128xbf16, #tpu.memory_space<vmem>>, vector<1x128x128xbf16>
    %59 = vector.shape_cast %58 : vector<1x128x128xbf16> to vector<128x128xbf16>
    %cst_30 = arith.constant dense<0.000000e+00> : vector<256x128xf32>
    %60 = tpu.matmul %57, %59, %cst_30 {dimension_numbers = #tpu.dot_dimension_numbers<[1], [0], [0], [1], [0, 0, 1, 1], [], []>} : vector<256x128xbf16>, vector<128x128xbf16>, vector<256x128xf32> -> vector<256x128xf32>
    %61 = arith.addf %54, %60 : vector<256x128xf32>
    %62 = vector.extract_strided_slice %46 {offsets = [0, 0, 0], sizes = [16, 16, 128], strides = [1, 1, 1]} : vector<18x16x128xf32> to vector<16x16x128xf32>
    %63 = vector.shape_cast %62 : vector<16x16x128xf32> to vector<256x128xf32>
    %64 = arith.truncf %63 : vector<256x128xf32> to vector<256x128xbf16>
    %c2 = arith.constant 2 : index
    %c0_31 = arith.constant 0 : index
    %c0_32 = arith.constant 0 : index
    %65 = vector.load %arg5[%c2, %c0_31, %c0_32] : memref<9x128x128xbf16, #tpu.memory_space<vmem>>, vector<1x128x128xbf16>
    %66 = vector.shape_cast %65 : vector<1x128x128xbf16> to vector<128x128xbf16>
    %cst_33 = arith.constant dense<0.000000e+00> : vector<256x128xf32>
    %67 = tpu.matmul %64, %66, %cst_33 {dimension_numbers = #tpu.dot_dimension_numbers<[1], [0], [0], [1], [0, 0, 1, 1], [], []>} : vector<256x128xbf16>, vector<128x128xbf16>, vector<256x128xf32> -> vector<256x128xf32>
    %68 = arith.addf %61, %67 : vector<256x128xf32>
    %69 = vector.extract_strided_slice %44 {offsets = [1, 0, 0], sizes = [16, 16, 128], strides = [1, 1, 1]} : vector<18x16x128xf32> to vector<16x16x128xf32>
    %70 = vector.shape_cast %69 : vector<16x16x128xf32> to vector<256x128xf32>
    %71 = arith.truncf %70 : vector<256x128xf32> to vector<256x128xbf16>
    %c3 = arith.constant 3 : index
    %c0_34 = arith.constant 0 : index
    %c0_35 = arith.constant 0 : index
    %72 = vector.load %arg5[%c3, %c0_34, %c0_35] : memref<9x128x128xbf16, #tpu.memory_space<vmem>>, vector<1x128x128xbf16>
    %73 = vector.shape_cast %72 : vector<1x128x128xbf16> to vector<128x128xbf16>
    %cst_36 = arith.constant dense<0.000000e+00> : vector<256x128xf32>
    %74 = tpu.matmul %71, %73, %cst_36 {dimension_numbers = #tpu.dot_dimension_numbers<[1], [0], [0], [1], [0, 0, 1, 1], [], []>} : vector<256x128xbf16>, vector<128x128xbf16>, vector<256x128xf32> -> vector<256x128xf32>
    %75 = arith.addf %68, %74 : vector<256x128xf32>
    %76 = vector.extract_strided_slice %41 {offsets = [1, 0, 0], sizes = [16, 16, 128], strides = [1, 1, 1]} : vector<18x16x128xf32> to vector<16x16x128xf32>
    %77 = vector.shape_cast %76 : vector<16x16x128xf32> to vector<256x128xf32>
    %78 = arith.truncf %77 : vector<256x128xf32> to vector<256x128xbf16>
    %c4 = arith.constant 4 : index
    %c0_37 = arith.constant 0 : index
    %c0_38 = arith.constant 0 : index
    %79 = vector.load %arg5[%c4, %c0_37, %c0_38] : memref<9x128x128xbf16, #tpu.memory_space<vmem>>, vector<1x128x128xbf16>
    %80 = vector.shape_cast %79 : vector<1x128x128xbf16> to vector<128x128xbf16>
    %cst_39 = arith.constant dense<0.000000e+00> : vector<256x128xf32>
    %81 = tpu.matmul %78, %80, %cst_39 {dimension_numbers = #tpu.dot_dimension_numbers<[1], [0], [0], [1], [0, 0, 1, 1], [], []>} : vector<256x128xbf16>, vector<128x128xbf16>, vector<256x128xf32> -> vector<256x128xf32>
    %82 = arith.addf %75, %81 : vector<256x128xf32>
    %83 = vector.extract_strided_slice %46 {offsets = [1, 0, 0], sizes = [16, 16, 128], strides = [1, 1, 1]} : vector<18x16x128xf32> to vector<16x16x128xf32>
    %84 = vector.shape_cast %83 : vector<16x16x128xf32> to vector<256x128xf32>
    %85 = arith.truncf %84 : vector<256x128xf32> to vector<256x128xbf16>
    %c5 = arith.constant 5 : index
    %c0_40 = arith.constant 0 : index
    %c0_41 = arith.constant 0 : index
    %86 = vector.load %arg5[%c5, %c0_40, %c0_41] : memref<9x128x128xbf16, #tpu.memory_space<vmem>>, vector<1x128x128xbf16>
    %87 = vector.shape_cast %86 : vector<1x128x128xbf16> to vector<128x128xbf16>
    %cst_42 = arith.constant dense<0.000000e+00> : vector<256x128xf32>
    %88 = tpu.matmul %85, %87, %cst_42 {dimension_numbers = #tpu.dot_dimension_numbers<[1], [0], [0], [1], [0, 0, 1, 1], [], []>} : vector<256x128xbf16>, vector<128x128xbf16>, vector<256x128xf32> -> vector<256x128xf32>
    %89 = arith.addf %82, %88 : vector<256x128xf32>
    %90 = vector.extract_strided_slice %44 {offsets = [2, 0, 0], sizes = [16, 16, 128], strides = [1, 1, 1]} : vector<18x16x128xf32> to vector<16x16x128xf32>
    %91 = vector.shape_cast %90 : vector<16x16x128xf32> to vector<256x128xf32>
    %92 = arith.truncf %91 : vector<256x128xf32> to vector<256x128xbf16>
    %c6 = arith.constant 6 : index
    %c0_43 = arith.constant 0 : index
    %c0_44 = arith.constant 0 : index
    %93 = vector.load %arg5[%c6, %c0_43, %c0_44] : memref<9x128x128xbf16, #tpu.memory_space<vmem>>, vector<1x128x128xbf16>
    %94 = vector.shape_cast %93 : vector<1x128x128xbf16> to vector<128x128xbf16>
    %cst_45 = arith.constant dense<0.000000e+00> : vector<256x128xf32>
    %95 = tpu.matmul %92, %94, %cst_45 {dimension_numbers = #tpu.dot_dimension_numbers<[1], [0], [0], [1], [0, 0, 1, 1], [], []>} : vector<256x128xbf16>, vector<128x128xbf16>, vector<256x128xf32> -> vector<256x128xf32>
    %96 = arith.addf %89, %95 : vector<256x128xf32>
    %97 = vector.extract_strided_slice %41 {offsets = [2, 0, 0], sizes = [16, 16, 128], strides = [1, 1, 1]} : vector<18x16x128xf32> to vector<16x16x128xf32>
    %98 = vector.shape_cast %97 : vector<16x16x128xf32> to vector<256x128xf32>
    %99 = arith.truncf %98 : vector<256x128xf32> to vector<256x128xbf16>
    %c7 = arith.constant 7 : index
    %c0_46 = arith.constant 0 : index
    %c0_47 = arith.constant 0 : index
    %100 = vector.load %arg5[%c7, %c0_46, %c0_47] : memref<9x128x128xbf16, #tpu.memory_space<vmem>>, vector<1x128x128xbf16>
    %101 = vector.shape_cast %100 : vector<1x128x128xbf16> to vector<128x128xbf16>
    %cst_48 = arith.constant dense<0.000000e+00> : vector<256x128xf32>
    %102 = tpu.matmul %99, %101, %cst_48 {dimension_numbers = #tpu.dot_dimension_numbers<[1], [0], [0], [1], [0, 0, 1, 1], [], []>} : vector<256x128xbf16>, vector<128x128xbf16>, vector<256x128xf32> -> vector<256x128xf32>
    %103 = arith.addf %96, %102 : vector<256x128xf32>
    %104 = vector.extract_strided_slice %46 {offsets = [2, 0, 0], sizes = [16, 16, 128], strides = [1, 1, 1]} : vector<18x16x128xf32> to vector<16x16x128xf32>
    %105 = vector.shape_cast %104 : vector<16x16x128xf32> to vector<256x128xf32>
    %106 = arith.truncf %105 : vector<256x128xf32> to vector<256x128xbf16>
    %c8 = arith.constant 8 : index
    %c0_49 = arith.constant 0 : index
    %c0_50 = arith.constant 0 : index
    %107 = vector.load %arg5[%c8, %c0_49, %c0_50] : memref<9x128x128xbf16, #tpu.memory_space<vmem>>, vector<1x128x128xbf16>
    %108 = vector.shape_cast %107 : vector<1x128x128xbf16> to vector<128x128xbf16>
    %cst_51 = arith.constant dense<0.000000e+00> : vector<256x128xf32>
    %109 = tpu.matmul %106, %108, %cst_51 {dimension_numbers = #tpu.dot_dimension_numbers<[1], [0], [0], [1], [0, 0, 1, 1], [], []>} : vector<256x128xbf16>, vector<128x128xbf16>, vector<256x128xf32> -> vector<256x128xf32>
    %110 = arith.addf %103, %109 : vector<256x128xf32>
    %111 = vector.shape_cast %110 : vector<256x128xf32> to vector<16x16x128xf32>
    %112 = arith.truncf %111 : vector<16x16x128xf32> to vector<16x16x128xbf16>
    %c0_52 = arith.constant 0 : index
    %c0_53 = arith.constant 0 : index
    %c0_54 = arith.constant 0 : index
    %c0_55 = arith.constant 0 : index
    %113 = vector.load %arg8[%c0_52, %c0_53, %c0_54, %c0_55] : memref<1x16x16x128xbf16, #tpu.memory_space<vmem>>, vector<1x16x16x128xbf16>
    %114 = vector.shape_cast %113 : vector<1x16x16x128xbf16> to vector<16x16x128xbf16>
    %115 = vector.shape_cast %112 : vector<16x16x128xbf16> to vector<1x16x16x128xbf16>
    tpu.vector_store %arg8[%c0_52, %c0_53, %c0_54, %c0_55], %115 {strides = array<i32>} : memref<1x16x16x128xbf16, #tpu.memory_space<vmem>>, vector<1x16x16x128xbf16>,
    %cst_56 = arith.constant dense<0.000000e+00> : vector<128xf32>
    %116 = vector.multi_reduction <add>, %110, %cst_56 [0] : vector<256x128xf32> to vector<128xf32>
    %117 = vector.shape_cast %116 : vector<128xf32> to vector<1x128xf32>
    %118 = arith.mulf %110, %110 : vector<256x128xf32>
    %cst_57 = arith.constant dense<0.000000e+00> : vector<128xf32>
    %119 = vector.multi_reduction <add>, %118, %cst_57 [0] : vector<256x128xf32> to vector<128xf32>
    %120 = vector.shape_cast %119 : vector<128xf32> to vector<1x128xf32>
    %121 = tpu.concatenate %117, %120 in 0 : vector<1x128xf32>, vector<1x128xf32> -> vector<2x128xf32>
    %c0_58 = arith.constant 0 : index
    %c0_59 = arith.constant 0 : index
    %c0_60 = arith.constant 0 : index
    %c0_61 = arith.constant 0 : index
    %122 = vector.load %arg9[%c0_58, %c0_59, %c0_60, %c0_61] : memref<1x1x2x128xf32, #tpu.memory_space<vmem>>, vector<1x1x2x128xf32>
    %123 = vector.shape_cast %122 : vector<1x1x2x128xf32> to vector<2x128xf32>
    %124 = vector.shape_cast %121 : vector<2x128xf32> to vector<1x1x2x128xf32>
    tpu.vector_store %arg9[%c0_58, %c0_59, %c0_60, %c0_61], %124 {strides = array<i32>} : memref<1x1x2x128xf32, #tpu.memory_space<vmem>>, vector<1x1x2x128xf32>,
    return
  }
  func.func @transform_0(%arg0: i32, %arg1: i32) -> (i32, i32, i32, i32) {
    %c0_i32 = arith.constant 0 : i32
    %c0_i32_0 = arith.constant 0 : i32
    %c0_i32_1 = arith.constant 0 : i32
    return %arg0, %arg1, %c0_i32, %c0_i32_0 : i32, i32, i32, i32
  }
  func.func @transform_1(%arg0: i32, %arg1: i32) -> (i32, i32, i32, i32) {
    %c16_i32 = arith.constant 16 : i32
    %0 = arith.muli %arg1, %c16_i32 : i32
    %c1_i32 = arith.constant 1 : i32
    %1 = arith.subi %0, %c1_i32 : i32
    %c0_i32 = arith.constant 0 : i32
    %2 = arith.maxsi %1, %c0_i32 : i32
    %c0_i32_0 = arith.constant 0 : i32
    %c0_i32_1 = arith.constant 0 : i32
    %c0_i32_2 = arith.constant 0 : i32
    return %arg0, %2, %c0_i32_0, %c0_i32_1 : i32, i32, i32, i32
  }
  func.func @transform_2(%arg0: i32, %arg1: i32) -> (i32, i32, i32, i32) {
    %c16_i32 = arith.constant 16 : i32
    %0 = arith.muli %arg1, %c16_i32 : i32
    %c16_i32_0 = arith.constant 16 : i32
    %1 = arith.addi %0, %c16_i32_0 : i32
    %c15_i32 = arith.constant 15 : i32
    %2 = arith.minsi %1, %c15_i32 : i32
    %c0_i32 = arith.constant 0 : i32
    %c0_i32_1 = arith.constant 0 : i32
    %c0_i32_2 = arith.constant 0 : i32
    return %arg0, %2, %c0_i32, %c0_i32_1 : i32, i32, i32, i32
  }
  func.func @transform_3(%arg0: i32, %arg1: i32) -> (i32, i32, i32) {
    %c0_i32 = arith.constant 0 : i32
    %c0_i32_0 = arith.constant 0 : i32
    %c0_i32_1 = arith.constant 0 : i32
    %c0_i32_2 = arith.constant 0 : i32
    return %c0_i32, %c0_i32_0, %c0_i32_1 : i32, i32, i32
  }
  func.func @transform_4(%arg0: i32, %arg1: i32) -> (i32, i32) {
    %c0_i32 = arith.constant 0 : i32
    %c0_i32_0 = arith.constant 0 : i32
    %c0_i32_1 = arith.constant 0 : i32
    return %c0_i32, %c0_i32_0 : i32, i32
  }
  func.func @transform_5(%arg0: i32, %arg1: i32) -> (i32, i32) {
    %c0_i32 = arith.constant 0 : i32
    %c0_i32_0 = arith.constant 0 : i32
    %c0_i32_1 = arith.constant 0 : i32
    return %c0_i32, %c0_i32_0 : i32, i32
  }
  func.func @transform_6(%arg0: i32, %arg1: i32) -> (i32, i32, i32, i32) {
    %c0_i32 = arith.constant 0 : i32
    %c0_i32_0 = arith.constant 0 : i32
    %c0_i32_1 = arith.constant 0 : i32
    return %arg0, %arg1, %c0_i32, %c0_i32_0 : i32, i32, i32, i32
  }
  func.func @transform_7(%arg0: i32, %arg1: i32) -> (i32, i32, i32, i32) {
    %c0_i32 = arith.constant 0 : i32
    %c0_i32_0 = arith.constant 0 : i32
    %c0_i32_1 = arith.constant 0 : i32
    return %arg0, %arg1, %c0_i32, %c0_i32_0 : i32, i32, i32, i32
  }
}

</mosaic_0001>

<llo_original>
// kernel: up_forward.3
$region0: #{up_forward.3}
  #allocation0 [shape = 'u32[]', space=smem, size = 0x4, offset = 0x4, fixed_abs, tag = 'smem constant byte address 0x4 - core index']
  #allocation1 [shape = 'u32[144,128]{1,0:T(1,128)}', space=vmem, size = 0x12000, scoped, tag = 'internal scratch']
  %s0 = inlined_call_operand.vmem [shape: bf16[2,8,8,128], index: 0, kind: input, shape index: {}]
  %s1 = inlined_call_operand.vmem [shape: bf16[128,128], index: 1, kind: input, shape index: {}]
  %s2 = inlined_call_operand.vmem [shape: f32[1,128], index: 2, kind: input, shape index: {}]
  %s3 = inlined_call_operand.vmem [shape: bf16[2,8,8,128], index: 3, kind: output, shape index: {}]
  %s4 = sld [smem:[#allocation0]]
  $region45: #{up_forward.3} parent=0
    _
  %s6 = ssub.s32 1, %s4
  %s7 = scalar_select 0, %s6, %s4
  loop: start=0, step=1, limit=4
  $region2: #{up_forward.3} parent=0 // loop_pre_header
    _
  $region3: #{up_forward.3} parent=0 // loop_header
    %s9 = sphi 0, %s13
    %p10 = scmp.ge.s32.totalorder %s9, 4
    %s16 = sphi 0, %s28
    %s17 = sphi 0, %s24
    %s18 = sphi 0, %s16
    %s19 = sphi 0, %s17
    %s20 = sphi 0, %s18
    %s21 = sphi 0, %s19
    %s33 = sphi 0, %s35
    %s36 = sphi 0, %s33
    %s37 = sphi 0, %s36
    %s53 = sphi 0, %s37
    %s57 = sphi 0, %s57
    %s59 = sphi 0, %s57
    %s60 = sphi 0, %s59
    %s74 = sphi 0, %s60
    %s78 = sphi 0, %s78
    %s80 = sphi 0, %s78
    %s81 = sphi 0, %s80
    %s95 = sphi 0, %s81
    %s103 = sphi 0, %s105
    %s106 = sphi 0, %s103
    %s107 = sphi 0, %s106
    %s123 = sphi 0, %s107
  $region4: #{up_forward.3} parent=0 // loop_header_branch
    %12 = sbr.rel (%p10) target = $region8
  $region5: #{up_forward.3} parent=0 // loop_body
    %s14 = ssub.s32 %s9, 1
    %s15 = ssub.s32 %s9, 2
    %s22 = sadd.s32 1, %s17
    %p23 = scmp.ge.s32.totalorder %s22, 1
    %s24 = scalar_select %p23, 0, %s22
    %s25 = sadd.s32 1, %s16
    %s26 = scalar_select %p23, %s25, %s16
    %p27 = scmp.ge.s32.totalorder %s26, 2
    %s28 = scalar_select %p27, 0, %s26
    %s29 = ssub.s32 %s16, %s28
    %s30 = ssub.s32 %s17, %s24
    %s31 = sor.u32 %s29, %s30
    %p32 = scmp.eq.s32.totalorder %s31, 0
    %s34 = sadd.s32 %s33, 1
    %s35 = scalar_select %p32, %s33, %s34
    %p38 = pneg %p32
    %p39 = scmp.eq.s32.totalorder %s9, 1
    %p40 = por %p38, %p39
    %p41 = scmp.ne.s32.totalorder %s33, %s36
    %p42 = scmp.eq.s32.totalorder %s9, 0
    %p43 = por %p41, %p42
    %p44 = scmp.ne.s32.totalorder %s33, %s36
    %p45 = scmp.eq.s32.totalorder %s14, 1
    %p46 = por %p44, %p45
    %p47 = scmp.ne.s32.totalorder %s36, %s37
    %p48 = scmp.eq.s32.totalorder %s14, 0
    %p49 = por %p47, %p48
    %p50 = scmp.ne.s32.totalorder %s36, %s37
    %p51 = scmp.eq.s32.totalorder %s15, 1
    %p52 = por %p50, %p51
    %p54 = scmp.ne.s32.totalorder %s37, %s53
    %p55 = scmp.eq.s32.totalorder %s15, 0
    %p56 = por %p54, %p55
    %s58 = sadd.s32 %s57, 1
    %p61 = scmp.eq.s32.totalorder %s9, 1
    %p62 = scmp.ne.s32.totalorder %s57, %s59
    %p63 = scmp.eq.s32.totalorder %s9, 0
    %p64 = por %p62, %p63
    %p65 = scmp.ne.s32.totalorder %s57, %s59
    %p66 = scmp.eq.s32.totalorder %s14, 1
    %p67 = por %p65, %p66
    %p68 = scmp.ne.s32.totalorder %s59, %s60
    %p69 = scmp.eq.s32.totalorder %s14, 0
    %p70 = por %p68, %p69
    %p71 = scmp.ne.s32.totalorder %s59, %s60
    %p72 = scmp.eq.s32.totalorder %s15, 1
    %p73 = por %p71, %p72
    %p75 = scmp.ne.s32.totalorder %s60, %s74
    %p76 = scmp.eq.s32.totalorder %s15, 0
    %p77 = por %p75, %p76
    %s79 = sadd.s32 %s78, 1
    %p82 = scmp.eq.s32.totalorder %s9, 1
    %p83 = scmp.ne.s32.totalorder %s78, %s80
    %p84 = scmp.eq.s32.totalorder %s9, 0
    %p85 = por %p83, %p84
    %p86 = scmp.ne.s32.totalorder %s78, %s80
    %p87 = scmp.eq.s32.totalorder %s14, 1
    %p88 = por %p86, %p87
    %p89 = scmp.ne.s32.totalorder %s80, %s81
    %p90 = scmp.eq.s32.totalorder %s14, 0
    %p91 = por %p89, %p90
    %p92 = scmp.ne.s32.totalorder %s80, %s81
    %p93 = scmp.eq.s32.totalorder %s15, 1
    %p94 = por %p92, %p93
    %p96 = scmp.ne.s32.totalorder %s81, %s95
    %p97 = scmp.eq.s32.totalorder %s15, 0
    %p98 = por %p96, %p97
    %s99 = ssub.s32 %s16, %s28
    %s100 = ssub.s32 %s17, %s24
    %s101 = sor.u32 %s99, %s100
    %p102 = scmp.eq.s32.totalorder %s101, 0
    %s104 = sadd.s32 %s103, 1
    %s105 = scalar_select %p102, %s103, %s104
    %p108 = pneg %p102
    %p109 = scmp.eq.s32.totalorder %s9, 1
    %p110 = por %p108, %p109
    %p111 = scmp.ne.s32.totalorder %s103, %s106
    %p112 = scmp.eq.s32.totalorder %s9, 0
    %p113 = por %p111, %p112
    %p114 = scmp.ne.s32.totalorder %s103, %s106
    %p115 = scmp.eq.s32.totalorder %s14, 1
    %p116 = por %p114, %p115
    %p117 = scmp.ne.s32.totalorder %s106, %s107
    %p118 = scmp.eq.s32.totalorder %s14, 0
    %p119 = por %p117, %p118
    %p120 = scmp.ne.s32.totalorder %s106, %s107
    %p121 = scmp.eq.s32.totalorder %s15, 1
    %p122 = por %p120, %p121
    %p124 = scmp.ne.s32.totalorder %s107, %s123
    %p125 = scmp.eq.s32.totalorder %s15, 0
    %p126 = por %p124, %p125
    %p127 = scmp.le.s32.totalorder 1, %s9
    %p128 = scmp.lt.s32.totalorder %s9, 3
    %p129 = pnand %p127, %p128
    %p130 = pneg %p129
    // Predicated region
    $region9: #{up_forward.3} parent=5 // pred_check
      _
    $region10: #{up_forward.3} parent=5 // pred_check_branch
      %132 = sbr.rel (%p129) target = $region12
    $region11: #{up_forward.3} parent=5 // pred_region
      %s133 = ssub.s32 %s9, 1
      // Predicated region
      $region13: #{up_forward.3} parent=11 // pred_check
        %p134 = pneg %p70
      $region14: #{up_forward.3} parent=11 // pred_check_branch
        %136 = sbr.rel (%p134) target = $region16
      $region15: #{up_forward.3} parent=11 // pred_region
        _
      $region16: #{up_forward.3} parent=11 // pred_fallthru
        _
      // Predicated region
      $region17: #{up_forward.3} parent=11 // pred_check
        %p137 = pneg %p91
      $region18: #{up_forward.3} parent=11 // pred_check_branch
        %139 = sbr.rel (%p137) target = $region20
      $region19: #{up_forward.3} parent=11 // pred_region
        _
      $region20: #{up_forward.3} parent=11 // pred_fallthru
        _
    $region12: #{up_forward.3} parent=5 // pred_fallthru
      _
    %p140 = scmp.lt.s32.totalorder %s9, 2
    // Predicated region
    $region21: #{up_forward.3} parent=5 // pred_check
      %p141 = pneg %p140
    $region22: #{up_forward.3} parent=5 // pred_check_branch
      %143 = sbr.rel (%p141) target = $region24
    $region23: #{up_forward.3} parent=5 // pred_region
      // Predicated region
      $region25: #{up_forward.3} parent=23 // pred_check
        %p144 = pneg %p43
      $region26: #{up_forward.3} parent=23 // pred_check_branch
        %146 = sbr.rel (%p144) target = $region28
      $region27: #{up_forward.3} parent=23 // pred_region
        %s147 = smul.u32 8, %s17
        %p148 = scmp.lt.s32.totalorder %s16, 1
        %s149 = scalar_select %p148, %s16, 1
        %p150 = scmp.lt.s32.totalorder %s147, 7
        %s151 = scalar_select %p150, %s147, 7
        %s152 = smul.addr %s149, 8
        %s153 = sadd.s32 %s151, %s152
        %s154 = smul.addr %s153, 4
        %s155 = scalar_lea.vmem %s0, %s154
        %s156 = smul.u32 8, %s17
      $region28: #{up_forward.3} parent=23 // pred_fallthru
        _
    $region24: #{up_forward.3} parent=5 // pred_fallthru
      _
    %p157 = scmp.le.s32.totalorder 1, %s9
    %p158 = scmp.lt.s32.totalorder %s9, 3
    %p159 = pnand %p157, %p158
    %p160 = pneg %p159
    // Predicated region
    $region29: #{up_forward.3} parent=5 // pred_check
      _
    $region30: #{up_forward.3} parent=5 // pred_check_branch
      %162 = sbr.rel (%p159) target = $region32
    $region31: #{up_forward.3} parent=5 // pred_region
      %s163 = ssub.s32 %s9, 1
      %s164 = smul.u32 8, %s19
      %p165 = scmp.lt.s32.totalorder %s18, 1
      %s166 = scalar_select %p165, %s18, 1
      %p167 = scmp.lt.s32.totalorder %s164, 7
      %s168 = scalar_select %p167, %s164, 7
      %s169 = smul.addr %s166, 8
      %s170 = sadd.s32 %s168, %s169
      %s171 = smul.addr %s170, 4
      %s172 = scalar_lea.vmem %s0, %s171
      %p173 = pneg %p49
      %p174 = pneg %p46
      %p175 = pneg %p70
      %p176 = pneg %p67
      %p177 = pneg %p91
      %p178 = pneg %p88
      %p179 = pneg %p119
      %p180 = pneg %p116
      %s181 = smul.u32 8, %s19
      %p182 = scmp.lt.s32.totalorder %s18, 1
      %s183 = scalar_select %p182, %s18, 1
      %p184 = scmp.lt.s32.totalorder %s181, 7
      %s185 = scalar_select %p184, %s181, 7
      %s186 = smul.addr %s183, 8
      %s187 = sadd.s32 %s185, %s186
      %s188 = smul.addr %s187, 4
      %s189 = scalar_lea.vmem %s3, %s188
      %s190 = smul.u32 8, %s19
      %p191 = scmp.lt.s32.totalorder %s18, 1
      %s192 = scalar_select %p191, %s18, 1
      %p193 = scmp.lt.s32.totalorder %s190, 7
      %s194 = scalar_select %p193, %s190, 7
      %s195 = smul.addr %s192, 8
      %s196 = sadd.s32 %s194, %s195
      %s197 = smul.addr %s196, 4
      %s198 = scalar_lea.vmem %s0, %s197
      %s199 = smul.u32 8, %s19
      %s200 = smul.u32 8, %s19
      %p201 = scmp.lt.s32.totalorder %s18, 1
      %s202 = scalar_select %p201, %s18, 1
      %p203 = scmp.lt.s32.totalorder %s200, 7
      %s204 = scalar_select %p203, %s200, 7
      %s205 = smul.addr %s202, 8
      %s206 = sadd.s32 %s204, %s205
      %s207 = smul.addr %s206, 4
      %s208 = scalar_lea.vmem %s3, %s207
      %s209 = smul.u32 8, %s19
      %v211 = vld [vmem:[%s198] sm:$0xf]
      %v212 = vld [vmem:[%s198 + $0x4] sm:$0xf]
      %v213 = vld [vmem:[%s198 + $0x8] sm:$0xf]
      %v214 = vld [vmem:[%s198 + $0xc] sm:$0xf]
      %v215 = vld [vmem:[%s198 + $0x10] sm:$0xf]
      %v216 = vld [vmem:[%s198 + $0x14] sm:$0xf]
      %v217 = vld [vmem:[%s198 + $0x18] sm:$0xf]
      %v218 = vld [vmem:[%s198 + $0x1c] sm:$0xf]
      %v219 = vld [vmem:[%s1] sm:$0xf]
      %v220 = vld [vmem:[%s1 + $0x4] sm:$0xf]
      %v221 = vld [vmem:[%s1 + $0x8] sm:$0xf]
      %v222 = vld [vmem:[%s1 + $0xc] sm:$0xf]
      %v223 = vld [vmem:[%s1 + $0x10] sm:$0xf]
      %v224 = vld [vmem:[%s1 + $0x14] sm:$0xf]
      %v225 = vld [vmem:[%s1 + $0x18] sm:$0xf]
      %v226 = vld [vmem:[%s1 + $0x1c] sm:$0xf]
      %v227 = vld [vmem:[%s1 + $0x20] sm:$0xf]
      %v228 = vld [vmem:[%s1 + $0x24] sm:$0xf]
      %v229 = vld [vmem:[%s1 + $0x28] sm:$0xf]
      %v230 = vld [vmem:[%s1 + $0x2c] sm:$0xf]
      %v231 = vld [vmem:[%s1 + $0x30] sm:$0xf]
      %v232 = vld [vmem:[%s1 + $0x34] sm:$0xf]
      %v233 = vld [vmem:[%s1 + $0x38] sm:$0xf]
      %v234 = vld [vmem:[%s1 + $0x3c] sm:$0xf]
      %v235 = vld [vmem:[%s2] sm:$0x1]
      %v237 = vlaneseq
      %v238 = vshrl.u32 %v237, 7
      %v239 = vsub.s32 0, %v238
      %v240 = vrot.slane %v235, %v239
      %v250 = vunpack.c.l.b16 %v211
      %v251 = vunpack.c.l.b16 %v212
      %v252 = vunpack.c.l.b16 %v213
      %v253 = vunpack.c.l.b16 %v214
      %v254 = vunpack.c.l.b16 %v215
      %v255 = vunpack.c.l.b16 %v216
      %v256 = vunpack.c.l.b16 %v217
      %v257 = vunpack.c.l.b16 %v218
      %v258 = vpack.c.b16 %v251, %v250
      %v259 = vpack.c.b16 %v253, %v252
      %v260 = vpack.c.b16 %v255, %v254
      %v261 = vpack.c.b16 %v257, %v256
      %v282 = vunpack.c.l.b16 %v219
      %v283 = vunpack.c.l.b16 %v220
      %v284 = vunpack.c.l.b16 %v221
      %v285 = vunpack.c.l.b16 %v222
      %v286 = vunpack.c.l.b16 %v223
      %v287 = vunpack.c.l.b16 %v224
      %v288 = vunpack.c.l.b16 %v225
      %v289 = vunpack.c.l.b16 %v226
      %v290 = vunpack.c.l.b16 %v227
      %v291 = vunpack.c.l.b16 %v228
      %v292 = vunpack.c.l.b16 %v229
      %v293 = vunpack.c.l.b16 %v230
      %v294 = vunpack.c.l.b16 %v231
      %v295 = vunpack.c.l.b16 %v232
      %v296 = vunpack.c.l.b16 %v233
      %v297 = vunpack.c.l.b16 %v234
      %v298 = vpack.c.b16 %v283, %v282
      %v299 = vpack.c.b16 %v285, %v284
      %v300 = vpack.c.b16 %v287, %v286
      %v301 = vpack.c.b16 %v289, %v288
      %v302 = vpack.c.b16 %v291, %v290
      %v303 = vpack.c.b16 %v293, %v292
      %v304 = vpack.c.b16 %v295, %v294
      %v305 = vpack.c.b16 %v297, %v296
      %314 = vmatprep.subr.bf16.mxu0 0
      %315 = vmatpush1.bf16.msra.mxu0 %v298
      %316 = vmatprep.subr.bf16.mxu0 0
      %317 = vmatpush1.bf16.msra.mxu0 %v299
      %318 = vmatprep.subr.bf16.mxu0 0
      %319 = vmatpush1.bf16.msra.mxu0 %v300
      %320 = vmatprep.subr.bf16.mxu0 0
      %321 = vmatpush1.bf16.msra.mxu0 %v301
      %322 = vmatprep.subr.bf16.mxu0 0
      %323 = vmatpush1.bf16.msra.mxu0 %v302
      %324 = vmatprep.subr.bf16.mxu0 0
      %325 = vmatpush1.bf16.msra.mxu0 %v303
      %326 = vmatprep.subr.bf16.mxu0 0
      %327 = vmatpush1.bf16.msra.mxu0 %v304
      %328 = vmatprep.subr.bf16.mxu0 0
      %329 = vmatpush1.bf16.msra.mxu0 %v305
      %330 = vmatprep.subr.bf16.mxu0 0
      %331 = vmatpush1.bf16.msra.mxu0 0
      %332 = vmatprep.subr.bf16.mxu0 0
      %333 = vmatpush1.bf16.msra.mxu0 0
      %334 = vmatprep.subr.bf16.mxu0 0
      %335 = vmatpush1.bf16.msra.mxu0 0
      %336 = vmatprep.subr.bf16.mxu0 0
      %337 = vmatpush1.bf16.msra.mxu0 0
      %338 = vmatprep.subr.bf16.mxu0 0
      %339 = vmatpush1.bf16.msra.mxu0 0
      %340 = vmatprep.subr.bf16.mxu0 0
      %341 = vmatpush1.bf16.msra.mxu0 0
      %342 = vmatprep.subr.bf16.mxu0 0
      %343 = vmatpush1.bf16.msra.mxu0 0
      %344 = vmatprep.subr.bf16.mxu0 0
      %345 = vmatpush1.bf16.msra.mxu0 0
      %346 = vmatprep.mubr.bf16.mxu0 0
      %347 = vmatmul.mubr.bf16.gmra.mrb[0].mxu0 %v258
      %v348 = vpop.f32.mrb[0].mxu0
      %v349 = vadd.f32 %v240, %v348
      %v350 = vpop.f32.mrb[0].mxu0
      %v351 = vpop.f32.mrb[0].mxu0
      %v352 = vadd.f32 %v240, %v351
      %v353 = vpop.f32.mrb[0].mxu0
      %354 = vmatprep.mubr.bf16.mxu0 0
      %355 = vmatmul.mubr.bf16.gmra.mrb[0].mxu0 %v259
      %v356 = vpop.f32.mrb[0].mxu0
      %v357 = vadd.f32 %v240, %v356
      %v358 = vpop.f32.mrb[0].mxu0
      %v359 = vpop.f32.mrb[0].mxu0
      %v360 = vadd.f32 %v240, %v359
      %v361 = vpop.f32.mrb[0].mxu0
      %362 = vmatprep.mubr.bf16.mxu0 0
      %363 = vmatmul.mubr.bf16.gmra.mrb[0].mxu0 %v260
      %v364 = vpop.f32.mrb[0].mxu0
      %v365 = vadd.f32 %v240, %v364
      %v366 = vpop.f32.mrb[0].mxu0
      %v367 = vpop.f32.mrb[0].mxu0
      %v368 = vadd.f32 %v240, %v367
      %v369 = vpop.f32.mrb[0].mxu0
      %370 = vmatprep.mubr.bf16.mxu0 0
      %371 = vmatmul.mubr.bf16.gmra.mrb[0].mxu0 %v261
      %v372 = vpop.f32.mrb[0].mxu0
      %v373 = vadd.f32 %v240, %v372
      %v374 = vpop.f32.mrb[0].mxu0
      %v375 = vpop.f32.mrb[0].mxu0
      %v376 = vadd.f32 %v240, %v375
      %v377 = vpop.f32.mrb[0].mxu0
      %378 = vdwg.mxu0
      %v379 = vpack.c.bf16 %v349, %v349
      %v380 = vpack.c.bf16 %v352, %v352
      %v381 = vpack.c.bf16 %v357, %v357
      %v382 = vpack.c.bf16 %v360, %v360
      %v383 = vpack.c.bf16 %v365, %v365
      %v384 = vpack.c.bf16 %v368, %v368
      %v385 = vpack.c.bf16 %v373, %v373
      %v386 = vpack.c.bf16 %v376, %v376
      %387 = vst [vmem:[%s208] sm:$0xf] %v379
      %388 = vst [vmem:[%s208 + $0x4] sm:$0xf] %v380
      %389 = vst [vmem:[%s208 + $0x8] sm:$0xf] %v381
      %390 = vst [vmem:[%s208 + $0xc] sm:$0xf] %v382
      %391 = vst [vmem:[%s208 + $0x10] sm:$0xf] %v383
      %392 = vst [vmem:[%s208 + $0x14] sm:$0xf] %v384
      %393 = vst [vmem:[%s208 + $0x18] sm:$0xf] %v385
      %394 = vst [vmem:[%s208 + $0x1c] sm:$0xf] %v386
      %s395 = smul.u32 8, %s19
      %p396 = scmp.lt.s32.totalorder %s18, 1
      %s397 = scalar_select %p396, %s18, 1
      %p398 = scmp.lt.s32.totalorder %s395, 7
      %s399 = scalar_select %p398, %s395, 7
      %s400 = smul.addr %s397, 8
      %s401 = sadd.s32 %s399, %s400
      %s402 = smul.addr %s401, 4
      %s403 = scalar_lea.vmem %s3, %s402
      // Predicated region
      $region33: #{up_forward.3} parent=31 // pred_check
        %p404 = pneg %p116
      $region34: #{up_forward.3} parent=31 // pred_check_branch
        %406 = sbr.rel (%p404) target = $region36
      $region35: #{up_forward.3} parent=31 // pred_region
        %s407 = smul.u32 8, %s19
      $region36: #{up_forward.3} parent=31 // pred_fallthru
        _
    $region32: #{up_forward.3} parent=5 // pred_fallthru
      _
    %p408 = scmp.le.s32.totalorder 2, %s9
    // Predicated region
    $region37: #{up_forward.3} parent=5 // pred_check
      %p409 = pneg %p408
    $region38: #{up_forward.3} parent=5 // pred_check_branch
      %411 = sbr.rel (%p409) target = $region40
    $region39: #{up_forward.3} parent=5 // pred_region
      %s412 = ssub.s32 %s9, 2
      // Predicated region
      $region41: #{up_forward.3} parent=39 // pred_check
        %p413 = pneg %p122
      $region42: #{up_forward.3} parent=39 // pred_check_branch
        %415 = sbr.rel (%p413) target = $region44
      $region43: #{up_forward.3} parent=39 // pred_region
        %s416 = smul.u32 8, %s21
        %p417 = scmp.lt.s32.totalorder %s20, 1
        %s418 = scalar_select %p417, %s20, 1
        %p419 = scmp.lt.s32.totalorder %s416, 7
        %s420 = scalar_select %p419, %s416, 7
        %s421 = smul.addr %s418, 8
        %s422 = sadd.s32 %s420, %s421
        %s423 = smul.addr %s422, 4
        %s424 = scalar_lea.vmem %s3, %s423
      $region44: #{up_forward.3} parent=39 // pred_fallthru
        _
    $region40: #{up_forward.3} parent=5 // pred_fallthru
      _
  $region6: #{up_forward.3} parent=0 // loop_footer
    %s13 = sadd.s32 1, %s9
  $region7: #{up_forward.3} parent=0 // loop_footer_branch
    %8 = sbr.rel target = $region3
  $region8: #{up_forward.3} parent=0 // loop_exit
    _

// kernel: up_forward.4
$region0: #{up_forward.4}
  #allocation0 [shape = 'u32[]', space=smem, size = 0x4, offset = 0x4, fixed_abs, tag = 'smem constant byte address 0x4 - core index']
  #allocation1 [shape = 'u32[144,128]{1,0:T(1,128)}', space=vmem, size = 0x12000, scoped, tag = 'internal scratch']
  %s0 = inlined_call_operand.vmem [shape: bf16[2,16,16,128], index: 0, kind: input, shape index: {}, may-alias: {0,1,2}]
  %s1 = inlined_call_operand.vmem [shape: bf16[2,16,16,128], index: 1, kind: input, shape index: {}, may-alias: {0,1,2}]
  %s2 = inlined_call_operand.vmem [shape: bf16[2,16,16,128], index: 2, kind: input, shape index: {}, may-alias: {0,1,2}]
  %s3 = inlined_call_operand.vmem [shape: bf16[9,128,128], index: 3, kind: input, shape index: {}]
  %s4 = inlined_call_operand.vmem [shape: f32[1,128], index: 4, kind: input, shape index: {}]
  %s5 = inlined_call_operand.vmem [shape: f32[1,128], index: 5, kind: input, shape index: {}]
  %s6 = inlined_call_operand.vmem [shape: bf16[2,16,16,128], index: 6, kind: output, shape index: {0}]
  %s7 = inlined_call_operand.vmem [shape: f32[2,1,2,128], index: 7, kind: output, shape index: {1}]
  %8 = xla_tuple %s6, %s7
  %s9 = sld [smem:[#allocation0]]
  $region65: #{up_forward.4} parent=0
    _
  %s11 = ssub.s32 1, %s9
  %s12 = scalar_select 0, %s11, %s9
  loop: start=0, step=1, limit=4
  $region2: #{up_forward.4} parent=0 // loop_pre_header
    _
  $region3: #{up_forward.4} parent=0 // loop_header
    %s14 = sphi 0, %s18
    %p15 = scmp.ge.s32.totalorder %s14, 4
    %s21 = sphi 0, %s33
    %s22 = sphi 0, %s29
    %s23 = sphi 0, %s21
    %s24 = sphi 0, %s22
    %s25 = sphi 0, %s23
    %s26 = sphi 0, %s24
    %s38 = sphi 0, %s40
    %s41 = sphi 0, %s38
    %s42 = sphi 0, %s41
    %s58 = sphi 0, %s42
    %s74 = sphi 0, %s76
    %s77 = sphi 0, %s74
    %s78 = sphi 0, %s77
    %s94 = sphi 0, %s78
    %s110 = sphi 0, %s112
    %s113 = sphi 0, %s110
    %s114 = sphi 0, %s113
    %s130 = sphi 0, %s114
    %s134 = sphi 0, %s134
    %s136 = sphi 0, %s134
    %s137 = sphi 0, %s136
    %s151 = sphi 0, %s137
    %s155 = sphi 0, %s155
    %s157 = sphi 0, %s155
    %s158 = sphi 0, %s157
    %s172 = sphi 0, %s158
    %s176 = sphi 0, %s176
    %s178 = sphi 0, %s176
    %s179 = sphi 0, %s178
    %s193 = sphi 0, %s179
    %s201 = sphi 0, %s203
    %s204 = sphi 0, %s201
    %s205 = sphi 0, %s204
    %s221 = sphi 0, %s205
    %s229 = sphi 0, %s231
    %s232 = sphi 0, %s229
    %s233 = sphi 0, %s232
    %s249 = sphi 0, %s233
  $region4: #{up_forward.4} parent=0 // loop_header_branch
    %17 = sbr.rel (%p15) target = $region8
  $region5: #{up_forward.4} parent=0 // loop_body
    %s19 = ssub.s32 %s14, 1
    %s20 = ssub.s32 %s14, 2
    %s27 = sadd.s32 1, %s22
    %p28 = scmp.ge.s32.totalorder %s27, 1
    %s29 = scalar_select %p28, 0, %s27
    %s30 = sadd.s32 1, %s21
    %s31 = scalar_select %p28, %s30, %s21
    %p32 = scmp.ge.s32.totalorder %s31, 2
    %s33 = scalar_select %p32, 0, %s31
    %s34 = ssub.s32 %s21, %s33
    %s35 = ssub.s32 %s22, %s29
    %s36 = sor.u32 %s34, %s35
    %p37 = scmp.eq.s32.totalorder %s36, 0
    %s39 = sadd.s32 %s38, 1
    %s40 = scalar_select %p37, %s38, %s39
    %p43 = pneg %p37
    %p44 = scmp.eq.s32.totalorder %s14, 1
    %p45 = por %p43, %p44
    %p46 = scmp.ne.s32.totalorder %s38, %s41
    %p47 = scmp.eq.s32.totalorder %s14, 0
    %p48 = por %p46, %p47
    %p49 = scmp.ne.s32.totalorder %s38, %s41
    %p50 = scmp.eq.s32.totalorder %s19, 1
    %p51 = por %p49, %p50
    %p52 = scmp.ne.s32.totalorder %s41, %s42
    %p53 = scmp.eq.s32.totalorder %s19, 0
    %p54 = por %p52, %p53
    %p55 = scmp.ne.s32.totalorder %s41, %s42
    %p56 = scmp.eq.s32.totalorder %s20, 1
    %p57 = por %p55, %p56
    %p59 = scmp.ne.s32.totalorder %s42, %s58
    %p60 = scmp.eq.s32.totalorder %s20, 0
    %p61 = por %p59, %p60
    %s62 = smul.u32 %s22, 16
    %s63 = ssub.s32 %s62, 1
    %p64 = scmp.gt.s32.totalorder %s63, 0
    %s65 = scalar_select %p64, %s63, 0
    %s66 = smul.u32 %s29, 16
    %s67 = ssub.s32 %s66, 1
    %p68 = scmp.gt.s32.totalorder %s67, 0
    %s69 = scalar_select %p68, %s67, 0
    %s70 = ssub.s32 %s21, %s33
    %s71 = ssub.s32 %s65, %s69
    %s72 = sor.u32 %s70, %s71
    %p73 = scmp.eq.s32.totalorder %s72, 0
    %s75 = sadd.s32 %s74, 1
    %s76 = scalar_select %p73, %s74, %s75
    %p79 = pneg %p73
    %p80 = scmp.eq.s32.totalorder %s14, 1
    %p81 = por %p79, %p80
    %p82 = scmp.ne.s32.totalorder %s74, %s77
    %p83 = scmp.eq.s32.totalorder %s14, 0
    %p84 = por %p82, %p83
    %p85 = scmp.ne.s32.totalorder %s74, %s77
    %p86 = scmp.eq.s32.totalorder %s19, 1
    %p87 = por %p85, %p86
    %p88 = scmp.ne.s32.totalorder %s77, %s78
    %p89 = scmp.eq.s32.totalorder %s19, 0
    %p90 = por %p88, %p89
    %p91 = scmp.ne.s32.totalorder %s77, %s78
    %p92 = scmp.eq.s32.totalorder %s20, 1
    %p93 = por %p91, %p92
    %p95 = scmp.ne.s32.totalorder %s78, %s94
    %p96 = scmp.eq.s32.totalorder %s20, 0
    %p97 = por %p95, %p96
    %s98 = smul.u32 %s22, 16
    %s99 = sadd.s32 %s98, 16
    %p100 = scmp.lt.s32.totalorder %s99, 15
    %s101 = scalar_select %p100, %s99, 15
    %s102 = smul.u32 %s29, 16
    %s103 = sadd.s32 %s102, 16
    %p104 = scmp.lt.s32.totalorder %s103, 15
    %s105 = scalar_select %p104, %s103, 15
    %s106 = ssub.s32 %s21, %s33
    %s107 = ssub.s32 %s101, %s105
    %s108 = sor.u32 %s106, %s107
    %p109 = scmp.eq.s32.totalorder %s108, 0
    %s111 = sadd.s32 %s110, 1
    %s112 = scalar_select %p109, %s110, %s111
    %p115 = pneg %p109
    %p116 = scmp.eq.s32.totalorder %s14, 1
    %p117 = por %p115, %p116
    %p118 = scmp.ne.s32.totalorder %s110, %s113
    %p119 = scmp.eq.s32.totalorder %s14, 0
    %p120 = por %p118, %p119
    %p121 = scmp.ne.s32.totalorder %s110, %s113
    %p122 = scmp.eq.s32.totalorder %s19, 1
    %p123 = por %p121, %p122
    %p124 = scmp.ne.s32.totalorder %s113, %s114
    %p125 = scmp.eq.s32.totalorder %s19, 0
    %p126 = por %p124, %p125
    %p127 = scmp.ne.s32.totalorder %s113, %s114
    %p128 = scmp.eq.s32.totalorder %s20, 1
    %p129 = por %p127, %p128
    %p131 = scmp.ne.s32.totalorder %s114, %s130
    %p132 = scmp.eq.s32.totalorder %s20, 0
    %p133 = por %p131, %p132
    %s135 = sadd.s32 %s134, 1
    %p138 = scmp.eq.s32.totalorder %s14, 1
    %p139 = scmp.ne.s32.totalorder %s134, %s136
    %p140 = scmp.eq.s32.totalorder %s14, 0
    %p141 = por %p139, %p140
    %p142 = scmp.ne.s32.totalorder %s134, %s136
    %p143 = scmp.eq.s32.totalorder %s19, 1
    %p144 = por %p142, %p143
    %p145 = scmp.ne.s32.totalorder %s136, %s137
    %p146 = scmp.eq.s32.totalorder %s19, 0
    %p147 = por %p145, %p146
    %p148 = scmp.ne.s32.totalorder %s136, %s137
    %p149 = scmp.eq.s32.totalorder %s20, 1
    %p150 = por %p148, %p149
    %p152 = scmp.ne.s32.totalorder %s137, %s151
    %p153 = scmp.eq.s32.totalorder %s20, 0
    %p154 = por %p152, %p153
    %s156 = sadd.s32 %s155, 1
    %p159 = scmp.eq.s32.totalorder %s14, 1
    %p160 = scmp.ne.s32.totalorder %s155, %s157
    %p161 = scmp.eq.s32.totalorder %s14, 0
    %p162 = por %p160, %p161
    %p163 = scmp.ne.s32.totalorder %s155, %s157
    %p164 = scmp.eq.s32.totalorder %s19, 1
    %p165 = por %p163, %p164
    %p166 = scmp.ne.s32.totalorder %s157, %s158
    %p167 = scmp.eq.s32.totalorder %s19, 0
    %p168 = por %p166, %p167
    %p169 = scmp.ne.s32.totalorder %s157, %s158
    %p170 = scmp.eq.s32.totalorder %s20, 1
    %p171 = por %p169, %p170
    %p173 = scmp.ne.s32.totalorder %s158, %s172
    %p174 = scmp.eq.s32.totalorder %s20, 0
    %p175 = por %p173, %p174
    %s177 = sadd.s32 %s176, 1
    %p180 = scmp.eq.s32.totalorder %s14, 1
    %p181 = scmp.ne.s32.totalorder %s176, %s178
    %p182 = scmp.eq.s32.totalorder %s14, 0
    %p183 = por %p181, %p182
    %p184 = scmp.ne.s32.totalorder %s176, %s178
    %p185 = scmp.eq.s32.totalorder %s19, 1
    %p186 = por %p184, %p185
    %p187 = scmp.ne.s32.totalorder %s178, %s179
    %p188 = scmp.eq.s32.totalorder %s19, 0
    %p189 = por %p187, %p188
    %p190 = scmp.ne.s32.totalorder %s178, %s179
    %p191 = scmp.eq.s32.totalorder %s20, 1
    %p192 = por %p190, %p191
    %p194 = scmp.ne.s32.totalorder %s179, %s193
    %p195 = scmp.eq.s32.totalorder %s20, 0
    %p196 = por %p194, %p195
    %s197 = ssub.s32 %s21, %s33
    %s198 = ssub.s32 %s22, %s29
    %s199 = sor.u32 %s197, %s198
    %p200 = scmp.eq.s32.totalorder %s199, 0
    %s202 = sadd.s32 %s201, 1
    %s203 = scalar_select %p200, %s201, %s202
    %p206 = pneg %p200
    %p207 = scmp.eq.s32.totalorder %s14, 1
    %p208 = por %p206, %p207
    %p209 = scmp.ne.s32.totalorder %s201, %s204
    %p210 = scmp.eq.s32.totalorder %s14, 0
    %p211 = por %p209, %p210
    %p212 = scmp.ne.s32.totalorder %s201, %s204
    %p213 = scmp.eq.s32.totalorder %s19, 1
    %p214 = por %p212, %p213
    %p215 = scmp.ne.s32.totalorder %s204, %s205
    %p216 = scmp.eq.s32.totalorder %s19, 0
    %p217 = por %p215, %p216
    %p218 = scmp.ne.s32.totalorder %s204, %s205
    %p219 = scmp.eq.s32.totalorder %s20, 1
    %p220 = por %p218, %p219
    %p222 = scmp.ne.s32.totalorder %s205, %s221
    %p223 = scmp.eq.s32.totalorder %s20, 0
    %p224 = por %p222, %p223
    %s225 = ssub.s32 %s21, %s33
    %s226 = ssub.s32 %s22, %s29
    %s227 = sor.u32 %s225, %s226
    %p228 = scmp.eq.s32.totalorder %s227, 0
    %s230 = sadd.s32 %s229, 1
    %s231 = scalar_select %p228, %s229, %s230
    %p234 = pneg %p228
    %p235 = scmp.eq.s32.totalorder %s14, 1
    %p236 = por %p234, %p235
    %p237 = scmp.ne.s32.totalorder %s229, %s232
    %p238 = scmp.eq.s32.totalorder %s14, 0
    %p239 = por %p237, %p238
    %p240 = scmp.ne.s32.totalorder %s229, %s232
    %p241 = scmp.eq.s32.totalorder %s19, 1
    %p242 = por %p240, %p241
    %p243 = scmp.ne.s32.totalorder %s232, %s233
    %p244 = scmp.eq.s32.totalorder %s19, 0
    %p245 = por %p243, %p244
    %p246 = scmp.ne.s32.totalorder %s232, %s233
    %p247 = scmp.eq.s32.totalorder %s20, 1
    %p248 = por %p246, %p247
    %p250 = scmp.ne.s32.totalorder %s233, %s249
    %p251 = scmp.eq.s32.totalorder %s20, 0
    %p252 = por %p250, %p251
    %p253 = scmp.le.s32.totalorder 1, %s14
    %p254 = scmp.lt.s32.totalorder %s14, 3
    %p255 = pnand %p253, %p254
    %p256 = pneg %p255
    // Predicated region
    $region9: #{up_forward.4} parent=5 // pred_check
      _
    $region10: #{up_forward.4} parent=5 // pred_check_branch
      %258 = sbr.rel (%p255) target = $region12
    $region11: #{up_forward.4} parent=5 // pred_region
      %s259 = ssub.s32 %s14, 1
      // Predicated region
      $region13: #{up_forward.4} parent=11 // pred_check
        %p260 = pneg %p147
      $region14: #{up_forward.4} parent=11 // pred_check_branch
        %262 = sbr.rel (%p260) target = $region16
      $region15: #{up_forward.4} parent=11 // pred_region
        _
      $region16: #{up_forward.4} parent=11 // pred_fallthru
        _
      // Predicated region
      $region17: #{up_forward.4} parent=11 // pred_check
        %p263 = pneg %p168
      $region18: #{up_forward.4} parent=11 // pred_check_branch
        %265 = sbr.rel (%p263) target = $region20
      $region19: #{up_forward.4} parent=11 // pred_region
        _
      $region20: #{up_forward.4} parent=11 // pred_fallthru
        _
      // Predicated region
      $region21: #{up_forward.4} parent=11 // pred_check
        %p266 = pneg %p189
      $region22: #{up_forward.4} parent=11 // pred_check_branch
        %268 = sbr.rel (%p266) target = $region24
      $region23: #{up_forward.4} parent=11 // pred_region
        _
      $region24: #{up_forward.4} parent=11 // pred_fallthru
        _
    $region12: #{up_forward.4} parent=5 // pred_fallthru
      _
    %p269 = scmp.lt.s32.totalorder %s14, 2
    // Predicated region
    $region25: #{up_forward.4} parent=5 // pred_check
      %p270 = pneg %p269
    $region26: #{up_forward.4} parent=5 // pred_check_branch
      %272 = sbr.rel (%p270) target = $region28
    $region27: #{up_forward.4} parent=5 // pred_region
      // Predicated region
      $region29: #{up_forward.4} parent=27 // pred_check
        %p273 = pneg %p48
      $region30: #{up_forward.4} parent=27 // pred_check_branch
        %275 = sbr.rel (%p273) target = $region32
      $region31: #{up_forward.4} parent=27 // pred_region
        %s276 = smul.u32 16, %s22
        %p277 = scmp.lt.s32.totalorder %s21, 1
        %s278 = scalar_select %p277, %s21, 1
        %p279 = scmp.lt.s32.totalorder %s276, 15
        %s280 = scalar_select %p279, %s276, 15
        %s281 = smul.addr %s280, 2
        %s282 = smul.addr %s278, 32
        %s283 = sadd.s32 %s281, %s282
        %s284 = smul.addr %s283, 4
        %s285 = scalar_lea.vmem %s0, %s284
        %s286 = smul.u32 16, %s22
      $region32: #{up_forward.4} parent=27 // pred_fallthru
        _
      // Predicated region
      $region33: #{up_forward.4} parent=27 // pred_check
        %p287 = pneg %p84
      $region34: #{up_forward.4} parent=27 // pred_check_branch
        %289 = sbr.rel (%p287) target = $region36
      $region35: #{up_forward.4} parent=27 // pred_region
        %s290 = smul.u32 %s22, 16
        %s291 = ssub.s32 %s290, 1
        %p292 = scmp.gt.s32.totalorder %s291, 0
        %s293 = scalar_select %p292, %s291, 0
        %p294 = scmp.lt.s32.totalorder %s21, 1
        %s295 = scalar_select %p294, %s21, 1
        %p296 = scmp.lt.s32.totalorder %s293, 15
        %s297 = scalar_select %p296, %s293, 15
        %s298 = smul.addr %s297, 2
        %s299 = smul.addr %s295, 32
        %s300 = sadd.s32 %s298, %s299
        %s301 = smul.addr %s300, 4
        %s302 = scalar_lea.vmem %s1, %s301
        %s303 = smul.u32 %s22, 16
        %s304 = ssub.s32 %s303, 1
        %p305 = scmp.gt.s32.totalorder %s304, 0
        %s306 = scalar_select %p305, %s304, 0
      $region36: #{up_forward.4} parent=27 // pred_fallthru
        _
      // Predicated region
      $region37: #{up_forward.4} parent=27 // pred_check
        %p307 = pneg %p120
      $region38: #{up_forward.4} parent=27 // pred_check_branch
        %309 = sbr.rel (%p307) target = $region40
      $region39: #{up_forward.4} parent=27 // pred_region
        %s310 = smul.u32 %s22, 16
        %s311 = sadd.s32 %s310, 16
        %p312 = scmp.lt.s32.totalorder %s311, 15
        %s313 = scalar_select %p312, %s311, 15
        %p314 = scmp.lt.s32.totalorder %s21, 1
        %s315 = scalar_select %p314, %s21, 1
        %p316 = scmp.lt.s32.totalorder %s313, 15
        %s317 = scalar_select %p316, %s313, 15
        %s318 = smul.addr %s317, 2
        %s319 = smul.addr %s315, 32
        %s320 = sadd.s32 %s318, %s319
        %s321 = smul.addr %s320, 4
        %s322 = scalar_lea.vmem %s2, %s321
        %s323 = smul.u32 %s22, 16
        %s324 = sadd.s32 %s323, 16
        %p325 = scmp.lt.s32.totalorder %s324, 15
        %s326 = scalar_select %p325, %s324, 15
      $region40: #{up_forward.4} parent=27 // pred_fallthru
        _
    $region28: #{up_forward.4} parent=5 // pred_fallthru
      _
    %p327 = scmp.le.s32.totalorder 1, %s14
    %p328 = scmp.lt.s32.totalorder %s14, 3
    %p329 = pnand %p327, %p328
    %p330 = pneg %p329
    // Predicated region
    $region41: #{up_forward.4} parent=5 // pred_check
      _
    $region42: #{up_forward.4} parent=5 // pred_check_branch
      %332 = sbr.rel (%p329) target = $region44
    $region43: #{up_forward.4} parent=5 // pred_region
      %s333 = ssub.s32 %s14, 1
      %s334 = smul.u32 16, %s24
      %p335 = scmp.lt.s32.totalorder %s23, 1
      %s336 = scalar_select %p335, %s23, 1
      %p337 = scmp.lt.s32.totalorder %s334, 15
      %s338 = scalar_select %p337, %s334, 15
      %s339 = smul.addr %s338, 2
      %s340 = smul.addr %s336, 32
      %s341 = sadd.s32 %s339, %s340
      %s342 = smul.addr %s341, 4
      %s343 = scalar_lea.vmem %s0, %s342
      %p344 = pneg %p54
      %p345 = pneg %p51
      %s346 = smul.u32 %s24, 16
      %s347 = ssub.s32 %s346, 1
      %p348 = scmp.gt.s32.totalorder %s347, 0
      %s349 = scalar_select %p348, %s347, 0
      %p350 = scmp.lt.s32.totalorder %s23, 1
      %s351 = scalar_select %p350, %s23, 1
      %p352 = scmp.lt.s32.totalorder %s349, 15
      %s353 = scalar_select %p352, %s349, 15
      %s354 = smul.addr %s353, 2
      %s355 = smul.addr %s351, 32
      %s356 = sadd.s32 %s354, %s355
      %s357 = smul.addr %s356, 4
      %s358 = scalar_lea.vmem %s1, %s357
      %p359 = pneg %p90
      %p360 = pneg %p87
      %s361 = smul.u32 %s24, 16
      %s362 = sadd.s32 %s361, 16
      %p363 = scmp.lt.s32.totalorder %s362, 15
      %s364 = scalar_select %p363, %s362, 15
      %p365 = scmp.lt.s32.totalorder %s23, 1
      %s366 = scalar_select %p365, %s23, 1
      %p367 = scmp.lt.s32.totalorder %s364, 15
      %s368 = scalar_select %p367, %s364, 15
      %s369 = smul.addr %s368, 2
      %s370 = smul.addr %s366, 32
      %s371 = sadd.s32 %s369, %s370
      %s372 = smul.addr %s371, 4
      %s373 = scalar_lea.vmem %s2, %s372
      %p374 = pneg %p126
      %p375 = pneg %p123
      %p376 = pneg %p147
      %p377 = pneg %p144
      %p378 = pneg %p168
      %p379 = pneg %p165
      %p380 = pneg %p189
      %p381 = pneg %p186
      %p382 = pneg %p217
      %p383 = pneg %p214
      %s384 = smul.u32 16, %s24
      %p385 = scmp.lt.s32.totalorder %s23, 1
      %s386 = scalar_select %p385, %s23, 1
      %p387 = scmp.lt.s32.totalorder %s384, 15
      %s388 = scalar_select %p387, %s384, 15
      %s389 = smul.addr %s388, 2
      %s390 = smul.addr %s386, 32
      %s391 = sadd.s32 %s389, %s390
      %s392 = smul.addr %s391, 4
      %s393 = scalar_lea.vmem %s6, %s392
      %p394 = pneg %p245
      %p395 = pneg %p242
      %p396 = scmp.lt.s32.totalorder %s23, 1
      %s397 = scalar_select %p396, %s23, 1
      %p398 = scmp.lt.s32.totalorder %s24, 0
      %s399 = scalar_select %p398, %s24, 0
      %s400 = sadd.s32 %s399, %s397
      %s401 = smul.addr %s400, 2
      %s402 = scalar_lea.vmem %s7, %s401
      %s403 = smul.u32 16, %s24
      %p404 = scmp.lt.s32.totalorder %s23, 1
      %s405 = scalar_select %p404, %s23, 1
      %p406 = scmp.lt.s32.totalorder %s403, 15
      %s407 = scalar_select %p406, %s403, 15
      %s408 = smul.addr %s407, 2
      %s409 = smul.addr %s405, 32
      %s410 = sadd.s32 %s408, %s409
      %s411 = smul.addr %s410, 4
      %s412 = scalar_lea.vmem %s0, %s411
      %s413 = smul.u32 16, %s24
      %s414 = smul.u32 %s24, 16
      %s415 = ssub.s32 %s414, 1
      %p416 = scmp.gt.s32.totalorder %s415, 0
      %s417 = scalar_select %p416, %s415, 0
      %p418 = scmp.lt.s32.totalorder %s23, 1
      %s419 = scalar_select %p418, %s23, 1
      %p420 = scmp.lt.s32.totalorder %s417, 15
      %s421 = scalar_select %p420, %s417, 15
      %s422 = smul.addr %s421, 2
      %s423 = smul.addr %s419, 32
      %s424 = sadd.s32 %s422, %s423
      %s425 = smul.addr %s424, 4
      %s426 = scalar_lea.vmem %s1, %s425
      %s427 = smul.u32 %s24, 16
      %s428 = ssub.s32 %s427, 1
      %p429 = scmp.gt.s32.totalorder %s428, 0
      %s430 = scalar_select %p429, %s428, 0
      %s431 = smul.u32 %s24, 16
      %s432 = sadd.s32 %s431, 16
      %p433 = scmp.lt.s32.totalorder %s432, 15
      %s434 = scalar_select %p433, %s432, 15
      %p435 = scmp.lt.s32.totalorder %s23, 1
      %s436 = scalar_select %p435, %s23, 1
      %p437 = scmp.lt.s32.totalorder %s434, 15
      %s438 = scalar_select %p437, %s434, 15
      %s439 = smul.addr %s438, 2
      %s440 = smul.addr %s436, 32
      %s441 = sadd.s32 %s439, %s440
      %s442 = smul.addr %s441, 4
      %s443 = scalar_lea.vmem %s2, %s442
      %s444 = smul.u32 %s24, 16
      %s445 = sadd.s32 %s444, 16
      %p446 = scmp.lt.s32.totalorder %s445, 15
      %s447 = scalar_select %p446, %s445, 15
      %s448 = smul.u32 16, %s24
      %p449 = scmp.lt.s32.totalorder %s23, 1
      %s450 = scalar_select %p449, %s23, 1
      %p451 = scmp.lt.s32.totalorder %s448, 15
      %s452 = scalar_select %p451, %s448, 15
      %s453 = smul.addr %s452, 2
      %s454 = smul.addr %s450, 32
      %s455 = sadd.s32 %s453, %s454
      %s456 = smul.addr %s455, 4
      %s457 = scalar_lea.vmem %s6, %s456
      %s458 = smul.u32 16, %s24
      %p459 = scmp.lt.s32.totalorder %s23, 1
      %s460 = scalar_select %p459, %s23, 1
      %p461 = scmp.lt.s32.totalorder %s24, 0
      %s462 = scalar_select %p461, %s24, 0
      %s463 = sadd.s32 %s462, %s460
      %s464 = smul.addr %s463, 2
      %s465 = scalar_lea.vmem %s7, %s464
      %v467 = vld [vmem:[%s412] sm:$0xf]
      %v468 = vld [vmem:[%s412 + $0x4] sm:$0xf]
      %v469 = vld [vmem:[%s412 + $0x8] sm:$0xf]
      %v470 = vld [vmem:[%s412 + $0xc] sm:$0xf]
      %v471 = vld [vmem:[%s412 + $0x10] sm:$0xf]
      %v472 = vld [vmem:[%s412 + $0x14] sm:$0xf]
      %v473 = vld [vmem:[%s412 + $0x18] sm:$0xf]
      %v474 = vld [vmem:[%s412 + $0x1c] sm:$0xf]
      %v475 = vld [vmem:[%s412 + $0x20] sm:$0xf]
      %v476 = vld [vmem:[%s412 + $0x24] sm:$0xf]
      %v477 = vld [vmem:[%s412 + $0x28] sm:$0xf]
      %v478 = vld [vmem:[%s412 + $0x2c] sm:$0xf]
      %v479 = vld [vmem:[%s412 + $0x30] sm:$0xf]
      %v480 = vld [vmem:[%s412 + $0x34] sm:$0xf]
      %v481 = vld [vmem:[%s412 + $0x38] sm:$0xf]
      %v482 = vld [vmem:[%s412 + $0x3c] sm:$0xf]
      %v483 = vld [vmem:[%s412 + $0x40] sm:$0xf]
      %v484 = vld [vmem:[%s412 + $0x44] sm:$0xf]
      %v485 = vld [vmem:[%s412 + $0x48] sm:$0xf]
      %v486 = vld [vmem:[%s412 + $0x4c] sm:$0xf]
      %v487 = vld [vmem:[%s412 + $0x50] sm:$0xf]
      %v488 = vld [vmem:[%s412 + $0x54] sm:$0xf]
      %v489 = vld [vmem:[%s412 + $0x58] sm:$0xf]
      %v490 = vld [vmem:[%s412 + $0x5c] sm:$0xf]
      %v491 = vld [vmem:[%s412 + $0x60] sm:$0xf]
      %v492 = vld [vmem:[%s412 + $0x64] sm:$0xf]
      %v493 = vld [vmem:[%s412 + $0x68] sm:$0xf]
      %v494 = vld [vmem:[%s412 + $0x6c] sm:$0xf]
      %v495 = vld [vmem:[%s412 + $0x70] sm:$0xf]
      %v496 = vld [vmem:[%s412 + $0x74] sm:$0xf]
      %v497 = vld [vmem:[%s412 + $0x78] sm:$0xf]
      %v498 = vld [vmem:[%s412 + $0x7c] sm:$0xf]
      %v499 = vunpack.c.l.bf16 %v467
      %v500 = vunpack.c.l.bf16 %v468
      %v501 = vunpack.c.l.bf16 %v469
      %v502 = vunpack.c.l.bf16 %v470
      %v503 = vunpack.c.l.bf16 %v471
      %v504 = vunpack.c.l.bf16 %v472
      %v505 = vunpack.c.l.bf16 %v473
      %v506 = vunpack.c.l.bf16 %v474
      %v507 = vunpack.c.l.bf16 %v475
      %v508 = vunpack.c.l.bf16 %v476
      %v509 = vunpack.c.l.bf16 %v477
      %v510 = vunpack.c.l.bf16 %v478
      %v511 = vunpack.c.l.bf16 %v479
      %v512 = vunpack.c.l.bf16 %v480
      %v513 = vunpack.c.l.bf16 %v481
      %v514 = vunpack.c.l.bf16 %v482
      %v515 = vunpack.c.l.bf16 %v483
      %v516 = vunpack.c.l.bf16 %v484
      %v517 = vunpack.c.l.bf16 %v485
      %v518 = vunpack.c.l.bf16 %v486
      %v519 = vunpack.c.l.bf16 %v487
      %v520 = vunpack.c.l.bf16 %v488
      %v521 = vunpack.c.l.bf16 %v489
      %v522 = vunpack.c.l.bf16 %v490
      %v523 = vunpack.c.l.bf16 %v491
      %v524 = vunpack.c.l.bf16 %v492
      %v525 = vunpack.c.l.bf16 %v493
      %v526 = vunpack.c.l.bf16 %v494
      %v527 = vunpack.c.l.bf16 %v495
      %v528 = vunpack.c.l.bf16 %v496
      %v529 = vunpack.c.l.bf16 %v497
      %v530 = vunpack.c.l.bf16 %v498
      %v531 = vld [vmem:[%s426] sm:$0xf]
      %v532 = vld [vmem:[%s426 + $0x4] sm:$0xf]
      %v533 = vunpack.c.l.bf16 %v531
      %v534 = vunpack.c.l.bf16 %v532
      %v535 = vld [vmem:[%s443] sm:$0xf]
      %v536 = vld [vmem:[%s443 + $0x4] sm:$0xf]
      %v537 = vunpack.c.l.bf16 %v535
      %v538 = vunpack.c.l.bf16 %v536
      %p539 = scmp.eq.s32.totalorder %s24, 0
      %s540 = scalar_select %p539, 0.0, 1.0
      %v541 = vstv %s540
      %v542 = vmul.f32 %v533, %v541
      %v543 = vmul.f32 %v534, %v541
      %v544 = vmul.f32 %v537, %v541
      %v545 = vmul.f32 %v538, %v541
      %vm582 = vcmask 1040384
      %v583 = vrot.slane %v542, 7
      %v584 = vrot.slane %v543, 7
      %v585 = vsel %vm582, %v583, %v584
      %v586 = vrot.slane %v499, 7
      %v587 = vrot.slane %v500, 7
      %v588 = vsel %vm582, %v586, %v587
      %v589 = vrot.slane %v501, 7
      %v590 = vrot.slane %v502, 7
      %v591 = vsel %vm582, %v589, %v590
      %v592 = vrot.slane %v503, 7
      %v593 = vrot.slane %v504, 7
      %v594 = vsel %vm582, %v592, %v593
      %v595 = vrot.slane %v505, 7
      %v596 = vrot.slane %v506, 7
      %v597 = vsel %vm582, %v595, %v596
      %v598 = vrot.slane %v507, 7
      %v599 = vrot.slane %v508, 7
      %v600 = vsel %vm582, %v598, %v599
      %v601 = vrot.slane %v509, 7
      %v602 = vrot.slane %v510, 7
      %v603 = vsel %vm582, %v601, %v602
      %v604 = vrot.slane %v511, 7
      %v605 = vrot.slane %v512, 7
      %v606 = vsel %vm582, %v604, %v605
      %v607 = vrot.slane %v513, 7
      %v608 = vrot.slane %v514, 7
      %v609 = vsel %vm582, %v607, %v608
      %v610 = vrot.slane %v515, 7
      %v611 = vrot.slane %v516, 7
      %v612 = vsel %vm582, %v610, %v611
      %v613 = vrot.slane %v517, 7
      %v614 = vrot.slane %v518, 7
      %v615 = vsel %vm582, %v613, %v614
      %v616 = vrot.slane %v519, 7
      %v617 = vrot.slane %v520, 7
      %v618 = vsel %vm582, %v616, %v617
      %v619 = vrot.slane %v521, 7
      %v620 = vrot.slane %v522, 7
      %v621 = vsel %vm582, %v619, %v620
      %v622 = vrot.slane %v523, 7
      %v623 = vrot.slane %v524, 7
      %v624 = vsel %vm582, %v622, %v623
      %v625 = vrot.slane %v525, 7
      %v626 = vrot.slane %v526, 7
      %v627 = vsel %vm582, %v625, %v626
      %v628 = vrot.slane %v527, 7
      %v629 = vrot.slane %v528, 7
      %v630 = vsel %vm582, %v628, %v629
      %v631 = vrot.slane %v529, 7
      %v632 = vrot.slane %v530, 7
      %v633 = vsel %vm582, %v631, %v632
      %v634 = vrot.slane %v544, 7
      %v635 = vrot.slane %v545, 7
      %v636 = vsel %vm582, %v634, %v635
      %v673 = vsel %vm582, 0.0, %v583
      %v674 = vsel %vm582, 0.0, %v586
      %v675 = vsel %vm582, 0.0, %v589
      %v676 = vsel %vm582, 0.0, %v592
      %v677 = vsel %vm582, 0.0, %v595
      %v678 = vsel %vm582, 0.0, %v598
      %v679 = vsel %vm582, 0.0, %v601
      %v680 = vsel %vm582, 0.0, %v604
      %v681 = vsel %vm582, 0.0, %v607
      %v682 = vsel %vm582, 0.0, %v610
      %v683 = vsel %vm582, 0.0, %v613
      %v684 = vsel %vm582, 0.0, %v616
      %v685 = vsel %vm582, 0.0, %v619
      %v686 = vsel %vm582, 0.0, %v622
      %v687 = vsel %vm582, 0.0, %v625
      %v688 = vsel %vm582, 0.0, %v628
      %v689 = vsel %vm582, 0.0, %v631
      %v690 = vsel %vm582, 0.0, %v634
      %vm691 = vcmask 1046528
      %v692 = vrot.slane %v542, 1
      %v693 = vrot.slane %v543, 1
      %v694 = vsel %vm691, %v692, %v693
      %v695 = vrot.slane %v499, 1
      %v696 = vrot.slane %v500, 1
      %v697 = vsel %vm691, %v695, %v696
      %v698 = vrot.slane %v501, 1
      %v699 = vrot.slane %v502, 1
      %v700 = vsel %vm691, %v698, %v699
      %v701 = vrot.slane %v503, 1
      %v702 = vrot.slane %v504, 1
      %v703 = vsel %vm691, %v701, %v702
      %v704 = vrot.slane %v505, 1
      %v705 = vrot.slane %v506, 1
      %v706 = vsel %vm691, %v704, %v705
      %v707 = vrot.slane %v507, 1
      %v708 = vrot.slane %v508, 1
      %v709 = vsel %vm691, %v707, %v708
      %v710 = vrot.slane %v509, 1
      %v711 = vrot.slane %v510, 1
      %v712 = vsel %vm691, %v710, %v711
      %v713 = vrot.slane %v511, 1
      %v714 = vrot.slane %v512, 1
      %v715 = vsel %vm691, %v713, %v714
      %v716 = vrot.slane %v513, 1
      %v717 = vrot.slane %v514, 1
      %v718 = vsel %vm691, %v716, %v717
      %v719 = vrot.slane %v515, 1
      %v720 = vrot.slane %v516, 1
      %v721 = vsel %vm691, %v719, %v720
      %v722 = vrot.slane %v517, 1
      %v723 = vrot.slane %v518, 1
      %v724 = vsel %vm691, %v722, %v723
      %v725 = vrot.slane %v519, 1
      %v726 = vrot.slane %v520, 1
      %v727 = vsel %vm691, %v725, %v726
      %v728 = vrot.slane %v521, 1
      %v729 = vrot.slane %v522, 1
      %v730 = vsel %vm691, %v728, %v729
      %v731 = vrot.slane %v523, 1
      %v732 = vrot.slane %v524, 1
      %v733 = vsel %vm691, %v731, %v732
      %v734 = vrot.slane %v525, 1
      %v735 = vrot.slane %v526, 1
      %v736 = vsel %vm691, %v734, %v735
      %v737 = vrot.slane %v527, 1
      %v738 = vrot.slane %v528, 1
      %v739 = vsel %vm691, %v737, %v738
      %v740 = vrot.slane %v529, 1
      %v741 = vrot.slane %v530, 1
      %v742 = vsel %vm691, %v740, %v741
      %v743 = vrot.slane %v544, 1
      %v744 = vrot.slane %v545, 1
      %v745 = vsel %vm691, %v743, %v744
      %v782 = vsel %vm691, %v693, 0.0
      %v783 = vsel %vm691, %v696, 0.0
      %v784 = vsel %vm691, %v699, 0.0
      %v785 = vsel %vm691, %v702, 0.0
      %v786 = vsel %vm691, %v705, 0.0
      %v787 = vsel %vm691, %v708, 0.0
      %v788 = vsel %vm691, %v711, 0.0
      %v789 = vsel %vm691, %v714, 0.0
      %v790 = vsel %vm691, %v717, 0.0
      %v791 = vsel %vm691, %v720, 0.0
      %v792 = vsel %vm691, %v723, 0.0
      %v793 = vsel %vm691, %v726, 0.0
      %v794 = vsel %vm691, %v729, 0.0
      %v795 = vsel %vm691, %v732, 0.0
      %v796 = vsel %vm691, %v735, 0.0
      %v797 = vsel %vm691, %v738, 0.0
      %v798 = vsel %vm691, %v741, 0.0
      %v799 = vsel %vm691, %v744, 0.0
      %v800 = vpack.c.bf16 %v585, %v673
      %v801 = vpack.c.bf16 %v588, %v674
      %v802 = vpack.c.bf16 %v591, %v675
      %v803 = vpack.c.bf16 %v594, %v676
      %v804 = vpack.c.bf16 %v597, %v677
      %v805 = vpack.c.bf16 %v600, %v678
      %v806 = vpack.c.bf16 %v603, %v679
      %v807 = vpack.c.bf16 %v606, %v680
      %v808 = vpack.c.bf16 %v609, %v681
      %v809 = vpack.c.bf16 %v612, %v682
      %v810 = vpack.c.bf16 %v615, %v683
      %v811 = vpack.c.bf16 %v618, %v684
      %v812 = vpack.c.bf16 %v621, %v685
      %v813 = vpack.c.bf16 %v624, %v686
      %v814 = vpack.c.bf16 %v627, %v687
      %v815 = vpack.c.bf16 %v630, %v688
      %v816 = vld [vmem:[%s3] sm:$0xf]
      %v817 = vld [vmem:[%s3 + $0x4] sm:$0xf]
      %v818 = vld [vmem:[%s3 + $0x8] sm:$0xf]
      %v819 = vld [vmem:[%s3 + $0xc] sm:$0xf]
      %v820 = vld [vmem:[%s3 + $0x10] sm:$0xf]
      %v821 = vld [vmem:[%s3 + $0x14] sm:$0xf]
      %v822 = vld [vmem:[%s3 + $0x18] sm:$0xf]
      %v823 = vld [vmem:[%s3 + $0x1c] sm:$0xf]
      %v824 = vld [vmem:[%s3 + $0x20] sm:$0xf]
      %v825 = vld [vmem:[%s3 + $0x24] sm:$0xf]
      %v826 = vld [vmem:[%s3 + $0x28] sm:$0xf]
      %v827 = vld [vmem:[%s3 + $0x2c] sm:$0xf]
      %v828 = vld [vmem:[%s3 + $0x30] sm:$0xf]
      %v829 = vld [vmem:[%s3 + $0x34] sm:$0xf]
      %v830 = vld [vmem:[%s3 + $0x38] sm:$0xf]
      %v831 = vld [vmem:[%s3 + $0x3c] sm:$0xf]
      %v832 = vpack.c.bf16 %v543, %v542
      %v833 = vpack.c.bf16 %v500, %v499
      %v834 = vpack.c.bf16 %v502, %v501
      %v835 = vpack.c.bf16 %v504, %v503
      %v836 = vpack.c.bf16 %v506, %v505
      %v837 = vpack.c.bf16 %v508, %v507
      %v838 = vpack.c.bf16 %v510, %v509
      %v839 = vpack.c.bf16 %v512, %v511
      %v840 = vpack.c.bf16 %v514, %v513
      %v841 = vpack.c.bf16 %v516, %v515
      %v842 = vpack.c.bf16 %v518, %v517
      %v843 = vpack.c.bf16 %v520, %v519
      %v844 = vpack.c.bf16 %v522, %v521
      %v845 = vpack.c.bf16 %v524, %v523
      %v846 = vpack.c.bf16 %v526, %v525
      %v847 = vpack.c.bf16 %v528, %v527
      %s848 = scalar_lea.vmem %s3, 64
      %v849 = vld [vmem:[%s848] sm:$0xf]
      %v850 = vld [vmem:[%s848 + $0x4] sm:$0xf]
      %v851 = vld [vmem:[%s848 + $0x8] sm:$0xf]
      %v852 = vld [vmem:[%s848 + $0xc] sm:$0xf]
      %v853 = vld [vmem:[%s848 + $0x10] sm:$0xf]
      %v854 = vld [vmem:[%s848 + $0x14] sm:$0xf]
      %v855 = vld [vmem:[%s848 + $0x18] sm:$0xf]
      %v856 = vld [vmem:[%s848 + $0x1c] sm:$0xf]
      %v857 = vld [vmem:[%s848 + $0x20] sm:$0xf]
      %v858 = vld [vmem:[%s848 + $0x24] sm:$0xf]
      %v859 = vld [vmem:[%s848 + $0x28] sm:$0xf]
      %v860 = vld [vmem:[%s848 + $0x2c] sm:$0xf]
      %v861 = vld [vmem:[%s848 + $0x30] sm:$0xf]
      %v862 = vld [vmem:[%s848 + $0x34] sm:$0xf]
      %v863 = vld [vmem:[%s848 + $0x38] sm:$0xf]
      %v864 = vld [vmem:[%s848 + $0x3c] sm:$0xf]
      %v881 = vunpack.c.l.b16 %v849
      %v882 = vunpack.c.l.b16 %v850
      %v883 = vunpack.c.l.b16 %v851
      %v884 = vunpack.c.l.b16 %v852
      %v885 = vunpack.c.l.b16 %v853
      %v886 = vunpack.c.l.b16 %v854
      %v887 = vunpack.c.l.b16 %v855
      %v888 = vunpack.c.l.b16 %v856
      %v889 = vunpack.c.l.b16 %v857
      %v890 = vunpack.c.l.b16 %v858
      %v891 = vunpack.c.l.b16 %v859
      %v892 = vunpack.c.l.b16 %v860
      %v893 = vunpack.c.l.b16 %v861
      %v894 = vunpack.c.l.b16 %v862
      %v895 = vunpack.c.l.b16 %v863
      %v896 = vunpack.c.l.b16 %v864
      %v897 = vpack.c.b16 %v882, %v881
      %v898 = vpack.c.b16 %v884, %v883
      %v899 = vpack.c.b16 %v886, %v885
      %v900 = vpack.c.b16 %v888, %v887
      %v901 = vpack.c.b16 %v890, %v889
      %v902 = vpack.c.b16 %v892, %v891
      %v903 = vpack.c.b16 %v894, %v893
      %v904 = vpack.c.b16 %v896, %v895
      %913 = vmatprep.subr.bf16.mxu0 0
      %914 = vmatpush1.bf16.msra.mxu0 %v897
      %915 = vmatprep.subr.bf16.mxu0 0
      %916 = vmatpush1.bf16.msra.mxu0 %v898
      %917 = vmatprep.subr.bf16.mxu0 0
      %918 = vmatpush1.bf16.msra.mxu0 %v899
      %919 = vmatprep.subr.bf16.mxu0 0
      %920 = vmatpush1.bf16.msra.mxu0 %v900
      %921 = vmatprep.subr.bf16.mxu0 0
      %922 = vmatpush1.bf16.msra.mxu0 %v901
      %923 = vmatprep.subr.bf16.mxu0 0
      %924 = vmatpush1.bf16.msra.mxu0 %v902
      %925 = vmatprep.subr.bf16.mxu0 0
      %926 = vmatpush1.bf16.msra.mxu0 %v903
      %927 = vmatprep.subr.bf16.mxu0 0
      %928 = vmatpush1.bf16.msra.mxu0 %v904
      %929 = vmatprep.subr.bf16.mxu0 0
      %930 = vmatpush1.bf16.msra.mxu0 0
      %931 = vmatprep.subr.bf16.mxu0 0
      %932 = vmatpush1.bf16.msra.mxu0 0
      %933 = vmatprep.subr.bf16.mxu0 0
      %934 = vmatpush1.bf16.msra.mxu0 0
      %935 = vmatprep.subr.bf16.mxu0 0
      %936 = vmatpush1.bf16.msra.mxu0 0
      %937 = vmatprep.subr.bf16.mxu0 0
      %938 = vmatpush1.bf16.msra.mxu0 0
      %939 = vmatprep.subr.bf16.mxu0 0
      %940 = vmatpush1.bf16.msra.mxu0 0
      %941 = vmatprep.subr.bf16.mxu0 0
      %942 = vmatpush1.bf16.msra.mxu0 0
      %943 = vmatprep.subr.bf16.mxu0 0
      %944 = vmatpush1.bf16.msra.mxu0 0
      %945 = vmatprep.mubr.bf16.mxu0 0
      %946 = vmatmul.mubr.bf16.gmra.mrb[0].mxu0 %v832
      %v947 = vpop.f32.mrb[0].mxu0
      %v948 = vadd.f32 0.0, %v947
      %v949 = vpop.f32.mrb[0].mxu0
      %v950 = vpop.f32.mrb[0].mxu0
      %v951 = vadd.f32 0.0, %v950
      %v952 = vpop.f32.mrb[0].mxu0
      %953 = vmatprep.mubr.bf16.mxu0 0
      %954 = vmatmul.mubr.bf16.gmra.mrb[0].mxu0 %v833
      %v955 = vpop.f32.mrb[0].mxu0
      %v956 = vadd.f32 0.0, %v955
      %v957 = vpop.f32.mrb[0].mxu0
      %v958 = vpop.f32.mrb[0].mxu0
      %v959 = vadd.f32 0.0, %v958
      %v960 = vpop.f32.mrb[0].mxu0
      %961 = vmatprep.mubr.bf16.mxu0 0
      %962 = vmatmul.mubr.bf16.gmra.mrb[0].mxu0 %v834
      %v963 = vpop.f32.mrb[0].mxu0
      %v964 = vadd.f32 0.0, %v963
      %v965 = vpop.f32.mrb[0].mxu0
      %v966 = vpop.f32.mrb[0].mxu0
      %v967 = vadd.f32 0.0, %v966
      %v968 = vpop.f32.mrb[0].mxu0
      %969 = vmatprep.mubr.bf16.mxu0 0
      %970 = vmatmul.mubr.bf16.gmra.mrb[0].mxu0 %v835
      %v971 = vpop.f32.mrb[0].mxu0
      %v972 = vadd.f32 0.0, %v971
      %v973 = vpop.f32.mrb[0].mxu0
      %v974 = vpop.f32.mrb[0].mxu0
      %v975 = vadd.f32 0.0, %v974
      %v976 = vpop.f32.mrb[0].mxu0
      %977 = vmatprep.mubr.bf16.mxu0 0
      %978 = vmatmul.mubr.bf16.gmra.mrb[0].mxu0 %v836
      %v979 = vpop.f32.mrb[0].mxu0
      %v980 = vadd.f32 0.0, %v979
      %v981 = vpop.f32.mrb[0].mxu0
      %v982 = vpop.f32.mrb[0].mxu0
      %v983 = vadd.f32 0.0, %v982
      %v984 = vpop.f32.mrb[0].mxu0
      %985 = vmatprep.mubr.bf16.mxu0 0
      %986 = vmatmul.mubr.bf16.gmra.mrb[0].mxu0 %v837
      %v987 = vpop.f32.mrb[0].mxu0
      %v988 = vadd.f32 0.0, %v987
      %v989 = vpop.f32.mrb[0].mxu0
      %v990 = vpop.f32.mrb[0].mxu0
      %v991 = vadd.f32 0.0, %v990
      %v992 = vpop.f32.mrb[0].mxu0
      %993 = vmatprep.mubr.bf16.mxu0 0
      %994 = vmatmul.mubr.bf16.gmra.mrb[0].mxu0 %v838
      %v995 = vpop.f32.mrb[0].mxu0
      %v996 = vadd.f32 0.0, %v995
      %v997 = vpop.f32.mrb[0].mxu0
      %v998 = vpop.f32.mrb[0].mxu0
      %v999 = vadd.f32 0.0, %v998
      %v1000 = vpop.f32.mrb[0].mxu0
      %1001 = vmatprep.mubr.bf16.mxu0 0
      %1002 = vmatmul.mubr.bf16.gmra.mrb[0].mxu0 %v839
      %v1003 = vpop.f32.mrb[0].mxu0
      %v1004 = vadd.f32 0.0, %v1003
      %v1005 = vpop.f32.mrb[0].mxu0
      %v1006 = vpop.f32.mrb[0].mxu0
      %v1007 = vadd.f32 0.0, %v1006
      %v1008 = vpop.f32.mrb[0].mxu0
      %1009 = vmatprep.mubr.bf16.mxu0 0
      %1010 = vmatmul.mubr.bf16.gmra.mrb[0].mxu0 %v840
      %v1011 = vpop.f32.mrb[0].mxu0
      %v1012 = vadd.f32 0.0, %v1011
      %v1013 = vpop.f32.mrb[0].mxu0
      %v1014 = vpop.f32.mrb[0].mxu0
      %v1015 = vadd.f32 0.0, %v1014
      %v1016 = vpop.f32.mrb[0].mxu0
      %1017 = vmatprep.mubr.bf16.mxu0 0
      %1018 = vmatmul.mubr.bf16.gmra.mrb[0].mxu0 %v841
      %v1019 = vpop.f32.mrb[0].mxu0
      %v1020 = vadd.f32 0.0, %v1019
      %v1021 = vpop.f32.mrb[0].mxu0
      %v1022 = vpop.f32.mrb[0].mxu0
      %v1023 = vadd.f32 0.0, %v1022
      %v1024 = vpop.f32.mrb[0].mxu0
      %1025 = vmatprep.mubr.bf16.mxu0 0
      %1026 = vmatmul.mubr.bf16.gmra.mrb[0].mxu0 %v842
      %v1027 = vpop.f32.mrb[0].mxu0
      %v1028 = vadd.f32 0.0, %v1027
      %v1029 = vpop.f32.mrb[0].mxu0
      %v1030 = vpop.f32.mrb[0].mxu0
      %v1031 = vadd.f32 0.0, %v1030
      %v1032 = vpop.f32.mrb[0].mxu0
      %1033 = vmatprep.mubr.bf16.mxu0 0
      %1034 = vmatmul.mubr.bf16.gmra.mrb[0].mxu0 %v843
      %v1035 = vpop.f32.mrb[0].mxu0
      %v1036 = vadd.f32 0.0, %v1035
      %v1037 = vpop.f32.mrb[0].mxu0
      %v1038 = vpop.f32.mrb[0].mxu0
      %v1039 = vadd.f32 0.0, %v1038
      %v1040 = vpop.f32.mrb[0].mxu0
      %1041 = vmatprep.mubr.bf16.mxu0 0
      %1042 = vmatmul.mubr.bf16.gmra.mrb[0].mxu0 %v844
      %v1043 = vpop.f32.mrb[0].mxu0
      %v1044 = vadd.f32 0.0, %v1043
      %v1045 = vpop.f32.mrb[0].mxu0
      %v1046 = vpop.f32.mrb[0].mxu0
      %v1047 = vadd.f32 0.0, %v1046
      %v1048 = vpop.f32.mrb[0].mxu0
      %1049 = vmatprep.mubr.bf16.mxu0 0
      %1050 = vmatmul.mubr.bf16.gmra.mrb[0].mxu0 %v845
      %v1051 = vpop.f32.mrb[0].mxu0
      %v1052 = vadd.f32 0.0, %v1051
      %v1053 = vpop.f32.mrb[0].mxu0
      %v1054 = vpop.f32.mrb[0].mxu0
      %v1055 = vadd.f32 0.0, %v1054
      %v1056 = vpop.f32.mrb[0].mxu0
      %1057 = vmatprep.mubr.bf16.mxu0 0
      %1058 = vmatmul.mubr.bf16.gmra.mrb[0].mxu0 %v846
      %v1059 = vpop.f32.mrb[0].mxu0
      %v1060 = vadd.f32 0.0, %v1059
      %v1061 = vpop.f32.mrb[0].mxu0
      %v1062 = vpop.f32.mrb[0].mxu0
      %v1063 = vadd.f32 0.0, %v1062
      %v1064 = vpop.f32.mrb[0].mxu0
      %1065 = vmatprep.mubr.bf16.mxu0 0
      %1066 = vmatmul.mubr.bf16.gmra.mrb[0].mxu0 %v847
      %v1067 = vpop.f32.mrb[0].mxu0
      %v1068 = vadd.f32 0.0, %v1067
      %v1069 = vpop.f32.mrb[0].mxu0
      %v1070 = vpop.f32.mrb[0].mxu0
      %v1071 = vadd.f32 0.0, %v1070
      %v1072 = vpop.f32.mrb[0].mxu0
      %1073 = vdwg.mxu0
      %v1090 = vunpack.c.l.b16 %v816
      %v1091 = vunpack.c.l.b16 %v817
      %v1092 = vunpack.c.l.b16 %v818
      %v1093 = vunpack.c.l.b16 %v819
      %v1094 = vunpack.c.l.b16 %v820
      %v1095 = vunpack.c.l.b16 %v821
      %v1096 = vunpack.c.l.b16 %v822
      %v1097 = vunpack.c.l.b16 %v823
      %v1098 = vunpack.c.l.b16 %v824
      %v1099 = vunpack.c.l.b16 %v825
      %v1100 = vunpack.c.l.b16 %v826
      %v1101 = vunpack.c.l.b16 %v827
      %v1102 = vunpack.c.l.b16 %v828
      %v1103 = vunpack.c.l.b16 %v829
      %v1104 = vunpack.c.l.b16 %v830
      %v1105 = vunpack.c.l.b16 %v831
      %v1106 = vpack.c.b16 %v1091, %v1090
      %v1107 = vpack.c.b16 %v1093, %v1092
      %v1108 = vpack.c.b16 %v1095, %v1094
      %v1109 = vpack.c.b16 %v1097, %v1096
      %v1110 = vpack.c.b16 %v1099, %v1098
      %v1111 = vpack.c.b16 %v1101, %v1100
      %v1112 = vpack.c.b16 %v1103, %v1102
      %v1113 = vpack.c.b16 %v1105, %v1104
      %1122 = vmatprep.subr.bf16.mxu0 0
      %1123 = vmatpush1.bf16.msra.mxu0 %v1106
      %1124 = vmatprep.subr.bf16.mxu0 0
      %1125 = vmatpush1.bf16.msra.mxu0 %v1107
      %1126 = vmatprep.subr.bf16.mxu0 0
      %1127 = vmatpush1.bf16.msra.mxu0 %v1108
      %1128 = vmatprep.subr.bf16.mxu0 0
      %1129 = vmatpush1.bf16.msra.mxu0 %v1109
      %1130 = vmatprep.subr.bf16.mxu0 0
      %1131 = vmatpush1.bf16.msra.mxu0 %v1110
      %1132 = vmatprep.subr.bf16.mxu0 0
      %1133 = vmatpush1.bf16.msra.mxu0 %v1111
      %1134 = vmatprep.subr.bf16.mxu0 0
      %1135 = vmatpush1.bf16.msra.mxu0 %v1112
      %1136 = vmatprep.subr.bf16.mxu0 0
      %1137 = vmatpush1.bf16.msra.mxu0 %v1113
      %1138 = vmatprep.subr.bf16.mxu0 0
      %1139 = vmatpush1.bf16.msra.mxu0 0
      %1140 = vmatprep.subr.bf16.mxu0 0
      %1141 = vmatpush1.bf16.msra.mxu0 0
      %1142 = vmatprep.subr.bf16.mxu0 0
      %1143 = vmatpush1.bf16.msra.mxu0 0
      %1144 = vmatprep.subr.bf16.mxu0 0
      %1145 = vmatpush1.bf16.msra.mxu0 0
      %1146 = vmatprep.subr.bf16.mxu0 0
      %1147 = vmatpush1.bf16.msra.mxu0 0
      %1148 = vmatprep.subr.bf16.mxu0 0
      %1149 = vmatpush1.bf16.msra.mxu0 0
      %1150 = vmatprep.subr.bf16.mxu0 0
      %1151 = vmatpush1.bf16.msra.mxu0 0
      %1152 = vmatprep.subr.bf16.mxu0 0
      %1153 = vmatpush1.bf16.msra.mxu0 0
      %1154 = vmatprep.mubr.bf16.mxu0 0
      %1155 = vmatmul.mubr.bf16.gmra.mrb[0].mxu0 %v800
      %v1156 = vpop.f32.mrb[0].mxu0
      %v1157 = vadd.f32 %v948, %v1156
      %v1158 = vpop.f32.mrb[0].mxu0
      %v1159 = vpop.f32.mrb[0].mxu0
      %v1160 = vadd.f32 %v951, %v1159
      %v1161 = vpop.f32.mrb[0].mxu0
      %1162 = vmatprep.mubr.bf16.mxu0 0
      %1163 = vmatmul.mubr.bf16.gmra.mrb[0].mxu0 %v801
      %v1164 = vpop.f32.mrb[0].mxu0
      %v1165 = vadd.f32 %v956, %v1164
      %v1166 = vpop.f32.mrb[0].mxu0
      %v1167 = vpop.f32.mrb[0].mxu0
      %v1168 = vadd.f32 %v959, %v1167
      %v1169 = vpop.f32.mrb[0].mxu0
      %1170 = vmatprep.mubr.bf16.mxu0 0
      %1171 = vmatmul.mubr.bf16.gmra.mrb[0].mxu0 %v802
      %v1172 = vpop.f32.mrb[0].mxu0
      %v1173 = vadd.f32 %v964, %v1172
      %v1174 = vpop.f32.mrb[0].mxu0
      %v1175 = vpop.f32.mrb[0].mxu0
      %v1176 = vadd.f32 %v967, %v1175
      %v1177 = vpop.f32.mrb[0].mxu0
      %1178 = vmatprep.mubr.bf16.mxu0 0
      %1179 = vmatmul.mubr.bf16.gmra.mrb[0].mxu0 %v803
      %v1180 = vpop.f32.mrb[0].mxu0
      %v1181 = vadd.f32 %v972, %v1180
      %v1182 = vpop.f32.mrb[0].mxu0
      %v1183 = vpop.f32.mrb[0].mxu0
      %v1184 = vadd.f32 %v975, %v1183
      %v1185 = vpop.f32.mrb[0].mxu0
      %1186 = vmatprep.mubr.bf16.mxu0 0
      %1187 = vmatmul.mubr.bf16.gmra.mrb[0].mxu0 %v804
      %v1188 = vpop.f32.mrb[0].mxu0
      %v1189 = vadd.f32 %v980, %v1188
      %v1190 = vpop.f32.mrb[0].mxu0
      %v1191 = vpop.f32.mrb[0].mxu0
      %v1192 = vadd.f32 %v983, %v1191
      %v1193 = vpop.f32.mrb[0].mxu0
      %1194 = vmatprep.mubr.bf16.mxu0 0
      %1195 = vmatmul.mubr.bf16.gmra.mrb[0].mxu0 %v805
      %v1196 = vpop.f32.mrb[0].mxu0
      %v1197 = vadd.f32 %v988, %v1196
      %v1198 = vpop.f32.mrb[0].mxu0
      %v1199 = vpop.f32.mrb[0].mxu0
      %v1200 = vadd.f32 %v991, %v1199
      %v1201 = vpop.f32.mrb[0].mxu0
      %1202 = vmatprep.mubr.bf16.mxu0 0
      %1203 = vmatmul.mubr.bf16.gmra.mrb[0].mxu0 %v806
      %v1204 = vpop.f32.mrb[0].mxu0
      %v1205 = vadd.f32 %v996, %v1204
      %v1206 = vpop.f32.mrb[0].mxu0
      %v1207 = vpop.f32.mrb[0].mxu0
      %v1208 = vadd.f32 %v999, %v1207
      %v1209 = vpop.f32.mrb[0].mxu0
      %1210 = vmatprep.mubr.bf16.mxu0 0
      %1211 = vmatmul.mubr.bf16.gmra.mrb[0].mxu0 %v807
      %v1212 = vpop.f32.mrb[0].mxu0
      %v1213 = vadd.f32 %v1004, %v1212
      %v1214 = vpop.f32.mrb[0].mxu0
      %v1215 = vpop.f32.mrb[0].mxu0
      %v1216 = vadd.f32 %v1007, %v1215
      %v1217 = vpop.f32.mrb[0].mxu0
      %1218 = vmatprep.mubr.bf16.mxu0 0
      %1219 = vmatmul.mubr.bf16.gmra.mrb[0].mxu0 %v808
      %v1220 = vpop.f32.mrb[0].mxu0
      %v1221 = vadd.f32 %v1012, %v1220
      %v1222 = vpop.f32.mrb[0].mxu0
      %v1223 = vpop.f32.mrb[0].mxu0
      %v1224 = vadd.f32 %v1015, %v1223
      %v1225 = vpop.f32.mrb[0].mxu0
      %1226 = vmatprep.mubr.bf16.mxu0 0
      %1227 = vmatmul.mubr.bf16.gmra.mrb[0].mxu0 %v809
      %v1228 = vpop.f32.mrb[0].mxu0
      %v1229 = vadd.f32 %v1020, %v1228
      %v1230 = vpop.f32.mrb[0].mxu0
      %v1231 = vpop.f32.mrb[0].mxu0
      %v1232 = vadd.f32 %v1023, %v1231
      %v1233 = vpop.f32.mrb[0].mxu0
      %1234 = vmatprep.mubr.bf16.mxu0 0
      %1235 = vmatmul.mubr.bf16.gmra.mrb[0].mxu0 %v810
      %v1236 = vpop.f32.mrb[0].mxu0
      %v1237 = vadd.f32 %v1028, %v1236
      %v1238 = vpop.f32.mrb[0].mxu0
      %v1239 = vpop.f32.mrb[0].mxu0
      %v1240 = vadd.f32 %v1031, %v1239
      %v1241 = vpop.f32.mrb[0].mxu0
      %1242 = vmatprep.mubr.bf16.mxu0 0
      %1243 = vmatmul.mubr.bf16.gmra.mrb[0].mxu0 %v811
      %v1244 = vpop.f32.mrb[0].mxu0
      %v1245 = vadd.f32 %v1036, %v1244
      %v1246 = vpop.f32.mrb[0].mxu0
      %v1247 = vpop.f32.mrb[0].mxu0
      %v1248 = vadd.f32 %v1039, %v1247
      %v1249 = vpop.f32.mrb[0].mxu0
      %1250 = vmatprep.mubr.bf16.mxu0 0
      %1251 = vmatmul.mubr.bf16.gmra.mrb[0].mxu0 %v812
      %v1252 = vpop.f32.mrb[0].mxu0
      %v1253 = vadd.f32 %v1044, %v1252
      %v1254 = vpop.f32.mrb[0].mxu0
      %v1255 = vpop.f32.mrb[0].mxu0
      %v1256 = vadd.f32 %v1047, %v1255
      %v1257 = vpop.f32.mrb[0].mxu0
      %1258 = vmatprep.mubr.bf16.mxu0 0
      %1259 = vmatmul.mubr.bf16.gmra.mrb[0].mxu0 %v813
      %v1260 = vpop.f32.mrb[0].mxu0
      %v1261 = vadd.f32 %v1052, %v1260
      %v1262 = vpop.f32.mrb[0].mxu0
      %v1263 = vpop.f32.mrb[0].mxu0
      %v1264 = vadd.f32 %v1055, %v1263
      %v1265 = vpop.f32.mrb[0].mxu0
      %1266 = vmatprep.mubr.bf16.mxu0 0
      %1267 = vmatmul.mubr.bf16.gmra.mrb[0].mxu0 %v814
      %v1268 = vpop.f32.mrb[0].mxu0
      %v1269 = vadd.f32 %v1060, %v1268
      %v1270 = vpop.f32.mrb[0].mxu0
      %v1271 = vpop.f32.mrb[0].mxu0
      %v1272 = vadd.f32 %v1063, %v1271
      %v1273 = vpop.f32.mrb[0].mxu0
      %1274 = vmatprep.mubr.bf16.mxu0 0
      %1275 = vmatmul.mubr.bf16.gmra.mrb[0].mxu0 %v815
      %v1276 = vpop.f32.mrb[0].mxu0
      %v1277 = vadd.f32 %v1068, %v1276
      %v1278 = vpop.f32.mrb[0].mxu0
      %v1279 = vpop.f32.mrb[0].mxu0
      %v1280 = vadd.f32 %v1071, %v1279
      %v1281 = vpop.f32.mrb[0].mxu0
      %1282 = vdwg.mxu0
      %v1283 = vpack.c.bf16 %v782, %v694
      %v1284 = vpack.c.bf16 %v783, %v697
      %v1285 = vpack.c.bf16 %v784, %v700
      %v1286 = vpack.c.bf16 %v785, %v703
      %v1287 = vpack.c.bf16 %v786, %v706
      %v1288 = vpack.c.bf16 %v787, %v709
      %v1289 = vpack.c.bf16 %v788, %v712
      %v1290 = vpack.c.bf16 %v789, %v715
      %v1291 = vpack.c.bf16 %v790, %v718
      %v1292 = vpack.c.bf16 %v791, %v721
      %v1293 = vpack.c.bf16 %v792, %v724
      %v1294 = vpack.c.bf16 %v793, %v727
      %v1295 = vpack.c.bf16 %v794, %v730
      %v1296 = vpack.c.bf16 %v795, %v733
      %v1297 = vpack.c.bf16 %v796, %v736
      %v1298 = vpack.c.bf16 %v797, %v739
      %s1299 = scalar_lea.vmem %s3, 128
      %v1300 = vld [vmem:[%s1299] sm:$0xf]
      %v1301 = vld [vmem:[%s1299 + $0x4] sm:$0xf]
      %v1302 = vld [vmem:[%s1299 + $0x8] sm:$0xf]
      %v1303 = vld [vmem:[%s1299 + $0xc] sm:$0xf]
      %v1304 = vld [vmem:[%s1299 + $0x10] sm:$0xf]
      %v1305 = vld [vmem:[%s1299 + $0x14] sm:$0xf]
      %v1306 = vld [vmem:[%s1299 + $0x18] sm:$0xf]
      %v1307 = vld [vmem:[%s1299 + $0x1c] sm:$0xf]
      %v1308 = vld [vmem:[%s1299 + $0x20] sm:$0xf]
      %v1309 = vld [vmem:[%s1299 + $0x24] sm:$0xf]
      %v1310 = vld [vmem:[%s1299 + $0x28] sm:$0xf]
      %v1311 = vld [vmem:[%s1299 + $0x2c] sm:$0xf]
      %v1312 = vld [vmem:[%s1299 + $0x30] sm:$0xf]
      %v1313 = vld [vmem:[%s1299 + $0x34] sm:$0xf]
      %v1314 = vld [vmem:[%s1299 + $0x38] sm:$0xf]
      %v1315 = vld [vmem:[%s1299 + $0x3c] sm:$0xf]
      %v1332 = vunpack.c.l.b16 %v1300
      %v1333 = vunpack.c.l.b16 %v1301
      %v1334 = vunpack.c.l.b16 %v1302
      %v1335 = vunpack.c.l.b16 %v1303
      %v1336 = vunpack.c.l.b16 %v1304
      %v1337 = vunpack.c.l.b16 %v1305
      %v1338 = vunpack.c.l.b16 %v1306
      %v1339 = vunpack.c.l.b16 %v1307
      %v1340 = vunpack.c.l.b16 %v1308
      %v1341 = vunpack.c.l.b16 %v1309
      %v1342 = vunpack.c.l.b16 %v1310
      %v1343 = vunpack.c.l.b16 %v1311
      %v1344 = vunpack.c.l.b16 %v1312
      %v1345 = vunpack.c.l.b16 %v1313
      %v1346 = vunpack.c.l.b16 %v1314
      %v1347 = vunpack.c.l.b16 %v1315
      %v1348 = vpack.c.b16 %v1333, %v1332
      %v1349 = vpack.c.b16 %v1335, %v1334
      %v1350 = vpack.c.b16 %v1337, %v1336
      %v1351 = vpack.c.b16 %v1339, %v1338
      %v1352 = vpack.c.b16 %v1341, %v1340
      %v1353 = vpack.c.b16 %v1343, %v1342
      %v1354 = vpack.c.b16 %v1345, %v1344
      %v1355 = vpack.c.b16 %v1347, %v1346
      %1364 = vmatprep.subr.bf16.mxu0 0
      %1365 = vmatpush1.bf16.msra.mxu0 %v1348
      %1366 = vmatprep.subr.bf16.mxu0 0
      %1367 = vmatpush1.bf16.msra.mxu0 %v1349
      %1368 = vmatprep.subr.bf16.mxu0 0
      %1369 = vmatpush1.bf16.msra.mxu0 %v1350
      %1370 = vmatprep.subr.bf16.mxu0 0
      %1371 = vmatpush1.bf16.msra.mxu0 %v1351
      %1372 = vmatprep.subr.bf16.mxu0 0
      %1373 = vmatpush1.bf16.msra.mxu0 %v1352
      %1374 = vmatprep.subr.bf16.mxu0 0
      %1375 = vmatpush1.bf16.msra.mxu0 %v1353
      %1376 = vmatprep.subr.bf16.mxu0 0
      %1377 = vmatpush1.bf16.msra.mxu0 %v1354
      %1378 = vmatprep.subr.bf16.mxu0 0
      %1379 = vmatpush1.bf16.msra.mxu0 %v1355
      %1380 = vmatprep.subr.bf16.mxu0 0
      %1381 = vmatpush1.bf16.msra.mxu0 0
      %1382 = vmatprep.subr.bf16.mxu0 0
      %1383 = vmatpush1.bf16.msra.mxu0 0
      %1384 = vmatprep.subr.bf16.mxu0 0
      %1385 = vmatpush1.bf16.msra.mxu0 0
      %1386 = vmatprep.subr.bf16.mxu0 0
      %1387 = vmatpush1.bf16.msra.mxu0 0
      %1388 = vmatprep.subr.bf16.mxu0 0
      %1389 = vmatpush1.bf16.msra.mxu0 0
      %1390 = vmatprep.subr.bf16.mxu0 0
      %1391 = vmatpush1.bf16.msra.mxu0 0
      %1392 = vmatprep.subr.bf16.mxu0 0
      %1393 = vmatpush1.bf16.msra.mxu0 0
      %1394 = vmatprep.subr.bf16.mxu0 0
      %1395 = vmatpush1.bf16.msra.mxu0 0
      %1396 = vmatprep.mubr.bf16.mxu0 0
      %1397 = vmatmul.mubr.bf16.gmra.mrb[0].mxu0 %v1283
      %v1398 = vpop.f32.mrb[0].mxu0
      %v1399 = vadd.f32 0.0, %v1398
      %v1400 = vpop.f32.mrb[0].mxu0
      %v1401 = vpop.f32.mrb[0].mxu0
      %v1402 = vadd.f32 0.0, %v1401
      %v1403 = vpop.f32.mrb[0].mxu0
      %1404 = vmatprep.mubr.bf16.mxu0 0
      %1405 = vmatmul.mubr.bf16.gmra.mrb[0].mxu0 %v1284
      %v1406 = vpop.f32.mrb[0].mxu0
      %v1407 = vadd.f32 0.0, %v1406
      %v1408 = vpop.f32.mrb[0].mxu0
      %v1409 = vpop.f32.mrb[0].mxu0
      %v1410 = vadd.f32 0.0, %v1409
      %v1411 = vpop.f32.mrb[0].mxu0
      %1412 = vmatprep.mubr.bf16.mxu0 0
      %1413 = vmatmul.mubr.bf16.gmra.mrb[0].mxu0 %v1285
      %v1414 = vpop.f32.mrb[0].mxu0
      %v1415 = vadd.f32 0.0, %v1414
      %v1416 = vpop.f32.mrb[0].mxu0
      %v1417 = vpop.f32.mrb[0].mxu0
      %v1418 = vadd.f32 0.0, %v1417
      %v1419 = vpop.f32.mrb[0].mxu0
      %1420 = vmatprep.mubr.bf16.mxu0 0
      %1421 = vmatmul.mubr.bf16.gmra.mrb[0].mxu0 %v1286
      %v1422 = vpop.f32.mrb[0].mxu0
      %v1423 = vadd.f32 0.0, %v1422
      %v1424 = vpop.f32.mrb[0].mxu0
      %v1425 = vpop.f32.mrb[0].mxu0
      %v1426 = vadd.f32 0.0, %v1425
      %v1427 = vpop.f32.mrb[0].mxu0
      %1428 = vmatprep.mubr.bf16.mxu0 0
      %1429 = vmatmul.mubr.bf16.gmra.mrb[0].mxu0 %v1287
      %v1430 = vpop.f32.mrb[0].mxu0
      %v1431 = vadd.f32 0.0, %v1430
      %v1432 = vpop.f32.mrb[0].mxu0
      %v1433 = vpop.f32.mrb[0].mxu0
      %v1434 = vadd.f32 0.0, %v1433
      %v1435 = vpop.f32.mrb[0].mxu0
      %1436 = vmatprep.mubr.bf16.mxu0 0
      %1437 = vmatmul.mubr.bf16.gmra.mrb[0].mxu0 %v1288
      %v1438 = vpop.f32.mrb[0].mxu0
      %v1439 = vadd.f32 0.0, %v1438
      %v1440 = vpop.f32.mrb[0].mxu0
      %v1441 = vpop.f32.mrb[0].mxu0
      %v1442 = vadd.f32 0.0, %v1441
      %v1443 = vpop.f32.mrb[0].mxu0
      %1444 = vmatprep.mubr.bf16.mxu0 0
      %1445 = vmatmul.mubr.bf16.gmra.mrb[0].mxu0 %v1289
      %v1446 = vpop.f32.mrb[0].mxu0
      %v1447 = vadd.f32 0.0, %v1446
      %v1448 = vpop.f32.mrb[0].mxu0
      %v1449 = vpop.f32.mrb[0].mxu0
      %v1450 = vadd.f32 0.0, %v1449
      %v1451 = vpop.f32.mrb[0].mxu0
      %1452 = vmatprep.mubr.bf16.mxu0 0
      %1453 = vmatmul.mubr.bf16.gmra.mrb[0].mxu0 %v1290
      %v1454 = vpop.f32.mrb[0].mxu0
      %v1455 = vadd.f32 0.0, %v1454
      %v1456 = vpop.f32.mrb[0].mxu0
      %v1457 = vpop.f32.mrb[0].mxu0
      %v1458 = vadd.f32 0.0, %v1457
      %v1459 = vpop.f32.mrb[0].mxu0
      %1460 = vmatprep.mubr.bf16.mxu0 0
      %1461 = vmatmul.mubr.bf16.gmra.mrb[0].mxu0 %v1291
      %v1462 = vpop.f32.mrb[0].mxu0
      %v1463 = vadd.f32 0.0, %v1462
      %v1464 = vpop.f32.mrb[0].mxu0
      %v1465 = vpop.f32.mrb[0].mxu0
      %v1466 = vadd.f32 0.0, %v1465
      %v1467 = vpop.f32.mrb[0].mxu0
      %1468 = vmatprep.mubr.bf16.mxu0 0
      %1469 = vmatmul.mubr.bf16.gmra.mrb[0].mxu0 %v1292
      %v1470 = vpop.f32.mrb[0].mxu0
      %v1471 = vadd.f32 0.0, %v1470
      %v1472 = vpop.f32.mrb[0].mxu0
      %v1473 = vpop.f32.mrb[0].mxu0
      %v1474 = vadd.f32 0.0, %v1473
      %v1475 = vpop.f32.mrb[0].mxu0
      %1476 = vmatprep.mubr.bf16.mxu0 0
      %1477 = vmatmul.mubr.bf16.gmra.mrb[0].mxu0 %v1293
      %v1478 = vpop.f32.mrb[0].mxu0
      %v1479 = vadd.f32 0.0, %v1478
      %v1480 = vpop.f32.mrb[0].mxu0
      %v1481 = vpop.f32.mrb[0].mxu0
      %v1482 = vadd.f32 0.0, %v1481
      %v1483 = vpop.f32.mrb[0].mxu0
      %1484 = vmatprep.mubr.bf16.mxu0 0
      %1485 = vmatmul.mubr.bf16.gmra.mrb[0].mxu0 %v1294
      %v1486 = vpop.f32.mrb[0].mxu0
      %v1487 = vadd.f32 0.0, %v1486
      %v1488 = vpop.f32.mrb[0].mxu0
      %v1489 = vpop.f32.mrb[0].mxu0
      %v1490 = vadd.f32 0.0, %v1489
      %v1491 = vpop.f32.mrb[0].mxu0
      %1492 = vmatprep.mubr.bf16.mxu0 0
      %1493 = vmatmul.mubr.bf16.gmra.mrb[0].mxu0 %v1295
      %v1494 = vpop.f32.mrb[0].mxu0
      %v1495 = vadd.f32 0.0, %v1494
      %v1496 = vpop.f32.mrb[0].mxu0
      %v1497 = vpop.f32.mrb[0].mxu0
      %v1498 = vadd.f32 0.0, %v1497
      %v1499 = vpop.f32.mrb[0].mxu0
      %1500 = vmatprep.mubr.bf16.mxu0 0
      %1501 = vmatmul.mubr.bf16.gmra.mrb[0].mxu0 %v1296
      %v1502 = vpop.f32.mrb[0].mxu0
      %v1503 = vadd.f32 0.0, %v1502
      %v1504 = vpop.f32.mrb[0].mxu0
      %v1505 = vpop.f32.mrb[0].mxu0
      %v1506 = vadd.f32 0.0, %v1505
      %v1507 = vpop.f32.mrb[0].mxu0
      %1508 = vmatprep.mubr.bf16.mxu0 0
      %1509 = vmatmul.mubr.bf16.gmra.mrb[0].mxu0 %v1297
      %v1510 = vpop.f32.mrb[0].mxu0
      %v1511 = vadd.f32 0.0, %v1510
      %v1512 = vpop.f32.mrb[0].mxu0
      %v1513 = vpop.f32.mrb[0].mxu0
      %v1514 = vadd.f32 0.0, %v1513
      %v1515 = vpop.f32.mrb[0].mxu0
      %1516 = vmatprep.mubr.bf16.mxu0 0
      %1517 = vmatmul.mubr.bf16.gmra.mrb[0].mxu0 %v1298
      %v1518 = vpop.f32.mrb[0].mxu0
      %v1519 = vadd.f32 0.0, %v1518
      %v1520 = vpop.f32.mrb[0].mxu0
      %v1521 = vpop.f32.mrb[0].mxu0
      %v1522 = vadd.f32 0.0, %v1521
      %v1523 = vpop.f32.mrb[0].mxu0
      %1524 = vdwg.mxu0
      %v1525 = vadd.f32 %v1157, %v1399
      %v1526 = vadd.f32 %v1160, %v1402
      %v1527 = vadd.f32 %v1165, %v1407
      %v1528 = vadd.f32 %v1168, %v1410
      %v1529 = vadd.f32 %v1173, %v1415
      %v1530 = vadd.f32 %v1176, %v1418
      %v1531 = vadd.f32 %v1181, %v1423
      %v1532 = vadd.f32 %v1184, %v1426
      %v1533 = vadd.f32 %v1189, %v1431
      %v1534 = vadd.f32 %v1192, %v1434
      %v1535 = vadd.f32 %v1197, %v1439
      %v1536 = vadd.f32 %v1200, %v1442
      %v1537 = vadd.f32 %v1205, %v1447
      %v1538 = vadd.f32 %v1208, %v1450
      %v1539 = vadd.f32 %v1213, %v1455
      %v1540 = vadd.f32 %v1216, %v1458
      %v1541 = vadd.f32 %v1221, %v1463
      %v1542 = vadd.f32 %v1224, %v1466
      %v1543 = vadd.f32 %v1229, %v1471
      %v1544 = vadd.f32 %v1232, %v1474
      %v1545 = vadd.f32 %v1237, %v1479
      %v1546 = vadd.f32 %v1240, %v1482
      %v1547 = vadd.f32 %v1245, %v1487
      %v1548 = vadd.f32 %v1248, %v1490
      %v1549 = vadd.f32 %v1253, %v1495
      %v1550 = vadd.f32 %v1256, %v1498
      %v1551 = vadd.f32 %v1261, %v1503
      %v1552 = vadd.f32 %v1264, %v1506
      %v1553 = vadd.f32 %v1269, %v1511
      %v1554 = vadd.f32 %v1272, %v1514
      %v1555 = vadd.f32 %v1277, %v1519
      %v1556 = vadd.f32 %v1280, %v1522
      %v1557 = vpack.c.bf16 %v633, %v689
      %s1558 = scalar_lea.vmem %s3, 192
      %v1559 = vld [vmem:[%s1558] sm:$0xf]
      %v1560 = vld [vmem:[%s1558 + $0x4] sm:$0xf]
      %v1561 = vld [vmem:[%s1558 + $0x8] sm:$0xf]
      %v1562 = vld [vmem:[%s1558 + $0xc] sm:$0xf]
      %v1563 = vld [vmem:[%s1558 + $0x10] sm:$0xf]
      %v1564 = vld [vmem:[%s1558 + $0x14] sm:$0xf]
      %v1565 = vld [vmem:[%s1558 + $0x18] sm:$0xf]
      %v1566 = vld [vmem:[%s1558 + $0x1c] sm:$0xf]
      %v1567 = vld [vmem:[%s1558 + $0x20] sm:$0xf]
      %v1568 = vld [vmem:[%s1558 + $0x24] sm:$0xf]
      %v1569 = vld [vmem:[%s1558 + $0x28] sm:$0xf]
      %v1570 = vld [vmem:[%s1558 + $0x2c] sm:$0xf]
      %v1571 = vld [vmem:[%s1558 + $0x30] sm:$0xf]
      %v1572 = vld [vmem:[%s1558 + $0x34] sm:$0xf]
      %v1573 = vld [vmem:[%s1558 + $0x38] sm:$0xf]
      %v1574 = vld [vmem:[%s1558 + $0x3c] sm:$0xf]
      %v1591 = vunpack.c.l.b16 %v1559
      %v1592 = vunpack.c.l.b16 %v1560
      %v1593 = vunpack.c.l.b16 %v1561
      %v1594 = vunpack.c.l.b16 %v1562
      %v1595 = vunpack.c.l.b16 %v1563
      %v1596 = vunpack.c.l.b16 %v1564
      %v1597 = vunpack.c.l.b16 %v1565
      %v1598 = vunpack.c.l.b16 %v1566
      %v1599 = vunpack.c.l.b16 %v1567
      %v1600 = vunpack.c.l.b16 %v1568
      %v1601 = vunpack.c.l.b16 %v1569
      %v1602 = vunpack.c.l.b16 %v1570
      %v1603 = vunpack.c.l.b16 %v1571
      %v1604 = vunpack.c.l.b16 %v1572
      %v1605 = vunpack.c.l.b16 %v1573
      %v1606 = vunpack.c.l.b16 %v1574
      %v1607 = vpack.c.b16 %v1592, %v1591
      %v1608 = vpack.c.b16 %v1594, %v1593
      %v1609 = vpack.c.b16 %v1596, %v1595
      %v1610 = vpack.c.b16 %v1598, %v1597
      %v1611 = vpack.c.b16 %v1600, %v1599
      %v1612 = vpack.c.b16 %v1602, %v1601
      %v1613 = vpack.c.b16 %v1604, %v1603
      %v1614 = vpack.c.b16 %v1606, %v1605
      %1623 = vmatprep.subr.bf16.mxu0 0
      %1624 = vmatpush1.bf16.msra.mxu0 %v1607
      %1625 = vmatprep.subr.bf16.mxu0 0
      %1626 = vmatpush1.bf16.msra.mxu0 %v1608
      %1627 = vmatprep.subr.bf16.mxu0 0
      %1628 = vmatpush1.bf16.msra.mxu0 %v1609
      %1629 = vmatprep.subr.bf16.mxu0 0
      %1630 = vmatpush1.bf16.msra.mxu0 %v1610
      %1631 = vmatprep.subr.bf16.mxu0 0
      %1632 = vmatpush1.bf16.msra.mxu0 %v1611
      %1633 = vmatprep.subr.bf16.mxu0 0
      %1634 = vmatpush1.bf16.msra.mxu0 %v1612
      %1635 = vmatprep.subr.bf16.mxu0 0
      %1636 = vmatpush1.bf16.msra.mxu0 %v1613
      %1637 = vmatprep.subr.bf16.mxu0 0
      %1638 = vmatpush1.bf16.msra.mxu0 %v1614
      %1639 = vmatprep.subr.bf16.mxu0 0
      %1640 = vmatpush1.bf16.msra.mxu0 0
      %1641 = vmatprep.subr.bf16.mxu0 0
      %1642 = vmatpush1.bf16.msra.mxu0 0
      %1643 = vmatprep.subr.bf16.mxu0 0
      %1644 = vmatpush1.bf16.msra.mxu0 0
      %1645 = vmatprep.subr.bf16.mxu0 0
      %1646 = vmatpush1.bf16.msra.mxu0 0
      %1647 = vmatprep.subr.bf16.mxu0 0
      %1648 = vmatpush1.bf16.msra.mxu0 0
      %1649 = vmatprep.subr.bf16.mxu0 0
      %1650 = vmatpush1.bf16.msra.mxu0 0
      %1651 = vmatprep.subr.bf16.mxu0 0
      %1652 = vmatpush1.bf16.msra.mxu0 0
      %1653 = vmatprep.subr.bf16.mxu0 0
      %1654 = vmatpush1.bf16.msra.mxu0 0
      %1655 = vmatprep.mubr.bf16.mxu0 0
      %1656 = vmatmul.mubr.bf16.gmra.mrb[0].mxu0 %v801
      %v1657 = vpop.f32.mrb[0].mxu0
      %v1658 = vadd.f32 0.0, %v1657
      %v1659 = vpop.f32.mrb[0].mxu0
      %v1660 = vpop.f32.mrb[0].mxu0
      %v1661 = vadd.f32 0.0, %v1660
      %v1662 = vpop.f32.mrb[0].mxu0
      %1663 = vmatprep.mubr.bf16.mxu0 0
      %1664 = vmatmul.mubr.bf16.gmra.mrb[0].mxu0 %v802
      %v1665 = vpop.f32.mrb[0].mxu0
      %v1666 = vadd.f32 0.0, %v1665
      %v1667 = vpop.f32.mrb[0].mxu0
      %v1668 = vpop.f32.mrb[0].mxu0
      %v1669 = vadd.f32 0.0, %v1668
      %v1670 = vpop.f32.mrb[0].mxu0
      %1671 = vmatprep.mubr.bf16.mxu0 0
      %1672 = vmatmul.mubr.bf16.gmra.mrb[0].mxu0 %v803
      %v1673 = vpop.f32.mrb[0].mxu0
      %v1674 = vadd.f32 0.0, %v1673
      %v1675 = vpop.f32.mrb[0].mxu0
      %v1676 = vpop.f32.mrb[0].mxu0
      %v1677 = vadd.f32 0.0, %v1676
      %v1678 = vpop.f32.mrb[0].mxu0
      %1679 = vmatprep.mubr.bf16.mxu0 0
      %1680 = vmatmul.mubr.bf16.gmra.mrb[0].mxu0 %v804
      %v1681 = vpop.f32.mrb[0].mxu0
      %v1682 = vadd.f32 0.0, %v1681
      %v1683 = vpop.f32.mrb[0].mxu0
      %v1684 = vpop.f32.mrb[0].mxu0
      %v1685 = vadd.f32 0.0, %v1684
      %v1686 = vpop.f32.mrb[0].mxu0
      %1687 = vmatprep.mubr.bf16.mxu0 0
      %1688 = vmatmul.mubr.bf16.gmra.mrb[0].mxu0 %v805
      %v1689 = vpop.f32.mrb[0].mxu0
      %v1690 = vadd.f32 0.0, %v1689
      %v1691 = vpop.f32.mrb[0].mxu0
      %v1692 = vpop.f32.mrb[0].mxu0
      %v1693 = vadd.f32 0.0, %v1692
      %v1694 = vpop.f32.mrb[0].mxu0
      %1695 = vmatprep.mubr.bf16.mxu0 0
      %1696 = vmatmul.mubr.bf16.gmra.mrb[0].mxu0 %v806
      %v1697 = vpop.f32.mrb[0].mxu0
      %v1698 = vadd.f32 0.0, %v1697
      %v1699 = vpop.f32.mrb[0].mxu0
      %v1700 = vpop.f32.mrb[0].mxu0
      %v1701 = vadd.f32 0.0, %v1700
      %v1702 = vpop.f32.mrb[0].mxu0
      %1703 = vmatprep.mubr.bf16.mxu0 0
      %1704 = vmatmul.mubr.bf16.gmra.mrb[0].mxu0 %v807
      %v1705 = vpop.f32.mrb[0].mxu0
      %v1706 = vadd.f32 0.0, %v1705
      %v1707 = vpop.f32.mrb[0].mxu0
      %v1708 = vpop.f32.mrb[0].mxu0
      %v1709 = vadd.f32 0.0, %v1708
      %v1710 = vpop.f32.mrb[0].mxu0
      %1711 = vmatprep.mubr.bf16.mxu0 0
      %1712 = vmatmul.mubr.bf16.gmra.mrb[0].mxu0 %v808
      %v1713 = vpop.f32.mrb[0].mxu0
      %v1714 = vadd.f32 0.0, %v1713
      %v1715 = vpop.f32.mrb[0].mxu0
      %v1716 = vpop.f32.mrb[0].mxu0
      %v1717 = vadd.f32 0.0, %v1716
      %v1718 = vpop.f32.mrb[0].mxu0
      %1719 = vmatprep.mubr.bf16.mxu0 0
      %1720 = vmatmul.mubr.bf16.gmra.mrb[0].mxu0 %v809
      %v1721 = vpop.f32.mrb[0].mxu0
      %v1722 = vadd.f32 0.0, %v1721
      %v1723 = vpop.f32.mrb[0].mxu0
      %v1724 = vpop.f32.mrb[0].mxu0
      %v1725 = vadd.f32 0.0, %v1724
      %v1726 = vpop.f32.mrb[0].mxu0
      %1727 = vmatprep.mubr.bf16.mxu0 0
      %1728 = vmatmul.mubr.bf16.gmra.mrb[0].mxu0 %v810
      %v1729 = vpop.f32.mrb[0].mxu0
      %v1730 = vadd.f32 0.0, %v1729
      %v1731 = vpop.f32.mrb[0].mxu0
      %v1732 = vpop.f32.mrb[0].mxu0
      %v1733 = vadd.f32 0.0, %v1732
      %v1734 = vpop.f32.mrb[0].mxu0
      %1735 = vmatprep.mubr.bf16.mxu0 0
      %1736 = vmatmul.mubr.bf16.gmra.mrb[0].mxu0 %v811
      %v1737 = vpop.f32.mrb[0].mxu0
      %v1738 = vadd.f32 0.0, %v1737
      %v1739 = vpop.f32.mrb[0].mxu0
      %v1740 = vpop.f32.mrb[0].mxu0
      %v1741 = vadd.f32 0.0, %v1740
      %v1742 = vpop.f32.mrb[0].mxu0
      %1743 = vmatprep.mubr.bf16.mxu0 0
      %1744 = vmatmul.mubr.bf16.gmra.mrb[0].mxu0 %v812
      %v1745 = vpop.f32.mrb[0].mxu0
      %v1746 = vadd.f32 0.0, %v1745
      %v1747 = vpop.f32.mrb[0].mxu0
      %v1748 = vpop.f32.mrb[0].mxu0
      %v1749 = vadd.f32 0.0, %v1748
      %v1750 = vpop.f32.mrb[0].mxu0
      %1751 = vmatprep.mubr.bf16.mxu0 0
      %1752 = vmatmul.mubr.bf16.gmra.mrb[0].mxu0 %v813
      %v1753 = vpop.f32.mrb[0].mxu0
      %v1754 = vadd.f32 0.0, %v1753
      %v1755 = vpop.f32.mrb[0].mxu0
      %v1756 = vpop.f32.mrb[0].mxu0
      %v1757 = vadd.f32 0.0, %v1756
      %v1758 = vpop.f32.mrb[0].mxu0
      %1759 = vmatprep.mubr.bf16.mxu0 0
      %1760 = vmatmul.mubr.bf16.gmra.mrb[0].mxu0 %v814
      %v1761 = vpop.f32.mrb[0].mxu0
      %v1762 = vadd.f32 0.0, %v1761
      %v1763 = vpop.f32.mrb[0].mxu0
      %v1764 = vpop.f32.mrb[0].mxu0
      %v1765 = vadd.f32 0.0, %v1764
      %v1766 = vpop.f32.mrb[0].mxu0
      %1767 = vmatprep.mubr.bf16.mxu0 0
      %1768 = vmatmul.mubr.bf16.gmra.mrb[0].mxu0 %v815
      %v1769 = vpop.f32.mrb[0].mxu0
      %v1770 = vadd.f32 0.0, %v1769
      %v1771 = vpop.f32.mrb[0].mxu0
      %v1772 = vpop.f32.mrb[0].mxu0
      %v1773 = vadd.f32 0.0, %v1772
      %v1774 = vpop.f32.mrb[0].mxu0
      %1775 = vmatprep.mubr.bf16.mxu0 0
      %1776 = vmatmul.mubr.bf16.gmra.mrb[0].mxu0 %v1557
      %v1777 = vpop.f32.mrb[0].mxu0
      %v1778 = vadd.f32 0.0, %v1777
      %v1779 = vpop.f32.mrb[0].mxu0
      %v1780 = vpop.f32.mrb[0].mxu0
      %v1781 = vadd.f32 0.0, %v1780
      %v1782 = vpop.f32.mrb[0].mxu0
      %1783 = vdwg.mxu0
      %v1784 = vadd.f32 %v1525, %v1658
      %v1785 = vadd.f32 %v1526, %v1661
      %v1786 = vadd.f32 %v1527, %v1666
      %v1787 = vadd.f32 %v1528, %v1669
      %v1788 = vadd.f32 %v1529, %v1674
      %v1789 = vadd.f32 %v1530, %v1677
      %v1790 = vadd.f32 %v1531, %v1682
      %v1791 = vadd.f32 %v1532, %v1685
      %v1792 = vadd.f32 %v1533, %v1690
      %v1793 = vadd.f32 %v1534, %v1693
      %v1794 = vadd.f32 %v1535, %v1698
      %v1795 = vadd.f32 %v1536, %v1701
      %v1796 = vadd.f32 %v1537, %v1706
      %v1797 = vadd.f32 %v1538, %v1709
      %v1798 = vadd.f32 %v1539, %v1714
      %v1799 = vadd.f32 %v1540, %v1717
      %v1800 = vadd.f32 %v1541, %v1722
      %v1801 = vadd.f32 %v1542, %v1725
      %v1802 = vadd.f32 %v1543, %v1730
      %v1803 = vadd.f32 %v1544, %v1733
      %v1804 = vadd.f32 %v1545, %v1738
      %v1805 = vadd.f32 %v1546, %v1741
      %v1806 = vadd.f32 %v1547, %v1746
      %v1807 = vadd.f32 %v1548, %v1749
      %v1808 = vadd.f32 %v1549, %v1754
      %v1809 = vadd.f32 %v1550, %v1757
      %v1810 = vadd.f32 %v1551, %v1762
      %v1811 = vadd.f32 %v1552, %v1765
      %v1812 = vadd.f32 %v1553, %v1770
      %v1813 = vadd.f32 %v1554, %v1773
      %v1814 = vadd.f32 %v1555, %v1778
      %v1815 = vadd.f32 %v1556, %v1781
      %v1816 = vpack.c.bf16 %v530, %v529
      %s1817 = scalar_lea.vmem %s3, 256
      %v1818 = vld [vmem:[%s1817] sm:$0xf]
      %v1819 = vld [vmem:[%s1817 + $0x4] sm:$0xf]
      %v1820 = vld [vmem:[%s1817 + $0x8] sm:$0xf]
      %v1821 = vld [vmem:[%s1817 + $0xc] sm:$0xf]
      %v1822 = vld [vmem:[%s1817 + $0x10] sm:$0xf]
      %v1823 = vld [vmem:[%s1817 + $0x14] sm:$0xf]
      %v1824 = vld [vmem:[%s1817 + $0x18] sm:$0xf]
      %v1825 = vld [vmem:[%s1817 + $0x1c] sm:$0xf]
      %v1826 = vld [vmem:[%s1817 + $0x20] sm:$0xf]
      %v1827 = vld [vmem:[%s1817 + $0x24] sm:$0xf]
      %v1828 = vld [vmem:[%s1817 + $0x28] sm:$0xf]
      %v1829 = vld [vmem:[%s1817 + $0x2c] sm:$0xf]
      %v1830 = vld [vmem:[%s1817 + $0x30] sm:$0xf]
      %v1831 = vld [vmem:[%s1817 + $0x34] sm:$0xf]
      %v1832 = vld [vmem:[%s1817 + $0x38] sm:$0xf]
      %v1833 = vld [vmem:[%s1817 + $0x3c] sm:$0xf]
      %v1850 = vunpack.c.l.b16 %v1818
      %v1851 = vunpack.c.l.b16 %v1819
      %v1852 = vunpack.c.l.b16 %v1820
      %v1853 = vunpack.c.l.b16 %v1821
      %v1854 = vunpack.c.l.b16 %v1822
      %v1855 = vunpack.c.l.b16 %v1823
      %v1856 = vunpack.c.l.b16 %v1824
      %v1857 = vunpack.c.l.b16 %v1825
      %v1858 = vunpack.c.l.b16 %v1826
      %v1859 = vunpack.c.l.b16 %v1827
      %v1860 = vunpack.c.l.b16 %v1828
      %v1861 = vunpack.c.l.b16 %v1829
      %v1862 = vunpack.c.l.b16 %v1830
      %v1863 = vunpack.c.l.b16 %v1831
      %v1864 = vunpack.c.l.b16 %v1832
      %v1865 = vunpack.c.l.b16 %v1833
      %v1866 = vpack.c.b16 %v1851, %v1850
      %v1867 = vpack.c.b16 %v1853, %v1852
      %v1868 = vpack.c.b16 %v1855, %v1854
      %v1869 = vpack.c.b16 %v1857, %v1856
      %v1870 = vpack.c.b16 %v1859, %v1858
      %v1871 = vpack.c.b16 %v1861, %v1860
      %v1872 = vpack.c.b16 %v1863, %v1862
      %v1873 = vpack.c.b16 %v1865, %v1864
      %1882 = vmatprep.subr.bf16.mxu0 0
      %1883 = vmatpush1.bf16.msra.mxu0 %v1866
      %1884 = vmatprep.subr.bf16.mxu0 0
      %1885 = vmatpush1.bf16.msra.mxu0 %v1867
      %1886 = vmatprep.subr.bf16.mxu0 0
      %1887 = vmatpush1.bf16.msra.mxu0 %v1868
      %1888 = vmatprep.subr.bf16.mxu0 0
      %1889 = vmatpush1.bf16.msra.mxu0 %v1869
      %1890 = vmatprep.subr.bf16.mxu0 0
      %1891 = vmatpush1.bf16.msra.mxu0 %v1870
      %1892 = vmatprep.subr.bf16.mxu0 0
      %1893 = vmatpush1.bf16.msra.mxu0 %v1871
      %1894 = vmatprep.subr.bf16.mxu0 0
      %1895 = vmatpush1.bf16.msra.mxu0 %v1872
      %1896 = vmatprep.subr.bf16.mxu0 0
      %1897 = vmatpush1.bf16.msra.mxu0 %v1873
      %1898 = vmatprep.subr.bf16.mxu0 0
      %1899 = vmatpush1.bf16.msra.mxu0 0
      %1900 = vmatprep.subr.bf16.mxu0 0
      %1901 = vmatpush1.bf16.msra.mxu0 0
      %1902 = vmatprep.subr.bf16.mxu0 0
      %1903 = vmatpush1.bf16.msra.mxu0 0
      %1904 = vmatprep.subr.bf16.mxu0 0
      %1905 = vmatpush1.bf16.msra.mxu0 0
      %1906 = vmatprep.subr.bf16.mxu0 0
      %1907 = vmatpush1.bf16.msra.mxu0 0
      %1908 = vmatprep.subr.bf16.mxu0 0
      %1909 = vmatpush1.bf16.msra.mxu0 0
      %1910 = vmatprep.subr.bf16.mxu0 0
      %1911 = vmatpush1.bf16.msra.mxu0 0
      %1912 = vmatprep.subr.bf16.mxu0 0
      %1913 = vmatpush1.bf16.msra.mxu0 0
      %1914 = vmatprep.mubr.bf16.mxu0 0
      %1915 = vmatmul.mubr.bf16.gmra.mrb[0].mxu0 %v833
      %v1916 = vpop.f32.mrb[0].mxu0
      %v1917 = vadd.f32 0.0, %v1916
      %v1918 = vpop.f32.mrb[0].mxu0
      %v1919 = vpop.f32.mrb[0].mxu0
      %v1920 = vadd.f32 0.0, %v1919
      %v1921 = vpop.f32.mrb[0].mxu0
      %1922 = vmatprep.mubr.bf16.mxu0 0
      %1923 = vmatmul.mubr.bf16.gmra.mrb[0].mxu0 %v834
      %v1924 = vpop.f32.mrb[0].mxu0
      %v1925 = vadd.f32 0.0, %v1924
      %v1926 = vpop.f32.mrb[0].mxu0
      %v1927 = vpop.f32.mrb[0].mxu0
      %v1928 = vadd.f32 0.0, %v1927
      %v1929 = vpop.f32.mrb[0].mxu0
      %1930 = vmatprep.mubr.bf16.mxu0 0
      %1931 = vmatmul.mubr.bf16.gmra.mrb[0].mxu0 %v835
      %v1932 = vpop.f32.mrb[0].mxu0
      %v1933 = vadd.f32 0.0, %v1932
      %v1934 = vpop.f32.mrb[0].mxu0
      %v1935 = vpop.f32.mrb[0].mxu0
      %v1936 = vadd.f32 0.0, %v1935
      %v1937 = vpop.f32.mrb[0].mxu0
      %1938 = vmatprep.mubr.bf16.mxu0 0
      %1939 = vmatmul.mubr.bf16.gmra.mrb[0].mxu0 %v836
      %v1940 = vpop.f32.mrb[0].mxu0
      %v1941 = vadd.f32 0.0, %v1940
      %v1942 = vpop.f32.mrb[0].mxu0
      %v1943 = vpop.f32.mrb[0].mxu0
      %v1944 = vadd.f32 0.0, %v1943
      %v1945 = vpop.f32.mrb[0].mxu0
      %1946 = vmatprep.mubr.bf16.mxu0 0
      %1947 = vmatmul.mubr.bf16.gmra.mrb[0].mxu0 %v837
      %v1948 = vpop.f32.mrb[0].mxu0
      %v1949 = vadd.f32 0.0, %v1948
      %v1950 = vpop.f32.mrb[0].mxu0
      %v1951 = vpop.f32.mrb[0].mxu0
      %v1952 = vadd.f32 0.0, %v1951
      %v1953 = vpop.f32.mrb[0].mxu0
      %1954 = vmatprep.mubr.bf16.mxu0 0
      %1955 = vmatmul.mubr.bf16.gmra.mrb[0].mxu0 %v838
      %v1956 = vpop.f32.mrb[0].mxu0
      %v1957 = vadd.f32 0.0, %v1956
      %v1958 = vpop.f32.mrb[0].mxu0
      %v1959 = vpop.f32.mrb[0].mxu0
      %v1960 = vadd.f32 0.0, %v1959
      %v1961 = vpop.f32.mrb[0].mxu0
      %1962 = vmatprep.mubr.bf16.mxu0 0
      %1963 = vmatmul.mubr.bf16.gmra.mrb[0].mxu0 %v839
      %v1964 = vpop.f32.mrb[0].mxu0
      %v1965 = vadd.f32 0.0, %v1964
      %v1966 = vpop.f32.mrb[0].mxu0
      %v1967 = vpop.f32.mrb[0].mxu0
      %v1968 = vadd.f32 0.0, %v1967
      %v1969 = vpop.f32.mrb[0].mxu0
      %1970 = vmatprep.mubr.bf16.mxu0 0
      %1971 = vmatmul.mubr.bf16.gmra.mrb[0].mxu0 %v840
      %v1972 = vpop.f32.mrb[0].mxu0
      %v1973 = vadd.f32 0.0, %v1972
      %v1974 = vpop.f32.mrb[0].mxu0
      %v1975 = vpop.f32.mrb[0].mxu0
      %v1976 = vadd.f32 0.0, %v1975
      %v1977 = vpop.f32.mrb[0].mxu0
      %1978 = vmatprep.mubr.bf16.mxu0 0
      %1979 = vmatmul.mubr.bf16.gmra.mrb[0].mxu0 %v841
      %v1980 = vpop.f32.mrb[0].mxu0
      %v1981 = vadd.f32 0.0, %v1980
      %v1982 = vpop.f32.mrb[0].mxu0
      %v1983 = vpop.f32.mrb[0].mxu0
      %v1984 = vadd.f32 0.0, %v1983
      %v1985 = vpop.f32.mrb[0].mxu0
      %1986 = vmatprep.mubr.bf16.mxu0 0
      %1987 = vmatmul.mubr.bf16.gmra.mrb[0].mxu0 %v842
      %v1988 = vpop.f32.mrb[0].mxu0
      %v1989 = vadd.f32 0.0, %v1988
      %v1990 = vpop.f32.mrb[0].mxu0
      %v1991 = vpop.f32.mrb[0].mxu0
      %v1992 = vadd.f32 0.0, %v1991
      %v1993 = vpop.f32.mrb[0].mxu0
      %1994 = vmatprep.mubr.bf16.mxu0 0
      %1995 = vmatmul.mubr.bf16.gmra.mrb[0].mxu0 %v843
      %v1996 = vpop.f32.mrb[0].mxu0
      %v1997 = vadd.f32 0.0, %v1996
      %v1998 = vpop.f32.mrb[0].mxu0
      %v1999 = vpop.f32.mrb[0].mxu0
      %v2000 = vadd.f32 0.0, %v1999
      %v2001 = vpop.f32.mrb[0].mxu0
      %2002 = vmatprep.mubr.bf16.mxu0 0
      %2003 = vmatmul.mubr.bf16.gmra.mrb[0].mxu0 %v844
      %v2004 = vpop.f32.mrb[0].mxu0
      %v2005 = vadd.f32 0.0, %v2004
      %v2006 = vpop.f32.mrb[0].mxu0
      %v2007 = vpop.f32.mrb[0].mxu0
      %v2008 = vadd.f32 0.0, %v2007
      %v2009 = vpop.f32.mrb[0].mxu0
      %2010 = vmatprep.mubr.bf16.mxu0 0
      %2011 = vmatmul.mubr.bf16.gmra.mrb[0].mxu0 %v845
      %v2012 = vpop.f32.mrb[0].mxu0
      %v2013 = vadd.f32 0.0, %v2012
      %v2014 = vpop.f32.mrb[0].mxu0
      %v2015 = vpop.f32.mrb[0].mxu0
      %v2016 = vadd.f32 0.0, %v2015
      %v2017 = vpop.f32.mrb[0].mxu0
      %2018 = vmatprep.mubr.bf16.mxu0 0
      %2019 = vmatmul.mubr.bf16.gmra.mrb[0].mxu0 %v846
      %v2020 = vpop.f32.mrb[0].mxu0
      %v2021 = vadd.f32 0.0, %v2020
      %v2022 = vpop.f32.mrb[0].mxu0
      %v2023 = vpop.f32.mrb[0].mxu0
      %v2024 = vadd.f32 0.0, %v2023
      %v2025 = vpop.f32.mrb[0].mxu0
      %2026 = vmatprep.mubr.bf16.mxu0 0
      %2027 = vmatmul.mubr.bf16.gmra.mrb[0].mxu0 %v847
      %v2028 = vpop.f32.mrb[0].mxu0
      %v2029 = vadd.f32 0.0, %v2028
      %v2030 = vpop.f32.mrb[0].mxu0
      %v2031 = vpop.f32.mrb[0].mxu0
      %v2032 = vadd.f32 0.0, %v2031
      %v2033 = vpop.f32.mrb[0].mxu0
      %2034 = vmatprep.mubr.bf16.mxu0 0
      %2035 = vmatmul.mubr.bf16.gmra.mrb[0].mxu0 %v1816
      %v2036 = vpop.f32.mrb[0].mxu0
      %v2037 = vadd.f32 0.0, %v2036
      %v2038 = vpop.f32.mrb[0].mxu0
      %v2039 = vpop.f32.mrb[0].mxu0
      %v2040 = vadd.f32 0.0, %v2039
      %v2041 = vpop.f32.mrb[0].mxu0
      %2042 = vdwg.mxu0
      %v2043 = vadd.f32 %v1784, %v1917
      %v2044 = vadd.f32 %v1785, %v1920
      %v2045 = vadd.f32 %v1786, %v1925
      %v2046 = vadd.f32 %v1787, %v1928
      %v2047 = vadd.f32 %v1788, %v1933
      %v2048 = vadd.f32 %v1789, %v1936
      %v2049 = vadd.f32 %v1790, %v1941
      %v2050 = vadd.f32 %v1791, %v1944
      %v2051 = vadd.f32 %v1792, %v1949
      %v2052 = vadd.f32 %v1793, %v1952
      %v2053 = vadd.f32 %v1794, %v1957
      %v2054 = vadd.f32 %v1795, %v1960
      %v2055 = vadd.f32 %v1796, %v1965
      %v2056 = vadd.f32 %v1797, %v1968
      %v2057 = vadd.f32 %v1798, %v1973
      %v2058 = vadd.f32 %v1799, %v1976
      %v2059 = vadd.f32 %v1800, %v1981
      %v2060 = vadd.f32 %v1801, %v1984
      %v2061 = vadd.f32 %v1802, %v1989
      %v2062 = vadd.f32 %v1803, %v1992
      %v2063 = vadd.f32 %v1804, %v1997
      %v2064 = vadd.f32 %v1805, %v2000
      %v2065 = vadd.f32 %v1806, %v2005
      %v2066 = vadd.f32 %v1807, %v2008
      %v2067 = vadd.f32 %v1808, %v2013
      %v2068 = vadd.f32 %v1809, %v2016
      %v2069 = vadd.f32 %v1810, %v2021
      %v2070 = vadd.f32 %v1811, %v2024
      %v2071 = vadd.f32 %v1812, %v2029
      %v2072 = vadd.f32 %v1813, %v2032
      %v2073 = vadd.f32 %v1814, %v2037
      %v2074 = vadd.f32 %v1815, %v2040
      %v2075 = vpack.c.bf16 %v798, %v742
      %s2076 = scalar_lea.vmem %s3, 320
      %v2077 = vld [vmem:[%s2076] sm:$0xf]
      %v2078 = vld [vmem:[%s2076 + $0x4] sm:$0xf]
      %v2079 = vld [vmem:[%s2076 + $0x8] sm:$0xf]
      %v2080 = vld [vmem:[%s2076 + $0xc] sm:$0xf]
      %v2081 = vld [vmem:[%s2076 + $0x10] sm:$0xf]
      %v2082 = vld [vmem:[%s2076 + $0x14] sm:$0xf]
      %v2083 = vld [vmem:[%s2076 + $0x18] sm:$0xf]
      %v2084 = vld [vmem:[%s2076 + $0x1c] sm:$0xf]
      %v2085 = vld [vmem:[%s2076 + $0x20] sm:$0xf]
      %v2086 = vld [vmem:[%s2076 + $0x24] sm:$0xf]
      %v2087 = vld [vmem:[%s2076 + $0x28] sm:$0xf]
      %v2088 = vld [vmem:[%s2076 + $0x2c] sm:$0xf]
      %v2089 = vld [vmem:[%s2076 + $0x30] sm:$0xf]
      %v2090 = vld [vmem:[%s2076 + $0x34] sm:$0xf]
      %v2091 = vld [vmem:[%s2076 + $0x38] sm:$0xf]
      %v2092 = vld [vmem:[%s2076 + $0x3c] sm:$0xf]
      %v2109 = vunpack.c.l.b16 %v2077
      %v2110 = vunpack.c.l.b16 %v2078
      %v2111 = vunpack.c.l.b16 %v2079
      %v2112 = vunpack.c.l.b16 %v2080
      %v2113 = vunpack.c.l.b16 %v2081
      %v2114 = vunpack.c.l.b16 %v2082
      %v2115 = vunpack.c.l.b16 %v2083
      %v2116 = vunpack.c.l.b16 %v2084
      %v2117 = vunpack.c.l.b16 %v2085
      %v2118 = vunpack.c.l.b16 %v2086
      %v2119 = vunpack.c.l.b16 %v2087
      %v2120 = vunpack.c.l.b16 %v2088
      %v2121 = vunpack.c.l.b16 %v2089
      %v2122 = vunpack.c.l.b16 %v2090
      %v2123 = vunpack.c.l.b16 %v2091
      %v2124 = vunpack.c.l.b16 %v2092
      %v2125 = vpack.c.b16 %v2110, %v2109
      %v2126 = vpack.c.b16 %v2112, %v2111
      %v2127 = vpack.c.b16 %v2114, %v2113
      %v2128 = vpack.c.b16 %v2116, %v2115
      %v2129 = vpack.c.b16 %v2118, %v2117
      %v2130 = vpack.c.b16 %v2120, %v2119
      %v2131 = vpack.c.b16 %v2122, %v2121
      %v2132 = vpack.c.b16 %v2124, %v2123
      %2141 = vmatprep.subr.bf16.mxu0 0
      %2142 = vmatpush1.bf16.msra.mxu0 %v2125
      %2143 = vmatprep.subr.bf16.mxu0 0
      %2144 = vmatpush1.bf16.msra.mxu0 %v2126
      %2145 = vmatprep.subr.bf16.mxu0 0
      %2146 = vmatpush1.bf16.msra.mxu0 %v2127
      %2147 = vmatprep.subr.bf16.mxu0 0
      %2148 = vmatpush1.bf16.msra.mxu0 %v2128
      %2149 = vmatprep.subr.bf16.mxu0 0
      %2150 = vmatpush1.bf16.msra.mxu0 %v2129
      %2151 = vmatprep.subr.bf16.mxu0 0
      %2152 = vmatpush1.bf16.msra.mxu0 %v2130
      %2153 = vmatprep.subr.bf16.mxu0 0
      %2154 = vmatpush1.bf16.msra.mxu0 %v2131
      %2155 = vmatprep.subr.bf16.mxu0 0
      %2156 = vmatpush1.bf16.msra.mxu0 %v2132
      %2157 = vmatprep.subr.bf16.mxu0 0
      %2158 = vmatpush1.bf16.msra.mxu0 0
      %2159 = vmatprep.subr.bf16.mxu0 0
      %2160 = vmatpush1.bf16.msra.mxu0 0
      %2161 = vmatprep.subr.bf16.mxu0 0
      %2162 = vmatpush1.bf16.msra.mxu0 0
      %2163 = vmatprep.subr.bf16.mxu0 0
      %2164 = vmatpush1.bf16.msra.mxu0 0
      %2165 = vmatprep.subr.bf16.mxu0 0
      %2166 = vmatpush1.bf16.msra.mxu0 0
      %2167 = vmatprep.subr.bf16.mxu0 0
      %2168 = vmatpush1.bf16.msra.mxu0 0
      %2169 = vmatprep.subr.bf16.mxu0 0
      %2170 = vmatpush1.bf16.msra.mxu0 0
      %2171 = vmatprep.subr.bf16.mxu0 0
      %2172 = vmatpush1.bf16.msra.mxu0 0
      %2173 = vmatprep.mubr.bf16.mxu0 0
      %2174 = vmatmul.mubr.bf16.gmra.mrb[0].mxu0 %v1284
      %v2175 = vpop.f32.mrb[0].mxu0
      %v2176 = vadd.f32 0.0, %v2175
      %v2177 = vpop.f32.mrb[0].mxu0
      %v2178 = vpop.f32.mrb[0].mxu0
      %v2179 = vadd.f32 0.0, %v2178
      %v2180 = vpop.f32.mrb[0].mxu0
      %2181 = vmatprep.mubr.bf16.mxu0 0
      %2182 = vmatmul.mubr.bf16.gmra.mrb[0].mxu0 %v1285
      %v2183 = vpop.f32.mrb[0].mxu0
      %v2184 = vadd.f32 0.0, %v2183
      %v2185 = vpop.f32.mrb[0].mxu0
      %v2186 = vpop.f32.mrb[0].mxu0
      %v2187 = vadd.f32 0.0, %v2186
      %v2188 = vpop.f32.mrb[0].mxu0
      %2189 = vmatprep.mubr.bf16.mxu0 0
      %2190 = vmatmul.mubr.bf16.gmra.mrb[0].mxu0 %v1286
      %v2191 = vpop.f32.mrb[0].mxu0
      %v2192 = vadd.f32 0.0, %v2191
      %v2193 = vpop.f32.mrb[0].mxu0
      %v2194 = vpop.f32.mrb[0].mxu0
      %v2195 = vadd.f32 0.0, %v2194
      %v2196 = vpop.f32.mrb[0].mxu0
      %2197 = vmatprep.mubr.bf16.mxu0 0
      %2198 = vmatmul.mubr.bf16.gmra.mrb[0].mxu0 %v1287
      %v2199 = vpop.f32.mrb[0].mxu0
      %v2200 = vadd.f32 0.0, %v2199
      %v2201 = vpop.f32.mrb[0].mxu0
      %v2202 = vpop.f32.mrb[0].mxu0
      %v2203 = vadd.f32 0.0, %v2202
      %v2204 = vpop.f32.mrb[0].mxu0
      %2205 = vmatprep.mubr.bf16.mxu0 0
      %2206 = vmatmul.mubr.bf16.gmra.mrb[0].mxu0 %v1288
      %v2207 = vpop.f32.mrb[0].mxu0
      %v2208 = vadd.f32 0.0, %v2207
      %v2209 = vpop.f32.mrb[0].mxu0
      %v2210 = vpop.f32.mrb[0].mxu0
      %v2211 = vadd.f32 0.0, %v2210
      %v2212 = vpop.f32.mrb[0].mxu0
      %2213 = vmatprep.mubr.bf16.mxu0 0
      %2214 = vmatmul.mubr.bf16.gmra.mrb[0].mxu0 %v1289
      %v2215 = vpop.f32.mrb[0].mxu0
      %v2216 = vadd.f32 0.0, %v2215
      %v2217 = vpop.f32.mrb[0].mxu0
      %v2218 = vpop.f32.mrb[0].mxu0
      %v2219 = vadd.f32 0.0, %v2218
      %v2220 = vpop.f32.mrb[0].mxu0
      %2221 = vmatprep.mubr.bf16.mxu0 0
      %2222 = vmatmul.mubr.bf16.gmra.mrb[0].mxu0 %v1290
      %v2223 = vpop.f32.mrb[0].mxu0
      %v2224 = vadd.f32 0.0, %v2223
      %v2225 = vpop.f32.mrb[0].mxu0
      %v2226 = vpop.f32.mrb[0].mxu0
      %v2227 = vadd.f32 0.0, %v2226
      %v2228 = vpop.f32.mrb[0].mxu0
      %2229 = vmatprep.mubr.bf16.mxu0 0
      %2230 = vmatmul.mubr.bf16.gmra.mrb[0].mxu0 %v1291
      %v2231 = vpop.f32.mrb[0].mxu0
      %v2232 = vadd.f32 0.0, %v2231
      %v2233 = vpop.f32.mrb[0].mxu0
      %v2234 = vpop.f32.mrb[0].mxu0
      %v2235 = vadd.f32 0.0, %v2234
      %v2236 = vpop.f32.mrb[0].mxu0
      %2237 = vmatprep.mubr.bf16.mxu0 0
      %2238 = vmatmul.mubr.bf16.gmra.mrb[0].mxu0 %v1292
      %v2239 = vpop.f32.mrb[0].mxu0
      %v2240 = vadd.f32 0.0, %v2239
      %v2241 = vpop.f32.mrb[0].mxu0
      %v2242 = vpop.f32.mrb[0].mxu0
      %v2243 = vadd.f32 0.0, %v2242
      %v2244 = vpop.f32.mrb[0].mxu0
      %2245 = vmatprep.mubr.bf16.mxu0 0
      %2246 = vmatmul.mubr.bf16.gmra.mrb[0].mxu0 %v1293
      %v2247 = vpop.f32.mrb[0].mxu0
      %v2248 = vadd.f32 0.0, %v2247
      %v2249 = vpop.f32.mrb[0].mxu0
      %v2250 = vpop.f32.mrb[0].mxu0
      %v2251 = vadd.f32 0.0, %v2250
      %v2252 = vpop.f32.mrb[0].mxu0
      %2253 = vmatprep.mubr.bf16.mxu0 0
      %2254 = vmatmul.mubr.bf16.gmra.mrb[0].mxu0 %v1294
      %v2255 = vpop.f32.mrb[0].mxu0
      %v2256 = vadd.f32 0.0, %v2255
      %v2257 = vpop.f32.mrb[0].mxu0
      %v2258 = vpop.f32.mrb[0].mxu0
      %v2259 = vadd.f32 0.0, %v2258
      %v2260 = vpop.f32.mrb[0].mxu0
      %2261 = vmatprep.mubr.bf16.mxu0 0
      %2262 = vmatmul.mubr.bf16.gmra.mrb[0].mxu0 %v1295
      %v2263 = vpop.f32.mrb[0].mxu0
      %v2264 = vadd.f32 0.0, %v2263
      %v2265 = vpop.f32.mrb[0].mxu0
      %v2266 = vpop.f32.mrb[0].mxu0
      %v2267 = vadd.f32 0.0, %v2266
      %v2268 = vpop.f32.mrb[0].mxu0
      %2269 = vmatprep.mubr.bf16.mxu0 0
      %2270 = vmatmul.mubr.bf16.gmra.mrb[0].mxu0 %v1296
      %v2271 = vpop.f32.mrb[0].mxu0
      %v2272 = vadd.f32 0.0, %v2271
      %v2273 = vpop.f32.mrb[0].mxu0
      %v2274 = vpop.f32.mrb[0].mxu0
      %v2275 = vadd.f32 0.0, %v2274
      %v2276 = vpop.f32.mrb[0].mxu0
      %2277 = vmatprep.mubr.bf16.mxu0 0
      %2278 = vmatmul.mubr.bf16.gmra.mrb[0].mxu0 %v1297
      %v2279 = vpop.f32.mrb[0].mxu0
      %v2280 = vadd.f32 0.0, %v2279
      %v2281 = vpop.f32.mrb[0].mxu0
      %v2282 = vpop.f32.mrb[0].mxu0
      %v2283 = vadd.f32 0.0, %v2282
      %v2284 = vpop.f32.mrb[0].mxu0
      %2285 = vmatprep.mubr.bf16.mxu0 0
      %2286 = vmatmul.mubr.bf16.gmra.mrb[0].mxu0 %v1298
      %v2287 = vpop.f32.mrb[0].mxu0
      %v2288 = vadd.f32 0.0, %v2287
      %v2289 = vpop.f32.mrb[0].mxu0
      %v2290 = vpop.f32.mrb[0].mxu0
      %v2291 = vadd.f32 0.0, %v2290
      %v2292 = vpop.f32.mrb[0].mxu0
      %2293 = vmatprep.mubr.bf16.mxu0 0
      %2294 = vmatmul.mubr.bf16.gmra.mrb[0].mxu0 %v2075
      %v2295 = vpop.f32.mrb[0].mxu0
      %v2296 = vadd.f32 0.0, %v2295
      %v2297 = vpop.f32.mrb[0].mxu0
      %v2298 = vpop.f32.mrb[0].mxu0
      %v2299 = vadd.f32 0.0, %v2298
      %v2300 = vpop.f32.mrb[0].mxu0
      %2301 = vdwg.mxu0
      %v2302 = vadd.f32 %v2043, %v2176
      %v2303 = vadd.f32 %v2044, %v2179
      %v2304 = vadd.f32 %v2045, %v2184
      %v2305 = vadd.f32 %v2046, %v2187
      %v2306 = vadd.f32 %v2047, %v2192
      %v2307 = vadd.f32 %v2048, %v2195
      %v2308 = vadd.f32 %v2049, %v2200
      %v2309 = vadd.f32 %v2050, %v2203
      %v2310 = vadd.f32 %v2051, %v2208
      %v2311 = vadd.f32 %v2052, %v2211
      %v2312 = vadd.f32 %v2053, %v2216
      %v2313 = vadd.f32 %v2054, %v2219
      %v2314 = vadd.f32 %v2055, %v2224
      %v2315 = vadd.f32 %v2056, %v2227
      %v2316 = vadd.f32 %v2057, %v2232
      %v2317 = vadd.f32 %v2058, %v2235
      %v2318 = vadd.f32 %v2059, %v2240
      %v2319 = vadd.f32 %v2060, %v2243
      %v2320 = vadd.f32 %v2061, %v2248
      %v2321 = vadd.f32 %v2062, %v2251
      %v2322 = vadd.f32 %v2063, %v2256
      %v2323 = vadd.f32 %v2064, %v2259
      %v2324 = vadd.f32 %v2065, %v2264
      %v2325 = vadd.f32 %v2066, %v2267
      %v2326 = vadd.f32 %v2067, %v2272
      %v2327 = vadd.f32 %v2068, %v2275
      %v2328 = vadd.f32 %v2069, %v2280
      %v2329 = vadd.f32 %v2070, %v2283
      %v2330 = vadd.f32 %v2071, %v2288
      %v2331 = vadd.f32 %v2072, %v2291
      %v2332 = vadd.f32 %v2073, %v2296
      %v2333 = vadd.f32 %v2074, %v2299
      %v2334 = vpack.c.bf16 %v636, %v690
      %s2335 = scalar_lea.vmem %s3, 384
      %v2336 = vld [vmem:[%s2335] sm:$0xf]
      %v2337 = vld [vmem:[%s2335 + $0x4] sm:$0xf]
      %v2338 = vld [vmem:[%s2335 + $0x8] sm:$0xf]
      %v2339 = vld [vmem:[%s2335 + $0xc] sm:$0xf]
      %v2340 = vld [vmem:[%s2335 + $0x10] sm:$0xf]
      %v2341 = vld [vmem:[%s2335 + $0x14] sm:$0xf]
      %v2342 = vld [vmem:[%s2335 + $0x18] sm:$0xf]
      %v2343 = vld [vmem:[%s2335 + $0x1c] sm:$0xf]
      %v2344 = vld [vmem:[%s2335 + $0x20] sm:$0xf]
      %v2345 = vld [vmem:[%s2335 + $0x24] sm:$0xf]
      %v2346 = vld [vmem:[%s2335 + $0x28] sm:$0xf]
      %v2347 = vld [vmem:[%s2335 + $0x2c] sm:$0xf]
      %v2348 = vld [vmem:[%s2335 + $0x30] sm:$0xf]
      %v2349 = vld [vmem:[%s2335 + $0x34] sm:$0xf]
      %v2350 = vld [vmem:[%s2335 + $0x38] sm:$0xf]
      %v2351 = vld [vmem:[%s2335 + $0x3c] sm:$0xf]
      %v2368 = vunpack.c.l.b16 %v2336
      %v2369 = vunpack.c.l.b16 %v2337
      %v2370 = vunpack.c.l.b16 %v2338
      %v2371 = vunpack.c.l.b16 %v2339
      %v2372 = vunpack.c.l.b16 %v2340
      %v2373 = vunpack.c.l.b16 %v2341
      %v2374 = vunpack.c.l.b16 %v2342
      %v2375 = vunpack.c.l.b16 %v2343
      %v2376 = vunpack.c.l.b16 %v2344
      %v2377 = vunpack.c.l.b16 %v2345
      %v2378 = vunpack.c.l.b16 %v2346
      %v2379 = vunpack.c.l.b16 %v2347
      %v2380 = vunpack.c.l.b16 %v2348
      %v2381 = vunpack.c.l.b16 %v2349
      %v2382 = vunpack.c.l.b16 %v2350
      %v2383 = vunpack.c.l.b16 %v2351
      %v2384 = vpack.c.b16 %v2369, %v2368
      %v2385 = vpack.c.b16 %v2371, %v2370
      %v2386 = vpack.c.b16 %v2373, %v2372
      %v2387 = vpack.c.b16 %v2375, %v2374
      %v2388 = vpack.c.b16 %v2377, %v2376
      %v2389 = vpack.c.b16 %v2379, %v2378
      %v2390 = vpack.c.b16 %v2381, %v2380
      %v2391 = vpack.c.b16 %v2383, %v2382
      %2400 = vmatprep.subr.bf16.mxu0 0
      %2401 = vmatpush1.bf16.msra.mxu0 %v2384
      %2402 = vmatprep.subr.bf16.mxu0 0
      %2403 = vmatpush1.bf16.msra.mxu0 %v2385
      %2404 = vmatprep.subr.bf16.mxu0 0
      %2405 = vmatpush1.bf16.msra.mxu0 %v2386
      %2406 = vmatprep.subr.bf16.mxu0 0
      %2407 = vmatpush1.bf16.msra.mxu0 %v2387
      %2408 = vmatprep.subr.bf16.mxu0 0
      %2409 = vmatpush1.bf16.msra.mxu0 %v2388
      %2410 = vmatprep.subr.bf16.mxu0 0
      %2411 = vmatpush1.bf16.msra.mxu0 %v2389
      %2412 = vmatprep.subr.bf16.mxu0 0
      %2413 = vmatpush1.bf16.msra.mxu0 %v2390
      %2414 = vmatprep.subr.bf16.mxu0 0
      %2415 = vmatpush1.bf16.msra.mxu0 %v2391
      %2416 = vmatprep.subr.bf16.mxu0 0
      %2417 = vmatpush1.bf16.msra.mxu0 0
      %2418 = vmatprep.subr.bf16.mxu0 0
      %2419 = vmatpush1.bf16.msra.mxu0 0
      %2420 = vmatprep.subr.bf16.mxu0 0
      %2421 = vmatpush1.bf16.msra.mxu0 0
      %2422 = vmatprep.subr.bf16.mxu0 0
      %2423 = vmatpush1.bf16.msra.mxu0 0
      %2424 = vmatprep.subr.bf16.mxu0 0
      %2425 = vmatpush1.bf16.msra.mxu0 0
      %2426 = vmatprep.subr.bf16.mxu0 0
      %2427 = vmatpush1.bf16.msra.mxu0 0
      %2428 = vmatprep.subr.bf16.mxu0 0
      %2429 = vmatpush1.bf16.msra.mxu0 0
      %2430 = vmatprep.subr.bf16.mxu0 0
      %2431 = vmatpush1.bf16.msra.mxu0 0
      %2432 = vmatprep.mubr.bf16.mxu0 0
      %2433 = vmatmul.mubr.bf16.gmra.mrb[0].mxu0 %v802
      %v2434 = vpop.f32.mrb[0].mxu0
      %v2435 = vadd.f32 0.0, %v2434
      %v2436 = vpop.f32.mrb[0].mxu0
      %v2437 = vpop.f32.mrb[0].mxu0
      %v2438 = vadd.f32 0.0, %v2437
      %v2439 = vpop.f32.mrb[0].mxu0
      %2440 = vmatprep.mubr.bf16.mxu0 0
      %2441 = vmatmul.mubr.bf16.gmra.mrb[0].mxu0 %v803
      %v2442 = vpop.f32.mrb[0].mxu0
      %v2443 = vadd.f32 0.0, %v2442
      %v2444 = vpop.f32.mrb[0].mxu0
      %v2445 = vpop.f32.mrb[0].mxu0
      %v2446 = vadd.f32 0.0, %v2445
      %v2447 = vpop.f32.mrb[0].mxu0
      %2448 = vmatprep.mubr.bf16.mxu0 0
      %2449 = vmatmul.mubr.bf16.gmra.mrb[0].mxu0 %v804
      %v2450 = vpop.f32.mrb[0].mxu0
      %v2451 = vadd.f32 0.0, %v2450
      %v2452 = vpop.f32.mrb[0].mxu0
      %v2453 = vpop.f32.mrb[0].mxu0
      %v2454 = vadd.f32 0.0, %v2453
      %v2455 = vpop.f32.mrb[0].mxu0
      %2456 = vmatprep.mubr.bf16.mxu0 0
      %2457 = vmatmul.mubr.bf16.gmra.mrb[0].mxu0 %v805
      %v2458 = vpop.f32.mrb[0].mxu0
      %v2459 = vadd.f32 0.0, %v2458
      %v2460 = vpop.f32.mrb[0].mxu0
      %v2461 = vpop.f32.mrb[0].mxu0
      %v2462 = vadd.f32 0.0, %v2461
      %v2463 = vpop.f32.mrb[0].mxu0
      %2464 = vmatprep.mubr.bf16.mxu0 0
      %2465 = vmatmul.mubr.bf16.gmra.mrb[0].mxu0 %v806
      %v2466 = vpop.f32.mrb[0].mxu0
      %v2467 = vadd.f32 0.0, %v2466
      %v2468 = vpop.f32.mrb[0].mxu0
      %v2469 = vpop.f32.mrb[0].mxu0
      %v2470 = vadd.f32 0.0, %v2469
      %v2471 = vpop.f32.mrb[0].mxu0
      %2472 = vmatprep.mubr.bf16.mxu0 0
      %2473 = vmatmul.mubr.bf16.gmra.mrb[0].mxu0 %v807
      %v2474 = vpop.f32.mrb[0].mxu0
      %v2475 = vadd.f32 0.0, %v2474
      %v2476 = vpop.f32.mrb[0].mxu0
      %v2477 = vpop.f32.mrb[0].mxu0
      %v2478 = vadd.f32 0.0, %v2477
      %v2479 = vpop.f32.mrb[0].mxu0
      %2480 = vmatprep.mubr.bf16.mxu0 0
      %2481 = vmatmul.mubr.bf16.gmra.mrb[0].mxu0 %v808
      %v2482 = vpop.f32.mrb[0].mxu0
      %v2483 = vadd.f32 0.0, %v2482
      %v2484 = vpop.f32.mrb[0].mxu0
      %v2485 = vpop.f32.mrb[0].mxu0
      %v2486 = vadd.f32 0.0, %v2485
      %v2487 = vpop.f32.mrb[0].mxu0
      %2488 = vmatprep.mubr.bf16.mxu0 0
      %2489 = vmatmul.mubr.bf16.gmra.mrb[0].mxu0 %v809
      %v2490 = vpop.f32.mrb[0].mxu0
      %v2491 = vadd.f32 0.0, %v2490
      %v2492 = vpop.f32.mrb[0].mxu0
      %v2493 = vpop.f32.mrb[0].mxu0
      %v2494 = vadd.f32 0.0, %v2493
      %v2495 = vpop.f32.mrb[0].mxu0
      %2496 = vmatprep.mubr.bf16.mxu0 0
      %2497 = vmatmul.mubr.bf16.gmra.mrb[0].mxu0 %v810
      %v2498 = vpop.f32.mrb[0].mxu0
      %v2499 = vadd.f32 0.0, %v2498
      %v2500 = vpop.f32.mrb[0].mxu0
      %v2501 = vpop.f32.mrb[0].mxu0
      %v2502 = vadd.f32 0.0, %v2501
      %v2503 = vpop.f32.mrb[0].mxu0
      %2504 = vmatprep.mubr.bf16.mxu0 0
      %2505 = vmatmul.mubr.bf16.gmra.mrb[0].mxu0 %v811
      %v2506 = vpop.f32.mrb[0].mxu0
      %v2507 = vadd.f32 0.0, %v2506
      %v2508 = vpop.f32.mrb[0].mxu0
      %v2509 = vpop.f32.mrb[0].mxu0
      %v2510 = vadd.f32 0.0, %v2509
      %v2511 = vpop.f32.mrb[0].mxu0
      %2512 = vmatprep.mubr.bf16.mxu0 0
      %2513 = vmatmul.mubr.bf16.gmra.mrb[0].mxu0 %v812
      %v2514 = vpop.f32.mrb[0].mxu0
      %v2515 = vadd.f32 0.0, %v2514
      %v2516 = vpop.f32.mrb[0].mxu0
      %v2517 = vpop.f32.mrb[0].mxu0
      %v2518 = vadd.f32 0.0, %v2517
      %v2519 = vpop.f32.mrb[0].mxu0
      %2520 = vmatprep.mubr.bf16.mxu0 0
      %2521 = vmatmul.mubr.bf16.gmra.mrb[0].mxu0 %v813
      %v2522 = vpop.f32.mrb[0].mxu0
      %v2523 = vadd.f32 0.0, %v2522
      %v2524 = vpop.f32.mrb[0].mxu0
      %v2525 = vpop.f32.mrb[0].mxu0
      %v2526 = vadd.f32 0.0, %v2525
      %v2527 = vpop.f32.mrb[0].mxu0
      %2528 = vmatprep.mubr.bf16.mxu0 0
      %2529 = vmatmul.mubr.bf16.gmra.mrb[0].mxu0 %v814
      %v2530 = vpop.f32.mrb[0].mxu0
      %v2531 = vadd.f32 0.0, %v2530
      %v2532 = vpop.f32.mrb[0].mxu0
      %v2533 = vpop.f32.mrb[0].mxu0
      %v2534 = vadd.f32 0.0, %v2533
      %v2535 = vpop.f32.mrb[0].mxu0
      %2536 = vmatprep.mubr.bf16.mxu0 0
      %2537 = vmatmul.mubr.bf16.gmra.mrb[0].mxu0 %v815
      %v2538 = vpop.f32.mrb[0].mxu0
      %v2539 = vadd.f32 0.0, %v2538
      %v2540 = vpop.f32.mrb[0].mxu0
      %v2541 = vpop.f32.mrb[0].mxu0
      %v2542 = vadd.f32 0.0, %v2541
      %v2543 = vpop.f32.mrb[0].mxu0
      %2544 = vmatprep.mubr.bf16.mxu0 0
      %2545 = vmatmul.mubr.bf16.gmra.mrb[0].mxu0 %v1557
      %v2546 = vpop.f32.mrb[0].mxu0
      %v2547 = vadd.f32 0.0, %v2546
      %v2548 = vpop.f32.mrb[0].mxu0
      %v2549 = vpop.f32.mrb[0].mxu0
      %v2550 = vadd.f32 0.0, %v2549
      %v2551 = vpop.f32.mrb[0].mxu0
      %2552 = vmatprep.mubr.bf16.mxu0 0
      %2553 = vmatmul.mubr.bf16.gmra.mrb[0].mxu0 %v2334
      %v2554 = vpop.f32.mrb[0].mxu0
      %v2555 = vadd.f32 0.0, %v2554
      %v2556 = vpop.f32.mrb[0].mxu0
      %v2557 = vpop.f32.mrb[0].mxu0
      %v2558 = vadd.f32 0.0, %v2557
      %v2559 = vpop.f32.mrb[0].mxu0
      %2560 = vdwg.mxu0
      %v2561 = vadd.f32 %v2302, %v2435
      %v2562 = vadd.f32 %v2303, %v2438
      %v2563 = vadd.f32 %v2304, %v2443
      %v2564 = vadd.f32 %v2305, %v2446
      %v2565 = vadd.f32 %v2306, %v2451
      %v2566 = vadd.f32 %v2307, %v2454
      %v2567 = vadd.f32 %v2308, %v2459
      %v2568 = vadd.f32 %v2309, %v2462
      %v2569 = vadd.f32 %v2310, %v2467
      %v2570 = vadd.f32 %v2311, %v2470
      %v2571 = vadd.f32 %v2312, %v2475
      %v2572 = vadd.f32 %v2313, %v2478
      %v2573 = vadd.f32 %v2314, %v2483
      %v2574 = vadd.f32 %v2315, %v2486
      %v2575 = vadd.f32 %v2316, %v2491
      %v2576 = vadd.f32 %v2317, %v2494
      %v2577 = vadd.f32 %v2318, %v2499
      %v2578 = vadd.f32 %v2319, %v2502
      %v2579 = vadd.f32 %v2320, %v2507
      %v2580 = vadd.f32 %v2321, %v2510
      %v2581 = vadd.f32 %v2322, %v2515
      %v2582 = vadd.f32 %v2323, %v2518
      %v2583 = vadd.f32 %v2324, %v2523
      %v2584 = vadd.f32 %v2325, %v2526
      %v2585 = vadd.f32 %v2326, %v2531
      %v2586 = vadd.f32 %v2327, %v2534
      %v2587 = vadd.f32 %v2328, %v2539
      %v2588 = vadd.f32 %v2329, %v2542
      %v2589 = vadd.f32 %v2330, %v2547
      %v2590 = vadd.f32 %v2331, %v2550
      %v2591 = vadd.f32 %v2332, %v2555
      %v2592 = vadd.f32 %v2333, %v2558
      %v2593 = vpack.c.bf16 %v545, %v544
      %s2594 = scalar_lea.vmem %s3, 448
      %v2595 = vld [vmem:[%s2594] sm:$0xf]
      %v2596 = vld [vmem:[%s2594 + $0x4] sm:$0xf]
      %v2597 = vld [vmem:[%s2594 + $0x8] sm:$0xf]
      %v2598 = vld [vmem:[%s2594 + $0xc] sm:$0xf]
      %v2599 = vld [vmem:[%s2594 + $0x10] sm:$0xf]
      %v2600 = vld [vmem:[%s2594 + $0x14] sm:$0xf]
      %v2601 = vld [vmem:[%s2594 + $0x18] sm:$0xf]
      %v2602 = vld [vmem:[%s2594 + $0x1c] sm:$0xf]
      %v2603 = vld [vmem:[%s2594 + $0x20] sm:$0xf]
      %v2604 = vld [vmem:[%s2594 + $0x24] sm:$0xf]
      %v2605 = vld [vmem:[%s2594 + $0x28] sm:$0xf]
      %v2606 = vld [vmem:[%s2594 + $0x2c] sm:$0xf]
      %v2607 = vld [vmem:[%s2594 + $0x30] sm:$0xf]
      %v2608 = vld [vmem:[%s2594 + $0x34] sm:$0xf]
      %v2609 = vld [vmem:[%s2594 + $0x38] sm:$0xf]
      %v2610 = vld [vmem:[%s2594 + $0x3c] sm:$0xf]
      %v2627 = vunpack.c.l.b16 %v2595
      %v2628 = vunpack.c.l.b16 %v2596
      %v2629 = vunpack.c.l.b16 %v2597
      %v2630 = vunpack.c.l.b16 %v2598
      %v2631 = vunpack.c.l.b16 %v2599
      %v2632 = vunpack.c.l.b16 %v2600
      %v2633 = vunpack.c.l.b16 %v2601
      %v2634 = vunpack.c.l.b16 %v2602
      %v2635 = vunpack.c.l.b16 %v2603
      %v2636 = vunpack.c.l.b16 %v2604
      %v2637 = vunpack.c.l.b16 %v2605
      %v2638 = vunpack.c.l.b16 %v2606
      %v2639 = vunpack.c.l.b16 %v2607
      %v2640 = vunpack.c.l.b16 %v2608
      %v2641 = vunpack.c.l.b16 %v2609
      %v2642 = vunpack.c.l.b16 %v2610
      %v2643 = vpack.c.b16 %v2628, %v2627
      %v2644 = vpack.c.b16 %v2630, %v2629
      %v2645 = vpack.c.b16 %v2632, %v2631
      %v2646 = vpack.c.b16 %v2634, %v2633
      %v2647 = vpack.c.b16 %v2636, %v2635
      %v2648 = vpack.c.b16 %v2638, %v2637
      %v2649 = vpack.c.b16 %v2640, %v2639
      %v2650 = vpack.c.b16 %v2642, %v2641
      %2659 = vmatprep.subr.bf16.mxu0 0
      %2660 = vmatpush1.bf16.msra.mxu0 %v2643
      %2661 = vmatprep.subr.bf16.mxu0 0
      %2662 = vmatpush1.bf16.msra.mxu0 %v2644
      %2663 = vmatprep.subr.bf16.mxu0 0
      %2664 = vmatpush1.bf16.msra.mxu0 %v2645
      %2665 = vmatprep.subr.bf16.mxu0 0
      %2666 = vmatpush1.bf16.msra.mxu0 %v2646
      %2667 = vmatprep.subr.bf16.mxu0 0
      %2668 = vmatpush1.bf16.msra.mxu0 %v2647
      %2669 = vmatprep.subr.bf16.mxu0 0
      %2670 = vmatpush1.bf16.msra.mxu0 %v2648
      %2671 = vmatprep.subr.bf16.mxu0 0
      %2672 = vmatpush1.bf16.msra.mxu0 %v2649
      %2673 = vmatprep.subr.bf16.mxu0 0
      %2674 = vmatpush1.bf16.msra.mxu0 %v2650
      %2675 = vmatprep.subr.bf16.mxu0 0
      %2676 = vmatpush1.bf16.msra.mxu0 0
      %2677 = vmatprep.subr.bf16.mxu0 0
      %2678 = vmatpush1.bf16.msra.mxu0 0
      %2679 = vmatprep.subr.bf16.mxu0 0
      %2680 = vmatpush1.bf16.msra.mxu0 0
      %2681 = vmatprep.subr.bf16.mxu0 0
      %2682 = vmatpush1.bf16.msra.mxu0 0
      %2683 = vmatprep.subr.bf16.mxu0 0
      %2684 = vmatpush1.bf16.msra.mxu0 0
      %2685 = vmatprep.subr.bf16.mxu0 0
      %2686 = vmatpush1.bf16.msra.mxu0 0
      %2687 = vmatprep.subr.bf16.mxu0 0
      %2688 = vmatpush1.bf16.msra.mxu0 0
      %2689 = vmatprep.subr.bf16.mxu0 0
      %2690 = vmatpush1.bf16.msra.mxu0 0
      %2691 = vmatprep.mubr.bf16.mxu0 0
      %2692 = vmatmul.mubr.bf16.gmra.mrb[0].mxu0 %v834
      %v2693 = vpop.f32.mrb[0].mxu0
      %v2694 = vadd.f32 0.0, %v2693
      %v2695 = vpop.f32.mrb[0].mxu0
      %v2696 = vpop.f32.mrb[0].mxu0
      %v2697 = vadd.f32 0.0, %v2696
      %v2698 = vpop.f32.mrb[0].mxu0
      %2699 = vmatprep.mubr.bf16.mxu0 0
      %2700 = vmatmul.mubr.bf16.gmra.mrb[0].mxu0 %v835
      %v2701 = vpop.f32.mrb[0].mxu0
      %v2702 = vadd.f32 0.0, %v2701
      %v2703 = vpop.f32.mrb[0].mxu0
      %v2704 = vpop.f32.mrb[0].mxu0
      %v2705 = vadd.f32 0.0, %v2704
      %v2706 = vpop.f32.mrb[0].mxu0
      %2707 = vmatprep.mubr.bf16.mxu0 0
      %2708 = vmatmul.mubr.bf16.gmra.mrb[0].mxu0 %v836
      %v2709 = vpop.f32.mrb[0].mxu0
      %v2710 = vadd.f32 0.0, %v2709
      %v2711 = vpop.f32.mrb[0].mxu0
      %v2712 = vpop.f32.mrb[0].mxu0
      %v2713 = vadd.f32 0.0, %v2712
      %v2714 = vpop.f32.mrb[0].mxu0
      %2715 = vmatprep.mubr.bf16.mxu0 0
      %2716 = vmatmul.mubr.bf16.gmra.mrb[0].mxu0 %v837
      %v2717 = vpop.f32.mrb[0].mxu0
      %v2718 = vadd.f32 0.0, %v2717
      %v2719 = vpop.f32.mrb[0].mxu0
      %v2720 = vpop.f32.mrb[0].mxu0
      %v2721 = vadd.f32 0.0, %v2720
      %v2722 = vpop.f32.mrb[0].mxu0
      %2723 = vmatprep.mubr.bf16.mxu0 0
      %2724 = vmatmul.mubr.bf16.gmra.mrb[0].mxu0 %v838
      %v2725 = vpop.f32.mrb[0].mxu0
      %v2726 = vadd.f32 0.0, %v2725
      %v2727 = vpop.f32.mrb[0].mxu0
      %v2728 = vpop.f32.mrb[0].mxu0
      %v2729 = vadd.f32 0.0, %v2728
      %v2730 = vpop.f32.mrb[0].mxu0
      %2731 = vmatprep.mubr.bf16.mxu0 0
      %2732 = vmatmul.mubr.bf16.gmra.mrb[0].mxu0 %v839
      %v2733 = vpop.f32.mrb[0].mxu0
      %v2734 = vadd.f32 0.0, %v2733
      %v2735 = vpop.f32.mrb[0].mxu0
      %v2736 = vpop.f32.mrb[0].mxu0
      %v2737 = vadd.f32 0.0, %v2736
      %v2738 = vpop.f32.mrb[0].mxu0
      %2739 = vmatprep.mubr.bf16.mxu0 0
      %2740 = vmatmul.mubr.bf16.gmra.mrb[0].mxu0 %v840
      %v2741 = vpop.f32.mrb[0].mxu0
      %v2742 = vadd.f32 0.0, %v2741
      %v2743 = vpop.f32.mrb[0].mxu0
      %v2744 = vpop.f32.mrb[0].mxu0
      %v2745 = vadd.f32 0.0, %v2744
      %v2746 = vpop.f32.mrb[0].mxu0
      %2747 = vmatprep.mubr.bf16.mxu0 0
      %2748 = vmatmul.mubr.bf16.gmra.mrb[0].mxu0 %v841
      %v2749 = vpop.f32.mrb[0].mxu0
      %v2750 = vadd.f32 0.0, %v2749
      %v2751 = vpop.f32.mrb[0].mxu0
      %v2752 = vpop.f32.mrb[0].mxu0
      %v2753 = vadd.f32 0.0, %v2752
      %v2754 = vpop.f32.mrb[0].mxu0
      %2755 = vmatprep.mubr.bf16.mxu0 0
      %2756 = vmatmul.mubr.bf16.gmra.mrb[0].mxu0 %v842
      %v2757 = vpop.f32.mrb[0].mxu0
      %v2758 = vadd.f32 0.0, %v2757
      %v2759 = vpop.f32.mrb[0].mxu0
      %v2760 = vpop.f32.mrb[0].mxu0
      %v2761 = vadd.f32 0.0, %v2760
      %v2762 = vpop.f32.mrb[0].mxu0
      %2763 = vmatprep.mubr.bf16.mxu0 0
      %2764 = vmatmul.mubr.bf16.gmra.mrb[0].mxu0 %v843
      %v2765 = vpop.f32.mrb[0].mxu0
      %v2766 = vadd.f32 0.0, %v2765
      %v2767 = vpop.f32.mrb[0].mxu0
      %v2768 = vpop.f32.mrb[0].mxu0
      %v2769 = vadd.f32 0.0, %v2768
      %v2770 = vpop.f32.mrb[0].mxu0
      %2771 = vmatprep.mubr.bf16.mxu0 0
      %2772 = vmatmul.mubr.bf16.gmra.mrb[0].mxu0 %v844
      %v2773 = vpop.f32.mrb[0].mxu0
      %v2774 = vadd.f32 0.0, %v2773
      %v2775 = vpop.f32.mrb[0].mxu0
      %v2776 = vpop.f32.mrb[0].mxu0
      %v2777 = vadd.f32 0.0, %v2776
      %v2778 = vpop.f32.mrb[0].mxu0
      %2779 = vmatprep.mubr.bf16.mxu0 0
      %2780 = vmatmul.mubr.bf16.gmra.mrb[0].mxu0 %v845
      %v2781 = vpop.f32.mrb[0].mxu0
      %v2782 = vadd.f32 0.0, %v2781
      %v2783 = vpop.f32.mrb[0].mxu0
      %v2784 = vpop.f32.mrb[0].mxu0
      %v2785 = vadd.f32 0.0, %v2784
      %v2786 = vpop.f32.mrb[0].mxu0
      %2787 = vmatprep.mubr.bf16.mxu0 0
      %2788 = vmatmul.mubr.bf16.gmra.mrb[0].mxu0 %v846
      %v2789 = vpop.f32.mrb[0].mxu0
      %v2790 = vadd.f32 0.0, %v2789
      %v2791 = vpop.f32.mrb[0].mxu0
      %v2792 = vpop.f32.mrb[0].mxu0
      %v2793 = vadd.f32 0.0, %v2792
      %v2794 = vpop.f32.mrb[0].mxu0
      %2795 = vmatprep.mubr.bf16.mxu0 0
      %2796 = vmatmul.mubr.bf16.gmra.mrb[0].mxu0 %v847
      %v2797 = vpop.f32.mrb[0].mxu0
      %v2798 = vadd.f32 0.0, %v2797
      %v2799 = vpop.f32.mrb[0].mxu0
      %v2800 = vpop.f32.mrb[0].mxu0
      %v2801 = vadd.f32 0.0, %v2800
      %v2802 = vpop.f32.mrb[0].mxu0
      %2803 = vmatprep.mubr.bf16.mxu0 0
      %2804 = vmatmul.mubr.bf16.gmra.mrb[0].mxu0 %v1816
      %v2805 = vpop.f32.mrb[0].mxu0
      %v2806 = vadd.f32 0.0, %v2805
      %v2807 = vpop.f32.mrb[0].mxu0
      %v2808 = vpop.f32.mrb[0].mxu0
      %v2809 = vadd.f32 0.0, %v2808
      %v2810 = vpop.f32.mrb[0].mxu0
      %2811 = vmatprep.mubr.bf16.mxu0 0
      %2812 = vmatmul.mubr.bf16.gmra.mrb[0].mxu0 %v2593
      %v2813 = vpop.f32.mrb[0].mxu0
      %v2814 = vadd.f32 0.0, %v2813
      %v2815 = vpop.f32.mrb[0].mxu0
      %v2816 = vpop.f32.mrb[0].mxu0
      %v2817 = vadd.f32 0.0, %v2816
      %v2818 = vpop.f32.mrb[0].mxu0
      %2819 = vdwg.mxu0
      %v2820 = vadd.f32 %v2561, %v2694
      %v2821 = vadd.f32 %v2562, %v2697
      %v2822 = vadd.f32 %v2563, %v2702
      %v2823 = vadd.f32 %v2564, %v2705
      %v2824 = vadd.f32 %v2565, %v2710
      %v2825 = vadd.f32 %v2566, %v2713
      %v2826 = vadd.f32 %v2567, %v2718
      %v2827 = vadd.f32 %v2568, %v2721
      %v2828 = vadd.f32 %v2569, %v2726
      %v2829 = vadd.f32 %v2570, %v2729
      %v2830 = vadd.f32 %v2571, %v2734
      %v2831 = vadd.f32 %v2572, %v2737
      %v2832 = vadd.f32 %v2573, %v2742
      %v2833 = vadd.f32 %v2574, %v2745
      %v2834 = vadd.f32 %v2575, %v2750
      %v2835 = vadd.f32 %v2576, %v2753
      %v2836 = vadd.f32 %v2577, %v2758
      %v2837 = vadd.f32 %v2578, %v2761
      %v2838 = vadd.f32 %v2579, %v2766
      %v2839 = vadd.f32 %v2580, %v2769
      %v2840 = vadd.f32 %v2581, %v2774
      %v2841 = vadd.f32 %v2582, %v2777
      %v2842 = vadd.f32 %v2583, %v2782
      %v2843 = vadd.f32 %v2584, %v2785
      %v2844 = vadd.f32 %v2585, %v2790
      %v2845 = vadd.f32 %v2586, %v2793
      %v2846 = vadd.f32 %v2587, %v2798
      %v2847 = vadd.f32 %v2588, %v2801
      %v2848 = vadd.f32 %v2589, %v2806
      %v2849 = vadd.f32 %v2590, %v2809
      %v2850 = vadd.f32 %v2591, %v2814
      %v2851 = vadd.f32 %v2592, %v2817
      %v2852 = vpack.c.bf16 %v799, %v745
      %s2853 = scalar_lea.vmem %s3, 512
      %v2854 = vld [vmem:[%s2853] sm:$0xf]
      %v2855 = vld [vmem:[%s2853 + $0x4] sm:$0xf]
      %v2856 = vld [vmem:[%s2853 + $0x8] sm:$0xf]
      %v2857 = vld [vmem:[%s2853 + $0xc] sm:$0xf]
      %v2858 = vld [vmem:[%s2853 + $0x10] sm:$0xf]
      %v2859 = vld [vmem:[%s2853 + $0x14] sm:$0xf]
      %v2860 = vld [vmem:[%s2853 + $0x18] sm:$0xf]
      %v2861 = vld [vmem:[%s2853 + $0x1c] sm:$0xf]
      %v2862 = vld [vmem:[%s2853 + $0x20] sm:$0xf]
      %v2863 = vld [vmem:[%s2853 + $0x24] sm:$0xf]
      %v2864 = vld [vmem:[%s2853 + $0x28] sm:$0xf]
      %v2865 = vld [vmem:[%s2853 + $0x2c] sm:$0xf]
      %v2866 = vld [vmem:[%s2853 + $0x30] sm:$0xf]
      %v2867 = vld [vmem:[%s2853 + $0x34] sm:$0xf]
      %v2868 = vld [vmem:[%s2853 + $0x38] sm:$0xf]
      %v2869 = vld [vmem:[%s2853 + $0x3c] sm:$0xf]
      %v2886 = vunpack.c.l.b16 %v2854
      %v2887 = vunpack.c.l.b16 %v2855
      %v2888 = vunpack.c.l.b16 %v2856
      %v2889 = vunpack.c.l.b16 %v2857
      %v2890 = vunpack.c.l.b16 %v2858
      %v2891 = vunpack.c.l.b16 %v2859
      %v2892 = vunpack.c.l.b16 %v2860
      %v2893 = vunpack.c.l.b16 %v2861
      %v2894 = vunpack.c.l.b16 %v2862
      %v2895 = vunpack.c.l.b16 %v2863
      %v2896 = vunpack.c.l.b16 %v2864
      %v2897 = vunpack.c.l.b16 %v2865
      %v2898 = vunpack.c.l.b16 %v2866
      %v2899 = vunpack.c.l.b16 %v2867
      %v2900 = vunpack.c.l.b16 %v2868
      %v2901 = vunpack.c.l.b16 %v2869
      %v2902 = vpack.c.b16 %v2887, %v2886
      %v2903 = vpack.c.b16 %v2889, %v2888
      %v2904 = vpack.c.b16 %v2891, %v2890
      %v2905 = vpack.c.b16 %v2893, %v2892
      %v2906 = vpack.c.b16 %v2895, %v2894
      %v2907 = vpack.c.b16 %v2897, %v2896
      %v2908 = vpack.c.b16 %v2899, %v2898
      %v2909 = vpack.c.b16 %v2901, %v2900
      %2918 = vmatprep.subr.bf16.mxu0 0
      %2919 = vmatpush1.bf16.msra.mxu0 %v2902
      %2920 = vmatprep.subr.bf16.mxu0 0
      %2921 = vmatpush1.bf16.msra.mxu0 %v2903
      %2922 = vmatprep.subr.bf16.mxu0 0
      %2923 = vmatpush1.bf16.msra.mxu0 %v2904
      %2924 = vmatprep.subr.bf16.mxu0 0
      %2925 = vmatpush1.bf16.msra.mxu0 %v2905
      %2926 = vmatprep.subr.bf16.mxu0 0
      %2927 = vmatpush1.bf16.msra.mxu0 %v2906
      %2928 = vmatprep.subr.bf16.mxu0 0
      %2929 = vmatpush1.bf16.msra.mxu0 %v2907
      %2930 = vmatprep.subr.bf16.mxu0 0
      %2931 = vmatpush1.bf16.msra.mxu0 %v2908
      %2932 = vmatprep.subr.bf16.mxu0 0
      %2933 = vmatpush1.bf16.msra.mxu0 %v2909
      %2934 = vmatprep.subr.bf16.mxu0 0
      %2935 = vmatpush1.bf16.msra.mxu0 0
      %2936 = vmatprep.subr.bf16.mxu0 0
      %2937 = vmatpush1.bf16.msra.mxu0 0
      %2938 = vmatprep.subr.bf16.mxu0 0
      %2939 = vmatpush1.bf16.msra.mxu0 0
      %2940 = vmatprep.subr.bf16.mxu0 0
      %2941 = vmatpush1.bf16.msra.mxu0 0
      %2942 = vmatprep.subr.bf16.mxu0 0
      %2943 = vmatpush1.bf16.msra.mxu0 0
      %2944 = vmatprep.subr.bf16.mxu0 0
      %2945 = vmatpush1.bf16.msra.mxu0 0
      %2946 = vmatprep.subr.bf16.mxu0 0
      %2947 = vmatpush1.bf16.msra.mxu0 0
      %2948 = vmatprep.subr.bf16.mxu0 0
      %2949 = vmatpush1.bf16.msra.mxu0 0
      %2950 = vmatprep.mubr.bf16.mxu0 0
      %2951 = vmatmul.mubr.bf16.gmra.mrb[0].mxu0 %v1285
      %v2952 = vpop.f32.mrb[0].mxu0
      %v2953 = vadd.f32 0.0, %v2952
      %v2954 = vpop.f32.mrb[0].mxu0
      %v2955 = vpop.f32.mrb[0].mxu0
      %v2956 = vadd.f32 0.0, %v2955
      %v2957 = vpop.f32.mrb[0].mxu0
      %2958 = vmatprep.mubr.bf16.mxu0 0
      %2959 = vmatmul.mubr.bf16.gmra.mrb[0].mxu0 %v1286
      %v2960 = vpop.f32.mrb[0].mxu0
      %v2961 = vadd.f32 0.0, %v2960
      %v2962 = vpop.f32.mrb[0].mxu0
      %v2963 = vpop.f32.mrb[0].mxu0
      %v2964 = vadd.f32 0.0, %v2963
      %v2965 = vpop.f32.mrb[0].mxu0
      %2966 = vmatprep.mubr.bf16.mxu0 0
      %2967 = vmatmul.mubr.bf16.gmra.mrb[0].mxu0 %v1287
      %v2968 = vpop.f32.mrb[0].mxu0
      %v2969 = vadd.f32 0.0, %v2968
      %v2970 = vpop.f32.mrb[0].mxu0
      %v2971 = vpop.f32.mrb[0].mxu0
      %v2972 = vadd.f32 0.0, %v2971
      %v2973 = vpop.f32.mrb[0].mxu0
      %2974 = vmatprep.mubr.bf16.mxu0 0
      %2975 = vmatmul.mubr.bf16.gmra.mrb[0].mxu0 %v1288
      %v2976 = vpop.f32.mrb[0].mxu0
      %v2977 = vadd.f32 0.0, %v2976
      %v2978 = vpop.f32.mrb[0].mxu0
      %v2979 = vpop.f32.mrb[0].mxu0
      %v2980 = vadd.f32 0.0, %v2979
      %v2981 = vpop.f32.mrb[0].mxu0
      %2982 = vmatprep.mubr.bf16.mxu0 0
      %2983 = vmatmul.mubr.bf16.gmra.mrb[0].mxu0 %v1289
      %v2984 = vpop.f32.mrb[0].mxu0
      %v2985 = vadd.f32 0.0, %v2984
      %v2986 = vpop.f32.mrb[0].mxu0
      %v2987 = vpop.f32.mrb[0].mxu0
      %v2988 = vadd.f32 0.0, %v2987
      %v2989 = vpop.f32.mrb[0].mxu0
      %2990 = vmatprep.mubr.bf16.mxu0 0
      %2991 = vmatmul.mubr.bf16.gmra.mrb[0].mxu0 %v1290
      %v2992 = vpop.f32.mrb[0].mxu0
      %v2993 = vadd.f32 0.0, %v2992
      %v2994 = vpop.f32.mrb[0].mxu0
      %v2995 = vpop.f32.mrb[0].mxu0
      %v2996 = vadd.f32 0.0, %v2995
      %v2997 = vpop.f32.mrb[0].mxu0
      %2998 = vmatprep.mubr.bf16.mxu0 0
      %2999 = vmatmul.mubr.bf16.gmra.mrb[0].mxu0 %v1291
      %v3000 = vpop.f32.mrb[0].mxu0
      %v3001 = vadd.f32 0.0, %v3000
      %v3002 = vpop.f32.mrb[0].mxu0
      %v3003 = vpop.f32.mrb[0].mxu0
      %v3004 = vadd.f32 0.0, %v3003
      %v3005 = vpop.f32.mrb[0].mxu0
      %3006 = vmatprep.mubr.bf16.mxu0 0
      %3007 = vmatmul.mubr.bf16.gmra.mrb[0].mxu0 %v1292
      %v3008 = vpop.f32.mrb[0].mxu0
      %v3009 = vadd.f32 0.0, %v3008
      %v3010 = vpop.f32.mrb[0].mxu0
      %v3011 = vpop.f32.mrb[0].mxu0
      %v3012 = vadd.f32 0.0, %v3011
      %v3013 = vpop.f32.mrb[0].mxu0
      %3014 = vmatprep.mubr.bf16.mxu0 0
      %3015 = vmatmul.mubr.bf16.gmra.mrb[0].mxu0 %v1293
      %v3016 = vpop.f32.mrb[0].mxu0
      %v3017 = vadd.f32 0.0, %v3016
      %v3018 = vpop.f32.mrb[0].mxu0
      %v3019 = vpop.f32.mrb[0].mxu0
      %v3020 = vadd.f32 0.0, %v3019
      %v3021 = vpop.f32.mrb[0].mxu0
      %3022 = vmatprep.mubr.bf16.mxu0 0
      %3023 = vmatmul.mubr.bf16.gmra.mrb[0].mxu0 %v1294
      %v3024 = vpop.f32.mrb[0].mxu0
      %v3025 = vadd.f32 0.0, %v3024
      %v3026 = vpop.f32.mrb[0].mxu0
      %v3027 = vpop.f32.mrb[0].mxu0
      %v3028 = vadd.f32 0.0, %v3027
      %v3029 = vpop.f32.mrb[0].mxu0
      %3030 = vmatprep.mubr.bf16.mxu0 0
      %3031 = vmatmul.mubr.bf16.gmra.mrb[0].mxu0 %v1295
      %v3032 = vpop.f32.mrb[0].mxu0
      %v3033 = vadd.f32 0.0, %v3032
      %v3034 = vpop.f32.mrb[0].mxu0
      %v3035 = vpop.f32.mrb[0].mxu0
      %v3036 = vadd.f32 0.0, %v3035
      %v3037 = vpop.f32.mrb[0].mxu0
      %3038 = vmatprep.mubr.bf16.mxu0 0
      %3039 = vmatmul.mubr.bf16.gmra.mrb[0].mxu0 %v1296
      %v3040 = vpop.f32.mrb[0].mxu0
      %v3041 = vadd.f32 0.0, %v3040
      %v3042 = vpop.f32.mrb[0].mxu0
      %v3043 = vpop.f32.mrb[0].mxu0
      %v3044 = vadd.f32 0.0, %v3043
      %v3045 = vpop.f32.mrb[0].mxu0
      %3046 = vmatprep.mubr.bf16.mxu0 0
      %3047 = vmatmul.mubr.bf16.gmra.mrb[0].mxu0 %v1297
      %v3048 = vpop.f32.mrb[0].mxu0
      %v3049 = vadd.f32 0.0, %v3048
      %v3050 = vpop.f32.mrb[0].mxu0
      %v3051 = vpop.f32.mrb[0].mxu0
      %v3052 = vadd.f32 0.0, %v3051
      %v3053 = vpop.f32.mrb[0].mxu0
      %3054 = vmatprep.mubr.bf16.mxu0 0
      %3055 = vmatmul.mubr.bf16.gmra.mrb[0].mxu0 %v1298
      %v3056 = vpop.f32.mrb[0].mxu0
      %v3057 = vadd.f32 0.0, %v3056
      %v3058 = vpop.f32.mrb[0].mxu0
      %v3059 = vpop.f32.mrb[0].mxu0
      %v3060 = vadd.f32 0.0, %v3059
      %v3061 = vpop.f32.mrb[0].mxu0
      %3062 = vmatprep.mubr.bf16.mxu0 0
      %3063 = vmatmul.mubr.bf16.gmra.mrb[0].mxu0 %v2075
      %v3064 = vpop.f32.mrb[0].mxu0
      %v3065 = vadd.f32 0.0, %v3064
      %v3066 = vpop.f32.mrb[0].mxu0
      %v3067 = vpop.f32.mrb[0].mxu0
      %v3068 = vadd.f32 0.0, %v3067
      %v3069 = vpop.f32.mrb[0].mxu0
      %3070 = vmatprep.mubr.bf16.mxu0 0
      %3071 = vmatmul.mubr.bf16.gmra.mrb[0].mxu0 %v2852
      %v3072 = vpop.f32.mrb[0].mxu0
      %v3073 = vadd.f32 0.0, %v3072
      %v3074 = vpop.f32.mrb[0].mxu0
      %v3075 = vpop.f32.mrb[0].mxu0
      %v3076 = vadd.f32 0.0, %v3075
      %v3077 = vpop.f32.mrb[0].mxu0
      %3078 = vdwg.mxu0
      %v3079 = vadd.f32 %v2820, %v2953
      %v3080 = vadd.f32 %v2821, %v2956
      %v3081 = vadd.f32 %v2822, %v2961
      %v3082 = vadd.f32 %v2823, %v2964
      %v3083 = vadd.f32 %v2824, %v2969
      %v3084 = vadd.f32 %v2825, %v2972
      %v3085 = vadd.f32 %v2826, %v2977
      %v3086 = vadd.f32 %v2827, %v2980
      %v3087 = vadd.f32 %v2828, %v2985
      %v3088 = vadd.f32 %v2829, %v2988
      %v3089 = vadd.f32 %v2830, %v2993
      %v3090 = vadd.f32 %v2831, %v2996
      %v3091 = vadd.f32 %v2832, %v3001
      %v3092 = vadd.f32 %v2833, %v3004
      %v3093 = vadd.f32 %v2834, %v3009
      %v3094 = vadd.f32 %v2835, %v3012
      %v3095 = vadd.f32 %v2836, %v3017
      %v3096 = vadd.f32 %v2837, %v3020
      %v3097 = vadd.f32 %v2838, %v3025
      %v3098 = vadd.f32 %v2839, %v3028
      %v3099 = vadd.f32 %v2840, %v3033
      %v3100 = vadd.f32 %v2841, %v3036
      %v3101 = vadd.f32 %v2842, %v3041
      %v3102 = vadd.f32 %v2843, %v3044
      %v3103 = vadd.f32 %v2844, %v3049
      %v3104 = vadd.f32 %v2845, %v3052
      %v3105 = vadd.f32 %v2846, %v3057
      %v3106 = vadd.f32 %v2847, %v3060
      %v3107 = vadd.f32 %v2848, %v3065
      %v3108 = vadd.f32 %v2849, %v3068
      %v3109 = vadd.f32 %v2850, %v3073
      %v3110 = vadd.f32 %v2851, %v3076
      %v3111 = vpack.c.bf16 %v3080, %v3079
      %v3112 = vpack.c.bf16 %v3082, %v3081
      %v3113 = vpack.c.bf16 %v3084, %v3083
      %v3114 = vpack.c.bf16 %v3086, %v3085
      %v3115 = vpack.c.bf16 %v3088, %v3087
      %v3116 = vpack.c.bf16 %v3090, %v3089
      %v3117 = vpack.c.bf16 %v3092, %v3091
      %v3118 = vpack.c.bf16 %v3094, %v3093
      %v3119 = vpack.c.bf16 %v3096, %v3095
      %v3120 = vpack.c.bf16 %v3098, %v3097
      %v3121 = vpack.c.bf16 %v3100, %v3099
      %v3122 = vpack.c.bf16 %v3102, %v3101
      %v3123 = vpack.c.bf16 %v3104, %v3103
      %v3124 = vpack.c.bf16 %v3106, %v3105
      %v3125 = vpack.c.bf16 %v3108, %v3107
      %v3126 = vpack.c.bf16 %v3110, %v3109
      %v3143 = vunpack.c.l.b16 %v3111
      %v3144 = vunpack.c.h.b16 %v3111
      %v3145 = vunpack.c.l.b16 %v3112
      %v3146 = vunpack.c.h.b16 %v3112
      %v3147 = vunpack.c.l.b16 %v3113
      %v3148 = vunpack.c.h.b16 %v3113
      %v3149 = vunpack.c.l.b16 %v3114
      %v3150 = vunpack.c.h.b16 %v3114
      %v3151 = vunpack.c.l.b16 %v3115
      %v3152 = vunpack.c.h.b16 %v3115
      %v3153 = vunpack.c.l.b16 %v3116
      %v3154 = vunpack.c.h.b16 %v3116
      %v3155 = vunpack.c.l.b16 %v3117
      %v3156 = vunpack.c.h.b16 %v3117
      %v3157 = vunpack.c.l.b16 %v3118
      %v3158 = vunpack.c.h.b16 %v3118
      %v3159 = vunpack.c.l.b16 %v3119
      %v3160 = vunpack.c.h.b16 %v3119
      %v3161 = vunpack.c.l.b16 %v3120
      %v3162 = vunpack.c.h.b16 %v3120
      %v3163 = vunpack.c.l.b16 %v3121
      %v3164 = vunpack.c.h.b16 %v3121
      %v3165 = vunpack.c.l.b16 %v3122
      %v3166 = vunpack.c.h.b16 %v3122
      %v3167 = vunpack.c.l.b16 %v3123
      %v3168 = vunpack.c.h.b16 %v3123
      %v3169 = vunpack.c.l.b16 %v3124
      %v3170 = vunpack.c.h.b16 %v3124
      %v3171 = vunpack.c.l.b16 %v3125
      %v3172 = vunpack.c.h.b16 %v3125
      %v3173 = vunpack.c.l.b16 %v3126
      %v3174 = vunpack.c.h.b16 %v3126
      %v3175 = vpack.c.b16 %v3143, %v3143
      %v3176 = vpack.c.b16 %v3144, %v3144
      %v3177 = vpack.c.b16 %v3145, %v3145
      %v3178 = vpack.c.b16 %v3146, %v3146
      %v3179 = vpack.c.b16 %v3147, %v3147
      %v3180 = vpack.c.b16 %v3148, %v3148
      %v3181 = vpack.c.b16 %v3149, %v3149
      %v3182 = vpack.c.b16 %v3150, %v3150
      %v3183 = vpack.c.b16 %v3151, %v3151
      %v3184 = vpack.c.b16 %v3152, %v3152
      %v3185 = vpack.c.b16 %v3153, %v3153
      %v3186 = vpack.c.b16 %v3154, %v3154
      %v3187 = vpack.c.b16 %v3155, %v3155
      %v3188 = vpack.c.b16 %v3156, %v3156
      %v3189 = vpack.c.b16 %v3157, %v3157
      %v3190 = vpack.c.b16 %v3158, %v3158
      %v3191 = vpack.c.b16 %v3159, %v3159
      %v3192 = vpack.c.b16 %v3160, %v3160
      %v3193 = vpack.c.b16 %v3161, %v3161
      %v3194 = vpack.c.b16 %v3162, %v3162
      %v3195 = vpack.c.b16 %v3163, %v3163
      %v3196 = vpack.c.b16 %v3164, %v3164
      %v3197 = vpack.c.b16 %v3165, %v3165
      %v3198 = vpack.c.b16 %v3166, %v3166
      %v3199 = vpack.c.b16 %v3167, %v3167
      %v3200 = vpack.c.b16 %v3168, %v3168
      %v3201 = vpack.c.b16 %v3169, %v3169
      %v3202 = vpack.c.b16 %v3170, %v3170
      %v3203 = vpack.c.b16 %v3171, %v3171
      %v3204 = vpack.c.b16 %v3172, %v3172
      %v3205 = vpack.c.b16 %v3173, %v3173
      %v3206 = vpack.c.b16 %v3174, %v3174
      %3239 = vst [vmem:[%s457] sm:$0xf] %v3175
      %3240 = vst [vmem:[%s457 + $0x4] sm:$0xf] %v3176
      %3241 = vst [vmem:[%s457 + $0x8] sm:$0xf] %v3177
      %3242 = vst [vmem:[%s457 + $0xc] sm:$0xf] %v3178
      %3243 = vst [vmem:[%s457 + $0x10] sm:$0xf] %v3179
      %3244 = vst [vmem:[%s457 + $0x14] sm:$0xf] %v3180
      %3245 = vst [vmem:[%s457 + $0x18] sm:$0xf] %v3181
      %3246 = vst [vmem:[%s457 + $0x1c] sm:$0xf] %v3182
      %3247 = vst [vmem:[%s457 + $0x20] sm:$0xf] %v3183
      %3248 = vst [vmem:[%s457 + $0x24] sm:$0xf] %v3184
      %3249 = vst [vmem:[%s457 + $0x28] sm:$0xf] %v3185
      %3250 = vst [vmem:[%s457 + $0x2c] sm:$0xf] %v3186
      %3251 = vst [vmem:[%s457 + $0x30] sm:$0xf] %v3187
      %3252 = vst [vmem:[%s457 + $0x34] sm:$0xf] %v3188
      %3253 = vst [vmem:[%s457 + $0x38] sm:$0xf] %v3189
      %3254 = vst [vmem:[%s457 + $0x3c] sm:$0xf] %v3190
      %3255 = vst [vmem:[%s457 + $0x40] sm:$0xf] %v3191
      %3256 = vst [vmem:[%s457 + $0x44] sm:$0xf] %v3192
      %3257 = vst [vmem:[%s457 + $0x48] sm:$0xf] %v3193
      %3258 = vst [vmem:[%s457 + $0x4c] sm:$0xf] %v3194
      %3259 = vst [vmem:[%s457 + $0x50] sm:$0xf] %v3195
      %3260 = vst [vmem:[%s457 + $0x54] sm:$0xf] %v3196
      %3261 = vst [vmem:[%s457 + $0x58] sm:$0xf] %v3197
      %3262 = vst [vmem:[%s457 + $0x5c] sm:$0xf] %v3198
      %3263 = vst [vmem:[%s457 + $0x60] sm:$0xf] %v3199
      %3264 = vst [vmem:[%s457 + $0x64] sm:$0xf] %v3200
      %3265 = vst [vmem:[%s457 + $0x68] sm:$0xf] %v3201
      %3266 = vst [vmem:[%s457 + $0x6c] sm:$0xf] %v3202
      %3267 = vst [vmem:[%s457 + $0x70] sm:$0xf] %v3203
      %3268 = vst [vmem:[%s457 + $0x74] sm:$0xf] %v3204
      %3269 = vst [vmem:[%s457 + $0x78] sm:$0xf] %v3205
      %3270 = vst [vmem:[%s457 + $0x7c] sm:$0xf] %v3206
      %v3271 = vadd.f32 %v3079, %v3080
      %v3272 = vadd.f32 %v3271, %v3081
      %v3273 = vadd.f32 %v3272, %v3082
      %v3274 = vadd.f32 %v3273, %v3083
      %v3275 = vadd.f32 %v3274, %v3084
      %v3276 = vadd.f32 %v3275, %v3085
      %v3277 = vadd.f32 %v3276, %v3086
      %v3278 = vadd.f32 %v3277, %v3087
      %v3279 = vadd.f32 %v3278, %v3088
      %v3280 = vadd.f32 %v3279, %v3089
      %v3281 = vadd.f32 %v3280, %v3090
      %v3282 = vadd.f32 %v3281, %v3091
      %v3283 = vadd.f32 %v3282, %v3092
      %v3284 = vadd.f32 %v3283, %v3093
      %v3285 = vadd.f32 %v3284, %v3094
      %v3286 = vadd.f32 %v3285, %v3095
      %v3287 = vadd.f32 %v3286, %v3096
      %v3288 = vadd.f32 %v3287, %v3097
      %v3289 = vadd.f32 %v3288, %v3098
      %v3290 = vadd.f32 %v3289, %v3099
      %v3291 = vadd.f32 %v3290, %v3100
      %v3292 = vadd.f32 %v3291, %v3101
      %v3293 = vadd.f32 %v3292, %v3102
      %v3294 = vadd.f32 %v3293, %v3103
      %v3295 = vadd.f32 %v3294, %v3104
      %v3296 = vadd.f32 %v3295, %v3105
      %v3297 = vadd.f32 %v3296, %v3106
      %v3298 = vadd.f32 %v3297, %v3107
      %v3299 = vadd.f32 %v3298, %v3108
      %v3300 = vadd.f32 %v3299, %v3109
      %v3301 = vadd.f32 %v3300, %v3110
      %v3302 = vrot.slane %v3301, 4
      %v3303 = vadd.f32 %v3301, %v3302
      %v3304 = vrot.slane %v3303, 2
      %v3305 = vadd.f32 %v3303, %v3304
      %v3306 = vrot.slane %v3305, 1
      %v3307 = vadd.f32 %v3305, %v3306
      %v3308 = vmul.f32 %v3079, %v3079
      %v3309 = vmul.f32 %v3080, %v3080
      %v3310 = vmul.f32 %v3081, %v3081
      %v3311 = vmul.f32 %v3082, %v3082
      %v3312 = vmul.f32 %v3083, %v3083
      %v3313 = vmul.f32 %v3084, %v3084
      %v3314 = vmul.f32 %v3085, %v3085
      %v3315 = vmul.f32 %v3086, %v3086
      %v3316 = vmul.f32 %v3087, %v3087
      %v3317 = vmul.f32 %v3088, %v3088
      %v3318 = vmul.f32 %v3089, %v3089
      %v3319 = vmul.f32 %v3090, %v3090
      %v3320 = vmul.f32 %v3091, %v3091
      %v3321 = vmul.f32 %v3092, %v3092
      %v3322 = vmul.f32 %v3093, %v3093
      %v3323 = vmul.f32 %v3094, %v3094
      %v3324 = vmul.f32 %v3095, %v3095
      %v3325 = vmul.f32 %v3096, %v3096
      %v3326 = vmul.f32 %v3097, %v3097
      %v3327 = vmul.f32 %v3098, %v3098
      %v3328 = vmul.f32 %v3099, %v3099
      %v3329 = vmul.f32 %v3100, %v3100
      %v3330 = vmul.f32 %v3101, %v3101
      %v3331 = vmul.f32 %v3102, %v3102
      %v3332 = vmul.f32 %v3103, %v3103
      %v3333 = vmul.f32 %v3104, %v3104
      %v3334 = vmul.f32 %v3105, %v3105
      %v3335 = vmul.f32 %v3106, %v3106
      %v3336 = vmul.f32 %v3107, %v3107
      %v3337 = vmul.f32 %v3108, %v3108
      %v3338 = vmul.f32 %v3109, %v3109
      %v3339 = vmul.f32 %v3110, %v3110
      %v3340 = vadd.f32 %v3308, %v3309
      %v3341 = vadd.f32 %v3340, %v3310
      %v3342 = vadd.f32 %v3341, %v3311
      %v3343 = vadd.f32 %v3342, %v3312
      %v3344 = vadd.f32 %v3343, %v3313
      %v3345 = vadd.f32 %v3344, %v3314
      %v3346 = vadd.f32 %v3345, %v3315
      %v3347 = vadd.f32 %v3346, %v3316
      %v3348 = vadd.f32 %v3347, %v3317
      %v3349 = vadd.f32 %v3348, %v3318
      %v3350 = vadd.f32 %v3349, %v3319
      %v3351 = vadd.f32 %v3350, %v3320
      %v3352 = vadd.f32 %v3351, %v3321
      %v3353 = vadd.f32 %v3352, %v3322
      %v3354 = vadd.f32 %v3353, %v3323
      %v3355 = vadd.f32 %v3354, %v3324
      %v3356 = vadd.f32 %v3355, %v3325
      %v3357 = vadd.f32 %v3356, %v3326
      %v3358 = vadd.f32 %v3357, %v3327
      %v3359 = vadd.f32 %v3358, %v3328
      %v3360 = vadd.f32 %v3359, %v3329
      %v3361 = vadd.f32 %v3360, %v3330
      %v3362 = vadd.f32 %v3361, %v3331
      %v3363 = vadd.f32 %v3362, %v3332
      %v3364 = vadd.f32 %v3363, %v3333
      %v3365 = vadd.f32 %v3364, %v3334
      %v3366 = vadd.f32 %v3365, %v3335
      %v3367 = vadd.f32 %v3366, %v3336
      %v3368 = vadd.f32 %v3367, %v3337
      %v3369 = vadd.f32 %v3368, %v3338
      %v3370 = vadd.f32 %v3369, %v3339
      %v3371 = vrot.slane %v3370, 4
      %v3372 = vadd.f32 %v3370, %v3371
      %v3373 = vrot.slane %v3372, 2
      %v3374 = vadd.f32 %v3372, %v3373
      %v3375 = vrot.slane %v3374, 1
      %v3376 = vadd.f32 %v3374, %v3375
      %v3377 = vsel %vm582, %v3307, %v3376
      %3378 = vst [vmem:[%s465] sm:$0x3] %v3377
      %s3379 = smul.u32 16, %s24
      %p3380 = scmp.lt.s32.totalorder %s23, 1
      %s3381 = scalar_select %p3380, %s23, 1
      %p3382 = scmp.lt.s32.totalorder %s3379, 15
      %s3383 = scalar_select %p3382, %s3379, 15
      %s3384 = smul.addr %s3383, 2
      %s3385 = smul.addr %s3381, 32
      %s3386 = sadd.s32 %s3384, %s3385
      %s3387 = smul.addr %s3386, 4
      %s3388 = scalar_lea.vmem %s6, %s3387
      %p3389 = scmp.lt.s32.totalorder %s23, 1
      %s3390 = scalar_select %p3389, %s23, 1
      %p3391 = scmp.lt.s32.totalorder %s24, 0
      %s3392 = scalar_select %p3391, %s24, 0
      %s3393 = sadd.s32 %s3392, %s3390
      %s3394 = smul.addr %s3393, 2
      %s3395 = scalar_lea.vmem %s7, %s3394
      // Predicated region
      $region45: #{up_forward.4} parent=43 // pred_check
        %p3396 = pneg %p214
      $region46: #{up_forward.4} parent=43 // pred_check_branch
        %3398 = sbr.rel (%p3396) target = $region48
      $region47: #{up_forward.4} parent=43 // pred_region
        %s3399 = smul.u32 16, %s24
      $region48: #{up_forward.4} parent=43 // pred_fallthru
        _
      // Predicated region
      $region49: #{up_forward.4} parent=43 // pred_check
        %p3400 = pneg %p242
      $region50: #{up_forward.4} parent=43 // pred_check_branch
        %3402 = sbr.rel (%p3400) target = $region52
      $region51: #{up_forward.4} parent=43 // pred_region
        _
      $region52: #{up_forward.4} parent=43 // pred_fallthru
        _
    $region44: #{up_forward.4} parent=5 // pred_fallthru
      _
    %p3403 = scmp.le.s32.totalorder 2, %s14
    // Predicated region
    $region53: #{up_forward.4} parent=5 // pred_check
      %p3404 = pneg %p3403
    $region54: #{up_forward.4} parent=5 // pred_check_branch
      %3406 = sbr.rel (%p3404) target = $region56
    $region55: #{up_forward.4} parent=5 // pred_region
      %s3407 = ssub.s32 %s14, 2
      // Predicated region
      $region57: #{up_forward.4} parent=55 // pred_check
        %p3408 = pneg %p220
      $region58: #{up_forward.4} parent=55 // pred_check_branch
        %3410 = sbr.rel (%p3408) target = $region60
      $region59: #{up_forward.4} parent=55 // pred_region
        %s3411 = smul.u32 16, %s26
        %p3412 = scmp.lt.s32.totalorder %s25, 1
        %s3413 = scalar_select %p3412, %s25, 1
        %p3414 = scmp.lt.s32.totalorder %s3411, 15
        %s3415 = scalar_select %p3414, %s3411, 15
        %s3416 = smul.addr %s3415, 2
        %s3417 = smul.addr %s3413, 32
        %s3418 = sadd.s32 %s3416, %s3417
        %s3419 = smul.addr %s3418, 4
        %s3420 = scalar_lea.vmem %s6, %s3419
      $region60: #{up_forward.4} parent=55 // pred_fallthru
        _
      // Predicated region
      $region61: #{up_forward.4} parent=55 // pred_check
        %p3421 = pneg %p248
      $region62: #{up_forward.4} parent=55 // pred_check_branch
        %3423 = sbr.rel (%p3421) target = $region64
      $region63: #{up_forward.4} parent=55 // pred_region
        %p3424 = scmp.lt.s32.totalorder %s25, 1
        %s3425 = scalar_select %p3424, %s25, 1
        %p3426 = scmp.lt.s32.totalorder %s26, 0
        %s3427 = scalar_select %p3426, %s26, 0
        %s3428 = sadd.s32 %s3427, %s3425
        %s3429 = smul.addr %s3428, 2
        %s3430 = scalar_lea.vmem %s7, %s3429
      $region64: #{up_forward.4} parent=55 // pred_fallthru
        _
    $region56: #{up_forward.4} parent=5 // pred_fallthru
      _
  $region6: #{up_forward.4} parent=0 // loop_footer
    %s18 = sadd.s32 1, %s14
  $region7: #{up_forward.4} parent=0 // loop_footer_branch
    %13 = sbr.rel target = $region3
  $region8: #{up_forward.4} parent=0 // loop_exit
    _

// kernel: up_forward.5
$region0: #{up_forward.5}
  #allocation0 [shape = 'u32[]', space=smem, size = 0x4, offset = 0x4, fixed_abs, tag = 'smem constant byte address 0x4 - core index']
  #allocation1 [shape = 'u32[144,128]{1,0:T(1,128)}', space=vmem, size = 0x12000, scoped, tag = 'internal scratch']
  %s0 = inlined_call_operand.vmem [shape: bf16[2,16,16,128], index: 0, kind: input, shape index: {}, may-alias: {0,1,2}]
  %s1 = inlined_call_operand.vmem [shape: bf16[2,16,16,128], index: 1, kind: input, shape index: {}, may-alias: {0,1,2}]
  %s2 = inlined_call_operand.vmem [shape: bf16[2,16,16,128], index: 2, kind: input, shape index: {}, may-alias: {0,1,2}]
  %s3 = inlined_call_operand.vmem [shape: bf16[9,128,128], index: 3, kind: input, shape index: {}]
  %s4 = inlined_call_operand.vmem [shape: f32[1,128], index: 4, kind: input, shape index: {}]
  %s5 = inlined_call_operand.vmem [shape: f32[1,128], index: 5, kind: input, shape index: {}]
  %s6 = inlined_call_operand.vmem [shape: bf16[2,16,16,128], index: 6, kind: output, shape index: {0}]
  %s7 = inlined_call_operand.vmem [shape: f32[2,1,2,128], index: 7, kind: output, shape index: {1}]
  %8 = xla_tuple %s6, %s7
  %s9 = sld [smem:[#allocation0]]
  $region65: #{up_forward.5} parent=0
    _
  %s11 = ssub.s32 1, %s9
  %s12 = scalar_select 0, %s11, %s9
  loop: start=0, step=1, limit=4
  $region2: #{up_forward.5} parent=0 // loop_pre_header
    _
  $region3: #{up_forward.5} parent=0 // loop_header
    %s14 = sphi 0, %s18
    %p15 = scmp.ge.s32.totalorder %s14, 4
    %s21 = sphi 0, %s33
    %s22 = sphi 0, %s29
    %s23 = sphi 0, %s21
    %s24 = sphi 0, %s22
    %s25 = sphi 0, %s23
    %s26 = sphi 0, %s24
    %s38 = sphi 0, %s40
    %s41 = sphi 0, %s38
    %s42 = sphi 0, %s41
    %s58 = sphi 0, %s42
    %s74 = sphi 0, %s76
    %s77 = sphi 0, %s74
    %s78 = sphi 0, %s77
    %s94 = sphi 0, %s78
    %s110 = sphi 0, %s112
    %s113 = sphi 0, %s110
    %s114 = sphi 0, %s113
    %s130 = sphi 0, %s114
    %s134 = sphi 0, %s134
    %s136 = sphi 0, %s134
    %s137 = sphi 0, %s136
    %s151 = sphi 0, %s137
    %s155 = sphi 0, %s155
    %s157 = sphi 0, %s155
    %s158 = sphi 0, %s157
    %s172 = sphi 0, %s158
    %s176 = sphi 0, %s176
    %s178 = sphi 0, %s176
    %s179 = sphi 0, %s178
    %s193 = sphi 0, %s179
    %s201 = sphi 0, %s203
    %s204 = sphi 0, %s201
    %s205 = sphi 0, %s204
    %s221 = sphi 0, %s205
    %s229 = sphi 0, %s231
    %s232 = sphi 0, %s229
    %s233 = sphi 0, %s232
    %s249 = sphi 0, %s233
  $region4: #{up_forward.5} parent=0 // loop_header_branch
    %17 = sbr.rel (%p15) target = $region8
  $region5: #{up_forward.5} parent=0 // loop_body
    %s19 = ssub.s32 %s14, 1
    %s20 = ssub.s32 %s14, 2
    %s27 = sadd.s32 1, %s22
    %p28 = scmp.ge.s32.totalorder %s27, 1
    %s29 = scalar_select %p28, 0, %s27
    %s30 = sadd.s32 1, %s21
    %s31 = scalar_select %p28, %s30, %s21
    %p32 = scmp.ge.s32.totalorder %s31, 2
    %s33 = scalar_select %p32, 0, %s31
    %s34 = ssub.s32 %s21, %s33
    %s35 = ssub.s32 %s22, %s29
    %s36 = sor.u32 %s34, %s35
    %p37 = scmp.eq.s32.totalorder %s36, 0
    %s39 = sadd.s32 %s38, 1
    %s40 = scalar_select %p37, %s38, %s39
    %p43 = pneg %p37
    %p44 = scmp.eq.s32.totalorder %s14, 1
    %p45 = por %p43, %p44
    %p46 = scmp.ne.s32.totalorder %s38, %s41
    %p47 = scmp.eq.s32.totalorder %s14, 0
    %p48 = por %p46, %p47
    %p49 = scmp.ne.s32.totalorder %s38, %s41
    %p50 = scmp.eq.s32.totalorder %s19, 1
    %p51 = por %p49, %p50
    %p52 = scmp.ne.s32.totalorder %s41, %s42
    %p53 = scmp.eq.s32.totalorder %s19, 0
    %p54 = por %p52, %p53
    %p55 = scmp.ne.s32.totalorder %s41, %s42
    %p56 = scmp.eq.s32.totalorder %s20, 1
    %p57 = por %p55, %p56
    %p59 = scmp.ne.s32.totalorder %s42, %s58
    %p60 = scmp.eq.s32.totalorder %s20, 0
    %p61 = por %p59, %p60
    %s62 = smul.u32 %s22, 16
    %s63 = ssub.s32 %s62, 1
    %p64 = scmp.gt.s32.totalorder %s63, 0
    %s65 = scalar_select %p64, %s63, 0
    %s66 = smul.u32 %s29, 16
    %s67 = ssub.s32 %s66, 1
    %p68 = scmp.gt.s32.totalorder %s67, 0
    %s69 = scalar_select %p68, %s67, 0
    %s70 = ssub.s32 %s21, %s33
    %s71 = ssub.s32 %s65, %s69
    %s72 = sor.u32 %s70, %s71
    %p73 = scmp.eq.s32.totalorder %s72, 0
    %s75 = sadd.s32 %s74, 1
    %s76 = scalar_select %p73, %s74, %s75
    %p79 = pneg %p73
    %p80 = scmp.eq.s32.totalorder %s14, 1
    %p81 = por %p79, %p80
    %p82 = scmp.ne.s32.totalorder %s74, %s77
    %p83 = scmp.eq.s32.totalorder %s14, 0
    %p84 = por %p82, %p83
    %p85 = scmp.ne.s32.totalorder %s74, %s77
    %p86 = scmp.eq.s32.totalorder %s19, 1
    %p87 = por %p85, %p86
    %p88 = scmp.ne.s32.totalorder %s77, %s78
    %p89 = scmp.eq.s32.totalorder %s19, 0
    %p90 = por %p88, %p89
    %p91 = scmp.ne.s32.totalorder %s77, %s78
    %p92 = scmp.eq.s32.totalorder %s20, 1
    %p93 = por %p91, %p92
    %p95 = scmp.ne.s32.totalorder %s78, %s94
    %p96 = scmp.eq.s32.totalorder %s20, 0
    %p97 = por %p95, %p96
    %s98 = smul.u32 %s22, 16
    %s99 = sadd.s32 %s98, 16
    %p100 = scmp.lt.s32.totalorder %s99, 15
    %s101 = scalar_select %p100, %s99, 15
    %s102 = smul.u32 %s29, 16
    %s103 = sadd.s32 %s102, 16
    %p104 = scmp.lt.s32.totalorder %s103, 15
    %s105 = scalar_select %p104, %s103, 15
    %s106 = ssub.s32 %s21, %s33
    %s107 = ssub.s32 %s101, %s105
    %s108 = sor.u32 %s106, %s107
    %p109 = scmp.eq.s32.totalorder %s108, 0
    %s111 = sadd.s32 %s110, 1
    %s112 = scalar_select %p109, %s110, %s111
    %p115 = pneg %p109
    %p116 = scmp.eq.s32.totalorder %s14, 1
    %p117 = por %p115, %p116
    %p118 = scmp.ne.s32.totalorder %s110, %s113
    %p119 = scmp.eq.s32.totalorder %s14, 0
    %p120 = por %p118, %p119
    %p121 = scmp.ne.s32.totalorder %s110, %s113
    %p122 = scmp.eq.s32.totalorder %s19, 1
    %p123 = por %p121, %p122
    %p124 = scmp.ne.s32.totalorder %s113, %s114
    %p125 = scmp.eq.s32.totalorder %s19, 0
    %p126 = por %p124, %p125
    %p127 = scmp.ne.s32.totalorder %s113, %s114
    %p128 = scmp.eq.s32.totalorder %s20, 1
    %p129 = por %p127, %p128
    %p131 = scmp.ne.s32.totalorder %s114, %s130
    %p132 = scmp.eq.s32.totalorder %s20, 0
    %p133 = por %p131, %p132
    %s135 = sadd.s32 %s134, 1
    %p138 = scmp.eq.s32.totalorder %s14, 1
    %p139 = scmp.ne.s32.totalorder %s134, %s136
    %p140 = scmp.eq.s32.totalorder %s14, 0
    %p141 = por %p139, %p140
    %p142 = scmp.ne.s32.totalorder %s134, %s136
    %p143 = scmp.eq.s32.totalorder %s19, 1
    %p144 = por %p142, %p143
    %p145 = scmp.ne.s32.totalorder %s136, %s137
    %p146 = scmp.eq.s32.totalorder %s19, 0
    %p147 = por %p145, %p146
    %p148 = scmp.ne.s32.totalorder %s136, %s137
    %p149 = scmp.eq.s32.totalorder %s20, 1
    %p150 = por %p148, %p149
    %p152 = scmp.ne.s32.totalorder %s137, %s151
    %p153 = scmp.eq.s32.totalorder %s20, 0
    %p154 = por %p152, %p153
    %s156 = sadd.s32 %s155, 1
    %p159 = scmp.eq.s32.totalorder %s14, 1
    %p160 = scmp.ne.s32.totalorder %s155, %s157
    %p161 = scmp.eq.s32.totalorder %s14, 0
    %p162 = por %p160, %p161
    %p163 = scmp.ne.s32.totalorder %s155, %s157
    %p164 = scmp.eq.s32.totalorder %s19, 1
    %p165 = por %p163, %p164
    %p166 = scmp.ne.s32.totalorder %s157, %s158
    %p167 = scmp.eq.s32.totalorder %s19, 0
    %p168 = por %p166, %p167
    %p169 = scmp.ne.s32.totalorder %s157, %s158
    %p170 = scmp.eq.s32.totalorder %s20, 1
    %p171 = por %p169, %p170
    %p173 = scmp.ne.s32.totalorder %s158, %s172
    %p174 = scmp.eq.s32.totalorder %s20, 0
    %p175 = por %p173, %p174
    %s177 = sadd.s32 %s176, 1
    %p180 = scmp.eq.s32.totalorder %s14, 1
    %p181 = scmp.ne.s32.totalorder %s176, %s178
    %p182 = scmp.eq.s32.totalorder %s14, 0
    %p183 = por %p181, %p182
    %p184 = scmp.ne.s32.totalorder %s176, %s178
    %p185 = scmp.eq.s32.totalorder %s19, 1
    %p186 = por %p184, %p185
    %p187 = scmp.ne.s32.totalorder %s178, %s179
    %p188 = scmp.eq.s32.totalorder %s19, 0
    %p189 = por %p187, %p188
    %p190 = scmp.ne.s32.totalorder %s178, %s179
    %p191 = scmp.eq.s32.totalorder %s20, 1
    %p192 = por %p190, %p191
    %p194 = scmp.ne.s32.totalorder %s179, %s193
    %p195 = scmp.eq.s32.totalorder %s20, 0
    %p196 = por %p194, %p195
    %s197 = ssub.s32 %s21, %s33
    %s198 = ssub.s32 %s22, %s29
    %s199 = sor.u32 %s197, %s198
    %p200 = scmp.eq.s32.totalorder %s199, 0
    %s202 = sadd.s32 %s201, 1
    %s203 = scalar_select %p200, %s201, %s202
    %p206 = pneg %p200
    %p207 = scmp.eq.s32.totalorder %s14, 1
    %p208 = por %p206, %p207
    %p209 = scmp.ne.s32.totalorder %s201, %s204
    %p210 = scmp.eq.s32.totalorder %s14, 0
    %p211 = por %p209, %p210
    %p212 = scmp.ne.s32.totalorder %s201, %s204
    %p213 = scmp.eq.s32.totalorder %s19, 1
    %p214 = por %p212, %p213
    %p215 = scmp.ne.s32.totalorder %s204, %s205
    %p216 = scmp.eq.s32.totalorder %s19, 0
    %p217 = por %p215, %p216
    %p218 = scmp.ne.s32.totalorder %s204, %s205
    %p219 = scmp.eq.s32.totalorder %s20, 1
    %p220 = por %p218, %p219
    %p222 = scmp.ne.s32.totalorder %s205, %s221
    %p223 = scmp.eq.s32.totalorder %s20, 0
    %p224 = por %p222, %p223
    %s225 = ssub.s32 %s21, %s33
    %s226 = ssub.s32 %s22, %s29
    %s227 = sor.u32 %s225, %s226
    %p228 = scmp.eq.s32.totalorder %s227, 0
    %s230 = sadd.s32 %s229, 1
    %s231 = scalar_select %p228, %s229, %s230
    %p234 = pneg %p228
    %p235 = scmp.eq.s32.totalorder %s14, 1
    %p236 = por %p234, %p235
    %p237 = scmp.ne.s32.totalorder %s229, %s232
    %p238 = scmp.eq.s32.totalorder %s14, 0
    %p239 = por %p237, %p238
    %p240 = scmp.ne.s32.totalorder %s229, %s232
    %p241 = scmp.eq.s32.totalorder %s19, 1
    %p242 = por %p240, %p241
    %p243 = scmp.ne.s32.totalorder %s232, %s233
    %p244 = scmp.eq.s32.totalorder %s19, 0
    %p245 = por %p243, %p244
    %p246 = scmp.ne.s32.totalorder %s232, %s233
    %p247 = scmp.eq.s32.totalorder %s20, 1
    %p248 = por %p246, %p247
    %p250 = scmp.ne.s32.totalorder %s233, %s249
    %p251 = scmp.eq.s32.totalorder %s20, 0
    %p252 = por %p250, %p251
    %p253 = scmp.le.s32.totalorder 1, %s14
    %p254 = scmp.lt.s32.totalorder %s14, 3
    %p255 = pnand %p253, %p254
    %p256 = pneg %p255
    // Predicated region
    $region9: #{up_forward.5} parent=5 // pred_check
      _
    $region10: #{up_forward.5} parent=5 // pred_check_branch
      %258 = sbr.rel (%p255) target = $region12
    $region11: #{up_forward.5} parent=5 // pred_region
      %s259 = ssub.s32 %s14, 1
      // Predicated region
      $region13: #{up_forward.5} parent=11 // pred_check
        %p260 = pneg %p147
      $region14: #{up_forward.5} parent=11 // pred_check_branch
        %262 = sbr.rel (%p260) target = $region16
      $region15: #{up_forward.5} parent=11 // pred_region
        _
      $region16: #{up_forward.5} parent=11 // pred_fallthru
        _
      // Predicated region
      $region17: #{up_forward.5} parent=11 // pred_check
        %p263 = pneg %p168
      $region18: #{up_forward.5} parent=11 // pred_check_branch
        %265 = sbr.rel (%p263) target = $region20
      $region19: #{up_forward.5} parent=11 // pred_region
        _
      $region20: #{up_forward.5} parent=11 // pred_fallthru
        _
      // Predicated region
      $region21: #{up_forward.5} parent=11 // pred_check
        %p266 = pneg %p189
      $region22: #{up_forward.5} parent=11 // pred_check_branch
        %268 = sbr.rel (%p266) target = $region24
      $region23: #{up_forward.5} parent=11 // pred_region
        _
      $region24: #{up_forward.5} parent=11 // pred_fallthru
        _
    $region12: #{up_forward.5} parent=5 // pred_fallthru
      _
    %p269 = scmp.lt.s32.totalorder %s14, 2
    // Predicated region
    $region25: #{up_forward.5} parent=5 // pred_check
      %p270 = pneg %p269
    $region26: #{up_forward.5} parent=5 // pred_check_branch
      %272 = sbr.rel (%p270) target = $region28
    $region27: #{up_forward.5} parent=5 // pred_region
      // Predicated region
      $region29: #{up_forward.5} parent=27 // pred_check
        %p273 = pneg %p48
      $region30: #{up_forward.5} parent=27 // pred_check_branch
        %275 = sbr.rel (%p273) target = $region32
      $region31: #{up_forward.5} parent=27 // pred_region
        %s276 = smul.u32 16, %s22
        %p277 = scmp.lt.s32.totalorder %s21, 1
        %s278 = scalar_select %p277, %s21, 1
        %p279 = scmp.lt.s32.totalorder %s276, 15
        %s280 = scalar_select %p279, %s276, 15
        %s281 = smul.addr %s280, 2
        %s282 = smul.addr %s278, 32
        %s283 = sadd.s32 %s281, %s282
        %s284 = smul.addr %s283, 4
        %s285 = scalar_lea.vmem %s0, %s284
        %s286 = smul.u32 16, %s22
      $region32: #{up_forward.5} parent=27 // pred_fallthru
        _
      // Predicated region
      $region33: #{up_forward.5} parent=27 // pred_check
        %p287 = pneg %p84
      $region34: #{up_forward.5} parent=27 // pred_check_branch
        %289 = sbr.rel (%p287) target = $region36
      $region35: #{up_forward.5} parent=27 // pred_region
        %s290 = smul.u32 %s22, 16
        %s291 = ssub.s32 %s290, 1
        %p292 = scmp.gt.s32.totalorder %s291, 0
        %s293 = scalar_select %p292, %s291, 0
        %p294 = scmp.lt.s32.totalorder %s21, 1
        %s295 = scalar_select %p294, %s21, 1
        %p296 = scmp.lt.s32.totalorder %s293, 15
        %s297 = scalar_select %p296, %s293, 15
        %s298 = smul.addr %s297, 2
        %s299 = smul.addr %s295, 32
        %s300 = sadd.s32 %s298, %s299
        %s301 = smul.addr %s300, 4
        %s302 = scalar_lea.vmem %s1, %s301
        %s303 = smul.u32 %s22, 16
        %s304 = ssub.s32 %s303, 1
        %p305 = scmp.gt.s32.totalorder %s304, 0
        %s306 = scalar_select %p305, %s304, 0
      $region36: #{up_forward.5} parent=27 // pred_fallthru
        _
      // Predicated region
      $region37: #{up_forward.5} parent=27 // pred_check
        %p307 = pneg %p120
      $region38: #{up_forward.5} parent=27 // pred_check_branch
        %309 = sbr.rel (%p307) target = $region40
      $region39: #{up_forward.5} parent=27 // pred_region
        %s310 = smul.u32 %s22, 16
        %s311 = sadd.s32 %s310, 16
        %p312 = scmp.lt.s32.totalorder %s311, 15
        %s313 = scalar_select %p312, %s311, 15
        %p314 = scmp.lt.s32.totalorder %s21, 1
        %s315 = scalar_select %p314, %s21, 1
        %p316 = scmp.lt.s32.totalorder %s313, 15
        %s317 = scalar_select %p316, %s313, 15
        %s318 = smul.addr %s317, 2
        %s319 = smul.addr %s315, 32
        %s320 = sadd.s32 %s318, %s319
        %s321 = smul.addr %s320, 4
        %s322 = scalar_lea.vmem %s2, %s321
        %s323 = smul.u32 %s22, 16
        %s324 = sadd.s32 %s323, 16
        %p325 = scmp.lt.s32.totalorder %s324, 15
        %s326 = scalar_select %p325, %s324, 15
      $region40: #{up_forward.5} parent=27 // pred_fallthru
        _
    $region28: #{up_forward.5} parent=5 // pred_fallthru
      _
    %p327 = scmp.le.s32.totalorder 1, %s14
    %p328 = scmp.lt.s32.totalorder %s14, 3
    %p329 = pnand %p327, %p328
    %p330 = pneg %p329
    // Predicated region
    $region41: #{up_forward.5} parent=5 // pred_check
      _
    $region42: #{up_forward.5} parent=5 // pred_check_branch
      %332 = sbr.rel (%p329) target = $region44
    $region43: #{up_forward.5} parent=5 // pred_region
      %s333 = ssub.s32 %s14, 1
      %s334 = smul.u32 16, %s24
      %p335 = scmp.lt.s32.totalorder %s23, 1
      %s336 = scalar_select %p335, %s23, 1
      %p337 = scmp.lt.s32.totalorder %s334, 15
      %s338 = scalar_select %p337, %s334, 15
      %s339 = smul.addr %s338, 2
      %s340 = smul.addr %s336, 32
      %s341 = sadd.s32 %s339, %s340
      %s342 = smul.addr %s341, 4
      %s343 = scalar_lea.vmem %s0, %s342
      %p344 = pneg %p54
      %p345 = pneg %p51
      %s346 = smul.u32 %s24, 16
      %s347 = ssub.s32 %s346, 1
      %p348 = scmp.gt.s32.totalorder %s347, 0
      %s349 = scalar_select %p348, %s347, 0
      %p350 = scmp.lt.s32.totalorder %s23, 1
      %s351 = scalar_select %p350, %s23, 1
      %p352 = scmp.lt.s32.totalorder %s349, 15
      %s353 = scalar_select %p352, %s349, 15
      %s354 = smul.addr %s353, 2
      %s355 = smul.addr %s351, 32
      %s356 = sadd.s32 %s354, %s355
      %s357 = smul.addr %s356, 4
      %s358 = scalar_lea.vmem %s1, %s357
      %p359 = pneg %p90
      %p360 = pneg %p87
      %s361 = smul.u32 %s24, 16
      %s362 = sadd.s32 %s361, 16
      %p363 = scmp.lt.s32.totalorder %s362, 15
      %s364 = scalar_select %p363, %s362, 15
      %p365 = scmp.lt.s32.totalorder %s23, 1
      %s366 = scalar_select %p365, %s23, 1
      %p367 = scmp.lt.s32.totalorder %s364, 15
      %s368 = scalar_select %p367, %s364, 15
      %s369 = smul.addr %s368, 2
      %s370 = smul.addr %s366, 32
      %s371 = sadd.s32 %s369, %s370
      %s372 = smul.addr %s371, 4
      %s373 = scalar_lea.vmem %s2, %s372
      %p374 = pneg %p126
      %p375 = pneg %p123
      %p376 = pneg %p147
      %p377 = pneg %p144
      %p378 = pneg %p168
      %p379 = pneg %p165
      %p380 = pneg %p189
      %p381 = pneg %p186
      %p382 = pneg %p217
      %p383 = pneg %p214
      %s384 = smul.u32 16, %s24
      %p385 = scmp.lt.s32.totalorder %s23, 1
      %s386 = scalar_select %p385, %s23, 1
      %p387 = scmp.lt.s32.totalorder %s384, 15
      %s388 = scalar_select %p387, %s384, 15
      %s389 = smul.addr %s388, 2
      %s390 = smul.addr %s386, 32
      %s391 = sadd.s32 %s389, %s390
      %s392 = smul.addr %s391, 4
      %s393 = scalar_lea.vmem %s6, %s392
      %p394 = pneg %p245
      %p395 = pneg %p242
      %p396 = scmp.lt.s32.totalorder %s23, 1
      %s397 = scalar_select %p396, %s23, 1
      %p398 = scmp.lt.s32.totalorder %s24, 0
      %s399 = scalar_select %p398, %s24, 0
      %s400 = sadd.s32 %s399, %s397
      %s401 = smul.addr %s400, 2
      %s402 = scalar_lea.vmem %s7, %s401
      %s403 = smul.u32 16, %s24
      %p404 = scmp.lt.s32.totalorder %s23, 1
      %s405 = scalar_select %p404, %s23, 1
      %p406 = scmp.lt.s32.totalorder %s403, 15
      %s407 = scalar_select %p406, %s403, 15
      %s408 = smul.addr %s407, 2
      %s409 = smul.addr %s405, 32
      %s410 = sadd.s32 %s408, %s409
      %s411 = smul.addr %s410, 4
      %s412 = scalar_lea.vmem %s0, %s411
      %s413 = smul.u32 16, %s24
      %s414 = smul.u32 %s24, 16
      %s415 = ssub.s32 %s414, 1
      %p416 = scmp.gt.s32.totalorder %s415, 0
      %s417 = scalar_select %p416, %s415, 0
      %p418 = scmp.lt.s32.totalorder %s23, 1
      %s419 = scalar_select %p418, %s23, 1
      %p420 = scmp.lt.s32.totalorder %s417, 15
      %s421 = scalar_select %p420, %s417, 15
      %s422 = smul.addr %s421, 2
      %s423 = smul.addr %s419, 32
      %s424 = sadd.s32 %s422, %s423
      %s425 = smul.addr %s424, 4
      %s426 = scalar_lea.vmem %s1, %s425
      %s427 = smul.u32 %s24, 16
      %s428 = ssub.s32 %s427, 1
      %p429 = scmp.gt.s32.totalorder %s428, 0
      %s430 = scalar_select %p429, %s428, 0
      %s431 = smul.u32 %s24, 16
      %s432 = sadd.s32 %s431, 16
      %p433 = scmp.lt.s32.totalorder %s432, 15
      %s434 = scalar_select %p433, %s432, 15
      %p435 = scmp.lt.s32.totalorder %s23, 1
      %s436 = scalar_select %p435, %s23, 1
      %p437 = scmp.lt.s32.totalorder %s434, 15
      %s438 = scalar_select %p437, %s434, 15
      %s439 = smul.addr %s438, 2
      %s440 = smul.addr %s436, 32
      %s441 = sadd.s32 %s439, %s440
      %s442 = smul.addr %s441, 4
      %s443 = scalar_lea.vmem %s2, %s442
      %s444 = smul.u32 %s24, 16
      %s445 = sadd.s32 %s444, 16
      %p446 = scmp.lt.s32.totalorder %s445, 15
      %s447 = scalar_select %p446, %s445, 15
      %s448 = smul.u32 16, %s24
      %p449 = scmp.lt.s32.totalorder %s23, 1
      %s450 = scalar_select %p449, %s23, 1
      %p451 = scmp.lt.s32.totalorder %s448, 15
      %s452 = scalar_select %p451, %s448, 15
      %s453 = smul.addr %s452, 2
      %s454 = smul.addr %s450, 32
      %s455 = sadd.s32 %s453, %s454
      %s456 = smul.addr %s455, 4
      %s457 = scalar_lea.vmem %s6, %s456
      %s458 = smul.u32 16, %s24
      %p459 = scmp.lt.s32.totalorder %s23, 1
      %s460 = scalar_select %p459, %s23, 1
      %p461 = scmp.lt.s32.totalorder %s24, 0
      %s462 = scalar_select %p461, %s24, 0
      %s463 = sadd.s32 %s462, %s460
      %s464 = smul.addr %s463, 2
      %s465 = scalar_lea.vmem %s7, %s464
      %v467 = vld [vmem:[%s412] sm:$0xf]
      %v468 = vld [vmem:[%s412 + $0x4] sm:$0xf]
      %v469 = vld [vmem:[%s412 + $0x8] sm:$0xf]
      %v470 = vld [vmem:[%s412 + $0xc] sm:$0xf]
      %v471 = vld [vmem:[%s412 + $0x10] sm:$0xf]
      %v472 = vld [vmem:[%s412 + $0x14] sm:$0xf]
      %v473 = vld [vmem:[%s412 + $0x18] sm:$0xf]
      %v474 = vld [vmem:[%s412 + $0x1c] sm:$0xf]
      %v475 = vld [vmem:[%s412 + $0x20] sm:$0xf]
      %v476 = vld [vmem:[%s412 + $0x24] sm:$0xf]
      %v477 = vld [vmem:[%s412 + $0x28] sm:$0xf]
      %v478 = vld [vmem:[%s412 + $0x2c] sm:$0xf]
      %v479 = vld [vmem:[%s412 + $0x30] sm:$0xf]
      %v480 = vld [vmem:[%s412 + $0x34] sm:$0xf]
      %v481 = vld [vmem:[%s412 + $0x38] sm:$0xf]
      %v482 = vld [vmem:[%s412 + $0x3c] sm:$0xf]
      %v483 = vld [vmem:[%s412 + $0x40] sm:$0xf]
      %v484 = vld [vmem:[%s412 + $0x44] sm:$0xf]
      %v485 = vld [vmem:[%s412 + $0x48] sm:$0xf]
      %v486 = vld [vmem:[%s412 + $0x4c] sm:$0xf]
      %v487 = vld [vmem:[%s412 + $0x50] sm:$0xf]
      %v488 = vld [vmem:[%s412 + $0x54] sm:$0xf]
      %v489 = vld [vmem:[%s412 + $0x58] sm:$0xf]
      %v490 = vld [vmem:[%s412 + $0x5c] sm:$0xf]
      %v491 = vld [vmem:[%s412 + $0x60] sm:$0xf]
      %v492 = vld [vmem:[%s412 + $0x64] sm:$0xf]
      %v493 = vld [vmem:[%s412 + $0x68] sm:$0xf]
      %v494 = vld [vmem:[%s412 + $0x6c] sm:$0xf]
      %v495 = vld [vmem:[%s412 + $0x70] sm:$0xf]
      %v496 = vld [vmem:[%s412 + $0x74] sm:$0xf]
      %v497 = vld [vmem:[%s412 + $0x78] sm:$0xf]
      %v498 = vld [vmem:[%s412 + $0x7c] sm:$0xf]
      %v499 = vunpack.c.l.bf16 %v467
      %v500 = vunpack.c.l.bf16 %v468
      %v501 = vunpack.c.l.bf16 %v469
      %v502 = vunpack.c.l.bf16 %v470
      %v503 = vunpack.c.l.bf16 %v471
      %v504 = vunpack.c.l.bf16 %v472
      %v505 = vunpack.c.l.bf16 %v473
      %v506 = vunpack.c.l.bf16 %v474
      %v507 = vunpack.c.l.bf16 %v475
      %v508 = vunpack.c.l.bf16 %v476
      %v509 = vunpack.c.l.bf16 %v477
      %v510 = vunpack.c.l.bf16 %v478
      %v511 = vunpack.c.l.bf16 %v479
      %v512 = vunpack.c.l.bf16 %v480
      %v513 = vunpack.c.l.bf16 %v481
      %v514 = vunpack.c.l.bf16 %v482
      %v515 = vunpack.c.l.bf16 %v483
      %v516 = vunpack.c.l.bf16 %v484
      %v517 = vunpack.c.l.bf16 %v485
      %v518 = vunpack.c.l.bf16 %v486
      %v519 = vunpack.c.l.bf16 %v487
      %v520 = vunpack.c.l.bf16 %v488
      %v521 = vunpack.c.l.bf16 %v489
      %v522 = vunpack.c.l.bf16 %v490
      %v523 = vunpack.c.l.bf16 %v491
      %v524 = vunpack.c.l.bf16 %v492
      %v525 = vunpack.c.l.bf16 %v493
      %v526 = vunpack.c.l.bf16 %v494
      %v527 = vunpack.c.l.bf16 %v495
      %v528 = vunpack.c.l.bf16 %v496
      %v529 = vunpack.c.l.bf16 %v497
      %v530 = vunpack.c.l.bf16 %v498
      %v531 = vld [vmem:[%s426] sm:$0xf]
      %v532 = vld [vmem:[%s426 + $0x4] sm:$0xf]
      %v533 = vunpack.c.l.bf16 %v531
      %v534 = vunpack.c.l.bf16 %v532
      %v535 = vld [vmem:[%s443] sm:$0xf]
      %v536 = vld [vmem:[%s443 + $0x4] sm:$0xf]
      %v537 = vunpack.c.l.bf16 %v535
      %v538 = vunpack.c.l.bf16 %v536
      %v539 = vld [vmem:[%s4] sm:$0x1]
      %v540 = vld [vmem:[%s5] sm:$0x1]
      %v542 = vlaneseq
      %v543 = vshrl.u32 %v542, 7
      %v544 = vsub.s32 0, %v543
      %v545 = vrot.slane %v539, %v544
      %v547 = vmul.f32 %v499, %v545
      %v548 = vmul.f32 %v500, %v545
      %v549 = vmul.f32 %v501, %v545
      %v550 = vmul.f32 %v502, %v545
      %v551 = vmul.f32 %v503, %v545
      %v552 = vmul.f32 %v504, %v545
      %v553 = vmul.f32 %v505, %v545
      %v554 = vmul.f32 %v506, %v545
      %v555 = vmul.f32 %v507, %v545
      %v556 = vmul.f32 %v508, %v545
      %v557 = vmul.f32 %v509, %v545
      %v558 = vmul.f32 %v510, %v545
      %v559 = vmul.f32 %v511, %v545
      %v560 = vmul.f32 %v512, %v545
      %v561 = vmul.f32 %v513, %v545
      %v562 = vmul.f32 %v514, %v545
      %v563 = vmul.f32 %v515, %v545
      %v564 = vmul.f32 %v516, %v545
      %v565 = vmul.f32 %v517, %v545
      %v566 = vmul.f32 %v518, %v545
      %v567 = vmul.f32 %v519, %v545
      %v568 = vmul.f32 %v520, %v545
      %v569 = vmul.f32 %v521, %v545
      %v570 = vmul.f32 %v522, %v545
      %v571 = vmul.f32 %v523, %v545
      %v572 = vmul.f32 %v524, %v545
      %v573 = vmul.f32 %v525, %v545
      %v574 = vmul.f32 %v526, %v545
      %v575 = vmul.f32 %v527, %v545
      %v576 = vmul.f32 %v528, %v545
      %v577 = vmul.f32 %v529, %v545
      %v578 = vmul.f32 %v530, %v545
      %v580 = vlaneseq
      %v581 = vshrl.u32 %v580, 7
      %v582 = vsub.s32 0, %v581
      %v583 = vrot.slane %v540, %v582
      %v585 = vadd.f32 %v547, %v583
      %v586 = vadd.f32 %v548, %v583
      %v587 = vadd.f32 %v549, %v583
      %v588 = vadd.f32 %v550, %v583
      %v589 = vadd.f32 %v551, %v583
      %v590 = vadd.f32 %v552, %v583
      %v591 = vadd.f32 %v553, %v583
      %v592 = vadd.f32 %v554, %v583
      %v593 = vadd.f32 %v555, %v583
      %v594 = vadd.f32 %v556, %v583
      %v595 = vadd.f32 %v557, %v583
      %v596 = vadd.f32 %v558, %v583
      %v597 = vadd.f32 %v559, %v583
      %v598 = vadd.f32 %v560, %v583
      %v599 = vadd.f32 %v561, %v583
      %v600 = vadd.f32 %v562, %v583
      %v601 = vadd.f32 %v563, %v583
      %v602 = vadd.f32 %v564, %v583
      %v603 = vadd.f32 %v565, %v583
      %v604 = vadd.f32 %v566, %v583
      %v605 = vadd.f32 %v567, %v583
      %v606 = vadd.f32 %v568, %v583
      %v607 = vadd.f32 %v569, %v583
      %v608 = vadd.f32 %v570, %v583
      %v609 = vadd.f32 %v571, %v583
      %v610 = vadd.f32 %v572, %v583
      %v611 = vadd.f32 %v573, %v583
      %v612 = vadd.f32 %v574, %v583
      %v613 = vadd.f32 %v575, %v583
      %v614 = vadd.f32 %v576, %v583
      %v615 = vadd.f32 %v577, %v583
      %v616 = vadd.f32 %v578, %v583
      %v617 = vmax.f32 %v585, 0.0
      %v618 = vmax.f32 %v586, 0.0
      %v619 = vmax.f32 %v587, 0.0
      %v620 = vmax.f32 %v588, 0.0
      %v621 = vmax.f32 %v589, 0.0
      %v622 = vmax.f32 %v590, 0.0
      %v623 = vmax.f32 %v591, 0.0
      %v624 = vmax.f32 %v592, 0.0
      %v625 = vmax.f32 %v593, 0.0
      %v626 = vmax.f32 %v594, 0.0
      %v627 = vmax.f32 %v595, 0.0
      %v628 = vmax.f32 %v596, 0.0
      %v629 = vmax.f32 %v597, 0.0
      %v630 = vmax.f32 %v598, 0.0
      %v631 = vmax.f32 %v599, 0.0
      %v632 = vmax.f32 %v600, 0.0
      %v633 = vmax.f32 %v601, 0.0
      %v634 = vmax.f32 %v602, 0.0
      %v635 = vmax.f32 %v603, 0.0
      %v636 = vmax.f32 %v604, 0.0
      %v637 = vmax.f32 %v605, 0.0
      %v638 = vmax.f32 %v606, 0.0
      %v639 = vmax.f32 %v607, 0.0
      %v640 = vmax.f32 %v608, 0.0
      %v641 = vmax.f32 %v609, 0.0
      %v642 = vmax.f32 %v610, 0.0
      %v643 = vmax.f32 %v611, 0.0
      %v644 = vmax.f32 %v612, 0.0
      %v645 = vmax.f32 %v613, 0.0
      %v646 = vmax.f32 %v614, 0.0
      %v647 = vmax.f32 %v615, 0.0
      %v648 = vmax.f32 %v616, 0.0
      %v649 = vmul.f32 %v533, %v545
      %v650 = vmul.f32 %v534, %v545
      %v651 = vadd.f32 %v649, %v583
      %v652 = vadd.f32 %v650, %v583
      %v653 = vmax.f32 %v651, 0.0
      %v654 = vmax.f32 %v652, 0.0
      %v655 = vmul.f32 %v537, %v545
      %v656 = vmul.f32 %v538, %v545
      %v657 = vadd.f32 %v655, %v583
      %v658 = vadd.f32 %v656, %v583
      %v659 = vmax.f32 %v657, 0.0
      %v660 = vmax.f32 %v658, 0.0
      %p661 = scmp.eq.s32.totalorder %s24, 0
      %s662 = scalar_select %p661, 0.0, 1.0
      %v663 = vstv %s662
      %v664 = vmul.f32 %v653, %v663
      %v665 = vmul.f32 %v654, %v663
      %v666 = vmul.f32 %v659, %v663
      %v667 = vmul.f32 %v660, %v663
      %vm704 = vcmask 1040384
      %v705 = vrot.slane %v664, 7
      %v706 = vrot.slane %v665, 7
      %v707 = vsel %vm704, %v705, %v706
      %v708 = vrot.slane %v617, 7
      %v709 = vrot.slane %v618, 7
      %v710 = vsel %vm704, %v708, %v709
      %v711 = vrot.slane %v619, 7
      %v712 = vrot.slane %v620, 7
      %v713 = vsel %vm704, %v711, %v712
      %v714 = vrot.slane %v621, 7
      %v715 = vrot.slane %v622, 7
      %v716 = vsel %vm704, %v714, %v715
      %v717 = vrot.slane %v623, 7
      %v718 = vrot.slane %v624, 7
      %v719 = vsel %vm704, %v717, %v718
      %v720 = vrot.slane %v625, 7
      %v721 = vrot.slane %v626, 7
      %v722 = vsel %vm704, %v720, %v721
      %v723 = vrot.slane %v627, 7
      %v724 = vrot.slane %v628, 7
      %v725 = vsel %vm704, %v723, %v724
      %v726 = vrot.slane %v629, 7
      %v727 = vrot.slane %v630, 7
      %v728 = vsel %vm704, %v726, %v727
      %v729 = vrot.slane %v631, 7
      %v730 = vrot.slane %v632, 7
      %v731 = vsel %vm704, %v729, %v730
      %v732 = vrot.slane %v633, 7
      %v733 = vrot.slane %v634, 7
      %v734 = vsel %vm704, %v732, %v733
      %v735 = vrot.slane %v635, 7
      %v736 = vrot.slane %v636, 7
      %v737 = vsel %vm704, %v735, %v736
      %v738 = vrot.slane %v637, 7
      %v739 = vrot.slane %v638, 7
      %v740 = vsel %vm704, %v738, %v739
      %v741 = vrot.slane %v639, 7
      %v742 = vrot.slane %v640, 7
      %v743 = vsel %vm704, %v741, %v742
      %v744 = vrot.slane %v641, 7
      %v745 = vrot.slane %v642, 7
      %v746 = vsel %vm704, %v744, %v745
      %v747 = vrot.slane %v643, 7
      %v748 = vrot.slane %v644, 7
      %v749 = vsel %vm704, %v747, %v748
      %v750 = vrot.slane %v645, 7
      %v751 = vrot.slane %v646, 7
      %v752 = vsel %vm704, %v750, %v751
      %v753 = vrot.slane %v647, 7
      %v754 = vrot.slane %v648, 7
      %v755 = vsel %vm704, %v753, %v754
      %v756 = vrot.slane %v666, 7
      %v757 = vrot.slane %v667, 7
      %v758 = vsel %vm704, %v756, %v757
      %v795 = vsel %vm704, 0.0, %v705
      %v796 = vsel %vm704, 0.0, %v708
      %v797 = vsel %vm704, 0.0, %v711
      %v798 = vsel %vm704, 0.0, %v714
      %v799 = vsel %vm704, 0.0, %v717
      %v800 = vsel %vm704, 0.0, %v720
      %v801 = vsel %vm704, 0.0, %v723
      %v802 = vsel %vm704, 0.0, %v726
      %v803 = vsel %vm704, 0.0, %v729
      %v804 = vsel %vm704, 0.0, %v732
      %v805 = vsel %vm704, 0.0, %v735
      %v806 = vsel %vm704, 0.0, %v738
      %v807 = vsel %vm704, 0.0, %v741
      %v808 = vsel %vm704, 0.0, %v744
      %v809 = vsel %vm704, 0.0, %v747
      %v810 = vsel %vm704, 0.0, %v750
      %v811 = vsel %vm704, 0.0, %v753
      %v812 = vsel %vm704, 0.0, %v756
      %vm813 = vcmask 1046528
      %v814 = vrot.slane %v664, 1
      %v815 = vrot.slane %v665, 1
      %v816 = vsel %vm813, %v814, %v815
      %v817 = vrot.slane %v617, 1
      %v818 = vrot.slane %v618, 1
      %v819 = vsel %vm813, %v817, %v818
      %v820 = vrot.slane %v619, 1
      %v821 = vrot.slane %v620, 1
      %v822 = vsel %vm813, %v820, %v821
      %v823 = vrot.slane %v621, 1
      %v824 = vrot.slane %v622, 1
      %v825 = vsel %vm813, %v823, %v824
      %v826 = vrot.slane %v623, 1
      %v827 = vrot.slane %v624, 1
      %v828 = vsel %vm813, %v826, %v827
      %v829 = vrot.slane %v625, 1
      %v830 = vrot.slane %v626, 1
      %v831 = vsel %vm813, %v829, %v830
      %v832 = vrot.slane %v627, 1
      %v833 = vrot.slane %v628, 1
      %v834 = vsel %vm813, %v832, %v833
      %v835 = vrot.slane %v629, 1
      %v836 = vrot.slane %v630, 1
      %v837 = vsel %vm813, %v835, %v836
      %v838 = vrot.slane %v631, 1
      %v839 = vrot.slane %v632, 1
      %v840 = vsel %vm813, %v838, %v839
      %v841 = vrot.slane %v633, 1
      %v842 = vrot.slane %v634, 1
      %v843 = vsel %vm813, %v841, %v842
      %v844 = vrot.slane %v635, 1
      %v845 = vrot.slane %v636, 1
      %v846 = vsel %vm813, %v844, %v845
      %v847 = vrot.slane %v637, 1
      %v848 = vrot.slane %v638, 1
      %v849 = vsel %vm813, %v847, %v848
      %v850 = vrot.slane %v639, 1
      %v851 = vrot.slane %v640, 1
      %v852 = vsel %vm813, %v850, %v851
      %v853 = vrot.slane %v641, 1
      %v854 = vrot.slane %v642, 1
      %v855 = vsel %vm813, %v853, %v854
      %v856 = vrot.slane %v643, 1
      %v857 = vrot.slane %v644, 1
      %v858 = vsel %vm813, %v856, %v857
      %v859 = vrot.slane %v645, 1
      %v860 = vrot.slane %v646, 1
      %v861 = vsel %vm813, %v859, %v860
      %v862 = vrot.slane %v647, 1
      %v863 = vrot.slane %v648, 1
      %v864 = vsel %vm813, %v862, %v863
      %v865 = vrot.slane %v666, 1
      %v866 = vrot.slane %v667, 1
      %v867 = vsel %vm813, %v865, %v866
      %v904 = vsel %vm813, %v815, 0.0
      %v905 = vsel %vm813, %v818, 0.0
      %v906 = vsel %vm813, %v821, 0.0
      %v907 = vsel %vm813, %v824, 0.0
      %v908 = vsel %vm813, %v827, 0.0
      %v909 = vsel %vm813, %v830, 0.0
      %v910 = vsel %vm813, %v833, 0.0
      %v911 = vsel %vm813, %v836, 0.0
      %v912 = vsel %vm813, %v839, 0.0
      %v913 = vsel %vm813, %v842, 0.0
      %v914 = vsel %vm813, %v845, 0.0
      %v915 = vsel %vm813, %v848, 0.0
      %v916 = vsel %vm813, %v851, 0.0
      %v917 = vsel %vm813, %v854, 0.0
      %v918 = vsel %vm813, %v857, 0.0
      %v919 = vsel %vm813, %v860, 0.0
      %v920 = vsel %vm813, %v863, 0.0
      %v921 = vsel %vm813, %v866, 0.0
      %v922 = vpack.c.bf16 %v707, %v795
      %v923 = vpack.c.bf16 %v710, %v796
      %v924 = vpack.c.bf16 %v713, %v797
      %v925 = vpack.c.bf16 %v716, %v798
      %v926 = vpack.c.bf16 %v719, %v799
      %v927 = vpack.c.bf16 %v722, %v800
      %v928 = vpack.c.bf16 %v725, %v801
      %v929 = vpack.c.bf16 %v728, %v802
      %v930 = vpack.c.bf16 %v731, %v803
      %v931 = vpack.c.bf16 %v734, %v804
      %v932 = vpack.c.bf16 %v737, %v805
      %v933 = vpack.c.bf16 %v740, %v806
      %v934 = vpack.c.bf16 %v743, %v807
      %v935 = vpack.c.bf16 %v746, %v808
      %v936 = vpack.c.bf16 %v749, %v809
      %v937 = vpack.c.bf16 %v752, %v810
      %v938 = vld [vmem:[%s3] sm:$0xf]
      %v939 = vld [vmem:[%s3 + $0x4] sm:$0xf]
      %v940 = vld [vmem:[%s3 + $0x8] sm:$0xf]
      %v941 = vld [vmem:[%s3 + $0xc] sm:$0xf]
      %v942 = vld [vmem:[%s3 + $0x10] sm:$0xf]
      %v943 = vld [vmem:[%s3 + $0x14] sm:$0xf]
      %v944 = vld [vmem:[%s3 + $0x18] sm:$0xf]
      %v945 = vld [vmem:[%s3 + $0x1c] sm:$0xf]
      %v946 = vld [vmem:[%s3 + $0x20] sm:$0xf]
      %v947 = vld [vmem:[%s3 + $0x24] sm:$0xf]
      %v948 = vld [vmem:[%s3 + $0x28] sm:$0xf]
      %v949 = vld [vmem:[%s3 + $0x2c] sm:$0xf]
      %v950 = vld [vmem:[%s3 + $0x30] sm:$0xf]
      %v951 = vld [vmem:[%s3 + $0x34] sm:$0xf]
      %v952 = vld [vmem:[%s3 + $0x38] sm:$0xf]
      %v953 = vld [vmem:[%s3 + $0x3c] sm:$0xf]
      %v954 = vpack.c.bf16 %v665, %v664
      %v955 = vpack.c.bf16 %v618, %v617
      %v956 = vpack.c.bf16 %v620, %v619
      %v957 = vpack.c.bf16 %v622, %v621
      %v958 = vpack.c.bf16 %v624, %v623
      %v959 = vpack.c.bf16 %v626, %v625
      %v960 = vpack.c.bf16 %v628, %v627
      %v961 = vpack.c.bf16 %v630, %v629
      %v962 = vpack.c.bf16 %v632, %v631
      %v963 = vpack.c.bf16 %v634, %v633
      %v964 = vpack.c.bf16 %v636, %v635
      %v965 = vpack.c.bf16 %v638, %v637
      %v966 = vpack.c.bf16 %v640, %v639
      %v967 = vpack.c.bf16 %v642, %v641
      %v968 = vpack.c.bf16 %v644, %v643
      %v969 = vpack.c.bf16 %v646, %v645
      %s970 = scalar_lea.vmem %s3, 64
      %v971 = vld [vmem:[%s970] sm:$0xf]
      %v972 = vld [vmem:[%s970 + $0x4] sm:$0xf]
      %v973 = vld [vmem:[%s970 + $0x8] sm:$0xf]
      %v974 = vld [vmem:[%s970 + $0xc] sm:$0xf]
      %v975 = vld [vmem:[%s970 + $0x10] sm:$0xf]
      %v976 = vld [vmem:[%s970 + $0x14] sm:$0xf]
      %v977 = vld [vmem:[%s970 + $0x18] sm:$0xf]
      %v978 = vld [vmem:[%s970 + $0x1c] sm:$0xf]
      %v979 = vld [vmem:[%s970 + $0x20] sm:$0xf]
      %v980 = vld [vmem:[%s970 + $0x24] sm:$0xf]
      %v981 = vld [vmem:[%s970 + $0x28] sm:$0xf]
      %v982 = vld [vmem:[%s970 + $0x2c] sm:$0xf]
      %v983 = vld [vmem:[%s970 + $0x30] sm:$0xf]
      %v984 = vld [vmem:[%s970 + $0x34] sm:$0xf]
      %v985 = vld [vmem:[%s970 + $0x38] sm:$0xf]
      %v986 = vld [vmem:[%s970 + $0x3c] sm:$0xf]
      %v1003 = vunpack.c.l.b16 %v971
      %v1004 = vunpack.c.l.b16 %v972
      %v1005 = vunpack.c.l.b16 %v973
      %v1006 = vunpack.c.l.b16 %v974
      %v1007 = vunpack.c.l.b16 %v975
      %v1008 = vunpack.c.l.b16 %v976
      %v1009 = vunpack.c.l.b16 %v977
      %v1010 = vunpack.c.l.b16 %v978
      %v1011 = vunpack.c.l.b16 %v979
      %v1012 = vunpack.c.l.b16 %v980
      %v1013 = vunpack.c.l.b16 %v981
      %v1014 = vunpack.c.l.b16 %v982
      %v1015 = vunpack.c.l.b16 %v983
      %v1016 = vunpack.c.l.b16 %v984
      %v1017 = vunpack.c.l.b16 %v985
      %v1018 = vunpack.c.l.b16 %v986
      %v1019 = vpack.c.b16 %v1004, %v1003
      %v1020 = vpack.c.b16 %v1006, %v1005
      %v1021 = vpack.c.b16 %v1008, %v1007
      %v1022 = vpack.c.b16 %v1010, %v1009
      %v1023 = vpack.c.b16 %v1012, %v1011
      %v1024 = vpack.c.b16 %v1014, %v1013
      %v1025 = vpack.c.b16 %v1016, %v1015
      %v1026 = vpack.c.b16 %v1018, %v1017
      %1035 = vmatprep.subr.bf16.mxu0 0
      %1036 = vmatpush1.bf16.msra.mxu0 %v1019
      %1037 = vmatprep.subr.bf16.mxu0 0
      %1038 = vmatpush1.bf16.msra.mxu0 %v1020
      %1039 = vmatprep.subr.bf16.mxu0 0
      %1040 = vmatpush1.bf16.msra.mxu0 %v1021
      %1041 = vmatprep.subr.bf16.mxu0 0
      %1042 = vmatpush1.bf16.msra.mxu0 %v1022
      %1043 = vmatprep.subr.bf16.mxu0 0
      %1044 = vmatpush1.bf16.msra.mxu0 %v1023
      %1045 = vmatprep.subr.bf16.mxu0 0
      %1046 = vmatpush1.bf16.msra.mxu0 %v1024
      %1047 = vmatprep.subr.bf16.mxu0 0
      %1048 = vmatpush1.bf16.msra.mxu0 %v1025
      %1049 = vmatprep.subr.bf16.mxu0 0
      %1050 = vmatpush1.bf16.msra.mxu0 %v1026
      %1051 = vmatprep.subr.bf16.mxu0 0
      %1052 = vmatpush1.bf16.msra.mxu0 0
      %1053 = vmatprep.subr.bf16.mxu0 0
      %1054 = vmatpush1.bf16.msra.mxu0 0
      %1055 = vmatprep.subr.bf16.mxu0 0
      %1056 = vmatpush1.bf16.msra.mxu0 0
      %1057 = vmatprep.subr.bf16.mxu0 0
      %1058 = vmatpush1.bf16.msra.mxu0 0
      %1059 = vmatprep.subr.bf16.mxu0 0
      %1060 = vmatpush1.bf16.msra.mxu0 0
      %1061 = vmatprep.subr.bf16.mxu0 0
      %1062 = vmatpush1.bf16.msra.mxu0 0
      %1063 = vmatprep.subr.bf16.mxu0 0
      %1064 = vmatpush1.bf16.msra.mxu0 0
      %1065 = vmatprep.subr.bf16.mxu0 0
      %1066 = vmatpush1.bf16.msra.mxu0 0
      %1067 = vmatprep.mubr.bf16.mxu0 0
      %1068 = vmatmul.mubr.bf16.gmra.mrb[0].mxu0 %v954
      %v1069 = vpop.f32.mrb[0].mxu0
      %v1070 = vadd.f32 0.0, %v1069
      %v1071 = vpop.f32.mrb[0].mxu0
      %v1072 = vpop.f32.mrb[0].mxu0
      %v1073 = vadd.f32 0.0, %v1072
      %v1074 = vpop.f32.mrb[0].mxu0
      %1075 = vmatprep.mubr.bf16.mxu0 0
      %1076 = vmatmul.mubr.bf16.gmra.mrb[0].mxu0 %v955
      %v1077 = vpop.f32.mrb[0].mxu0
      %v1078 = vadd.f32 0.0, %v1077
      %v1079 = vpop.f32.mrb[0].mxu0
      %v1080 = vpop.f32.mrb[0].mxu0
      %v1081 = vadd.f32 0.0, %v1080
      %v1082 = vpop.f32.mrb[0].mxu0
      %1083 = vmatprep.mubr.bf16.mxu0 0
      %1084 = vmatmul.mubr.bf16.gmra.mrb[0].mxu0 %v956
      %v1085 = vpop.f32.mrb[0].mxu0
      %v1086 = vadd.f32 0.0, %v1085
      %v1087 = vpop.f32.mrb[0].mxu0
      %v1088 = vpop.f32.mrb[0].mxu0
      %v1089 = vadd.f32 0.0, %v1088
      %v1090 = vpop.f32.mrb[0].mxu0
      %1091 = vmatprep.mubr.bf16.mxu0 0
      %1092 = vmatmul.mubr.bf16.gmra.mrb[0].mxu0 %v957
      %v1093 = vpop.f32.mrb[0].mxu0
      %v1094 = vadd.f32 0.0, %v1093
      %v1095 = vpop.f32.mrb[0].mxu0
      %v1096 = vpop.f32.mrb[0].mxu0
      %v1097 = vadd.f32 0.0, %v1096
      %v1098 = vpop.f32.mrb[0].mxu0
      %1099 = vmatprep.mubr.bf16.mxu0 0
      %1100 = vmatmul.mubr.bf16.gmra.mrb[0].mxu0 %v958
      %v1101 = vpop.f32.mrb[0].mxu0
      %v1102 = vadd.f32 0.0, %v1101
      %v1103 = vpop.f32.mrb[0].mxu0
      %v1104 = vpop.f32.mrb[0].mxu0
      %v1105 = vadd.f32 0.0, %v1104
      %v1106 = vpop.f32.mrb[0].mxu0
      %1107 = vmatprep.mubr.bf16.mxu0 0
      %1108 = vmatmul.mubr.bf16.gmra.mrb[0].mxu0 %v959
      %v1109 = vpop.f32.mrb[0].mxu0
      %v1110 = vadd.f32 0.0, %v1109
      %v1111 = vpop.f32.mrb[0].mxu0
      %v1112 = vpop.f32.mrb[0].mxu0
      %v1113 = vadd.f32 0.0, %v1112
      %v1114 = vpop.f32.mrb[0].mxu0
      %1115 = vmatprep.mubr.bf16.mxu0 0
      %1116 = vmatmul.mubr.bf16.gmra.mrb[0].mxu0 %v960
      %v1117 = vpop.f32.mrb[0].mxu0
      %v1118 = vadd.f32 0.0, %v1117
      %v1119 = vpop.f32.mrb[0].mxu0
      %v1120 = vpop.f32.mrb[0].mxu0
      %v1121 = vadd.f32 0.0, %v1120
      %v1122 = vpop.f32.mrb[0].mxu0
      %1123 = vmatprep.mubr.bf16.mxu0 0
      %1124 = vmatmul.mubr.bf16.gmra.mrb[0].mxu0 %v961
      %v1125 = vpop.f32.mrb[0].mxu0
      %v1126 = vadd.f32 0.0, %v1125
      %v1127 = vpop.f32.mrb[0].mxu0
      %v1128 = vpop.f32.mrb[0].mxu0
      %v1129 = vadd.f32 0.0, %v1128
      %v1130 = vpop.f32.mrb[0].mxu0
      %1131 = vmatprep.mubr.bf16.mxu0 0
      %1132 = vmatmul.mubr.bf16.gmra.mrb[0].mxu0 %v962
      %v1133 = vpop.f32.mrb[0].mxu0
      %v1134 = vadd.f32 0.0, %v1133
      %v1135 = vpop.f32.mrb[0].mxu0
      %v1136 = vpop.f32.mrb[0].mxu0
      %v1137 = vadd.f32 0.0, %v1136
      %v1138 = vpop.f32.mrb[0].mxu0
      %1139 = vmatprep.mubr.bf16.mxu0 0
      %1140 = vmatmul.mubr.bf16.gmra.mrb[0].mxu0 %v963
      %v1141 = vpop.f32.mrb[0].mxu0
      %v1142 = vadd.f32 0.0, %v1141
      %v1143 = vpop.f32.mrb[0].mxu0
      %v1144 = vpop.f32.mrb[0].mxu0
      %v1145 = vadd.f32 0.0, %v1144
      %v1146 = vpop.f32.mrb[0].mxu0
      %1147 = vmatprep.mubr.bf16.mxu0 0
      %1148 = vmatmul.mubr.bf16.gmra.mrb[0].mxu0 %v964
      %v1149 = vpop.f32.mrb[0].mxu0
      %v1150 = vadd.f32 0.0, %v1149
      %v1151 = vpop.f32.mrb[0].mxu0
      %v1152 = vpop.f32.mrb[0].mxu0
      %v1153 = vadd.f32 0.0, %v1152
      %v1154 = vpop.f32.mrb[0].mxu0
      %1155 = vmatprep.mubr.bf16.mxu0 0
      %1156 = vmatmul.mubr.bf16.gmra.mrb[0].mxu0 %v965
      %v1157 = vpop.f32.mrb[0].mxu0
      %v1158 = vadd.f32 0.0, %v1157
      %v1159 = vpop.f32.mrb[0].mxu0
      %v1160 = vpop.f32.mrb[0].mxu0
      %v1161 = vadd.f32 0.0, %v1160
      %v1162 = vpop.f32.mrb[0].mxu0
      %1163 = vmatprep.mubr.bf16.mxu0 0
      %1164 = vmatmul.mubr.bf16.gmra.mrb[0].mxu0 %v966
      %v1165 = vpop.f32.mrb[0].mxu0
      %v1166 = vadd.f32 0.0, %v1165
      %v1167 = vpop.f32.mrb[0].mxu0
      %v1168 = vpop.f32.mrb[0].mxu0
      %v1169 = vadd.f32 0.0, %v1168
      %v1170 = vpop.f32.mrb[0].mxu0
      %1171 = vmatprep.mubr.bf16.mxu0 0
      %1172 = vmatmul.mubr.bf16.gmra.mrb[0].mxu0 %v967
      %v1173 = vpop.f32.mrb[0].mxu0
      %v1174 = vadd.f32 0.0, %v1173
      %v1175 = vpop.f32.mrb[0].mxu0
      %v1176 = vpop.f32.mrb[0].mxu0
      %v1177 = vadd.f32 0.0, %v1176
      %v1178 = vpop.f32.mrb[0].mxu0
      %1179 = vmatprep.mubr.bf16.mxu0 0
      %1180 = vmatmul.mubr.bf16.gmra.mrb[0].mxu0 %v968
      %v1181 = vpop.f32.mrb[0].mxu0
      %v1182 = vadd.f32 0.0, %v1181
      %v1183 = vpop.f32.mrb[0].mxu0
      %v1184 = vpop.f32.mrb[0].mxu0
      %v1185 = vadd.f32 0.0, %v1184
      %v1186 = vpop.f32.mrb[0].mxu0
      %1187 = vmatprep.mubr.bf16.mxu0 0
      %1188 = vmatmul.mubr.bf16.gmra.mrb[0].mxu0 %v969
      %v1189 = vpop.f32.mrb[0].mxu0
      %v1190 = vadd.f32 0.0, %v1189
      %v1191 = vpop.f32.mrb[0].mxu0
      %v1192 = vpop.f32.mrb[0].mxu0
      %v1193 = vadd.f32 0.0, %v1192
      %v1194 = vpop.f32.mrb[0].mxu0
      %1195 = vdwg.mxu0
      %v1212 = vunpack.c.l.b16 %v938
      %v1213 = vunpack.c.l.b16 %v939
      %v1214 = vunpack.c.l.b16 %v940
      %v1215 = vunpack.c.l.b16 %v941
      %v1216 = vunpack.c.l.b16 %v942
      %v1217 = vunpack.c.l.b16 %v943
      %v1218 = vunpack.c.l.b16 %v944
      %v1219 = vunpack.c.l.b16 %v945
      %v1220 = vunpack.c.l.b16 %v946
      %v1221 = vunpack.c.l.b16 %v947
      %v1222 = vunpack.c.l.b16 %v948
      %v1223 = vunpack.c.l.b16 %v949
      %v1224 = vunpack.c.l.b16 %v950
      %v1225 = vunpack.c.l.b16 %v951
      %v1226 = vunpack.c.l.b16 %v952
      %v1227 = vunpack.c.l.b16 %v953
      %v1228 = vpack.c.b16 %v1213, %v1212
      %v1229 = vpack.c.b16 %v1215, %v1214
      %v1230 = vpack.c.b16 %v1217, %v1216
      %v1231 = vpack.c.b16 %v1219, %v1218
      %v1232 = vpack.c.b16 %v1221, %v1220
      %v1233 = vpack.c.b16 %v1223, %v1222
      %v1234 = vpack.c.b16 %v1225, %v1224
      %v1235 = vpack.c.b16 %v1227, %v1226
      %1244 = vmatprep.subr.bf16.mxu0 0
      %1245 = vmatpush1.bf16.msra.mxu0 %v1228
      %1246 = vmatprep.subr.bf16.mxu0 0
      %1247 = vmatpush1.bf16.msra.mxu0 %v1229
      %1248 = vmatprep.subr.bf16.mxu0 0
      %1249 = vmatpush1.bf16.msra.mxu0 %v1230
      %1250 = vmatprep.subr.bf16.mxu0 0
      %1251 = vmatpush1.bf16.msra.mxu0 %v1231
      %1252 = vmatprep.subr.bf16.mxu0 0
      %1253 = vmatpush1.bf16.msra.mxu0 %v1232
      %1254 = vmatprep.subr.bf16.mxu0 0
      %1255 = vmatpush1.bf16.msra.mxu0 %v1233
      %1256 = vmatprep.subr.bf16.mxu0 0
      %1257 = vmatpush1.bf16.msra.mxu0 %v1234
      %1258 = vmatprep.subr.bf16.mxu0 0
      %1259 = vmatpush1.bf16.msra.mxu0 %v1235
      %1260 = vmatprep.subr.bf16.mxu0 0
      %1261 = vmatpush1.bf16.msra.mxu0 0
      %1262 = vmatprep.subr.bf16.mxu0 0
      %1263 = vmatpush1.bf16.msra.mxu0 0
      %1264 = vmatprep.subr.bf16.mxu0 0
      %1265 = vmatpush1.bf16.msra.mxu0 0
      %1266 = vmatprep.subr.bf16.mxu0 0
      %1267 = vmatpush1.bf16.msra.mxu0 0
      %1268 = vmatprep.subr.bf16.mxu0 0
      %1269 = vmatpush1.bf16.msra.mxu0 0
      %1270 = vmatprep.subr.bf16.mxu0 0
      %1271 = vmatpush1.bf16.msra.mxu0 0
      %1272 = vmatprep.subr.bf16.mxu0 0
      %1273 = vmatpush1.bf16.msra.mxu0 0
      %1274 = vmatprep.subr.bf16.mxu0 0
      %1275 = vmatpush1.bf16.msra.mxu0 0
      %1276 = vmatprep.mubr.bf16.mxu0 0
      %1277 = vmatmul.mubr.bf16.gmra.mrb[0].mxu0 %v922
      %v1278 = vpop.f32.mrb[0].mxu0
      %v1279 = vadd.f32 %v1070, %v1278
      %v1280 = vpop.f32.mrb[0].mxu0
      %v1281 = vpop.f32.mrb[0].mxu0
      %v1282 = vadd.f32 %v1073, %v1281
      %v1283 = vpop.f32.mrb[0].mxu0
      %1284 = vmatprep.mubr.bf16.mxu0 0
      %1285 = vmatmul.mubr.bf16.gmra.mrb[0].mxu0 %v923
      %v1286 = vpop.f32.mrb[0].mxu0
      %v1287 = vadd.f32 %v1078, %v1286
      %v1288 = vpop.f32.mrb[0].mxu0
      %v1289 = vpop.f32.mrb[0].mxu0
      %v1290 = vadd.f32 %v1081, %v1289
      %v1291 = vpop.f32.mrb[0].mxu0
      %1292 = vmatprep.mubr.bf16.mxu0 0
      %1293 = vmatmul.mubr.bf16.gmra.mrb[0].mxu0 %v924
      %v1294 = vpop.f32.mrb[0].mxu0
      %v1295 = vadd.f32 %v1086, %v1294
      %v1296 = vpop.f32.mrb[0].mxu0
      %v1297 = vpop.f32.mrb[0].mxu0
      %v1298 = vadd.f32 %v1089, %v1297
      %v1299 = vpop.f32.mrb[0].mxu0
      %1300 = vmatprep.mubr.bf16.mxu0 0
      %1301 = vmatmul.mubr.bf16.gmra.mrb[0].mxu0 %v925
      %v1302 = vpop.f32.mrb[0].mxu0
      %v1303 = vadd.f32 %v1094, %v1302
      %v1304 = vpop.f32.mrb[0].mxu0
      %v1305 = vpop.f32.mrb[0].mxu0
      %v1306 = vadd.f32 %v1097, %v1305
      %v1307 = vpop.f32.mrb[0].mxu0
      %1308 = vmatprep.mubr.bf16.mxu0 0
      %1309 = vmatmul.mubr.bf16.gmra.mrb[0].mxu0 %v926
      %v1310 = vpop.f32.mrb[0].mxu0
      %v1311 = vadd.f32 %v1102, %v1310
      %v1312 = vpop.f32.mrb[0].mxu0
      %v1313 = vpop.f32.mrb[0].mxu0
      %v1314 = vadd.f32 %v1105, %v1313
      %v1315 = vpop.f32.mrb[0].mxu0
      %1316 = vmatprep.mubr.bf16.mxu0 0
      %1317 = vmatmul.mubr.bf16.gmra.mrb[0].mxu0 %v927
      %v1318 = vpop.f32.mrb[0].mxu0
      %v1319 = vadd.f32 %v1110, %v1318
      %v1320 = vpop.f32.mrb[0].mxu0
      %v1321 = vpop.f32.mrb[0].mxu0
      %v1322 = vadd.f32 %v1113, %v1321
      %v1323 = vpop.f32.mrb[0].mxu0
      %1324 = vmatprep.mubr.bf16.mxu0 0
      %1325 = vmatmul.mubr.bf16.gmra.mrb[0].mxu0 %v928
      %v1326 = vpop.f32.mrb[0].mxu0
      %v1327 = vadd.f32 %v1118, %v1326
      %v1328 = vpop.f32.mrb[0].mxu0
      %v1329 = vpop.f32.mrb[0].mxu0
      %v1330 = vadd.f32 %v1121, %v1329
      %v1331 = vpop.f32.mrb[0].mxu0
      %1332 = vmatprep.mubr.bf16.mxu0 0
      %1333 = vmatmul.mubr.bf16.gmra.mrb[0].mxu0 %v929
      %v1334 = vpop.f32.mrb[0].mxu0
      %v1335 = vadd.f32 %v1126, %v1334
      %v1336 = vpop.f32.mrb[0].mxu0
      %v1337 = vpop.f32.mrb[0].mxu0
      %v1338 = vadd.f32 %v1129, %v1337
      %v1339 = vpop.f32.mrb[0].mxu0
      %1340 = vmatprep.mubr.bf16.mxu0 0
      %1341 = vmatmul.mubr.bf16.gmra.mrb[0].mxu0 %v930
      %v1342 = vpop.f32.mrb[0].mxu0
      %v1343 = vadd.f32 %v1134, %v1342
      %v1344 = vpop.f32.mrb[0].mxu0
      %v1345 = vpop.f32.mrb[0].mxu0
      %v1346 = vadd.f32 %v1137, %v1345
      %v1347 = vpop.f32.mrb[0].mxu0
      %1348 = vmatprep.mubr.bf16.mxu0 0
      %1349 = vmatmul.mubr.bf16.gmra.mrb[0].mxu0 %v931
      %v1350 = vpop.f32.mrb[0].mxu0
      %v1351 = vadd.f32 %v1142, %v1350
      %v1352 = vpop.f32.mrb[0].mxu0
      %v1353 = vpop.f32.mrb[0].mxu0
      %v1354 = vadd.f32 %v1145, %v1353
      %v1355 = vpop.f32.mrb[0].mxu0
      %1356 = vmatprep.mubr.bf16.mxu0 0
      %1357 = vmatmul.mubr.bf16.gmra.mrb[0].mxu0 %v932
      %v1358 = vpop.f32.mrb[0].mxu0
      %v1359 = vadd.f32 %v1150, %v1358
      %v1360 = vpop.f32.mrb[0].mxu0
      %v1361 = vpop.f32.mrb[0].mxu0
      %v1362 = vadd.f32 %v1153, %v1361
      %v1363 = vpop.f32.mrb[0].mxu0
      %1364 = vmatprep.mubr.bf16.mxu0 0
      %1365 = vmatmul.mubr.bf16.gmra.mrb[0].mxu0 %v933
      %v1366 = vpop.f32.mrb[0].mxu0
      %v1367 = vadd.f32 %v1158, %v1366
      %v1368 = vpop.f32.mrb[0].mxu0
      %v1369 = vpop.f32.mrb[0].mxu0
      %v1370 = vadd.f32 %v1161, %v1369
      %v1371 = vpop.f32.mrb[0].mxu0
      %1372 = vmatprep.mubr.bf16.mxu0 0
      %1373 = vmatmul.mubr.bf16.gmra.mrb[0].mxu0 %v934
      %v1374 = vpop.f32.mrb[0].mxu0
      %v1375 = vadd.f32 %v1166, %v1374
      %v1376 = vpop.f32.mrb[0].mxu0
      %v1377 = vpop.f32.mrb[0].mxu0
      %v1378 = vadd.f32 %v1169, %v1377
      %v1379 = vpop.f32.mrb[0].mxu0
      %1380 = vmatprep.mubr.bf16.mxu0 0
      %1381 = vmatmul.mubr.bf16.gmra.mrb[0].mxu0 %v935
      %v1382 = vpop.f32.mrb[0].mxu0
      %v1383 = vadd.f32 %v1174, %v1382
      %v1384 = vpop.f32.mrb[0].mxu0
      %v1385 = vpop.f32.mrb[0].mxu0
      %v1386 = vadd.f32 %v1177, %v1385
      %v1387 = vpop.f32.mrb[0].mxu0
      %1388 = vmatprep.mubr.bf16.mxu0 0
      %1389 = vmatmul.mubr.bf16.gmra.mrb[0].mxu0 %v936
      %v1390 = vpop.f32.mrb[0].mxu0
      %v1391 = vadd.f32 %v1182, %v1390
      %v1392 = vpop.f32.mrb[0].mxu0
      %v1393 = vpop.f32.mrb[0].mxu0
      %v1394 = vadd.f32 %v1185, %v1393
      %v1395 = vpop.f32.mrb[0].mxu0
      %1396 = vmatprep.mubr.bf16.mxu0 0
      %1397 = vmatmul.mubr.bf16.gmra.mrb[0].mxu0 %v937
      %v1398 = vpop.f32.mrb[0].mxu0
      %v1399 = vadd.f32 %v1190, %v1398
      %v1400 = vpop.f32.mrb[0].mxu0
      %v1401 = vpop.f32.mrb[0].mxu0
      %v1402 = vadd.f32 %v1193, %v1401
      %v1403 = vpop.f32.mrb[0].mxu0
      %1404 = vdwg.mxu0
      %v1405 = vpack.c.bf16 %v904, %v816
      %v1406 = vpack.c.bf16 %v905, %v819
      %v1407 = vpack.c.bf16 %v906, %v822
      %v1408 = vpack.c.bf16 %v907, %v825
      %v1409 = vpack.c.bf16 %v908, %v828
      %v1410 = vpack.c.bf16 %v909, %v831
      %v1411 = vpack.c.bf16 %v910, %v834
      %v1412 = vpack.c.bf16 %v911, %v837
      %v1413 = vpack.c.bf16 %v912, %v840
      %v1414 = vpack.c.bf16 %v913, %v843
      %v1415 = vpack.c.bf16 %v914, %v846
      %v1416 = vpack.c.bf16 %v915, %v849
      %v1417 = vpack.c.bf16 %v916, %v852
      %v1418 = vpack.c.bf16 %v917, %v855
      %v1419 = vpack.c.bf16 %v918, %v858
      %v1420 = vpack.c.bf16 %v919, %v861
      %s1421 = scalar_lea.vmem %s3, 128
      %v1422 = vld [vmem:[%s1421] sm:$0xf]
      %v1423 = vld [vmem:[%s1421 + $0x4] sm:$0xf]
      %v1424 = vld [vmem:[%s1421 + $0x8] sm:$0xf]
      %v1425 = vld [vmem:[%s1421 + $0xc] sm:$0xf]
      %v1426 = vld [vmem:[%s1421 + $0x10] sm:$0xf]
      %v1427 = vld [vmem:[%s1421 + $0x14] sm:$0xf]
      %v1428 = vld [vmem:[%s1421 + $0x18] sm:$0xf]
      %v1429 = vld [vmem:[%s1421 + $0x1c] sm:$0xf]
      %v1430 = vld [vmem:[%s1421 + $0x20] sm:$0xf]
      %v1431 = vld [vmem:[%s1421 + $0x24] sm:$0xf]
      %v1432 = vld [vmem:[%s1421 + $0x28] sm:$0xf]
      %v1433 = vld [vmem:[%s1421 + $0x2c] sm:$0xf]
      %v1434 = vld [vmem:[%s1421 + $0x30] sm:$0xf]
      %v1435 = vld [vmem:[%s1421 + $0x34] sm:$0xf]
      %v1436 = vld [vmem:[%s1421 + $0x38] sm:$0xf]
      %v1437 = vld [vmem:[%s1421 + $0x3c] sm:$0xf]
      %v1454 = vunpack.c.l.b16 %v1422
      %v1455 = vunpack.c.l.b16 %v1423
      %v1456 = vunpack.c.l.b16 %v1424
      %v1457 = vunpack.c.l.b16 %v1425
      %v1458 = vunpack.c.l.b16 %v1426
      %v1459 = vunpack.c.l.b16 %v1427
      %v1460 = vunpack.c.l.b16 %v1428
      %v1461 = vunpack.c.l.b16 %v1429
      %v1462 = vunpack.c.l.b16 %v1430
      %v1463 = vunpack.c.l.b16 %v1431
      %v1464 = vunpack.c.l.b16 %v1432
      %v1465 = vunpack.c.l.b16 %v1433
      %v1466 = vunpack.c.l.b16 %v1434
      %v1467 = vunpack.c.l.b16 %v1435
      %v1468 = vunpack.c.l.b16 %v1436
      %v1469 = vunpack.c.l.b16 %v1437
      %v1470 = vpack.c.b16 %v1455, %v1454
      %v1471 = vpack.c.b16 %v1457, %v1456
      %v1472 = vpack.c.b16 %v1459, %v1458
      %v1473 = vpack.c.b16 %v1461, %v1460
      %v1474 = vpack.c.b16 %v1463, %v1462
      %v1475 = vpack.c.b16 %v1465, %v1464
      %v1476 = vpack.c.b16 %v1467, %v1466
      %v1477 = vpack.c.b16 %v1469, %v1468
      %1486 = vmatprep.subr.bf16.mxu0 0
      %1487 = vmatpush1.bf16.msra.mxu0 %v1470
      %1488 = vmatprep.subr.bf16.mxu0 0
      %1489 = vmatpush1.bf16.msra.mxu0 %v1471
      %1490 = vmatprep.subr.bf16.mxu0 0
      %1491 = vmatpush1.bf16.msra.mxu0 %v1472
      %1492 = vmatprep.subr.bf16.mxu0 0
      %1493 = vmatpush1.bf16.msra.mxu0 %v1473
      %1494 = vmatprep.subr.bf16.mxu0 0
      %1495 = vmatpush1.bf16.msra.mxu0 %v1474
      %1496 = vmatprep.subr.bf16.mxu0 0
      %1497 = vmatpush1.bf16.msra.mxu0 %v1475
      %1498 = vmatprep.subr.bf16.mxu0 0
      %1499 = vmatpush1.bf16.msra.mxu0 %v1476
      %1500 = vmatprep.subr.bf16.mxu0 0
      %1501 = vmatpush1.bf16.msra.mxu0 %v1477
      %1502 = vmatprep.subr.bf16.mxu0 0
      %1503 = vmatpush1.bf16.msra.mxu0 0
      %1504 = vmatprep.subr.bf16.mxu0 0
      %1505 = vmatpush1.bf16.msra.mxu0 0
      %1506 = vmatprep.subr.bf16.mxu0 0
      %1507 = vmatpush1.bf16.msra.mxu0 0
      %1508 = vmatprep.subr.bf16.mxu0 0
      %1509 = vmatpush1.bf16.msra.mxu0 0
      %1510 = vmatprep.subr.bf16.mxu0 0
      %1511 = vmatpush1.bf16.msra.mxu0 0
      %1512 = vmatprep.subr.bf16.mxu0 0
      %1513 = vmatpush1.bf16.msra.mxu0 0
      %1514 = vmatprep.subr.bf16.mxu0 0
      %1515 = vmatpush1.bf16.msra.mxu0 0
      %1516 = vmatprep.subr.bf16.mxu0 0
      %1517 = vmatpush1.bf16.msra.mxu0 0
      %1518 = vmatprep.mubr.bf16.mxu0 0
      %1519 = vmatmul.mubr.bf16.gmra.mrb[0].mxu0 %v1405
      %v1520 = vpop.f32.mrb[0].mxu0
      %v1521 = vadd.f32 0.0, %v1520
      %v1522 = vpop.f32.mrb[0].mxu0
      %v1523 = vpop.f32.mrb[0].mxu0
      %v1524 = vadd.f32 0.0, %v1523
      %v1525 = vpop.f32.mrb[0].mxu0
      %1526 = vmatprep.mubr.bf16.mxu0 0
      %1527 = vmatmul.mubr.bf16.gmra.mrb[0].mxu0 %v1406
      %v1528 = vpop.f32.mrb[0].mxu0
      %v1529 = vadd.f32 0.0, %v1528
      %v1530 = vpop.f32.mrb[0].mxu0
      %v1531 = vpop.f32.mrb[0].mxu0
      %v1532 = vadd.f32 0.0, %v1531
      %v1533 = vpop.f32.mrb[0].mxu0
      %1534 = vmatprep.mubr.bf16.mxu0 0
      %1535 = vmatmul.mubr.bf16.gmra.mrb[0].mxu0 %v1407
      %v1536 = vpop.f32.mrb[0].mxu0
      %v1537 = vadd.f32 0.0, %v1536
      %v1538 = vpop.f32.mrb[0].mxu0
      %v1539 = vpop.f32.mrb[0].mxu0
      %v1540 = vadd.f32 0.0, %v1539
      %v1541 = vpop.f32.mrb[0].mxu0
      %1542 = vmatprep.mubr.bf16.mxu0 0
      %1543 = vmatmul.mubr.bf16.gmra.mrb[0].mxu0 %v1408
      %v1544 = vpop.f32.mrb[0].mxu0
      %v1545 = vadd.f32 0.0, %v1544
      %v1546 = vpop.f32.mrb[0].mxu0
      %v1547 = vpop.f32.mrb[0].mxu0
      %v1548 = vadd.f32 0.0, %v1547
      %v1549 = vpop.f32.mrb[0].mxu0
      %1550 = vmatprep.mubr.bf16.mxu0 0
      %1551 = vmatmul.mubr.bf16.gmra.mrb[0].mxu0 %v1409
      %v1552 = vpop.f32.mrb[0].mxu0
      %v1553 = vadd.f32 0.0, %v1552
      %v1554 = vpop.f32.mrb[0].mxu0
      %v1555 = vpop.f32.mrb[0].mxu0
      %v1556 = vadd.f32 0.0, %v1555
      %v1557 = vpop.f32.mrb[0].mxu0
      %1558 = vmatprep.mubr.bf16.mxu0 0
      %1559 = vmatmul.mubr.bf16.gmra.mrb[0].mxu0 %v1410
      %v1560 = vpop.f32.mrb[0].mxu0
      %v1561 = vadd.f32 0.0, %v1560
      %v1562 = vpop.f32.mrb[0].mxu0
      %v1563 = vpop.f32.mrb[0].mxu0
      %v1564 = vadd.f32 0.0, %v1563
      %v1565 = vpop.f32.mrb[0].mxu0
      %1566 = vmatprep.mubr.bf16.mxu0 0
      %1567 = vmatmul.mubr.bf16.gmra.mrb[0].mxu0 %v1411
      %v1568 = vpop.f32.mrb[0].mxu0
      %v1569 = vadd.f32 0.0, %v1568
      %v1570 = vpop.f32.mrb[0].mxu0
      %v1571 = vpop.f32.mrb[0].mxu0
      %v1572 = vadd.f32 0.0, %v1571
      %v1573 = vpop.f32.mrb[0].mxu0
      %1574 = vmatprep.mubr.bf16.mxu0 0
      %1575 = vmatmul.mubr.bf16.gmra.mrb[0].mxu0 %v1412
      %v1576 = vpop.f32.mrb[0].mxu0
      %v1577 = vadd.f32 0.0, %v1576
      %v1578 = vpop.f32.mrb[0].mxu0
      %v1579 = vpop.f32.mrb[0].mxu0
      %v1580 = vadd.f32 0.0, %v1579
      %v1581 = vpop.f32.mrb[0].mxu0
      %1582 = vmatprep.mubr.bf16.mxu0 0
      %1583 = vmatmul.mubr.bf16.gmra.mrb[0].mxu0 %v1413
      %v1584 = vpop.f32.mrb[0].mxu0
      %v1585 = vadd.f32 0.0, %v1584
      %v1586 = vpop.f32.mrb[0].mxu0
      %v1587 = vpop.f32.mrb[0].mxu0
      %v1588 = vadd.f32 0.0, %v1587
      %v1589 = vpop.f32.mrb[0].mxu0
      %1590 = vmatprep.mubr.bf16.mxu0 0
      %1591 = vmatmul.mubr.bf16.gmra.mrb[0].mxu0 %v1414
      %v1592 = vpop.f32.mrb[0].mxu0
      %v1593 = vadd.f32 0.0, %v1592
      %v1594 = vpop.f32.mrb[0].mxu0
      %v1595 = vpop.f32.mrb[0].mxu0
      %v1596 = vadd.f32 0.0, %v1595
      %v1597 = vpop.f32.mrb[0].mxu0
      %1598 = vmatprep.mubr.bf16.mxu0 0
      %1599 = vmatmul.mubr.bf16.gmra.mrb[0].mxu0 %v1415
      %v1600 = vpop.f32.mrb[0].mxu0
      %v1601 = vadd.f32 0.0, %v1600
      %v1602 = vpop.f32.mrb[0].mxu0
      %v1603 = vpop.f32.mrb[0].mxu0
      %v1604 = vadd.f32 0.0, %v1603
      %v1605 = vpop.f32.mrb[0].mxu0
      %1606 = vmatprep.mubr.bf16.mxu0 0
      %1607 = vmatmul.mubr.bf16.gmra.mrb[0].mxu0 %v1416
      %v1608 = vpop.f32.mrb[0].mxu0
      %v1609 = vadd.f32 0.0, %v1608
      %v1610 = vpop.f32.mrb[0].mxu0
      %v1611 = vpop.f32.mrb[0].mxu0
      %v1612 = vadd.f32 0.0, %v1611
      %v1613 = vpop.f32.mrb[0].mxu0
      %1614 = vmatprep.mubr.bf16.mxu0 0
      %1615 = vmatmul.mubr.bf16.gmra.mrb[0].mxu0 %v1417
      %v1616 = vpop.f32.mrb[0].mxu0
      %v1617 = vadd.f32 0.0, %v1616
      %v1618 = vpop.f32.mrb[0].mxu0
      %v1619 = vpop.f32.mrb[0].mxu0
      %v1620 = vadd.f32 0.0, %v1619
      %v1621 = vpop.f32.mrb[0].mxu0
      %1622 = vmatprep.mubr.bf16.mxu0 0
      %1623 = vmatmul.mubr.bf16.gmra.mrb[0].mxu0 %v1418
      %v1624 = vpop.f32.mrb[0].mxu0
      %v1625 = vadd.f32 0.0, %v1624
      %v1626 = vpop.f32.mrb[0].mxu0
      %v1627 = vpop.f32.mrb[0].mxu0
      %v1628 = vadd.f32 0.0, %v1627
      %v1629 = vpop.f32.mrb[0].mxu0
      %1630 = vmatprep.mubr.bf16.mxu0 0
      %1631 = vmatmul.mubr.bf16.gmra.mrb[0].mxu0 %v1419
      %v1632 = vpop.f32.mrb[0].mxu0
      %v1633 = vadd.f32 0.0, %v1632
      %v1634 = vpop.f32.mrb[0].mxu0
      %v1635 = vpop.f32.mrb[0].mxu0
      %v1636 = vadd.f32 0.0, %v1635
      %v1637 = vpop.f32.mrb[0].mxu0
      %1638 = vmatprep.mubr.bf16.mxu0 0
      %1639 = vmatmul.mubr.bf16.gmra.mrb[0].mxu0 %v1420
      %v1640 = vpop.f32.mrb[0].mxu0
      %v1641 = vadd.f32 0.0, %v1640
      %v1642 = vpop.f32.mrb[0].mxu0
      %v1643 = vpop.f32.mrb[0].mxu0
      %v1644 = vadd.f32 0.0, %v1643
      %v1645 = vpop.f32.mrb[0].mxu0
      %1646 = vdwg.mxu0
      %v1647 = vadd.f32 %v1279, %v1521
      %v1648 = vadd.f32 %v1282, %v1524
      %v1649 = vadd.f32 %v1287, %v1529
      %v1650 = vadd.f32 %v1290, %v1532
      %v1651 = vadd.f32 %v1295, %v1537
      %v1652 = vadd.f32 %v1298, %v1540
      %v1653 = vadd.f32 %v1303, %v1545
      %v1654 = vadd.f32 %v1306, %v1548
      %v1655 = vadd.f32 %v1311, %v1553
      %v1656 = vadd.f32 %v1314, %v1556
      %v1657 = vadd.f32 %v1319, %v1561
      %v1658 = vadd.f32 %v1322, %v1564
      %v1659 = vadd.f32 %v1327, %v1569
      %v1660 = vadd.f32 %v1330, %v1572
      %v1661 = vadd.f32 %v1335, %v1577
      %v1662 = vadd.f32 %v1338, %v1580
      %v1663 = vadd.f32 %v1343, %v1585
      %v1664 = vadd.f32 %v1346, %v1588
      %v1665 = vadd.f32 %v1351, %v1593
      %v1666 = vadd.f32 %v1354, %v1596
      %v1667 = vadd.f32 %v1359, %v1601
      %v1668 = vadd.f32 %v1362, %v1604
      %v1669 = vadd.f32 %v1367, %v1609
      %v1670 = vadd.f32 %v1370, %v1612
      %v1671 = vadd.f32 %v1375, %v1617
      %v1672 = vadd.f32 %v1378, %v1620
      %v1673 = vadd.f32 %v1383, %v1625
      %v1674 = vadd.f32 %v1386, %v1628
      %v1675 = vadd.f32 %v1391, %v1633
      %v1676 = vadd.f32 %v1394, %v1636
      %v1677 = vadd.f32 %v1399, %v1641
      %v1678 = vadd.f32 %v1402, %v1644
      %v1679 = vpack.c.bf16 %v755, %v811
      %s1680 = scalar_lea.vmem %s3, 192
      %v1681 = vld [vmem:[%s1680] sm:$0xf]
      %v1682 = vld [vmem:[%s1680 + $0x4] sm:$0xf]
      %v1683 = vld [vmem:[%s1680 + $0x8] sm:$0xf]
      %v1684 = vld [vmem:[%s1680 + $0xc] sm:$0xf]
      %v1685 = vld [vmem:[%s1680 + $0x10] sm:$0xf]
      %v1686 = vld [vmem:[%s1680 + $0x14] sm:$0xf]
      %v1687 = vld [vmem:[%s1680 + $0x18] sm:$0xf]
      %v1688 = vld [vmem:[%s1680 + $0x1c] sm:$0xf]
      %v1689 = vld [vmem:[%s1680 + $0x20] sm:$0xf]
      %v1690 = vld [vmem:[%s1680 + $0x24] sm:$0xf]
      %v1691 = vld [vmem:[%s1680 + $0x28] sm:$0xf]
      %v1692 = vld [vmem:[%s1680 + $0x2c] sm:$0xf]
      %v1693 = vld [vmem:[%s1680 + $0x30] sm:$0xf]
      %v1694 = vld [vmem:[%s1680 + $0x34] sm:$0xf]
      %v1695 = vld [vmem:[%s1680 + $0x38] sm:$0xf]
      %v1696 = vld [vmem:[%s1680 + $0x3c] sm:$0xf]
      %v1713 = vunpack.c.l.b16 %v1681
      %v1714 = vunpack.c.l.b16 %v1682
      %v1715 = vunpack.c.l.b16 %v1683
      %v1716 = vunpack.c.l.b16 %v1684
      %v1717 = vunpack.c.l.b16 %v1685
      %v1718 = vunpack.c.l.b16 %v1686
      %v1719 = vunpack.c.l.b16 %v1687
      %v1720 = vunpack.c.l.b16 %v1688
      %v1721 = vunpack.c.l.b16 %v1689
      %v1722 = vunpack.c.l.b16 %v1690
      %v1723 = vunpack.c.l.b16 %v1691
      %v1724 = vunpack.c.l.b16 %v1692
      %v1725 = vunpack.c.l.b16 %v1693
      %v1726 = vunpack.c.l.b16 %v1694
      %v1727 = vunpack.c.l.b16 %v1695
      %v1728 = vunpack.c.l.b16 %v1696
      %v1729 = vpack.c.b16 %v1714, %v1713
      %v1730 = vpack.c.b16 %v1716, %v1715
      %v1731 = vpack.c.b16 %v1718, %v1717
      %v1732 = vpack.c.b16 %v1720, %v1719
      %v1733 = vpack.c.b16 %v1722, %v1721
      %v1734 = vpack.c.b16 %v1724, %v1723
      %v1735 = vpack.c.b16 %v1726, %v1725
      %v1736 = vpack.c.b16 %v1728, %v1727
      %1745 = vmatprep.subr.bf16.mxu0 0
      %1746 = vmatpush1.bf16.msra.mxu0 %v1729
      %1747 = vmatprep.subr.bf16.mxu0 0
      %1748 = vmatpush1.bf16.msra.mxu0 %v1730
      %1749 = vmatprep.subr.bf16.mxu0 0
      %1750 = vmatpush1.bf16.msra.mxu0 %v1731
      %1751 = vmatprep.subr.bf16.mxu0 0
      %1752 = vmatpush1.bf16.msra.mxu0 %v1732
      %1753 = vmatprep.subr.bf16.mxu0 0
      %1754 = vmatpush1.bf16.msra.mxu0 %v1733
      %1755 = vmatprep.subr.bf16.mxu0 0
      %1756 = vmatpush1.bf16.msra.mxu0 %v1734
      %1757 = vmatprep.subr.bf16.mxu0 0
      %1758 = vmatpush1.bf16.msra.mxu0 %v1735
      %1759 = vmatprep.subr.bf16.mxu0 0
      %1760 = vmatpush1.bf16.msra.mxu0 %v1736
      %1761 = vmatprep.subr.bf16.mxu0 0
      %1762 = vmatpush1.bf16.msra.mxu0 0
      %1763 = vmatprep.subr.bf16.mxu0 0
      %1764 = vmatpush1.bf16.msra.mxu0 0
      %1765 = vmatprep.subr.bf16.mxu0 0
      %1766 = vmatpush1.bf16.msra.mxu0 0
      %1767 = vmatprep.subr.bf16.mxu0 0
      %1768 = vmatpush1.bf16.msra.mxu0 0
      %1769 = vmatprep.subr.bf16.mxu0 0
      %1770 = vmatpush1.bf16.msra.mxu0 0
      %1771 = vmatprep.subr.bf16.mxu0 0
      %1772 = vmatpush1.bf16.msra.mxu0 0
      %1773 = vmatprep.subr.bf16.mxu0 0
      %1774 = vmatpush1.bf16.msra.mxu0 0
      %1775 = vmatprep.subr.bf16.mxu0 0
      %1776 = vmatpush1.bf16.msra.mxu0 0
      %1777 = vmatprep.mubr.bf16.mxu0 0
      %1778 = vmatmul.mubr.bf16.gmra.mrb[0].mxu0 %v923
      %v1779 = vpop.f32.mrb[0].mxu0
      %v1780 = vadd.f32 0.0, %v1779
      %v1781 = vpop.f32.mrb[0].mxu0
      %v1782 = vpop.f32.mrb[0].mxu0
      %v1783 = vadd.f32 0.0, %v1782
      %v1784 = vpop.f32.mrb[0].mxu0
      %1785 = vmatprep.mubr.bf16.mxu0 0
      %1786 = vmatmul.mubr.bf16.gmra.mrb[0].mxu0 %v924
      %v1787 = vpop.f32.mrb[0].mxu0
      %v1788 = vadd.f32 0.0, %v1787
      %v1789 = vpop.f32.mrb[0].mxu0
      %v1790 = vpop.f32.mrb[0].mxu0
      %v1791 = vadd.f32 0.0, %v1790
      %v1792 = vpop.f32.mrb[0].mxu0
      %1793 = vmatprep.mubr.bf16.mxu0 0
      %1794 = vmatmul.mubr.bf16.gmra.mrb[0].mxu0 %v925
      %v1795 = vpop.f32.mrb[0].mxu0
      %v1796 = vadd.f32 0.0, %v1795
      %v1797 = vpop.f32.mrb[0].mxu0
      %v1798 = vpop.f32.mrb[0].mxu0
      %v1799 = vadd.f32 0.0, %v1798
      %v1800 = vpop.f32.mrb[0].mxu0
      %1801 = vmatprep.mubr.bf16.mxu0 0
      %1802 = vmatmul.mubr.bf16.gmra.mrb[0].mxu0 %v926
      %v1803 = vpop.f32.mrb[0].mxu0
      %v1804 = vadd.f32 0.0, %v1803
      %v1805 = vpop.f32.mrb[0].mxu0
      %v1806 = vpop.f32.mrb[0].mxu0
      %v1807 = vadd.f32 0.0, %v1806
      %v1808 = vpop.f32.mrb[0].mxu0
      %1809 = vmatprep.mubr.bf16.mxu0 0
      %1810 = vmatmul.mubr.bf16.gmra.mrb[0].mxu0 %v927
      %v1811 = vpop.f32.mrb[0].mxu0
      %v1812 = vadd.f32 0.0, %v1811
      %v1813 = vpop.f32.mrb[0].mxu0
      %v1814 = vpop.f32.mrb[0].mxu0
      %v1815 = vadd.f32 0.0, %v1814
      %v1816 = vpop.f32.mrb[0].mxu0
      %1817 = vmatprep.mubr.bf16.mxu0 0
      %1818 = vmatmul.mubr.bf16.gmra.mrb[0].mxu0 %v928
      %v1819 = vpop.f32.mrb[0].mxu0
      %v1820 = vadd.f32 0.0, %v1819
      %v1821 = vpop.f32.mrb[0].mxu0
      %v1822 = vpop.f32.mrb[0].mxu0
      %v1823 = vadd.f32 0.0, %v1822
      %v1824 = vpop.f32.mrb[0].mxu0
      %1825 = vmatprep.mubr.bf16.mxu0 0
      %1826 = vmatmul.mubr.bf16.gmra.mrb[0].mxu0 %v929
      %v1827 = vpop.f32.mrb[0].mxu0
      %v1828 = vadd.f32 0.0, %v1827
      %v1829 = vpop.f32.mrb[0].mxu0
      %v1830 = vpop.f32.mrb[0].mxu0
      %v1831 = vadd.f32 0.0, %v1830
      %v1832 = vpop.f32.mrb[0].mxu0
      %1833 = vmatprep.mubr.bf16.mxu0 0
      %1834 = vmatmul.mubr.bf16.gmra.mrb[0].mxu0 %v930
      %v1835 = vpop.f32.mrb[0].mxu0
      %v1836 = vadd.f32 0.0, %v1835
      %v1837 = vpop.f32.mrb[0].mxu0
      %v1838 = vpop.f32.mrb[0].mxu0
      %v1839 = vadd.f32 0.0, %v1838
      %v1840 = vpop.f32.mrb[0].mxu0
      %1841 = vmatprep.mubr.bf16.mxu0 0
      %1842 = vmatmul.mubr.bf16.gmra.mrb[0].mxu0 %v931
      %v1843 = vpop.f32.mrb[0].mxu0
      %v1844 = vadd.f32 0.0, %v1843
      %v1845 = vpop.f32.mrb[0].mxu0
      %v1846 = vpop.f32.mrb[0].mxu0
      %v1847 = vadd.f32 0.0, %v1846
      %v1848 = vpop.f32.mrb[0].mxu0
      %1849 = vmatprep.mubr.bf16.mxu0 0
      %1850 = vmatmul.mubr.bf16.gmra.mrb[0].mxu0 %v932
      %v1851 = vpop.f32.mrb[0].mxu0
      %v1852 = vadd.f32 0.0, %v1851
      %v1853 = vpop.f32.mrb[0].mxu0
      %v1854 = vpop.f32.mrb[0].mxu0
      %v1855 = vadd.f32 0.0, %v1854
      %v1856 = vpop.f32.mrb[0].mxu0
      %1857 = vmatprep.mubr.bf16.mxu0 0
      %1858 = vmatmul.mubr.bf16.gmra.mrb[0].mxu0 %v933
      %v1859 = vpop.f32.mrb[0].mxu0
      %v1860 = vadd.f32 0.0, %v1859
      %v1861 = vpop.f32.mrb[0].mxu0
      %v1862 = vpop.f32.mrb[0].mxu0
      %v1863 = vadd.f32 0.0, %v1862
      %v1864 = vpop.f32.mrb[0].mxu0
      %1865 = vmatprep.mubr.bf16.mxu0 0
      %1866 = vmatmul.mubr.bf16.gmra.mrb[0].mxu0 %v934
      %v1867 = vpop.f32.mrb[0].mxu0
      %v1868 = vadd.f32 0.0, %v1867
      %v1869 = vpop.f32.mrb[0].mxu0
      %v1870 = vpop.f32.mrb[0].mxu0
      %v1871 = vadd.f32 0.0, %v1870
      %v1872 = vpop.f32.mrb[0].mxu0
      %1873 = vmatprep.mubr.bf16.mxu0 0
      %1874 = vmatmul.mubr.bf16.gmra.mrb[0].mxu0 %v935
      %v1875 = vpop.f32.mrb[0].mxu0
      %v1876 = vadd.f32 0.0, %v1875
      %v1877 = vpop.f32.mrb[0].mxu0
      %v1878 = vpop.f32.mrb[0].mxu0
      %v1879 = vadd.f32 0.0, %v1878
      %v1880 = vpop.f32.mrb[0].mxu0
      %1881 = vmatprep.mubr.bf16.mxu0 0
      %1882 = vmatmul.mubr.bf16.gmra.mrb[0].mxu0 %v936
      %v1883 = vpop.f32.mrb[0].mxu0
      %v1884 = vadd.f32 0.0, %v1883
      %v1885 = vpop.f32.mrb[0].mxu0
      %v1886 = vpop.f32.mrb[0].mxu0
      %v1887 = vadd.f32 0.0, %v1886
      %v1888 = vpop.f32.mrb[0].mxu0
      %1889 = vmatprep.mubr.bf16.mxu0 0
      %1890 = vmatmul.mubr.bf16.gmra.mrb[0].mxu0 %v937
      %v1891 = vpop.f32.mrb[0].mxu0
      %v1892 = vadd.f32 0.0, %v1891
      %v1893 = vpop.f32.mrb[0].mxu0
      %v1894 = vpop.f32.mrb[0].mxu0
      %v1895 = vadd.f32 0.0, %v1894
      %v1896 = vpop.f32.mrb[0].mxu0
      %1897 = vmatprep.mubr.bf16.mxu0 0
      %1898 = vmatmul.mubr.bf16.gmra.mrb[0].mxu0 %v1679
      %v1899 = vpop.f32.mrb[0].mxu0
      %v1900 = vadd.f32 0.0, %v1899
      %v1901 = vpop.f32.mrb[0].mxu0
      %v1902 = vpop.f32.mrb[0].mxu0
      %v1903 = vadd.f32 0.0, %v1902
      %v1904 = vpop.f32.mrb[0].mxu0
      %1905 = vdwg.mxu0
      %v1906 = vadd.f32 %v1647, %v1780
      %v1907 = vadd.f32 %v1648, %v1783
      %v1908 = vadd.f32 %v1649, %v1788
      %v1909 = vadd.f32 %v1650, %v1791
      %v1910 = vadd.f32 %v1651, %v1796
      %v1911 = vadd.f32 %v1652, %v1799
      %v1912 = vadd.f32 %v1653, %v1804
      %v1913 = vadd.f32 %v1654, %v1807
      %v1914 = vadd.f32 %v1655, %v1812
      %v1915 = vadd.f32 %v1656, %v1815
      %v1916 = vadd.f32 %v1657, %v1820
      %v1917 = vadd.f32 %v1658, %v1823
      %v1918 = vadd.f32 %v1659, %v1828
      %v1919 = vadd.f32 %v1660, %v1831
      %v1920 = vadd.f32 %v1661, %v1836
      %v1921 = vadd.f32 %v1662, %v1839
      %v1922 = vadd.f32 %v1663, %v1844
      %v1923 = vadd.f32 %v1664, %v1847
      %v1924 = vadd.f32 %v1665, %v1852
      %v1925 = vadd.f32 %v1666, %v1855
      %v1926 = vadd.f32 %v1667, %v1860
      %v1927 = vadd.f32 %v1668, %v1863
      %v1928 = vadd.f32 %v1669, %v1868
      %v1929 = vadd.f32 %v1670, %v1871
      %v1930 = vadd.f32 %v1671, %v1876
      %v1931 = vadd.f32 %v1672, %v1879
      %v1932 = vadd.f32 %v1673, %v1884
      %v1933 = vadd.f32 %v1674, %v1887
      %v1934 = vadd.f32 %v1675, %v1892
      %v1935 = vadd.f32 %v1676, %v1895
      %v1936 = vadd.f32 %v1677, %v1900
      %v1937 = vadd.f32 %v1678, %v1903
      %v1938 = vpack.c.bf16 %v648, %v647
      %s1939 = scalar_lea.vmem %s3, 256
      %v1940 = vld [vmem:[%s1939] sm:$0xf]
      %v1941 = vld [vmem:[%s1939 + $0x4] sm:$0xf]
      %v1942 = vld [vmem:[%s1939 + $0x8] sm:$0xf]
      %v1943 = vld [vmem:[%s1939 + $0xc] sm:$0xf]
      %v1944 = vld [vmem:[%s1939 + $0x10] sm:$0xf]
      %v1945 = vld [vmem:[%s1939 + $0x14] sm:$0xf]
      %v1946 = vld [vmem:[%s1939 + $0x18] sm:$0xf]
      %v1947 = vld [vmem:[%s1939 + $0x1c] sm:$0xf]
      %v1948 = vld [vmem:[%s1939 + $0x20] sm:$0xf]
      %v1949 = vld [vmem:[%s1939 + $0x24] sm:$0xf]
      %v1950 = vld [vmem:[%s1939 + $0x28] sm:$0xf]
      %v1951 = vld [vmem:[%s1939 + $0x2c] sm:$0xf]
      %v1952 = vld [vmem:[%s1939 + $0x30] sm:$0xf]
      %v1953 = vld [vmem:[%s1939 + $0x34] sm:$0xf]
      %v1954 = vld [vmem:[%s1939 + $0x38] sm:$0xf]
      %v1955 = vld [vmem:[%s1939 + $0x3c] sm:$0xf]
      %v1972 = vunpack.c.l.b16 %v1940
      %v1973 = vunpack.c.l.b16 %v1941
      %v1974 = vunpack.c.l.b16 %v1942
      %v1975 = vunpack.c.l.b16 %v1943
      %v1976 = vunpack.c.l.b16 %v1944
      %v1977 = vunpack.c.l.b16 %v1945
      %v1978 = vunpack.c.l.b16 %v1946
      %v1979 = vunpack.c.l.b16 %v1947
      %v1980 = vunpack.c.l.b16 %v1948
      %v1981 = vunpack.c.l.b16 %v1949
      %v1982 = vunpack.c.l.b16 %v1950
      %v1983 = vunpack.c.l.b16 %v1951
      %v1984 = vunpack.c.l.b16 %v1952
      %v1985 = vunpack.c.l.b16 %v1953
      %v1986 = vunpack.c.l.b16 %v1954
      %v1987 = vunpack.c.l.b16 %v1955
      %v1988 = vpack.c.b16 %v1973, %v1972
      %v1989 = vpack.c.b16 %v1975, %v1974
      %v1990 = vpack.c.b16 %v1977, %v1976
      %v1991 = vpack.c.b16 %v1979, %v1978
      %v1992 = vpack.c.b16 %v1981, %v1980
      %v1993 = vpack.c.b16 %v1983, %v1982
      %v1994 = vpack.c.b16 %v1985, %v1984
      %v1995 = vpack.c.b16 %v1987, %v1986
      %2004 = vmatprep.subr.bf16.mxu0 0
      %2005 = vmatpush1.bf16.msra.mxu0 %v1988
      %2006 = vmatprep.subr.bf16.mxu0 0
      %2007 = vmatpush1.bf16.msra.mxu0 %v1989
      %2008 = vmatprep.subr.bf16.mxu0 0
      %2009 = vmatpush1.bf16.msra.mxu0 %v1990
      %2010 = vmatprep.subr.bf16.mxu0 0
      %2011 = vmatpush1.bf16.msra.mxu0 %v1991
      %2012 = vmatprep.subr.bf16.mxu0 0
      %2013 = vmatpush1.bf16.msra.mxu0 %v1992
      %2014 = vmatprep.subr.bf16.mxu0 0
      %2015 = vmatpush1.bf16.msra.mxu0 %v1993
      %2016 = vmatprep.subr.bf16.mxu0 0
      %2017 = vmatpush1.bf16.msra.mxu0 %v1994
      %2018 = vmatprep.subr.bf16.mxu0 0
      %2019 = vmatpush1.bf16.msra.mxu0 %v1995
      %2020 = vmatprep.subr.bf16.mxu0 0
      %2021 = vmatpush1.bf16.msra.mxu0 0
      %2022 = vmatprep.subr.bf16.mxu0 0
      %2023 = vmatpush1.bf16.msra.mxu0 0
      %2024 = vmatprep.subr.bf16.mxu0 0
      %2025 = vmatpush1.bf16.msra.mxu0 0
      %2026 = vmatprep.subr.bf16.mxu0 0
      %2027 = vmatpush1.bf16.msra.mxu0 0
      %2028 = vmatprep.subr.bf16.mxu0 0
      %2029 = vmatpush1.bf16.msra.mxu0 0
      %2030 = vmatprep.subr.bf16.mxu0 0
      %2031 = vmatpush1.bf16.msra.mxu0 0
      %2032 = vmatprep.subr.bf16.mxu0 0
      %2033 = vmatpush1.bf16.msra.mxu0 0
      %2034 = vmatprep.subr.bf16.mxu0 0
      %2035 = vmatpush1.bf16.msra.mxu0 0
      %2036 = vmatprep.mubr.bf16.mxu0 0
      %2037 = vmatmul.mubr.bf16.gmra.mrb[0].mxu0 %v955
      %v2038 = vpop.f32.mrb[0].mxu0
      %v2039 = vadd.f32 0.0, %v2038
      %v2040 = vpop.f32.mrb[0].mxu0
      %v2041 = vpop.f32.mrb[0].mxu0
      %v2042 = vadd.f32 0.0, %v2041
      %v2043 = vpop.f32.mrb[0].mxu0
      %2044 = vmatprep.mubr.bf16.mxu0 0
      %2045 = vmatmul.mubr.bf16.gmra.mrb[0].mxu0 %v956
      %v2046 = vpop.f32.mrb[0].mxu0
      %v2047 = vadd.f32 0.0, %v2046
      %v2048 = vpop.f32.mrb[0].mxu0
      %v2049 = vpop.f32.mrb[0].mxu0
      %v2050 = vadd.f32 0.0, %v2049
      %v2051 = vpop.f32.mrb[0].mxu0
      %2052 = vmatprep.mubr.bf16.mxu0 0
      %2053 = vmatmul.mubr.bf16.gmra.mrb[0].mxu0 %v957
      %v2054 = vpop.f32.mrb[0].mxu0
      %v2055 = vadd.f32 0.0, %v2054
      %v2056 = vpop.f32.mrb[0].mxu0
      %v2057 = vpop.f32.mrb[0].mxu0
      %v2058 = vadd.f32 0.0, %v2057
      %v2059 = vpop.f32.mrb[0].mxu0
      %2060 = vmatprep.mubr.bf16.mxu0 0
      %2061 = vmatmul.mubr.bf16.gmra.mrb[0].mxu0 %v958
      %v2062 = vpop.f32.mrb[0].mxu0
      %v2063 = vadd.f32 0.0, %v2062
      %v2064 = vpop.f32.mrb[0].mxu0
      %v2065 = vpop.f32.mrb[0].mxu0
      %v2066 = vadd.f32 0.0, %v2065
      %v2067 = vpop.f32.mrb[0].mxu0
      %2068 = vmatprep.mubr.bf16.mxu0 0
      %2069 = vmatmul.mubr.bf16.gmra.mrb[0].mxu0 %v959
      %v2070 = vpop.f32.mrb[0].mxu0
      %v2071 = vadd.f32 0.0, %v2070
      %v2072 = vpop.f32.mrb[0].mxu0
      %v2073 = vpop.f32.mrb[0].mxu0
      %v2074 = vadd.f32 0.0, %v2073
      %v2075 = vpop.f32.mrb[0].mxu0
      %2076 = vmatprep.mubr.bf16.mxu0 0
      %2077 = vmatmul.mubr.bf16.gmra.mrb[0].mxu0 %v960
      %v2078 = vpop.f32.mrb[0].mxu0
      %v2079 = vadd.f32 0.0, %v2078
      %v2080 = vpop.f32.mrb[0].mxu0
      %v2081 = vpop.f32.mrb[0].mxu0
      %v2082 = vadd.f32 0.0, %v2081
      %v2083 = vpop.f32.mrb[0].mxu0
      %2084 = vmatprep.mubr.bf16.mxu0 0
      %2085 = vmatmul.mubr.bf16.gmra.mrb[0].mxu0 %v961
      %v2086 = vpop.f32.mrb[0].mxu0
      %v2087 = vadd.f32 0.0, %v2086
      %v2088 = vpop.f32.mrb[0].mxu0
      %v2089 = vpop.f32.mrb[0].mxu0
      %v2090 = vadd.f32 0.0, %v2089
      %v2091 = vpop.f32.mrb[0].mxu0
      %2092 = vmatprep.mubr.bf16.mxu0 0
      %2093 = vmatmul.mubr.bf16.gmra.mrb[0].mxu0 %v962
      %v2094 = vpop.f32.mrb[0].mxu0
      %v2095 = vadd.f32 0.0, %v2094
      %v2096 = vpop.f32.mrb[0].mxu0
      %v2097 = vpop.f32.mrb[0].mxu0
      %v2098 = vadd.f32 0.0, %v2097
      %v2099 = vpop.f32.mrb[0].mxu0
      %2100 = vmatprep.mubr.bf16.mxu0 0
      %2101 = vmatmul.mubr.bf16.gmra.mrb[0].mxu0 %v963
      %v2102 = vpop.f32.mrb[0].mxu0
      %v2103 = vadd.f32 0.0, %v2102
      %v2104 = vpop.f32.mrb[0].mxu0
      %v2105 = vpop.f32.mrb[0].mxu0
      %v2106 = vadd.f32 0.0, %v2105
      %v2107 = vpop.f32.mrb[0].mxu0
      %2108 = vmatprep.mubr.bf16.mxu0 0
      %2109 = vmatmul.mubr.bf16.gmra.mrb[0].mxu0 %v964
      %v2110 = vpop.f32.mrb[0].mxu0
      %v2111 = vadd.f32 0.0, %v2110
      %v2112 = vpop.f32.mrb[0].mxu0
      %v2113 = vpop.f32.mrb[0].mxu0
      %v2114 = vadd.f32 0.0, %v2113
      %v2115 = vpop.f32.mrb[0].mxu0
      %2116 = vmatprep.mubr.bf16.mxu0 0
      %2117 = vmatmul.mubr.bf16.gmra.mrb[0].mxu0 %v965
      %v2118 = vpop.f32.mrb[0].mxu0
      %v2119 = vadd.f32 0.0, %v2118
      %v2120 = vpop.f32.mrb[0].mxu0
      %v2121 = vpop.f32.mrb[0].mxu0
      %v2122 = vadd.f32 0.0, %v2121
      %v2123 = vpop.f32.mrb[0].mxu0
      %2124 = vmatprep.mubr.bf16.mxu0 0
      %2125 = vmatmul.mubr.bf16.gmra.mrb[0].mxu0 %v966
      %v2126 = vpop.f32.mrb[0].mxu0
      %v2127 = vadd.f32 0.0, %v2126
      %v2128 = vpop.f32.mrb[0].mxu0
      %v2129 = vpop.f32.mrb[0].mxu0
      %v2130 = vadd.f32 0.0, %v2129
      %v2131 = vpop.f32.mrb[0].mxu0
      %2132 = vmatprep.mubr.bf16.mxu0 0
      %2133 = vmatmul.mubr.bf16.gmra.mrb[0].mxu0 %v967
      %v2134 = vpop.f32.mrb[0].mxu0
      %v2135 = vadd.f32 0.0, %v2134
      %v2136 = vpop.f32.mrb[0].mxu0
      %v2137 = vpop.f32.mrb[0].mxu0
      %v2138 = vadd.f32 0.0, %v2137
      %v2139 = vpop.f32.mrb[0].mxu0
      %2140 = vmatprep.mubr.bf16.mxu0 0
      %2141 = vmatmul.mubr.bf16.gmra.mrb[0].mxu0 %v968
      %v2142 = vpop.f32.mrb[0].mxu0
      %v2143 = vadd.f32 0.0, %v2142
      %v2144 = vpop.f32.mrb[0].mxu0
      %v2145 = vpop.f32.mrb[0].mxu0
      %v2146 = vadd.f32 0.0, %v2145
      %v2147 = vpop.f32.mrb[0].mxu0
      %2148 = vmatprep.mubr.bf16.mxu0 0
      %2149 = vmatmul.mubr.bf16.gmra.mrb[0].mxu0 %v969
      %v2150 = vpop.f32.mrb[0].mxu0
      %v2151 = vadd.f32 0.0, %v2150
      %v2152 = vpop.f32.mrb[0].mxu0
      %v2153 = vpop.f32.mrb[0].mxu0
      %v2154 = vadd.f32 0.0, %v2153
      %v2155 = vpop.f32.mrb[0].mxu0
      %2156 = vmatprep.mubr.bf16.mxu0 0
      %2157 = vmatmul.mubr.bf16.gmra.mrb[0].mxu0 %v1938
      %v2158 = vpop.f32.mrb[0].mxu0
      %v2159 = vadd.f32 0.0, %v2158
      %v2160 = vpop.f32.mrb[0].mxu0
      %v2161 = vpop.f32.mrb[0].mxu0
      %v2162 = vadd.f32 0.0, %v2161
      %v2163 = vpop.f32.mrb[0].mxu0
      %2164 = vdwg.mxu0
      %v2165 = vadd.f32 %v1906, %v2039
      %v2166 = vadd.f32 %v1907, %v2042
      %v2167 = vadd.f32 %v1908, %v2047
      %v2168 = vadd.f32 %v1909, %v2050
      %v2169 = vadd.f32 %v1910, %v2055
      %v2170 = vadd.f32 %v1911, %v2058
      %v2171 = vadd.f32 %v1912, %v2063
      %v2172 = vadd.f32 %v1913, %v2066
      %v2173 = vadd.f32 %v1914, %v2071
      %v2174 = vadd.f32 %v1915, %v2074
      %v2175 = vadd.f32 %v1916, %v2079
      %v2176 = vadd.f32 %v1917, %v2082
      %v2177 = vadd.f32 %v1918, %v2087
      %v2178 = vadd.f32 %v1919, %v2090
      %v2179 = vadd.f32 %v1920, %v2095
      %v2180 = vadd.f32 %v1921, %v2098
      %v2181 = vadd.f32 %v1922, %v2103
      %v2182 = vadd.f32 %v1923, %v2106
      %v2183 = vadd.f32 %v1924, %v2111
      %v2184 = vadd.f32 %v1925, %v2114
      %v2185 = vadd.f32 %v1926, %v2119
      %v2186 = vadd.f32 %v1927, %v2122
      %v2187 = vadd.f32 %v1928, %v2127
      %v2188 = vadd.f32 %v1929, %v2130
      %v2189 = vadd.f32 %v1930, %v2135
      %v2190 = vadd.f32 %v1931, %v2138
      %v2191 = vadd.f32 %v1932, %v2143
      %v2192 = vadd.f32 %v1933, %v2146
      %v2193 = vadd.f32 %v1934, %v2151
      %v2194 = vadd.f32 %v1935, %v2154
      %v2195 = vadd.f32 %v1936, %v2159
      %v2196 = vadd.f32 %v1937, %v2162
      %v2197 = vpack.c.bf16 %v920, %v864
      %s2198 = scalar_lea.vmem %s3, 320
      %v2199 = vld [vmem:[%s2198] sm:$0xf]
      %v2200 = vld [vmem:[%s2198 + $0x4] sm:$0xf]
      %v2201 = vld [vmem:[%s2198 + $0x8] sm:$0xf]
      %v2202 = vld [vmem:[%s2198 + $0xc] sm:$0xf]
      %v2203 = vld [vmem:[%s2198 + $0x10] sm:$0xf]
      %v2204 = vld [vmem:[%s2198 + $0x14] sm:$0xf]
      %v2205 = vld [vmem:[%s2198 + $0x18] sm:$0xf]
      %v2206 = vld [vmem:[%s2198 + $0x1c] sm:$0xf]
      %v2207 = vld [vmem:[%s2198 + $0x20] sm:$0xf]
      %v2208 = vld [vmem:[%s2198 + $0x24] sm:$0xf]
      %v2209 = vld [vmem:[%s2198 + $0x28] sm:$0xf]
      %v2210 = vld [vmem:[%s2198 + $0x2c] sm:$0xf]
      %v2211 = vld [vmem:[%s2198 + $0x30] sm:$0xf]
      %v2212 = vld [vmem:[%s2198 + $0x34] sm:$0xf]
      %v2213 = vld [vmem:[%s2198 + $0x38] sm:$0xf]
      %v2214 = vld [vmem:[%s2198 + $0x3c] sm:$0xf]
      %v2231 = vunpack.c.l.b16 %v2199
      %v2232 = vunpack.c.l.b16 %v2200
      %v2233 = vunpack.c.l.b16 %v2201
      %v2234 = vunpack.c.l.b16 %v2202
      %v2235 = vunpack.c.l.b16 %v2203
      %v2236 = vunpack.c.l.b16 %v2204
      %v2237 = vunpack.c.l.b16 %v2205
      %v2238 = vunpack.c.l.b16 %v2206
      %v2239 = vunpack.c.l.b16 %v2207
      %v2240 = vunpack.c.l.b16 %v2208
      %v2241 = vunpack.c.l.b16 %v2209
      %v2242 = vunpack.c.l.b16 %v2210
      %v2243 = vunpack.c.l.b16 %v2211
      %v2244 = vunpack.c.l.b16 %v2212
      %v2245 = vunpack.c.l.b16 %v2213
      %v2246 = vunpack.c.l.b16 %v2214
      %v2247 = vpack.c.b16 %v2232, %v2231
      %v2248 = vpack.c.b16 %v2234, %v2233
      %v2249 = vpack.c.b16 %v2236, %v2235
      %v2250 = vpack.c.b16 %v2238, %v2237
      %v2251 = vpack.c.b16 %v2240, %v2239
      %v2252 = vpack.c.b16 %v2242, %v2241
      %v2253 = vpack.c.b16 %v2244, %v2243
      %v2254 = vpack.c.b16 %v2246, %v2245
      %2263 = vmatprep.subr.bf16.mxu0 0
      %2264 = vmatpush1.bf16.msra.mxu0 %v2247
      %2265 = vmatprep.subr.bf16.mxu0 0
      %2266 = vmatpush1.bf16.msra.mxu0 %v2248
      %2267 = vmatprep.subr.bf16.mxu0 0
      %2268 = vmatpush1.bf16.msra.mxu0 %v2249
      %2269 = vmatprep.subr.bf16.mxu0 0
      %2270 = vmatpush1.bf16.msra.mxu0 %v2250
      %2271 = vmatprep.subr.bf16.mxu0 0
      %2272 = vmatpush1.bf16.msra.mxu0 %v2251
      %2273 = vmatprep.subr.bf16.mxu0 0
      %2274 = vmatpush1.bf16.msra.mxu0 %v2252
      %2275 = vmatprep.subr.bf16.mxu0 0
      %2276 = vmatpush1.bf16.msra.mxu0 %v2253
      %2277 = vmatprep.subr.bf16.mxu0 0
      %2278 = vmatpush1.bf16.msra.mxu0 %v2254
      %2279 = vmatprep.subr.bf16.mxu0 0
      %2280 = vmatpush1.bf16.msra.mxu0 0
      %2281 = vmatprep.subr.bf16.mxu0 0
      %2282 = vmatpush1.bf16.msra.mxu0 0
      %2283 = vmatprep.subr.bf16.mxu0 0
      %2284 = vmatpush1.bf16.msra.mxu0 0
      %2285 = vmatprep.subr.bf16.mxu0 0
      %2286 = vmatpush1.bf16.msra.mxu0 0
      %2287 = vmatprep.subr.bf16.mxu0 0
      %2288 = vmatpush1.bf16.msra.mxu0 0
      %2289 = vmatprep.subr.bf16.mxu0 0
      %2290 = vmatpush1.bf16.msra.mxu0 0
      %2291 = vmatprep.subr.bf16.mxu0 0
      %2292 = vmatpush1.bf16.msra.mxu0 0
      %2293 = vmatprep.subr.bf16.mxu0 0
      %2294 = vmatpush1.bf16.msra.mxu0 0
      %2295 = vmatprep.mubr.bf16.mxu0 0
      %2296 = vmatmul.mubr.bf16.gmra.mrb[0].mxu0 %v1406
      %v2297 = vpop.f32.mrb[0].mxu0
      %v2298 = vadd.f32 0.0, %v2297
      %v2299 = vpop.f32.mrb[0].mxu0
      %v2300 = vpop.f32.mrb[0].mxu0
      %v2301 = vadd.f32 0.0, %v2300
      %v2302 = vpop.f32.mrb[0].mxu0
      %2303 = vmatprep.mubr.bf16.mxu0 0
      %2304 = vmatmul.mubr.bf16.gmra.mrb[0].mxu0 %v1407
      %v2305 = vpop.f32.mrb[0].mxu0
      %v2306 = vadd.f32 0.0, %v2305
      %v2307 = vpop.f32.mrb[0].mxu0
      %v2308 = vpop.f32.mrb[0].mxu0
      %v2309 = vadd.f32 0.0, %v2308
      %v2310 = vpop.f32.mrb[0].mxu0
      %2311 = vmatprep.mubr.bf16.mxu0 0
      %2312 = vmatmul.mubr.bf16.gmra.mrb[0].mxu0 %v1408
      %v2313 = vpop.f32.mrb[0].mxu0
      %v2314 = vadd.f32 0.0, %v2313
      %v2315 = vpop.f32.mrb[0].mxu0
      %v2316 = vpop.f32.mrb[0].mxu0
      %v2317 = vadd.f32 0.0, %v2316
      %v2318 = vpop.f32.mrb[0].mxu0
      %2319 = vmatprep.mubr.bf16.mxu0 0
      %2320 = vmatmul.mubr.bf16.gmra.mrb[0].mxu0 %v1409
      %v2321 = vpop.f32.mrb[0].mxu0
      %v2322 = vadd.f32 0.0, %v2321
      %v2323 = vpop.f32.mrb[0].mxu0
      %v2324 = vpop.f32.mrb[0].mxu0
      %v2325 = vadd.f32 0.0, %v2324
      %v2326 = vpop.f32.mrb[0].mxu0
      %2327 = vmatprep.mubr.bf16.mxu0 0
      %2328 = vmatmul.mubr.bf16.gmra.mrb[0].mxu0 %v1410
      %v2329 = vpop.f32.mrb[0].mxu0
      %v2330 = vadd.f32 0.0, %v2329
      %v2331 = vpop.f32.mrb[0].mxu0
      %v2332 = vpop.f32.mrb[0].mxu0
      %v2333 = vadd.f32 0.0, %v2332
      %v2334 = vpop.f32.mrb[0].mxu0
      %2335 = vmatprep.mubr.bf16.mxu0 0
      %2336 = vmatmul.mubr.bf16.gmra.mrb[0].mxu0 %v1411
      %v2337 = vpop.f32.mrb[0].mxu0
      %v2338 = vadd.f32 0.0, %v2337
      %v2339 = vpop.f32.mrb[0].mxu0
      %v2340 = vpop.f32.mrb[0].mxu0
      %v2341 = vadd.f32 0.0, %v2340
      %v2342 = vpop.f32.mrb[0].mxu0
      %2343 = vmatprep.mubr.bf16.mxu0 0
      %2344 = vmatmul.mubr.bf16.gmra.mrb[0].mxu0 %v1412
      %v2345 = vpop.f32.mrb[0].mxu0
      %v2346 = vadd.f32 0.0, %v2345
      %v2347 = vpop.f32.mrb[0].mxu0
      %v2348 = vpop.f32.mrb[0].mxu0
      %v2349 = vadd.f32 0.0, %v2348
      %v2350 = vpop.f32.mrb[0].mxu0
      %2351 = vmatprep.mubr.bf16.mxu0 0
      %2352 = vmatmul.mubr.bf16.gmra.mrb[0].mxu0 %v1413
      %v2353 = vpop.f32.mrb[0].mxu0
      %v2354 = vadd.f32 0.0, %v2353
      %v2355 = vpop.f32.mrb[0].mxu0
      %v2356 = vpop.f32.mrb[0].mxu0
      %v2357 = vadd.f32 0.0, %v2356
      %v2358 = vpop.f32.mrb[0].mxu0
      %2359 = vmatprep.mubr.bf16.mxu0 0
      %2360 = vmatmul.mubr.bf16.gmra.mrb[0].mxu0 %v1414
      %v2361 = vpop.f32.mrb[0].mxu0
      %v2362 = vadd.f32 0.0, %v2361
      %v2363 = vpop.f32.mrb[0].mxu0
      %v2364 = vpop.f32.mrb[0].mxu0
      %v2365 = vadd.f32 0.0, %v2364
      %v2366 = vpop.f32.mrb[0].mxu0
      %2367 = vmatprep.mubr.bf16.mxu0 0
      %2368 = vmatmul.mubr.bf16.gmra.mrb[0].mxu0 %v1415
      %v2369 = vpop.f32.mrb[0].mxu0
      %v2370 = vadd.f32 0.0, %v2369
      %v2371 = vpop.f32.mrb[0].mxu0
      %v2372 = vpop.f32.mrb[0].mxu0
      %v2373 = vadd.f32 0.0, %v2372
      %v2374 = vpop.f32.mrb[0].mxu0
      %2375 = vmatprep.mubr.bf16.mxu0 0
      %2376 = vmatmul.mubr.bf16.gmra.mrb[0].mxu0 %v1416
      %v2377 = vpop.f32.mrb[0].mxu0
      %v2378 = vadd.f32 0.0, %v2377
      %v2379 = vpop.f32.mrb[0].mxu0
      %v2380 = vpop.f32.mrb[0].mxu0
      %v2381 = vadd.f32 0.0, %v2380
      %v2382 = vpop.f32.mrb[0].mxu0
      %2383 = vmatprep.mubr.bf16.mxu0 0
      %2384 = vmatmul.mubr.bf16.gmra.mrb[0].mxu0 %v1417
      %v2385 = vpop.f32.mrb[0].mxu0
      %v2386 = vadd.f32 0.0, %v2385
      %v2387 = vpop.f32.mrb[0].mxu0
      %v2388 = vpop.f32.mrb[0].mxu0
      %v2389 = vadd.f32 0.0, %v2388
      %v2390 = vpop.f32.mrb[0].mxu0
      %2391 = vmatprep.mubr.bf16.mxu0 0
      %2392 = vmatmul.mubr.bf16.gmra.mrb[0].mxu0 %v1418
      %v2393 = vpop.f32.mrb[0].mxu0
      %v2394 = vadd.f32 0.0, %v2393
      %v2395 = vpop.f32.mrb[0].mxu0
      %v2396 = vpop.f32.mrb[0].mxu0
      %v2397 = vadd.f32 0.0, %v2396
      %v2398 = vpop.f32.mrb[0].mxu0
      %2399 = vmatprep.mubr.bf16.mxu0 0
      %2400 = vmatmul.mubr.bf16.gmra.mrb[0].mxu0 %v1419
      %v2401 = vpop.f32.mrb[0].mxu0
      %v2402 = vadd.f32 0.0, %v2401
      %v2403 = vpop.f32.mrb[0].mxu0
      %v2404 = vpop.f32.mrb[0].mxu0
      %v2405 = vadd.f32 0.0, %v2404
      %v2406 = vpop.f32.mrb[0].mxu0
      %2407 = vmatprep.mubr.bf16.mxu0 0
      %2408 = vmatmul.mubr.bf16.gmra.mrb[0].mxu0 %v1420
      %v2409 = vpop.f32.mrb[0].mxu0
      %v2410 = vadd.f32 0.0, %v2409
      %v2411 = vpop.f32.mrb[0].mxu0
      %v2412 = vpop.f32.mrb[0].mxu0
      %v2413 = vadd.f32 0.0, %v2412
      %v2414 = vpop.f32.mrb[0].mxu0
      %2415 = vmatprep.mubr.bf16.mxu0 0
      %2416 = vmatmul.mubr.bf16.gmra.mrb[0].mxu0 %v2197
      %v2417 = vpop.f32.mrb[0].mxu0
      %v2418 = vadd.f32 0.0, %v2417
      %v2419 = vpop.f32.mrb[0].mxu0
      %v2420 = vpop.f32.mrb[0].mxu0
      %v2421 = vadd.f32 0.0, %v2420
      %v2422 = vpop.f32.mrb[0].mxu0
      %2423 = vdwg.mxu0
      %v2424 = vadd.f32 %v2165, %v2298
      %v2425 = vadd.f32 %v2166, %v2301
      %v2426 = vadd.f32 %v2167, %v2306
      %v2427 = vadd.f32 %v2168, %v2309
      %v2428 = vadd.f32 %v2169, %v2314
      %v2429 = vadd.f32 %v2170, %v2317
      %v2430 = vadd.f32 %v2171, %v2322
      %v2431 = vadd.f32 %v2172, %v2325
      %v2432 = vadd.f32 %v2173, %v2330
      %v2433 = vadd.f32 %v2174, %v2333
      %v2434 = vadd.f32 %v2175, %v2338
      %v2435 = vadd.f32 %v2176, %v2341
      %v2436 = vadd.f32 %v2177, %v2346
      %v2437 = vadd.f32 %v2178, %v2349
      %v2438 = vadd.f32 %v2179, %v2354
      %v2439 = vadd.f32 %v2180, %v2357
      %v2440 = vadd.f32 %v2181, %v2362
      %v2441 = vadd.f32 %v2182, %v2365
      %v2442 = vadd.f32 %v2183, %v2370
      %v2443 = vadd.f32 %v2184, %v2373
      %v2444 = vadd.f32 %v2185, %v2378
      %v2445 = vadd.f32 %v2186, %v2381
      %v2446 = vadd.f32 %v2187, %v2386
      %v2447 = vadd.f32 %v2188, %v2389
      %v2448 = vadd.f32 %v2189, %v2394
      %v2449 = vadd.f32 %v2190, %v2397
      %v2450 = vadd.f32 %v2191, %v2402
      %v2451 = vadd.f32 %v2192, %v2405
      %v2452 = vadd.f32 %v2193, %v2410
      %v2453 = vadd.f32 %v2194, %v2413
      %v2454 = vadd.f32 %v2195, %v2418
      %v2455 = vadd.f32 %v2196, %v2421
      %v2456 = vpack.c.bf16 %v758, %v812
      %s2457 = scalar_lea.vmem %s3, 384
      %v2458 = vld [vmem:[%s2457] sm:$0xf]
      %v2459 = vld [vmem:[%s2457 + $0x4] sm:$0xf]
      %v2460 = vld [vmem:[%s2457 + $0x8] sm:$0xf]
      %v2461 = vld [vmem:[%s2457 + $0xc] sm:$0xf]
      %v2462 = vld [vmem:[%s2457 + $0x10] sm:$0xf]
      %v2463 = vld [vmem:[%s2457 + $0x14] sm:$0xf]
      %v2464 = vld [vmem:[%s2457 + $0x18] sm:$0xf]
      %v2465 = vld [vmem:[%s2457 + $0x1c] sm:$0xf]
      %v2466 = vld [vmem:[%s2457 + $0x20] sm:$0xf]
      %v2467 = vld [vmem:[%s2457 + $0x24] sm:$0xf]
      %v2468 = vld [vmem:[%s2457 + $0x28] sm:$0xf]
      %v2469 = vld [vmem:[%s2457 + $0x2c] sm:$0xf]
      %v2470 = vld [vmem:[%s2457 + $0x30] sm:$0xf]
      %v2471 = vld [vmem:[%s2457 + $0x34] sm:$0xf]
      %v2472 = vld [vmem:[%s2457 + $0x38] sm:$0xf]
      %v2473 = vld [vmem:[%s2457 + $0x3c] sm:$0xf]
      %v2490 = vunpack.c.l.b16 %v2458
      %v2491 = vunpack.c.l.b16 %v2459
      %v2492 = vunpack.c.l.b16 %v2460
      %v2493 = vunpack.c.l.b16 %v2461
      %v2494 = vunpack.c.l.b16 %v2462
      %v2495 = vunpack.c.l.b16 %v2463
      %v2496 = vunpack.c.l.b16 %v2464
      %v2497 = vunpack.c.l.b16 %v2465
      %v2498 = vunpack.c.l.b16 %v2466
      %v2499 = vunpack.c.l.b16 %v2467
      %v2500 = vunpack.c.l.b16 %v2468
      %v2501 = vunpack.c.l.b16 %v2469
      %v2502 = vunpack.c.l.b16 %v2470
      %v2503 = vunpack.c.l.b16 %v2471
      %v2504 = vunpack.c.l.b16 %v2472
      %v2505 = vunpack.c.l.b16 %v2473
      %v2506 = vpack.c.b16 %v2491, %v2490
      %v2507 = vpack.c.b16 %v2493, %v2492
      %v2508 = vpack.c.b16 %v2495, %v2494
      %v2509 = vpack.c.b16 %v2497, %v2496
      %v2510 = vpack.c.b16 %v2499, %v2498
      %v2511 = vpack.c.b16 %v2501, %v2500
      %v2512 = vpack.c.b16 %v2503, %v2502
      %v2513 = vpack.c.b16 %v2505, %v2504
      %2522 = vmatprep.subr.bf16.mxu0 0
      %2523 = vmatpush1.bf16.msra.mxu0 %v2506
      %2524 = vmatprep.subr.bf16.mxu0 0
      %2525 = vmatpush1.bf16.msra.mxu0 %v2507
      %2526 = vmatprep.subr.bf16.mxu0 0
      %2527 = vmatpush1.bf16.msra.mxu0 %v2508
      %2528 = vmatprep.subr.bf16.mxu0 0
      %2529 = vmatpush1.bf16.msra.mxu0 %v2509
      %2530 = vmatprep.subr.bf16.mxu0 0
      %2531 = vmatpush1.bf16.msra.mxu0 %v2510
      %2532 = vmatprep.subr.bf16.mxu0 0
      %2533 = vmatpush1.bf16.msra.mxu0 %v2511
      %2534 = vmatprep.subr.bf16.mxu0 0
      %2535 = vmatpush1.bf16.msra.mxu0 %v2512
      %2536 = vmatprep.subr.bf16.mxu0 0
      %2537 = vmatpush1.bf16.msra.mxu0 %v2513
      %2538 = vmatprep.subr.bf16.mxu0 0
      %2539 = vmatpush1.bf16.msra.mxu0 0
      %2540 = vmatprep.subr.bf16.mxu0 0
      %2541 = vmatpush1.bf16.msra.mxu0 0
      %2542 = vmatprep.subr.bf16.mxu0 0
      %2543 = vmatpush1.bf16.msra.mxu0 0
      %2544 = vmatprep.subr.bf16.mxu0 0
      %2545 = vmatpush1.bf16.msra.mxu0 0
      %2546 = vmatprep.subr.bf16.mxu0 0
      %2547 = vmatpush1.bf16.msra.mxu0 0
      %2548 = vmatprep.subr.bf16.mxu0 0
      %2549 = vmatpush1.bf16.msra.mxu0 0
      %2550 = vmatprep.subr.bf16.mxu0 0
      %2551 = vmatpush1.bf16.msra.mxu0 0
      %2552 = vmatprep.subr.bf16.mxu0 0
      %2553 = vmatpush1.bf16.msra.mxu0 0
      %2554 = vmatprep.mubr.bf16.mxu0 0
      %2555 = vmatmul.mubr.bf16.gmra.mrb[0].mxu0 %v924
      %v2556 = vpop.f32.mrb[0].mxu0
      %v2557 = vadd.f32 0.0, %v2556
      %v2558 = vpop.f32.mrb[0].mxu0
      %v2559 = vpop.f32.mrb[0].mxu0
      %v2560 = vadd.f32 0.0, %v2559
      %v2561 = vpop.f32.mrb[0].mxu0
      %2562 = vmatprep.mubr.bf16.mxu0 0
      %2563 = vmatmul.mubr.bf16.gmra.mrb[0].mxu0 %v925
      %v2564 = vpop.f32.mrb[0].mxu0
      %v2565 = vadd.f32 0.0, %v2564
      %v2566 = vpop.f32.mrb[0].mxu0
      %v2567 = vpop.f32.mrb[0].mxu0
      %v2568 = vadd.f32 0.0, %v2567
      %v2569 = vpop.f32.mrb[0].mxu0
      %2570 = vmatprep.mubr.bf16.mxu0 0
      %2571 = vmatmul.mubr.bf16.gmra.mrb[0].mxu0 %v926
      %v2572 = vpop.f32.mrb[0].mxu0
      %v2573 = vadd.f32 0.0, %v2572
      %v2574 = vpop.f32.mrb[0].mxu0
      %v2575 = vpop.f32.mrb[0].mxu0
      %v2576 = vadd.f32 0.0, %v2575
      %v2577 = vpop.f32.mrb[0].mxu0
      %2578 = vmatprep.mubr.bf16.mxu0 0
      %2579 = vmatmul.mubr.bf16.gmra.mrb[0].mxu0 %v927
      %v2580 = vpop.f32.mrb[0].mxu0
      %v2581 = vadd.f32 0.0, %v2580
      %v2582 = vpop.f32.mrb[0].mxu0
      %v2583 = vpop.f32.mrb[0].mxu0
      %v2584 = vadd.f32 0.0, %v2583
      %v2585 = vpop.f32.mrb[0].mxu0
      %2586 = vmatprep.mubr.bf16.mxu0 0
      %2587 = vmatmul.mubr.bf16.gmra.mrb[0].mxu0 %v928
      %v2588 = vpop.f32.mrb[0].mxu0
      %v2589 = vadd.f32 0.0, %v2588
      %v2590 = vpop.f32.mrb[0].mxu0
      %v2591 = vpop.f32.mrb[0].mxu0
      %v2592 = vadd.f32 0.0, %v2591
      %v2593 = vpop.f32.mrb[0].mxu0
      %2594 = vmatprep.mubr.bf16.mxu0 0
      %2595 = vmatmul.mubr.bf16.gmra.mrb[0].mxu0 %v929
      %v2596 = vpop.f32.mrb[0].mxu0
      %v2597 = vadd.f32 0.0, %v2596
      %v2598 = vpop.f32.mrb[0].mxu0
      %v2599 = vpop.f32.mrb[0].mxu0
      %v2600 = vadd.f32 0.0, %v2599
      %v2601 = vpop.f32.mrb[0].mxu0
      %2602 = vmatprep.mubr.bf16.mxu0 0
      %2603 = vmatmul.mubr.bf16.gmra.mrb[0].mxu0 %v930
      %v2604 = vpop.f32.mrb[0].mxu0
      %v2605 = vadd.f32 0.0, %v2604
      %v2606 = vpop.f32.mrb[0].mxu0
      %v2607 = vpop.f32.mrb[0].mxu0
      %v2608 = vadd.f32 0.0, %v2607
      %v2609 = vpop.f32.mrb[0].mxu0
      %2610 = vmatprep.mubr.bf16.mxu0 0
      %2611 = vmatmul.mubr.bf16.gmra.mrb[0].mxu0 %v931
      %v2612 = vpop.f32.mrb[0].mxu0
      %v2613 = vadd.f32 0.0, %v2612
      %v2614 = vpop.f32.mrb[0].mxu0
      %v2615 = vpop.f32.mrb[0].mxu0
      %v2616 = vadd.f32 0.0, %v2615
      %v2617 = vpop.f32.mrb[0].mxu0
      %2618 = vmatprep.mubr.bf16.mxu0 0
      %2619 = vmatmul.mubr.bf16.gmra.mrb[0].mxu0 %v932
      %v2620 = vpop.f32.mrb[0].mxu0
      %v2621 = vadd.f32 0.0, %v2620
      %v2622 = vpop.f32.mrb[0].mxu0
      %v2623 = vpop.f32.mrb[0].mxu0
      %v2624 = vadd.f32 0.0, %v2623
      %v2625 = vpop.f32.mrb[0].mxu0
      %2626 = vmatprep.mubr.bf16.mxu0 0
      %2627 = vmatmul.mubr.bf16.gmra.mrb[0].mxu0 %v933
      %v2628 = vpop.f32.mrb[0].mxu0
      %v2629 = vadd.f32 0.0, %v2628
      %v2630 = vpop.f32.mrb[0].mxu0
      %v2631 = vpop.f32.mrb[0].mxu0
      %v2632 = vadd.f32 0.0, %v2631
      %v2633 = vpop.f32.mrb[0].mxu0
      %2634 = vmatprep.mubr.bf16.mxu0 0
      %2635 = vmatmul.mubr.bf16.gmra.mrb[0].mxu0 %v934
      %v2636 = vpop.f32.mrb[0].mxu0
      %v2637 = vadd.f32 0.0, %v2636
      %v2638 = vpop.f32.mrb[0].mxu0
      %v2639 = vpop.f32.mrb[0].mxu0
      %v2640 = vadd.f32 0.0, %v2639
      %v2641 = vpop.f32.mrb[0].mxu0
      %2642 = vmatprep.mubr.bf16.mxu0 0
      %2643 = vmatmul.mubr.bf16.gmra.mrb[0].mxu0 %v935
      %v2644 = vpop.f32.mrb[0].mxu0
      %v2645 = vadd.f32 0.0, %v2644
      %v2646 = vpop.f32.mrb[0].mxu0
      %v2647 = vpop.f32.mrb[0].mxu0
      %v2648 = vadd.f32 0.0, %v2647
      %v2649 = vpop.f32.mrb[0].mxu0
      %2650 = vmatprep.mubr.bf16.mxu0 0
      %2651 = vmatmul.mubr.bf16.gmra.mrb[0].mxu0 %v936
      %v2652 = vpop.f32.mrb[0].mxu0
      %v2653 = vadd.f32 0.0, %v2652
      %v2654 = vpop.f32.mrb[0].mxu0
      %v2655 = vpop.f32.mrb[0].mxu0
      %v2656 = vadd.f32 0.0, %v2655
      %v2657 = vpop.f32.mrb[0].mxu0
      %2658 = vmatprep.mubr.bf16.mxu0 0
      %2659 = vmatmul.mubr.bf16.gmra.mrb[0].mxu0 %v937
      %v2660 = vpop.f32.mrb[0].mxu0
      %v2661 = vadd.f32 0.0, %v2660
      %v2662 = vpop.f32.mrb[0].mxu0
      %v2663 = vpop.f32.mrb[0].mxu0
      %v2664 = vadd.f32 0.0, %v2663
      %v2665 = vpop.f32.mrb[0].mxu0
      %2666 = vmatprep.mubr.bf16.mxu0 0
      %2667 = vmatmul.mubr.bf16.gmra.mrb[0].mxu0 %v1679
      %v2668 = vpop.f32.mrb[0].mxu0
      %v2669 = vadd.f32 0.0, %v2668
      %v2670 = vpop.f32.mrb[0].mxu0
      %v2671 = vpop.f32.mrb[0].mxu0
      %v2672 = vadd.f32 0.0, %v2671
      %v2673 = vpop.f32.mrb[0].mxu0
      %2674 = vmatprep.mubr.bf16.mxu0 0
      %2675 = vmatmul.mubr.bf16.gmra.mrb[0].mxu0 %v2456
      %v2676 = vpop.f32.mrb[0].mxu0
      %v2677 = vadd.f32 0.0, %v2676
      %v2678 = vpop.f32.mrb[0].mxu0
      %v2679 = vpop.f32.mrb[0].mxu0
      %v2680 = vadd.f32 0.0, %v2679
      %v2681 = vpop.f32.mrb[0].mxu0
      %2682 = vdwg.mxu0
      %v2683 = vadd.f32 %v2424, %v2557
      %v2684 = vadd.f32 %v2425, %v2560
      %v2685 = vadd.f32 %v2426, %v2565
      %v2686 = vadd.f32 %v2427, %v2568
      %v2687 = vadd.f32 %v2428, %v2573
      %v2688 = vadd.f32 %v2429, %v2576
      %v2689 = vadd.f32 %v2430, %v2581
      %v2690 = vadd.f32 %v2431, %v2584
      %v2691 = vadd.f32 %v2432, %v2589
      %v2692 = vadd.f32 %v2433, %v2592
      %v2693 = vadd.f32 %v2434, %v2597
      %v2694 = vadd.f32 %v2435, %v2600
      %v2695 = vadd.f32 %v2436, %v2605
      %v2696 = vadd.f32 %v2437, %v2608
      %v2697 = vadd.f32 %v2438, %v2613
      %v2698 = vadd.f32 %v2439, %v2616
      %v2699 = vadd.f32 %v2440, %v2621
      %v2700 = vadd.f32 %v2441, %v2624
      %v2701 = vadd.f32 %v2442, %v2629
      %v2702 = vadd.f32 %v2443, %v2632
      %v2703 = vadd.f32 %v2444, %v2637
      %v2704 = vadd.f32 %v2445, %v2640
      %v2705 = vadd.f32 %v2446, %v2645
      %v2706 = vadd.f32 %v2447, %v2648
      %v2707 = vadd.f32 %v2448, %v2653
      %v2708 = vadd.f32 %v2449, %v2656
      %v2709 = vadd.f32 %v2450, %v2661
      %v2710 = vadd.f32 %v2451, %v2664
      %v2711 = vadd.f32 %v2452, %v2669
      %v2712 = vadd.f32 %v2453, %v2672
      %v2713 = vadd.f32 %v2454, %v2677
      %v2714 = vadd.f32 %v2455, %v2680
      %v2715 = vpack.c.bf16 %v667, %v666
      %s2716 = scalar_lea.vmem %s3, 448
      %v2717 = vld [vmem:[%s2716] sm:$0xf]
      %v2718 = vld [vmem:[%s2716 + $0x4] sm:$0xf]
      %v2719 = vld [vmem:[%s2716 + $0x8] sm:$0xf]
      %v2720 = vld [vmem:[%s2716 + $0xc] sm:$0xf]
      %v2721 = vld [vmem:[%s2716 + $0x10] sm:$0xf]
      %v2722 = vld [vmem:[%s2716 + $0x14] sm:$0xf]
      %v2723 = vld [vmem:[%s2716 + $0x18] sm:$0xf]
      %v2724 = vld [vmem:[%s2716 + $0x1c] sm:$0xf]
      %v2725 = vld [vmem:[%s2716 + $0x20] sm:$0xf]
      %v2726 = vld [vmem:[%s2716 + $0x24] sm:$0xf]
      %v2727 = vld [vmem:[%s2716 + $0x28] sm:$0xf]
      %v2728 = vld [vmem:[%s2716 + $0x2c] sm:$0xf]
      %v2729 = vld [vmem:[%s2716 + $0x30] sm:$0xf]
      %v2730 = vld [vmem:[%s2716 + $0x34] sm:$0xf]
      %v2731 = vld [vmem:[%s2716 + $0x38] sm:$0xf]
      %v2732 = vld [vmem:[%s2716 + $0x3c] sm:$0xf]
      %v2749 = vunpack.c.l.b16 %v2717
      %v2750 = vunpack.c.l.b16 %v2718
      %v2751 = vunpack.c.l.b16 %v2719
      %v2752 = vunpack.c.l.b16 %v2720
      %v2753 = vunpack.c.l.b16 %v2721
      %v2754 = vunpack.c.l.b16 %v2722
      %v2755 = vunpack.c.l.b16 %v2723
      %v2756 = vunpack.c.l.b16 %v2724
      %v2757 = vunpack.c.l.b16 %v2725
      %v2758 = vunpack.c.l.b16 %v2726
      %v2759 = vunpack.c.l.b16 %v2727
      %v2760 = vunpack.c.l.b16 %v2728
      %v2761 = vunpack.c.l.b16 %v2729
      %v2762 = vunpack.c.l.b16 %v2730
      %v2763 = vunpack.c.l.b16 %v2731
      %v2764 = vunpack.c.l.b16 %v2732
      %v2765 = vpack.c.b16 %v2750, %v2749
      %v2766 = vpack.c.b16 %v2752, %v2751
      %v2767 = vpack.c.b16 %v2754, %v2753
      %v2768 = vpack.c.b16 %v2756, %v2755
      %v2769 = vpack.c.b16 %v2758, %v2757
      %v2770 = vpack.c.b16 %v2760, %v2759
      %v2771 = vpack.c.b16 %v2762, %v2761
      %v2772 = vpack.c.b16 %v2764, %v2763
      %2781 = vmatprep.subr.bf16.mxu0 0
      %2782 = vmatpush1.bf16.msra.mxu0 %v2765
      %2783 = vmatprep.subr.bf16.mxu0 0
      %2784 = vmatpush1.bf16.msra.mxu0 %v2766
      %2785 = vmatprep.subr.bf16.mxu0 0
      %2786 = vmatpush1.bf16.msra.mxu0 %v2767
      %2787 = vmatprep.subr.bf16.mxu0 0
      %2788 = vmatpush1.bf16.msra.mxu0 %v2768
      %2789 = vmatprep.subr.bf16.mxu0 0
      %2790 = vmatpush1.bf16.msra.mxu0 %v2769
      %2791 = vmatprep.subr.bf16.mxu0 0
      %2792 = vmatpush1.bf16.msra.mxu0 %v2770
      %2793 = vmatprep.subr.bf16.mxu0 0
      %2794 = vmatpush1.bf16.msra.mxu0 %v2771
      %2795 = vmatprep.subr.bf16.mxu0 0
      %2796 = vmatpush1.bf16.msra.mxu0 %v2772
      %2797 = vmatprep.subr.bf16.mxu0 0
      %2798 = vmatpush1.bf16.msra.mxu0 0
      %2799 = vmatprep.subr.bf16.mxu0 0
      %2800 = vmatpush1.bf16.msra.mxu0 0
      %2801 = vmatprep.subr.bf16.mxu0 0
      %2802 = vmatpush1.bf16.msra.mxu0 0
      %2803 = vmatprep.subr.bf16.mxu0 0
      %2804 = vmatpush1.bf16.msra.mxu0 0
      %2805 = vmatprep.subr.bf16.mxu0 0
      %2806 = vmatpush1.bf16.msra.mxu0 0
      %2807 = vmatprep.subr.bf16.mxu0 0
      %2808 = vmatpush1.bf16.msra.mxu0 0
      %2809 = vmatprep.subr.bf16.mxu0 0
      %2810 = vmatpush1.bf16.msra.mxu0 0
      %2811 = vmatprep.subr.bf16.mxu0 0
      %2812 = vmatpush1.bf16.msra.mxu0 0
      %2813 = vmatprep.mubr.bf16.mxu0 0
      %2814 = vmatmul.mubr.bf16.gmra.mrb[0].mxu0 %v956
      %v2815 = vpop.f32.mrb[0].mxu0
      %v2816 = vadd.f32 0.0, %v2815
      %v2817 = vpop.f32.mrb[0].mxu0
      %v2818 = vpop.f32.mrb[0].mxu0
      %v2819 = vadd.f32 0.0, %v2818
      %v2820 = vpop.f32.mrb[0].mxu0
      %2821 = vmatprep.mubr.bf16.mxu0 0
      %2822 = vmatmul.mubr.bf16.gmra.mrb[0].mxu0 %v957
      %v2823 = vpop.f32.mrb[0].mxu0
      %v2824 = vadd.f32 0.0, %v2823
      %v2825 = vpop.f32.mrb[0].mxu0
      %v2826 = vpop.f32.mrb[0].mxu0
      %v2827 = vadd.f32 0.0, %v2826
      %v2828 = vpop.f32.mrb[0].mxu0
      %2829 = vmatprep.mubr.bf16.mxu0 0
      %2830 = vmatmul.mubr.bf16.gmra.mrb[0].mxu0 %v958
      %v2831 = vpop.f32.mrb[0].mxu0
      %v2832 = vadd.f32 0.0, %v2831
      %v2833 = vpop.f32.mrb[0].mxu0
      %v2834 = vpop.f32.mrb[0].mxu0
      %v2835 = vadd.f32 0.0, %v2834
      %v2836 = vpop.f32.mrb[0].mxu0
      %2837 = vmatprep.mubr.bf16.mxu0 0
      %2838 = vmatmul.mubr.bf16.gmra.mrb[0].mxu0 %v959
      %v2839 = vpop.f32.mrb[0].mxu0
      %v2840 = vadd.f32 0.0, %v2839
      %v2841 = vpop.f32.mrb[0].mxu0
      %v2842 = vpop.f32.mrb[0].mxu0
      %v2843 = vadd.f32 0.0, %v2842
      %v2844 = vpop.f32.mrb[0].mxu0
      %2845 = vmatprep.mubr.bf16.mxu0 0
      %2846 = vmatmul.mubr.bf16.gmra.mrb[0].mxu0 %v960
      %v2847 = vpop.f32.mrb[0].mxu0
      %v2848 = vadd.f32 0.0, %v2847
      %v2849 = vpop.f32.mrb[0].mxu0
      %v2850 = vpop.f32.mrb[0].mxu0
      %v2851 = vadd.f32 0.0, %v2850
      %v2852 = vpop.f32.mrb[0].mxu0
      %2853 = vmatprep.mubr.bf16.mxu0 0
      %2854 = vmatmul.mubr.bf16.gmra.mrb[0].mxu0 %v961
      %v2855 = vpop.f32.mrb[0].mxu0
      %v2856 = vadd.f32 0.0, %v2855
      %v2857 = vpop.f32.mrb[0].mxu0
      %v2858 = vpop.f32.mrb[0].mxu0
      %v2859 = vadd.f32 0.0, %v2858
      %v2860 = vpop.f32.mrb[0].mxu0
      %2861 = vmatprep.mubr.bf16.mxu0 0
      %2862 = vmatmul.mubr.bf16.gmra.mrb[0].mxu0 %v962
      %v2863 = vpop.f32.mrb[0].mxu0
      %v2864 = vadd.f32 0.0, %v2863
      %v2865 = vpop.f32.mrb[0].mxu0
      %v2866 = vpop.f32.mrb[0].mxu0
      %v2867 = vadd.f32 0.0, %v2866
      %v2868 = vpop.f32.mrb[0].mxu0
      %2869 = vmatprep.mubr.bf16.mxu0 0
      %2870 = vmatmul.mubr.bf16.gmra.mrb[0].mxu0 %v963
      %v2871 = vpop.f32.mrb[0].mxu0
      %v2872 = vadd.f32 0.0, %v2871
      %v2873 = vpop.f32.mrb[0].mxu0
      %v2874 = vpop.f32.mrb[0].mxu0
      %v2875 = vadd.f32 0.0, %v2874
      %v2876 = vpop.f32.mrb[0].mxu0
      %2877 = vmatprep.mubr.bf16.mxu0 0
      %2878 = vmatmul.mubr.bf16.gmra.mrb[0].mxu0 %v964
      %v2879 = vpop.f32.mrb[0].mxu0
      %v2880 = vadd.f32 0.0, %v2879
      %v2881 = vpop.f32.mrb[0].mxu0
      %v2882 = vpop.f32.mrb[0].mxu0
      %v2883 = vadd.f32 0.0, %v2882
      %v2884 = vpop.f32.mrb[0].mxu0
      %2885 = vmatprep.mubr.bf16.mxu0 0
      %2886 = vmatmul.mubr.bf16.gmra.mrb[0].mxu0 %v965
      %v2887 = vpop.f32.mrb[0].mxu0
      %v2888 = vadd.f32 0.0, %v2887
      %v2889 = vpop.f32.mrb[0].mxu0
      %v2890 = vpop.f32.mrb[0].mxu0
      %v2891 = vadd.f32 0.0, %v2890
      %v2892 = vpop.f32.mrb[0].mxu0
      %2893 = vmatprep.mubr.bf16.mxu0 0
      %2894 = vmatmul.mubr.bf16.gmra.mrb[0].mxu0 %v966
      %v2895 = vpop.f32.mrb[0].mxu0
      %v2896 = vadd.f32 0.0, %v2895
      %v2897 = vpop.f32.mrb[0].mxu0
      %v2898 = vpop.f32.mrb[0].mxu0
      %v2899 = vadd.f32 0.0, %v2898
      %v2900 = vpop.f32.mrb[0].mxu0
      %2901 = vmatprep.mubr.bf16.mxu0 0
      %2902 = vmatmul.mubr.bf16.gmra.mrb[0].mxu0 %v967
      %v2903 = vpop.f32.mrb[0].mxu0
      %v2904 = vadd.f32 0.0, %v2903
      %v2905 = vpop.f32.mrb[0].mxu0
      %v2906 = vpop.f32.mrb[0].mxu0
      %v2907 = vadd.f32 0.0, %v2906
      %v2908 = vpop.f32.mrb[0].mxu0
      %2909 = vmatprep.mubr.bf16.mxu0 0
      %2910 = vmatmul.mubr.bf16.gmra.mrb[0].mxu0 %v968
      %v2911 = vpop.f32.mrb[0].mxu0
      %v2912 = vadd.f32 0.0, %v2911
      %v2913 = vpop.f32.mrb[0].mxu0
      %v2914 = vpop.f32.mrb[0].mxu0
      %v2915 = vadd.f32 0.0, %v2914
      %v2916 = vpop.f32.mrb[0].mxu0
      %2917 = vmatprep.mubr.bf16.mxu0 0
      %2918 = vmatmul.mubr.bf16.gmra.mrb[0].mxu0 %v969
      %v2919 = vpop.f32.mrb[0].mxu0
      %v2920 = vadd.f32 0.0, %v2919
      %v2921 = vpop.f32.mrb[0].mxu0
      %v2922 = vpop.f32.mrb[0].mxu0
      %v2923 = vadd.f32 0.0, %v2922
      %v2924 = vpop.f32.mrb[0].mxu0
      %2925 = vmatprep.mubr.bf16.mxu0 0
      %2926 = vmatmul.mubr.bf16.gmra.mrb[0].mxu0 %v1938
      %v2927 = vpop.f32.mrb[0].mxu0
      %v2928 = vadd.f32 0.0, %v2927
      %v2929 = vpop.f32.mrb[0].mxu0
      %v2930 = vpop.f32.mrb[0].mxu0
      %v2931 = vadd.f32 0.0, %v2930
      %v2932 = vpop.f32.mrb[0].mxu0
      %2933 = vmatprep.mubr.bf16.mxu0 0
      %2934 = vmatmul.mubr.bf16.gmra.mrb[0].mxu0 %v2715
      %v2935 = vpop.f32.mrb[0].mxu0
      %v2936 = vadd.f32 0.0, %v2935
      %v2937 = vpop.f32.mrb[0].mxu0
      %v2938 = vpop.f32.mrb[0].mxu0
      %v2939 = vadd.f32 0.0, %v2938
      %v2940 = vpop.f32.mrb[0].mxu0
      %2941 = vdwg.mxu0
      %v2942 = vadd.f32 %v2683, %v2816
      %v2943 = vadd.f32 %v2684, %v2819
      %v2944 = vadd.f32 %v2685, %v2824
      %v2945 = vadd.f32 %v2686, %v2827
      %v2946 = vadd.f32 %v2687, %v2832
      %v2947 = vadd.f32 %v2688, %v2835
      %v2948 = vadd.f32 %v2689, %v2840
      %v2949 = vadd.f32 %v2690, %v2843
      %v2950 = vadd.f32 %v2691, %v2848
      %v2951 = vadd.f32 %v2692, %v2851
      %v2952 = vadd.f32 %v2693, %v2856
      %v2953 = vadd.f32 %v2694, %v2859
      %v2954 = vadd.f32 %v2695, %v2864
      %v2955 = vadd.f32 %v2696, %v2867
      %v2956 = vadd.f32 %v2697, %v2872
      %v2957 = vadd.f32 %v2698, %v2875
      %v2958 = vadd.f32 %v2699, %v2880
      %v2959 = vadd.f32 %v2700, %v2883
      %v2960 = vadd.f32 %v2701, %v2888
      %v2961 = vadd.f32 %v2702, %v2891
      %v2962 = vadd.f32 %v2703, %v2896
      %v2963 = vadd.f32 %v2704, %v2899
      %v2964 = vadd.f32 %v2705, %v2904
      %v2965 = vadd.f32 %v2706, %v2907
      %v2966 = vadd.f32 %v2707, %v2912
      %v2967 = vadd.f32 %v2708, %v2915
      %v2968 = vadd.f32 %v2709, %v2920
      %v2969 = vadd.f32 %v2710, %v2923
      %v2970 = vadd.f32 %v2711, %v2928
      %v2971 = vadd.f32 %v2712, %v2931
      %v2972 = vadd.f32 %v2713, %v2936
      %v2973 = vadd.f32 %v2714, %v2939
      %v2974 = vpack.c.bf16 %v921, %v867
      %s2975 = scalar_lea.vmem %s3, 512
      %v2976 = vld [vmem:[%s2975] sm:$0xf]
      %v2977 = vld [vmem:[%s2975 + $0x4] sm:$0xf]
      %v2978 = vld [vmem:[%s2975 + $0x8] sm:$0xf]
      %v2979 = vld [vmem:[%s2975 + $0xc] sm:$0xf]
      %v2980 = vld [vmem:[%s2975 + $0x10] sm:$0xf]
      %v2981 = vld [vmem:[%s2975 + $0x14] sm:$0xf]
      %v2982 = vld [vmem:[%s2975 + $0x18] sm:$0xf]
      %v2983 = vld [vmem:[%s2975 + $0x1c] sm:$0xf]
      %v2984 = vld [vmem:[%s2975 + $0x20] sm:$0xf]
      %v2985 = vld [vmem:[%s2975 + $0x24] sm:$0xf]
      %v2986 = vld [vmem:[%s2975 + $0x28] sm:$0xf]
      %v2987 = vld [vmem:[%s2975 + $0x2c] sm:$0xf]
      %v2988 = vld [vmem:[%s2975 + $0x30] sm:$0xf]
      %v2989 = vld [vmem:[%s2975 + $0x34] sm:$0xf]
      %v2990 = vld [vmem:[%s2975 + $0x38] sm:$0xf]
      %v2991 = vld [vmem:[%s2975 + $0x3c] sm:$0xf]
      %v3008 = vunpack.c.l.b16 %v2976
      %v3009 = vunpack.c.l.b16 %v2977
      %v3010 = vunpack.c.l.b16 %v2978
      %v3011 = vunpack.c.l.b16 %v2979
      %v3012 = vunpack.c.l.b16 %v2980
      %v3013 = vunpack.c.l.b16 %v2981
      %v3014 = vunpack.c.l.b16 %v2982
      %v3015 = vunpack.c.l.b16 %v2983
      %v3016 = vunpack.c.l.b16 %v2984
      %v3017 = vunpack.c.l.b16 %v2985
      %v3018 = vunpack.c.l.b16 %v2986
      %v3019 = vunpack.c.l.b16 %v2987
      %v3020 = vunpack.c.l.b16 %v2988
      %v3021 = vunpack.c.l.b16 %v2989
      %v3022 = vunpack.c.l.b16 %v2990
      %v3023 = vunpack.c.l.b16 %v2991
      %v3024 = vpack.c.b16 %v3009, %v3008
      %v3025 = vpack.c.b16 %v3011, %v3010
      %v3026 = vpack.c.b16 %v3013, %v3012
      %v3027 = vpack.c.b16 %v3015, %v3014
      %v3028 = vpack.c.b16 %v3017, %v3016
      %v3029 = vpack.c.b16 %v3019, %v3018
      %v3030 = vpack.c.b16 %v3021, %v3020
      %v3031 = vpack.c.b16 %v3023, %v3022
      %3040 = vmatprep.subr.bf16.mxu0 0
      %3041 = vmatpush1.bf16.msra.mxu0 %v3024
      %3042 = vmatprep.subr.bf16.mxu0 0
      %3043 = vmatpush1.bf16.msra.mxu0 %v3025
      %3044 = vmatprep.subr.bf16.mxu0 0
      %3045 = vmatpush1.bf16.msra.mxu0 %v3026
      %3046 = vmatprep.subr.bf16.mxu0 0
      %3047 = vmatpush1.bf16.msra.mxu0 %v3027
      %3048 = vmatprep.subr.bf16.mxu0 0
      %3049 = vmatpush1.bf16.msra.mxu0 %v3028
      %3050 = vmatprep.subr.bf16.mxu0 0
      %3051 = vmatpush1.bf16.msra.mxu0 %v3029
      %3052 = vmatprep.subr.bf16.mxu0 0
      %3053 = vmatpush1.bf16.msra.mxu0 %v3030
      %3054 = vmatprep.subr.bf16.mxu0 0
      %3055 = vmatpush1.bf16.msra.mxu0 %v3031
      %3056 = vmatprep.subr.bf16.mxu0 0
      %3057 = vmatpush1.bf16.msra.mxu0 0
      %3058 = vmatprep.subr.bf16.mxu0 0
      %3059 = vmatpush1.bf16.msra.mxu0 0
      %3060 = vmatprep.subr.bf16.mxu0 0
      %3061 = vmatpush1.bf16.msra.mxu0 0
      %3062 = vmatprep.subr.bf16.mxu0 0
      %3063 = vmatpush1.bf16.msra.mxu0 0
      %3064 = vmatprep.subr.bf16.mxu0 0
      %3065 = vmatpush1.bf16.msra.mxu0 0
      %3066 = vmatprep.subr.bf16.mxu0 0
      %3067 = vmatpush1.bf16.msra.mxu0 0
      %3068 = vmatprep.subr.bf16.mxu0 0
      %3069 = vmatpush1.bf16.msra.mxu0 0
      %3070 = vmatprep.subr.bf16.mxu0 0
      %3071 = vmatpush1.bf16.msra.mxu0 0
      %3072 = vmatprep.mubr.bf16.mxu0 0
      %3073 = vmatmul.mubr.bf16.gmra.mrb[0].mxu0 %v1407
      %v3074 = vpop.f32.mrb[0].mxu0
      %v3075 = vadd.f32 0.0, %v3074
      %v3076 = vpop.f32.mrb[0].mxu0
      %v3077 = vpop.f32.mrb[0].mxu0
      %v3078 = vadd.f32 0.0, %v3077
      %v3079 = vpop.f32.mrb[0].mxu0
      %3080 = vmatprep.mubr.bf16.mxu0 0
      %3081 = vmatmul.mubr.bf16.gmra.mrb[0].mxu0 %v1408
      %v3082 = vpop.f32.mrb[0].mxu0
      %v3083 = vadd.f32 0.0, %v3082
      %v3084 = vpop.f32.mrb[0].mxu0
      %v3085 = vpop.f32.mrb[0].mxu0
      %v3086 = vadd.f32 0.0, %v3085
      %v3087 = vpop.f32.mrb[0].mxu0
      %3088 = vmatprep.mubr.bf16.mxu0 0
      %3089 = vmatmul.mubr.bf16.gmra.mrb[0].mxu0 %v1409
      %v3090 = vpop.f32.mrb[0].mxu0
      %v3091 = vadd.f32 0.0, %v3090
      %v3092 = vpop.f32.mrb[0].mxu0
      %v3093 = vpop.f32.mrb[0].mxu0
      %v3094 = vadd.f32 0.0, %v3093
      %v3095 = vpop.f32.mrb[0].mxu0
      %3096 = vmatprep.mubr.bf16.mxu0 0
      %3097 = vmatmul.mubr.bf16.gmra.mrb[0].mxu0 %v1410
      %v3098 = vpop.f32.mrb[0].mxu0
      %v3099 = vadd.f32 0.0, %v3098
      %v3100 = vpop.f32.mrb[0].mxu0
      %v3101 = vpop.f32.mrb[0].mxu0
      %v3102 = vadd.f32 0.0, %v3101
      %v3103 = vpop.f32.mrb[0].mxu0
      %3104 = vmatprep.mubr.bf16.mxu0 0
      %3105 = vmatmul.mubr.bf16.gmra.mrb[0].mxu0 %v1411
      %v3106 = vpop.f32.mrb[0].mxu0
      %v3107 = vadd.f32 0.0, %v3106
      %v3108 = vpop.f32.mrb[0].mxu0
      %v3109 = vpop.f32.mrb[0].mxu0
      %v3110 = vadd.f32 0.0, %v3109
      %v3111 = vpop.f32.mrb[0].mxu0
      %3112 = vmatprep.mubr.bf16.mxu0 0
      %3113 = vmatmul.mubr.bf16.gmra.mrb[0].mxu0 %v1412
      %v3114 = vpop.f32.mrb[0].mxu0
      %v3115 = vadd.f32 0.0, %v3114
      %v3116 = vpop.f32.mrb[0].mxu0
      %v3117 = vpop.f32.mrb[0].mxu0
      %v3118 = vadd.f32 0.0, %v3117
      %v3119 = vpop.f32.mrb[0].mxu0
      %3120 = vmatprep.mubr.bf16.mxu0 0
      %3121 = vmatmul.mubr.bf16.gmra.mrb[0].mxu0 %v1413
      %v3122 = vpop.f32.mrb[0].mxu0
      %v3123 = vadd.f32 0.0, %v3122
      %v3124 = vpop.f32.mrb[0].mxu0
      %v3125 = vpop.f32.mrb[0].mxu0
      %v3126 = vadd.f32 0.0, %v3125
      %v3127 = vpop.f32.mrb[0].mxu0
      %3128 = vmatprep.mubr.bf16.mxu0 0
      %3129 = vmatmul.mubr.bf16.gmra.mrb[0].mxu0 %v1414
      %v3130 = vpop.f32.mrb[0].mxu0
      %v3131 = vadd.f32 0.0, %v3130
      %v3132 = vpop.f32.mrb[0].mxu0
      %v3133 = vpop.f32.mrb[0].mxu0
      %v3134 = vadd.f32 0.0, %v3133
      %v3135 = vpop.f32.mrb[0].mxu0
      %3136 = vmatprep.mubr.bf16.mxu0 0
      %3137 = vmatmul.mubr.bf16.gmra.mrb[0].mxu0 %v1415
      %v3138 = vpop.f32.mrb[0].mxu0
      %v3139 = vadd.f32 0.0, %v3138
      %v3140 = vpop.f32.mrb[0].mxu0
      %v3141 = vpop.f32.mrb[0].mxu0
      %v3142 = vadd.f32 0.0, %v3141
      %v3143 = vpop.f32.mrb[0].mxu0
      %3144 = vmatprep.mubr.bf16.mxu0 0
      %3145 = vmatmul.mubr.bf16.gmra.mrb[0].mxu0 %v1416
      %v3146 = vpop.f32.mrb[0].mxu0
      %v3147 = vadd.f32 0.0, %v3146
      %v3148 = vpop.f32.mrb[0].mxu0
      %v3149 = vpop.f32.mrb[0].mxu0
      %v3150 = vadd.f32 0.0, %v3149
      %v3151 = vpop.f32.mrb[0].mxu0
      %3152 = vmatprep.mubr.bf16.mxu0 0
      %3153 = vmatmul.mubr.bf16.gmra.mrb[0].mxu0 %v1417
      %v3154 = vpop.f32.mrb[0].mxu0
      %v3155 = vadd.f32 0.0, %v3154
      %v3156 = vpop.f32.mrb[0].mxu0
      %v3157 = vpop.f32.mrb[0].mxu0
      %v3158 = vadd.f32 0.0, %v3157
      %v3159 = vpop.f32.mrb[0].mxu0
      %3160 = vmatprep.mubr.bf16.mxu0 0
      %3161 = vmatmul.mubr.bf16.gmra.mrb[0].mxu0 %v1418
      %v3162 = vpop.f32.mrb[0].mxu0
      %v3163 = vadd.f32 0.0, %v3162
      %v3164 = vpop.f32.mrb[0].mxu0
      %v3165 = vpop.f32.mrb[0].mxu0
      %v3166 = vadd.f32 0.0, %v3165
      %v3167 = vpop.f32.mrb[0].mxu0
      %3168 = vmatprep.mubr.bf16.mxu0 0
      %3169 = vmatmul.mubr.bf16.gmra.mrb[0].mxu0 %v1419
      %v3170 = vpop.f32.mrb[0].mxu0
      %v3171 = vadd.f32 0.0, %v3170
      %v3172 = vpop.f32.mrb[0].mxu0
      %v3173 = vpop.f32.mrb[0].mxu0
      %v3174 = vadd.f32 0.0, %v3173
      %v3175 = vpop.f32.mrb[0].mxu0
      %3176 = vmatprep.mubr.bf16.mxu0 0
      %3177 = vmatmul.mubr.bf16.gmra.mrb[0].mxu0 %v1420
      %v3178 = vpop.f32.mrb[0].mxu0
      %v3179 = vadd.f32 0.0, %v3178
      %v3180 = vpop.f32.mrb[0].mxu0
      %v3181 = vpop.f32.mrb[0].mxu0
      %v3182 = vadd.f32 0.0, %v3181
      %v3183 = vpop.f32.mrb[0].mxu0
      %3184 = vmatprep.mubr.bf16.mxu0 0
      %3185 = vmatmul.mubr.bf16.gmra.mrb[0].mxu0 %v2197
      %v3186 = vpop.f32.mrb[0].mxu0
      %v3187 = vadd.f32 0.0, %v3186
      %v3188 = vpop.f32.mrb[0].mxu0
      %v3189 = vpop.f32.mrb[0].mxu0
      %v3190 = vadd.f32 0.0, %v3189
      %v3191 = vpop.f32.mrb[0].mxu0
      %3192 = vmatprep.mubr.bf16.mxu0 0
      %3193 = vmatmul.mubr.bf16.gmra.mrb[0].mxu0 %v2974
      %v3194 = vpop.f32.mrb[0].mxu0
      %v3195 = vadd.f32 0.0, %v3194
      %v3196 = vpop.f32.mrb[0].mxu0
      %v3197 = vpop.f32.mrb[0].mxu0
      %v3198 = vadd.f32 0.0, %v3197
      %v3199 = vpop.f32.mrb[0].mxu0
      %3200 = vdwg.mxu0
      %v3201 = vadd.f32 %v2942, %v3075
      %v3202 = vadd.f32 %v2943, %v3078
      %v3203 = vadd.f32 %v2944, %v3083
      %v3204 = vadd.f32 %v2945, %v3086
      %v3205 = vadd.f32 %v2946, %v3091
      %v3206 = vadd.f32 %v2947, %v3094
      %v3207 = vadd.f32 %v2948, %v3099
      %v3208 = vadd.f32 %v2949, %v3102
      %v3209 = vadd.f32 %v2950, %v3107
      %v3210 = vadd.f32 %v2951, %v3110
      %v3211 = vadd.f32 %v2952, %v3115
      %v3212 = vadd.f32 %v2953, %v3118
      %v3213 = vadd.f32 %v2954, %v3123
      %v3214 = vadd.f32 %v2955, %v3126
      %v3215 = vadd.f32 %v2956, %v3131
      %v3216 = vadd.f32 %v2957, %v3134
      %v3217 = vadd.f32 %v2958, %v3139
      %v3218 = vadd.f32 %v2959, %v3142
      %v3219 = vadd.f32 %v2960, %v3147
      %v3220 = vadd.f32 %v2961, %v3150
      %v3221 = vadd.f32 %v2962, %v3155
      %v3222 = vadd.f32 %v2963, %v3158
      %v3223 = vadd.f32 %v2964, %v3163
      %v3224 = vadd.f32 %v2965, %v3166
      %v3225 = vadd.f32 %v2966, %v3171
      %v3226 = vadd.f32 %v2967, %v3174
      %v3227 = vadd.f32 %v2968, %v3179
      %v3228 = vadd.f32 %v2969, %v3182
      %v3229 = vadd.f32 %v2970, %v3187
      %v3230 = vadd.f32 %v2971, %v3190
      %v3231 = vadd.f32 %v2972, %v3195
      %v3232 = vadd.f32 %v2973, %v3198
      %v3233 = vpack.c.bf16 %v3202, %v3201
      %v3234 = vpack.c.bf16 %v3204, %v3203
      %v3235 = vpack.c.bf16 %v3206, %v3205
      %v3236 = vpack.c.bf16 %v3208, %v3207
      %v3237 = vpack.c.bf16 %v3210, %v3209
      %v3238 = vpack.c.bf16 %v3212, %v3211
      %v3239 = vpack.c.bf16 %v3214, %v3213
      %v3240 = vpack.c.bf16 %v3216, %v3215
      %v3241 = vpack.c.bf16 %v3218, %v3217
      %v3242 = vpack.c.bf16 %v3220, %v3219
      %v3243 = vpack.c.bf16 %v3222, %v3221
      %v3244 = vpack.c.bf16 %v3224, %v3223
      %v3245 = vpack.c.bf16 %v3226, %v3225
      %v3246 = vpack.c.bf16 %v3228, %v3227
      %v3247 = vpack.c.bf16 %v3230, %v3229
      %v3248 = vpack.c.bf16 %v3232, %v3231
      %v3265 = vunpack.c.l.b16 %v3233
      %v3266 = vunpack.c.h.b16 %v3233
      %v3267 = vunpack.c.l.b16 %v3234
      %v3268 = vunpack.c.h.b16 %v3234
      %v3269 = vunpack.c.l.b16 %v3235
      %v3270 = vunpack.c.h.b16 %v3235
      %v3271 = vunpack.c.l.b16 %v3236
      %v3272 = vunpack.c.h.b16 %v3236
      %v3273 = vunpack.c.l.b16 %v3237
      %v3274 = vunpack.c.h.b16 %v3237
      %v3275 = vunpack.c.l.b16 %v3238
      %v3276 = vunpack.c.h.b16 %v3238
      %v3277 = vunpack.c.l.b16 %v3239
      %v3278 = vunpack.c.h.b16 %v3239
      %v3279 = vunpack.c.l.b16 %v3240
      %v3280 = vunpack.c.h.b16 %v3240
      %v3281 = vunpack.c.l.b16 %v3241
      %v3282 = vunpack.c.h.b16 %v3241
      %v3283 = vunpack.c.l.b16 %v3242
      %v3284 = vunpack.c.h.b16 %v3242
      %v3285 = vunpack.c.l.b16 %v3243
      %v3286 = vunpack.c.h.b16 %v3243
      %v3287 = vunpack.c.l.b16 %v3244
      %v3288 = vunpack.c.h.b16 %v3244
      %v3289 = vunpack.c.l.b16 %v3245
      %v3290 = vunpack.c.h.b16 %v3245
      %v3291 = vunpack.c.l.b16 %v3246
      %v3292 = vunpack.c.h.b16 %v3246
      %v3293 = vunpack.c.l.b16 %v3247
      %v3294 = vunpack.c.h.b16 %v3247
      %v3295 = vunpack.c.l.b16 %v3248
      %v3296 = vunpack.c.h.b16 %v3248
      %v3297 = vpack.c.b16 %v3265, %v3265
      %v3298 = vpack.c.b16 %v3266, %v3266
      %v3299 = vpack.c.b16 %v3267, %v3267
      %v3300 = vpack.c.b16 %v3268, %v3268
      %v3301 = vpack.c.b16 %v3269, %v3269
      %v3302 = vpack.c.b16 %v3270, %v3270
      %v3303 = vpack.c.b16 %v3271, %v3271
      %v3304 = vpack.c.b16 %v3272, %v3272
      %v3305 = vpack.c.b16 %v3273, %v3273
      %v3306 = vpack.c.b16 %v3274, %v3274
      %v3307 = vpack.c.b16 %v3275, %v3275
      %v3308 = vpack.c.b16 %v3276, %v3276
      %v3309 = vpack.c.b16 %v3277, %v3277
      %v3310 = vpack.c.b16 %v3278, %v3278
      %v3311 = vpack.c.b16 %v3279, %v3279
      %v3312 = vpack.c.b16 %v3280, %v3280
      %v3313 = vpack.c.b16 %v3281, %v3281
      %v3314 = vpack.c.b16 %v3282, %v3282
      %v3315 = vpack.c.b16 %v3283, %v3283
      %v3316 = vpack.c.b16 %v3284, %v3284
      %v3317 = vpack.c.b16 %v3285, %v3285
      %v3318 = vpack.c.b16 %v3286, %v3286
      %v3319 = vpack.c.b16 %v3287, %v3287
      %v3320 = vpack.c.b16 %v3288, %v3288
      %v3321 = vpack.c.b16 %v3289, %v3289
      %v3322 = vpack.c.b16 %v3290, %v3290
      %v3323 = vpack.c.b16 %v3291, %v3291
      %v3324 = vpack.c.b16 %v3292, %v3292
      %v3325 = vpack.c.b16 %v3293, %v3293
      %v3326 = vpack.c.b16 %v3294, %v3294
      %v3327 = vpack.c.b16 %v3295, %v3295
      %v3328 = vpack.c.b16 %v3296, %v3296
      %3361 = vst [vmem:[%s457] sm:$0xf] %v3297
      %3362 = vst [vmem:[%s457 + $0x4] sm:$0xf] %v3298
      %3363 = vst [vmem:[%s457 + $0x8] sm:$0xf] %v3299
      %3364 = vst [vmem:[%s457 + $0xc] sm:$0xf] %v3300
      %3365 = vst [vmem:[%s457 + $0x10] sm:$0xf] %v3301
      %3366 = vst [vmem:[%s457 + $0x14] sm:$0xf] %v3302
      %3367 = vst [vmem:[%s457 + $0x18] sm:$0xf] %v3303
      %3368 = vst [vmem:[%s457 + $0x1c] sm:$0xf] %v3304
      %3369 = vst [vmem:[%s457 + $0x20] sm:$0xf] %v3305
      %3370 = vst [vmem:[%s457 + $0x24] sm:$0xf] %v3306
      %3371 = vst [vmem:[%s457 + $0x28] sm:$0xf] %v3307
      %3372 = vst [vmem:[%s457 + $0x2c] sm:$0xf] %v3308
      %3373 = vst [vmem:[%s457 + $0x30] sm:$0xf] %v3309
      %3374 = vst [vmem:[%s457 + $0x34] sm:$0xf] %v3310
      %3375 = vst [vmem:[%s457 + $0x38] sm:$0xf] %v3311
      %3376 = vst [vmem:[%s457 + $0x3c] sm:$0xf] %v3312
      %3377 = vst [vmem:[%s457 + $0x40] sm:$0xf] %v3313
      %3378 = vst [vmem:[%s457 + $0x44] sm:$0xf] %v3314
      %3379 = vst [vmem:[%s457 + $0x48] sm:$0xf] %v3315
      %3380 = vst [vmem:[%s457 + $0x4c] sm:$0xf] %v3316
      %3381 = vst [vmem:[%s457 + $0x50] sm:$0xf] %v3317
      %3382 = vst [vmem:[%s457 + $0x54] sm:$0xf] %v3318
      %3383 = vst [vmem:[%s457 + $0x58] sm:$0xf] %v3319
      %3384 = vst [vmem:[%s457 + $0x5c] sm:$0xf] %v3320
      %3385 = vst [vmem:[%s457 + $0x60] sm:$0xf] %v3321
      %3386 = vst [vmem:[%s457 + $0x64] sm:$0xf] %v3322
      %3387 = vst [vmem:[%s457 + $0x68] sm:$0xf] %v3323
      %3388 = vst [vmem:[%s457 + $0x6c] sm:$0xf] %v3324
      %3389 = vst [vmem:[%s457 + $0x70] sm:$0xf] %v3325
      %3390 = vst [vmem:[%s457 + $0x74] sm:$0xf] %v3326
      %3391 = vst [vmem:[%s457 + $0x78] sm:$0xf] %v3327
      %3392 = vst [vmem:[%s457 + $0x7c] sm:$0xf] %v3328
      %v3393 = vadd.f32 %v3201, %v3202
      %v3394 = vadd.f32 %v3393, %v3203
      %v3395 = vadd.f32 %v3394, %v3204
      %v3396 = vadd.f32 %v3395, %v3205
      %v3397 = vadd.f32 %v3396, %v3206
      %v3398 = vadd.f32 %v3397, %v3207
      %v3399 = vadd.f32 %v3398, %v3208
      %v3400 = vadd.f32 %v3399, %v3209
      %v3401 = vadd.f32 %v3400, %v3210
      %v3402 = vadd.f32 %v3401, %v3211
      %v3403 = vadd.f32 %v3402, %v3212
      %v3404 = vadd.f32 %v3403, %v3213
      %v3405 = vadd.f32 %v3404, %v3214
      %v3406 = vadd.f32 %v3405, %v3215
      %v3407 = vadd.f32 %v3406, %v3216
      %v3408 = vadd.f32 %v3407, %v3217
      %v3409 = vadd.f32 %v3408, %v3218
      %v3410 = vadd.f32 %v3409, %v3219
      %v3411 = vadd.f32 %v3410, %v3220
      %v3412 = vadd.f32 %v3411, %v3221
      %v3413 = vadd.f32 %v3412, %v3222
      %v3414 = vadd.f32 %v3413, %v3223
      %v3415 = vadd.f32 %v3414, %v3224
      %v3416 = vadd.f32 %v3415, %v3225
      %v3417 = vadd.f32 %v3416, %v3226
      %v3418 = vadd.f32 %v3417, %v3227
      %v3419 = vadd.f32 %v3418, %v3228
      %v3420 = vadd.f32 %v3419, %v3229
      %v3421 = vadd.f32 %v3420, %v3230
      %v3422 = vadd.f32 %v3421, %v3231
      %v3423 = vadd.f32 %v3422, %v3232
      %v3424 = vrot.slane %v3423, 4
      %v3425 = vadd.f32 %v3423, %v3424
      %v3426 = vrot.slane %v3425, 2
      %v3427 = vadd.f32 %v3425, %v3426
      %v3428 = vrot.slane %v3427, 1
      %v3429 = vadd.f32 %v3427, %v3428
      %v3430 = vmul.f32 %v3201, %v3201
      %v3431 = vmul.f32 %v3202, %v3202
      %v3432 = vmul.f32 %v3203, %v3203
      %v3433 = vmul.f32 %v3204, %v3204
      %v3434 = vmul.f32 %v3205, %v3205
      %v3435 = vmul.f32 %v3206, %v3206
      %v3436 = vmul.f32 %v3207, %v3207
      %v3437 = vmul.f32 %v3208, %v3208
      %v3438 = vmul.f32 %v3209, %v3209
      %v3439 = vmul.f32 %v3210, %v3210
      %v3440 = vmul.f32 %v3211, %v3211
      %v3441 = vmul.f32 %v3212, %v3212
      %v3442 = vmul.f32 %v3213, %v3213
      %v3443 = vmul.f32 %v3214, %v3214
      %v3444 = vmul.f32 %v3215, %v3215
      %v3445 = vmul.f32 %v3216, %v3216
      %v3446 = vmul.f32 %v3217, %v3217
      %v3447 = vmul.f32 %v3218, %v3218
      %v3448 = vmul.f32 %v3219, %v3219
      %v3449 = vmul.f32 %v3220, %v3220
      %v3450 = vmul.f32 %v3221, %v3221
      %v3451 = vmul.f32 %v3222, %v3222
      %v3452 = vmul.f32 %v3223, %v3223
      %v3453 = vmul.f32 %v3224, %v3224
      %v3454 = vmul.f32 %v3225, %v3225
      %v3455 = vmul.f32 %v3226, %v3226
      %v3456 = vmul.f32 %v3227, %v3227
      %v3457 = vmul.f32 %v3228, %v3228
      %v3458 = vmul.f32 %v3229, %v3229
      %v3459 = vmul.f32 %v3230, %v3230
      %v3460 = vmul.f32 %v3231, %v3231
      %v3461 = vmul.f32 %v3232, %v3232
      %v3462 = vadd.f32 %v3430, %v3431
      %v3463 = vadd.f32 %v3462, %v3432
      %v3464 = vadd.f32 %v3463, %v3433
      %v3465 = vadd.f32 %v3464, %v3434
      %v3466 = vadd.f32 %v3465, %v3435
      %v3467 = vadd.f32 %v3466, %v3436
      %v3468 = vadd.f32 %v3467, %v3437
      %v3469 = vadd.f32 %v3468, %v3438
      %v3470 = vadd.f32 %v3469, %v3439
      %v3471 = vadd.f32 %v3470, %v3440
      %v3472 = vadd.f32 %v3471, %v3441
      %v3473 = vadd.f32 %v3472, %v3442
      %v3474 = vadd.f32 %v3473, %v3443
      %v3475 = vadd.f32 %v3474, %v3444
      %v3476 = vadd.f32 %v3475, %v3445
      %v3477 = vadd.f32 %v3476, %v3446
      %v3478 = vadd.f32 %v3477, %v3447
      %v3479 = vadd.f32 %v3478, %v3448
      %v3480 = vadd.f32 %v3479, %v3449
      %v3481 = vadd.f32 %v3480, %v3450
      %v3482 = vadd.f32 %v3481, %v3451
      %v3483 = vadd.f32 %v3482, %v3452
      %v3484 = vadd.f32 %v3483, %v3453
      %v3485 = vadd.f32 %v3484, %v3454
      %v3486 = vadd.f32 %v3485, %v3455
      %v3487 = vadd.f32 %v3486, %v3456
      %v3488 = vadd.f32 %v3487, %v3457
      %v3489 = vadd.f32 %v3488, %v3458
      %v3490 = vadd.f32 %v3489, %v3459
      %v3491 = vadd.f32 %v3490, %v3460
      %v3492 = vadd.f32 %v3491, %v3461
      %v3493 = vrot.slane %v3492, 4
      %v3494 = vadd.f32 %v3492, %v3493
      %v3495 = vrot.slane %v3494, 2
      %v3496 = vadd.f32 %v3494, %v3495
      %v3497 = vrot.slane %v3496, 1
      %v3498 = vadd.f32 %v3496, %v3497
      %v3499 = vsel %vm704, %v3429, %v3498
      %3500 = vst [vmem:[%s465] sm:$0x3] %v3499
      %s3501 = smul.u32 16, %s24
      %p3502 = scmp.lt.s32.totalorder %s23, 1
      %s3503 = scalar_select %p3502, %s23, 1
      %p3504 = scmp.lt.s32.totalorder %s3501, 15
      %s3505 = scalar_select %p3504, %s3501, 15
      %s3506 = smul.addr %s3505, 2
      %s3507 = smul.addr %s3503, 32
      %s3508 = sadd.s32 %s3506, %s3507
      %s3509 = smul.addr %s3508, 4
      %s3510 = scalar_lea.vmem %s6, %s3509
      %p3511 = scmp.lt.s32.totalorder %s23, 1
      %s3512 = scalar_select %p3511, %s23, 1
      %p3513 = scmp.lt.s32.totalorder %s24, 0
      %s3514 = scalar_select %p3513, %s24, 0
      %s3515 = sadd.s32 %s3514, %s3512
      %s3516 = smul.addr %s3515, 2
      %s3517 = scalar_lea.vmem %s7, %s3516
      // Predicated region
      $region45: #{up_forward.5} parent=43 // pred_check
        %p3518 = pneg %p214
      $region46: #{up_forward.5} parent=43 // pred_check_branch
        %3520 = sbr.rel (%p3518) target = $region48
      $region47: #{up_forward.5} parent=43 // pred_region
        %s3521 = smul.u32 16, %s24
      $region48: #{up_forward.5} parent=43 // pred_fallthru
        _
      // Predicated region
      $region49: #{up_forward.5} parent=43 // pred_check
        %p3522 = pneg %p242
      $region50: #{up_forward.5} parent=43 // pred_check_branch
        %3524 = sbr.rel (%p3522) target = $region52
      $region51: #{up_forward.5} parent=43 // pred_region
        _
      $region52: #{up_forward.5} parent=43 // pred_fallthru
        _
    $region44: #{up_forward.5} parent=5 // pred_fallthru
      _
    %p3525 = scmp.le.s32.totalorder 2, %s14
    // Predicated region
    $region53: #{up_forward.5} parent=5 // pred_check
      %p3526 = pneg %p3525
    $region54: #{up_forward.5} parent=5 // pred_check_branch
      %3528 = sbr.rel (%p3526) target = $region56
    $region55: #{up_forward.5} parent=5 // pred_region
      %s3529 = ssub.s32 %s14, 2
      // Predicated region
      $region57: #{up_forward.5} parent=55 // pred_check
        %p3530 = pneg %p220
      $region58: #{up_forward.5} parent=55 // pred_check_branch
        %3532 = sbr.rel (%p3530) target = $region60
      $region59: #{up_forward.5} parent=55 // pred_region
        %s3533 = smul.u32 16, %s26
        %p3534 = scmp.lt.s32.totalorder %s25, 1
        %s3535 = scalar_select %p3534, %s25, 1
        %p3536 = scmp.lt.s32.totalorder %s3533, 15
        %s3537 = scalar_select %p3536, %s3533, 15
        %s3538 = smul.addr %s3537, 2
        %s3539 = smul.addr %s3535, 32
        %s3540 = sadd.s32 %s3538, %s3539
        %s3541 = smul.addr %s3540, 4
        %s3542 = scalar_lea.vmem %s6, %s3541
      $region60: #{up_forward.5} parent=55 // pred_fallthru
        _
      // Predicated region
      $region61: #{up_forward.5} parent=55 // pred_check
        %p3543 = pneg %p248
      $region62: #{up_forward.5} parent=55 // pred_check_branch
        %3545 = sbr.rel (%p3543) target = $region64
      $region63: #{up_forward.5} parent=55 // pred_region
        %p3546 = scmp.lt.s32.totalorder %s25, 1
        %s3547 = scalar_select %p3546, %s25, 1
        %p3548 = scmp.lt.s32.totalorder %s26, 0
        %s3549 = scalar_select %p3548, %s26, 0
        %s3550 = sadd.s32 %s3549, %s3547
        %s3551 = smul.addr %s3550, 2
        %s3552 = scalar_lea.vmem %s7, %s3551
      $region64: #{up_forward.5} parent=55 // pred_fallthru
        _
    $region56: #{up_forward.5} parent=5 // pred_fallthru
      _
  $region6: #{up_forward.5} parent=0 // loop_footer
    %s18 = sadd.s32 1, %s14
  $region7: #{up_forward.5} parent=0 // loop_footer_branch
    %13 = sbr.rel target = $region3
  $region8: #{up_forward.5} parent=0 // loop_exit
    _

</llo_original>
